<compile_context>
chip_gen: v5e
topology: v5e:2x2
jax: 0.10.0
libtpu: 0.0.40
codegen_flags: <defaults>
</compile_context>

<pallas_src>
import functools
import numpy as np

import jax
import jax.numpy as jnp
from jax.experimental import pallas as pl
from jax.experimental.pallas import tpu as pltpu


# ---------------------------------------------------------------------------
# Pallas kernel
# ---------------------------------------------------------------------------
def _make_gnconv_kernel(dims, H, W, ksize, base, padw, bt):
    order = len(dims)
    Cd = sum(dims)
    HW = H * W
    P = (ksize - 1) // 2
    offs = [0]
    for d in dims:
        offs.append(offs[-1] + d)
    f32 = jnp.float32
    bf16 = jnp.bfloat16
    dot = functools.partial(jnp.dot, preferred_element_type=f32)

    def split_hl(v):
        # f32 value -> (hi, lo) bf16 parts, hi + lo ~= v to ~2^-17 rel.
        hi = v.astype(bf16)
        lo = (v - hi.astype(f32)).astype(bf16)
        return hi, lo

    def dot3(w_ref, v_hi, v_lo):
        # full-precision f32 matmul out of three bf16 MXU passes.
        w_hi = w_ref[0]
        w_lo = w_ref[1]
        return dot(w_hi, v_hi) + dot(w_hi, v_lo) + dot(w_lo, v_hi)

    def kernel(*refs):
        (x_ref, wia_ref, wib_ref, bia_ref, bib_ref,
         dww_ref, dwb_ref, cmask_ref) = refs[:8]
        pws_w_refs = refs[8:8 + (order - 1)]
        pws_b_refs = refs[8 + (order - 1):8 + 2 * (order - 1)]
        wout_ref, bout_ref, o_ref, pad_ref, dw_ref = refs[8 + 2 * (order - 1):]

        # Zero only the halo stripes (128-aligned, once per grid step); the
        # live region [base:base+HW] is fully overwritten for every image.
        pad_ref[:, :base] = jnp.zeros((Cd, base), f32)
        tail = padw - (base + HW)
        pad_ref[:, base + HW:] = jnp.zeros((Cd, tail), f32)

        for b in range(bt):                               # Bt images per step
            x = x_ref[b]                                   # (dim, H*W) f32
            x_hi, x_lo = split_hl(x)

            # ---- proj_in (1x1 conv): channel-batched bf16x3 MXU matmuls ----
            pwa = dot3(wia_ref, x_hi, x_lo) + bia_ref[...]   # (dims[0], HW)
            abc = dot3(wib_ref, x_hi, x_lo) + bib_ref[...]   # (sum(dims), HW)

            # ---- depthwise KxK conv over the zero-padded lane slab --------
            # dj-outer / di-inner: per-column-shift partial, mask applied once.
            pad_ref[:, base:base + HW] = abc               # 128-aligned store
            acc = jnp.zeros((Cd, HW), f32)
            for dj in range(ksize):
                ox = dj - P
                partial = jnp.zeros((Cd, HW), f32)
                for di in range(ksize):
                    oy = di - P
                    start = base + oy * W + ox
                    win = pad_ref[:, start:start + HW]     # shifted (Cd, HW)
                    j = di * ksize + dj
                    tap = dww_ref[:, j:j + 1]              # (Cd, 1) scaled tap
                    partial = partial + tap * win
                if dj == P:                                # center: mask == 1
                    acc = acc + partial
                else:
                    acc = acc + partial * cmask_ref[dj:dj + 1, :]
            dw_ref[...] = acc + dwb_ref[...]               # scale already folded

            # ---- gated recursion -----------------------------------------
            xg = pwa * dw_ref[offs[0]:offs[1], :]
            for i in range(order - 1):
                g_hi, g_lo = split_hl(xg)
                xg = dot3(pws_w_refs[i], g_hi, g_lo) + pws_b_refs[i][...]
                xg = xg * dw_ref[offs[i + 1]:offs[i + 2], :]

            # ---- proj_out (1x1 conv) ---------------------------------------
            g_hi, g_lo = split_hl(xg)
            out = dot3(wout_ref, g_hi, g_lo) + bout_ref[...]
            o_ref[b] = out.astype(o_ref.dtype)

    return kernel


# ---------------------------------------------------------------------------
# Wrapper
# ---------------------------------------------------------------------------
def gnconv_forward(x, w_in, b_in, dw_w, dw_b, pws_w, pws_b, w_out, b_out, *,
                   dims, scale=1.0):
    B, dim, H, W = x.shape
    order = len(dims)
    d0, Cd = dims[0], sum(dims)
    HW = H * W
    assert HW % 128 == 0, "lane-dense layout assumes H*W is a multiple of 128"
    ksize = dw_w.shape[-1]
    P = (ksize - 1) // 2

    # lane-dense layout: flatten spatial dims (free layout plumbing).
    x2 = x.reshape(B, dim, HW).astype(jnp.float32)

    def split2(w):
        # (out, in) f32 -> (2, out, in) bf16 packed (hi, lo) for bf16x3 matmuls.
        w = w.astype(jnp.float32)
        hi = w.astype(jnp.bfloat16)
        lo = (w - hi.astype(jnp.float32)).astype(jnp.bfloat16)
        return jnp.stack([hi, lo])

    # proj_in split so the kernel never slices the fused tensor along channels.
    wia = split2(w_in[:d0])
    wib = split2(w_in[d0:])
    bia = b_in[:d0].reshape(d0, 1).astype(jnp.float32)
    bib = b_in[d0:].reshape(Cd, 1).astype(jnp.float32)
    # scale folded into the depthwise taps and bias (review item 2).
    dww = (dw_w.reshape(Cd, ksize * ksize).astype(jnp.float32) * scale)
    dwb = (dw_b.reshape(Cd, 1).astype(jnp.float32) * scale)
    pws_w2 = [split2(w) for w in pws_w]
    pws_b2 = [b.reshape(-1, 1).astype(jnp.float32) for b in pws_b]
    wo = split2(w_out)
    bo = b_out.reshape(dim, 1).astype(jnp.float32)

    # Column-validity masks: zero the lanes whose horizontal shift wrapped rows.
    cols = np.arange(HW) % W
    cmask = jnp.asarray(np.stack(
        [((cols + (dj - P) >= 0) & (cols + (dj - P) < W)).astype(np.float32)
         for dj in range(ksize)]))

    # Padded-slab geometry: live data at a 128-aligned lane offset so the
    # in-kernel store is unmasked; the 49 window reads are offset loads.
    halo = P * W + P
    base = -(-halo // 128) * 128
    padw = -(-(base + HW + halo) // 128) * 128

    # Batch blocking (review item 6/7): Bt images per step, keep >=2 grid steps.
    bt = 1
    for cand in (8, 4, 2):
        if B % cand == 0 and B // cand >= 2:
            bt = cand
            break
    nsteps = B // bt

    kernel = _make_gnconv_kernel(tuple(int(d) for d in dims), H, W, ksize,
                                 base, padw, bt)

    def const_spec(shape):
        n = len(shape)
        return pl.BlockSpec(shape, lambda b, _n=n: (0,) * _n)

    in_specs = [pl.BlockSpec((bt, dim, HW), lambda b: (b, 0, 0))]
    in_specs += [const_spec(a.shape) for a in (wia, wib, bia, bib, dww, dwb, cmask)]
    in_specs += [const_spec(w.shape) for w in pws_w2]
    in_specs += [const_spec(bb.shape) for bb in pws_b2]
    in_specs += [const_spec(wo.shape), const_spec(bo.shape)]

    out = pl.pallas_call(
        kernel,
        out_shape=jax.ShapeDtypeStruct((B, dim, HW), jnp.float32),
        grid=(nsteps,),
        in_specs=in_specs,
        out_specs=pl.BlockSpec((bt, dim, HW), lambda b: (b, 0, 0)),
        scratch_shapes=[pltpu.VMEM((Cd, padw), jnp.float32),   # padded conv slab
                        pltpu.VMEM((Cd, HW), jnp.float32)],    # dw_abc buffer
        compiler_params=pltpu.CompilerParams(
            dimension_semantics=("parallel",),
            vmem_limit_bytes=32 * 1024 * 1024),
    )(x2, wia, wib, bia, bib, dww, dwb, cmask, *pws_w2, *pws_b2, wo, bo)
    return out.reshape(B, dim, H, W)


# ---------------------------------------------------------------------------
# Pure-JAX reference (mirrors the PyTorch gnconv.forward) for validation
# ---------------------------------------------------------------------------
def _gnconv_reference(x, w_in, b_in, dw_w, dw_b, pws_w, pws_b, w_out, b_out, *,
                      dims, scale=1.0):
    hi = jax.lax.Precision.HIGHEST
    order = len(dims)
    d0, Cd = dims[0], sum(dims)
    P = (dw_w.shape[-1] - 1) // 2
    fused = jnp.einsum('oi,bihw->bohw', w_in, x, precision=hi) \
        + b_in[None, :, None, None]
    pwa, abc = fused[:, :d0], fused[:, d0:]
    dw_abc = jax.lax.conv_general_dilated(
        abc, dw_w, window_strides=(1, 1), padding=((P, P), (P, P)),
        dimension_numbers=("NCHW", "OIHW", "NCHW"),
        feature_group_count=Cd, precision=hi)
    dw_abc = (dw_abc + dw_b[None, :, None, None]) * scale
    offs = np.cumsum([0] + list(dims))
    y = pwa * dw_abc[:, offs[0]:offs[1]]
    for i in range(order - 1):
        y = jnp.einsum('oi,bihw->bohw', pws_w[i], y, precision=hi) \
            + pws_b[i][None, :, None, None]
        y = y * dw_abc[:, offs[i + 1]:offs[i + 2]]
    return jnp.einsum('oi,bihw->bohw', w_out, y, precision=hi) \
        + b_out[None, :, None, None]


if __name__ == "__main__":
    B, dim, order = 2, 32, 5          # module default order=5 needs dim >= 16
    H = W = 16
    scale = 1.0                       # module default s=1.0
    dims = [dim // 2 ** i for i in range(order)]
    dims.reverse()                    # [2, 4, 8, 16, 32]
    d0, Cd = dims[0], sum(dims)       # 2, 62

    key = jax.random.PRNGKey(0)
    ks = iter(jax.random.split(key, 16))
    x = jax.random.normal(next(ks), (B, dim, H, W), jnp.float32)
    w_in = jax.random.normal(next(ks), (2 * dim, dim), jnp.float32) / float(np.sqrt(dim))
    b_in = 0.05 * jax.random.normal(next(ks), (2 * dim,), jnp.float32)
    dw_w = jax.random.normal(next(ks), (Cd, 1, 7, 7), jnp.float32) / 7.0
    dw_b = 0.05 * jax.random.normal(next(ks), (Cd,), jnp.float32)
    pws_w = [jax.random.normal(next(ks), (dims[i + 1], dims[i]), jnp.float32)
             / float(np.sqrt(dims[i])) for i in range(order - 1)]
    pws_b = [0.05 * jax.random.normal(next(ks), (dims[i + 1],), jnp.float32)
             for i in range(order - 1)]
    w_out = jax.random.normal(next(ks), (dim, dim), jnp.float32) / float(np.sqrt(dim))
    b_out = 0.05 * jax.random.normal(next(ks), (dim,), jnp.float32)

    out = gnconv_forward(x, w_in, b_in, dw_w, dw_b, pws_w, pws_b, w_out, b_out,
                         dims=dims, scale=scale)
    out = jax.block_until_ready(out)

    ref = _gnconv_reference(x, w_in, b_in, dw_w, dw_b, pws_w, pws_b,
                            w_out, b_out, dims=dims, scale=scale)
    # bf16x3 matmuls give ~1e-5 per-dot relative error; through the gated
    # multiplicative cascade the worst case stays well under 1e-3.
    np.testing.assert_allclose(np.asarray(out), np.asarray(ref),
                               rtol=1e-2, atol=1e-2)
    print("KERNEL_OK")
</pallas_src>

<mosaic_0001>
module attributes {stable_mosaic.version = 11 : i64} {
  func.func @kernel(%arg0: i32, %arg1: memref<1x32x256xf32, #tpu.memory_space<vmem>>, %arg2: memref<2x2x32xbf16, #tpu.memory_space<vmem>>, %arg3: memref<2x62x32xbf16, #tpu.memory_space<vmem>>, %arg4: memref<2x1xf32, #tpu.memory_space<vmem>>, %arg5: memref<62x1xf32, #tpu.memory_space<vmem>>, %arg6: memref<62x49xf32, #tpu.memory_space<vmem>>, %arg7: memref<62x1xf32, #tpu.memory_space<vmem>>, %arg8: memref<7x256xf32, #tpu.memory_space<vmem>>, %arg9: memref<2x4x2xbf16, #tpu.memory_space<vmem>>, %arg10: memref<2x8x4xbf16, #tpu.memory_space<vmem>>, %arg11: memref<2x16x8xbf16, #tpu.memory_space<vmem>>, %arg12: memref<2x32x16xbf16, #tpu.memory_space<vmem>>, %arg13: memref<4x1xf32, #tpu.memory_space<vmem>>, %arg14: memref<8x1xf32, #tpu.memory_space<vmem>>, %arg15: memref<16x1xf32, #tpu.memory_space<vmem>>, %arg16: memref<32x1xf32, #tpu.memory_space<vmem>>, %arg17: memref<2x32x32xbf16, #tpu.memory_space<vmem>>, %arg18: memref<32x1xf32, #tpu.memory_space<vmem>>, %arg19: memref<1x32x256xf32, #tpu.memory_space<vmem>>, %arg20: memref<62x512xf32, #tpu.memory_space<vmem>>, %arg21: memref<62x256xf32, #tpu.memory_space<vmem>>) attributes {dimension_semantics = [#tpu.dimension_semantics<parallel>], iteration_bounds = array<i64: 2>, scalar_prefetch = 0 : i64, scratch_operands = 2 : i64, tpu.core_type = #tpu.core_type<tc>, window_params = [{transform_indices = @transform_0, window_bounds = array<i64: 1, 32, 256>}, {pipeline_mode = #tpu.pipeline_mode<synchronous>, transform_indices = @transform_1, window_bounds = array<i64: 2, 2, 32>}, {pipeline_mode = #tpu.pipeline_mode<synchronous>, transform_indices = @transform_2, window_bounds = array<i64: 2, 62, 32>}, {pipeline_mode = #tpu.pipeline_mode<synchronous>, transform_indices = @transform_3, window_bounds = array<i64: 2, 1>}, {pipeline_mode = #tpu.pipeline_mode<synchronous>, transform_indices = @transform_4, window_bounds = array<i64: 62, 1>}, {pipeline_mode = #tpu.pipeline_mode<synchronous>, transform_indices = @transform_5, window_bounds = array<i64: 62, 49>}, {pipeline_mode = #tpu.pipeline_mode<synchronous>, transform_indices = @transform_6, window_bounds = array<i64: 62, 1>}, {pipeline_mode = #tpu.pipeline_mode<synchronous>, transform_indices = @transform_7, window_bounds = array<i64: 7, 256>}, {pipeline_mode = #tpu.pipeline_mode<synchronous>, transform_indices = @transform_8, window_bounds = array<i64: 2, 4, 2>}, {pipeline_mode = #tpu.pipeline_mode<synchronous>, transform_indices = @transform_9, window_bounds = array<i64: 2, 8, 4>}, {pipeline_mode = #tpu.pipeline_mode<synchronous>, transform_indices = @transform_10, window_bounds = array<i64: 2, 16, 8>}, {pipeline_mode = #tpu.pipeline_mode<synchronous>, transform_indices = @transform_11, window_bounds = array<i64: 2, 32, 16>}, {pipeline_mode = #tpu.pipeline_mode<synchronous>, transform_indices = @transform_12, window_bounds = array<i64: 4, 1>}, {pipeline_mode = #tpu.pipeline_mode<synchronous>, transform_indices = @transform_13, window_bounds = array<i64: 8, 1>}, {pipeline_mode = #tpu.pipeline_mode<synchronous>, transform_indices = @transform_14, window_bounds = array<i64: 16, 1>}, {pipeline_mode = #tpu.pipeline_mode<synchronous>, transform_indices = @transform_15, window_bounds = array<i64: 32, 1>}, {pipeline_mode = #tpu.pipeline_mode<synchronous>, transform_indices = @transform_16, window_bounds = array<i64: 2, 32, 32>}, {pipeline_mode = #tpu.pipeline_mode<synchronous>, transform_indices = @transform_17, window_bounds = array<i64: 32, 1>}, {transform_indices = @transform_18, window_bounds = array<i64: 1, 32, 256>}]} {
    %cst = arith.constant 0.000000e+00 : f32
    %0 = vector.broadcast %cst : f32 to vector<62x128xf32>
    %c0 = arith.constant 0 : index
    %c0_0 = arith.constant 0 : index
    %1 = vector.load %arg20[%c0, %c0_0] : memref<62x512xf32, #tpu.memory_space<vmem>>, vector<62x128xf32>
    tpu.vector_store %arg20[%c0, %c0_0], %0 {strides = array<i32>} : memref<62x512xf32, #tpu.memory_space<vmem>>, vector<62x128xf32>,
    %cst_1 = arith.constant 0.000000e+00 : f32
    %2 = vector.broadcast %cst_1 : f32 to vector<62x128xf32>
    %c0_2 = arith.constant 0 : index
    %c384 = arith.constant 384 : index
    %3 = vector.load %arg20[%c0_2, %c384] : memref<62x512xf32, #tpu.memory_space<vmem>>, vector<62x128xf32>
    tpu.vector_store %arg20[%c0_2, %c384], %2 {strides = array<i32>} : memref<62x512xf32, #tpu.memory_space<vmem>>, vector<62x128xf32>,
    %c0_3 = arith.constant 0 : index
    %c0_4 = arith.constant 0 : index
    %c0_5 = arith.constant 0 : index
    %4 = vector.load %arg1[%c0_3, %c0_4, %c0_5] : memref<1x32x256xf32, #tpu.memory_space<vmem>>, vector<1x32x256xf32>
    %5 = vector.shape_cast %4 : vector<1x32x256xf32> to vector<32x256xf32>
    %6 = arith.truncf %5 : vector<32x256xf32> to vector<32x256xbf16>
    %7 = arith.extf %6 : vector<32x256xbf16> to vector<32x256xf32>
    %8 = arith.subf %5, %7 : vector<32x256xf32>
    %9 = arith.truncf %8 : vector<32x256xf32> to vector<32x256xbf16>
    %c0_6 = arith.constant 0 : index
    %c0_7 = arith.constant 0 : index
    %c0_8 = arith.constant 0 : index
    %10 = vector.load %arg2[%c0_6, %c0_7, %c0_8] : memref<2x2x32xbf16, #tpu.memory_space<vmem>>, vector<1x2x32xbf16>
    %11 = vector.shape_cast %10 : vector<1x2x32xbf16> to vector<2x32xbf16>
    %c1 = arith.constant 1 : index
    %c0_9 = arith.constant 0 : index
    %c0_10 = arith.constant 0 : index
    %12 = vector.load %arg2[%c1, %c0_9, %c0_10] : memref<2x2x32xbf16, #tpu.memory_space<vmem>>, vector<1x2x32xbf16>
    %13 = vector.shape_cast %12 : vector<1x2x32xbf16> to vector<2x32xbf16>
    %cst_11 = arith.constant dense<0.000000e+00> : vector<2x256xf32>
    %14 = tpu.matmul %11, %6, %cst_11 {dimension_numbers = #tpu.dot_dimension_numbers<[1], [0], [0], [1], [0, 0, 1, 1], [], []>} : vector<2x32xbf16>, vector<32x256xbf16>, vector<2x256xf32> -> vector<2x256xf32>
    %cst_12 = arith.constant dense<0.000000e+00> : vector<2x256xf32>
    %15 = tpu.matmul %11, %9, %cst_12 {dimension_numbers = #tpu.dot_dimension_numbers<[1], [0], [0], [1], [0, 0, 1, 1], [], []>} : vector<2x32xbf16>, vector<32x256xbf16>, vector<2x256xf32> -> vector<2x256xf32>
    %16 = arith.addf %14, %15 : vector<2x256xf32>
    %cst_13 = arith.constant dense<0.000000e+00> : vector<2x256xf32>
    %17 = tpu.matmul %13, %6, %cst_13 {dimension_numbers = #tpu.dot_dimension_numbers<[1], [0], [0], [1], [0, 0, 1, 1], [], []>} : vector<2x32xbf16>, vector<32x256xbf16>, vector<2x256xf32> -> vector<2x256xf32>
    %18 = arith.addf %16, %17 : vector<2x256xf32>
    %c0_14 = arith.constant 0 : index
    %c0_15 = arith.constant 0 : index
    %19 = vector.load %arg4[%c0_14, %c0_15] : memref<2x1xf32, #tpu.memory_space<vmem>>, vector<2x1xf32>
    %20 = vector.broadcast %19 : vector<2x1xf32> to vector<2x256xf32>
    %21 = arith.addf %18, %20 : vector<2x256xf32>
    %c0_16 = arith.constant 0 : index
    %c0_17 = arith.constant 0 : index
    %c0_18 = arith.constant 0 : index
    %22 = vector.load %arg3[%c0_16, %c0_17, %c0_18] : memref<2x62x32xbf16, #tpu.memory_space<vmem>>, vector<1x62x32xbf16>
    %23 = vector.shape_cast %22 : vector<1x62x32xbf16> to vector<62x32xbf16>
    %c1_19 = arith.constant 1 : index
    %c0_20 = arith.constant 0 : index
    %c0_21 = arith.constant 0 : index
    %24 = vector.load %arg3[%c1_19, %c0_20, %c0_21] : memref<2x62x32xbf16, #tpu.memory_space<vmem>>, vector<1x62x32xbf16>
    %25 = vector.shape_cast %24 : vector<1x62x32xbf16> to vector<62x32xbf16>
    %cst_22 = arith.constant dense<0.000000e+00> : vector<62x256xf32>
    %26 = tpu.matmul %23, %6, %cst_22 {dimension_numbers = #tpu.dot_dimension_numbers<[1], [0], [0], [1], [0, 0, 1, 1], [], []>} : vector<62x32xbf16>, vector<32x256xbf16>, vector<62x256xf32> -> vector<62x256xf32>
    %cst_23 = arith.constant dense<0.000000e+00> : vector<62x256xf32>
    %27 = tpu.matmul %23, %9, %cst_23 {dimension_numbers = #tpu.dot_dimension_numbers<[1], [0], [0], [1], [0, 0, 1, 1], [], []>} : vector<62x32xbf16>, vector<32x256xbf16>, vector<62x256xf32> -> vector<62x256xf32>
    %28 = arith.addf %26, %27 : vector<62x256xf32>
    %cst_24 = arith.constant dense<0.000000e+00> : vector<62x256xf32>
    %29 = tpu.matmul %25, %6, %cst_24 {dimension_numbers = #tpu.dot_dimension_numbers<[1], [0], [0], [1], [0, 0, 1, 1], [], []>} : vector<62x32xbf16>, vector<32x256xbf16>, vector<62x256xf32> -> vector<62x256xf32>
    %30 = arith.addf %28, %29 : vector<62x256xf32>
    %c0_25 = arith.constant 0 : index
    %c0_26 = arith.constant 0 : index
    %31 = vector.load %arg5[%c0_25, %c0_26] : memref<62x1xf32, #tpu.memory_space<vmem>>, vector<62x1xf32>
    %32 = vector.broadcast %31 : vector<62x1xf32> to vector<62x256xf32>
    %33 = arith.addf %30, %32 : vector<62x256xf32>
    %c0_27 = arith.constant 0 : index
    %c128 = arith.constant 128 : index
    %34 = vector.load %arg20[%c0_27, %c128] : memref<62x512xf32, #tpu.memory_space<vmem>>, vector<62x256xf32>
    tpu.vector_store %arg20[%c0_27, %c128], %33 {strides = array<i32>} : memref<62x512xf32, #tpu.memory_space<vmem>>, vector<62x256xf32>,
    %cst_28 = arith.constant 0.000000e+00 : f32
    %35 = vector.broadcast %cst_28 : f32 to vector<62x256xf32>
    %cst_29 = arith.constant 0.000000e+00 : f32
    %36 = vector.broadcast %cst_29 : f32 to vector<62x256xf32>
    %c0_30 = arith.constant 0 : index
    %c77 = arith.constant 77 : index
    %37 = vector.load %arg20[%c0_30, %c77] : memref<62x512xf32, #tpu.memory_space<vmem>>, vector<62x256xf32>
    %c0_31 = arith.constant 0 : index
    %c0_32 = arith.constant 0 : index
    %38 = vector.load %arg6[%c0_31, %c0_32] : memref<62x49xf32, #tpu.memory_space<vmem>>, vector<62x1xf32>
    %39 = vector.broadcast %38 : vector<62x1xf32> to vector<62x256xf32>
    %40 = arith.mulf %39, %37 : vector<62x256xf32>
    %41 = arith.addf %36, %40 : vector<62x256xf32>
    %c0_33 = arith.constant 0 : index
    %c93 = arith.constant 93 : index
    %42 = vector.load %arg20[%c0_33, %c93] : memref<62x512xf32, #tpu.memory_space<vmem>>, vector<62x256xf32>
    %c0_34 = arith.constant 0 : index
    %c7 = arith.constant 7 : index
    %43 = vector.load %arg6[%c0_34, %c7] : memref<62x49xf32, #tpu.memory_space<vmem>>, vector<62x1xf32>
    %44 = vector.broadcast %43 : vector<62x1xf32> to vector<62x256xf32>
    %45 = arith.mulf %44, %42 : vector<62x256xf32>
    %46 = arith.addf %41, %45 : vector<62x256xf32>
    %c0_35 = arith.constant 0 : index
    %c109 = arith.constant 109 : index
    %47 = vector.load %arg20[%c0_35, %c109] : memref<62x512xf32, #tpu.memory_space<vmem>>, vector<62x256xf32>
    %c0_36 = arith.constant 0 : index
    %c14 = arith.constant 14 : index
    %48 = vector.load %arg6[%c0_36, %c14] : memref<62x49xf32, #tpu.memory_space<vmem>>, vector<62x1xf32>
    %49 = vector.broadcast %48 : vector<62x1xf32> to vector<62x256xf32>
    %50 = arith.mulf %49, %47 : vector<62x256xf32>
    %51 = arith.addf %46, %50 : vector<62x256xf32>
    %c0_37 = arith.constant 0 : index
    %c125 = arith.constant 125 : index
    %52 = vector.load %arg20[%c0_37, %c125] : memref<62x512xf32, #tpu.memory_space<vmem>>, vector<62x256xf32>
    %c0_38 = arith.constant 0 : index
    %c21 = arith.constant 21 : index
    %53 = vector.load %arg6[%c0_38, %c21] : memref<62x49xf32, #tpu.memory_space<vmem>>, vector<62x1xf32>
    %54 = vector.broadcast %53 : vector<62x1xf32> to vector<62x256xf32>
    %55 = arith.mulf %54, %52 : vector<62x256xf32>
    %56 = arith.addf %51, %55 : vector<62x256xf32>
    %c0_39 = arith.constant 0 : index
    %c141 = arith.constant 141 : index
    %57 = vector.load %arg20[%c0_39, %c141] : memref<62x512xf32, #tpu.memory_space<vmem>>, vector<62x256xf32>
    %c0_40 = arith.constant 0 : index
    %c28 = arith.constant 28 : index
    %58 = vector.load %arg6[%c0_40, %c28] : memref<62x49xf32, #tpu.memory_space<vmem>>, vector<62x1xf32>
    %59 = vector.broadcast %58 : vector<62x1xf32> to vector<62x256xf32>
    %60 = arith.mulf %59, %57 : vector<62x256xf32>
    %61 = arith.addf %56, %60 : vector<62x256xf32>
    %c0_41 = arith.constant 0 : index
    %c157 = arith.constant 157 : index
    %62 = vector.load %arg20[%c0_41, %c157] : memref<62x512xf32, #tpu.memory_space<vmem>>, vector<62x256xf32>
    %c0_42 = arith.constant 0 : index
    %c35 = arith.constant 35 : index
    %63 = vector.load %arg6[%c0_42, %c35] : memref<62x49xf32, #tpu.memory_space<vmem>>, vector<62x1xf32>
    %64 = vector.broadcast %63 : vector<62x1xf32> to vector<62x256xf32>
    %65 = arith.mulf %64, %62 : vector<62x256xf32>
    %66 = arith.addf %61, %65 : vector<62x256xf32>
    %c0_43 = arith.constant 0 : index
    %c173 = arith.constant 173 : index
    %67 = vector.load %arg20[%c0_43, %c173] : memref<62x512xf32, #tpu.memory_space<vmem>>, vector<62x256xf32>
    %c0_44 = arith.constant 0 : index
    %c42 = arith.constant 42 : index
    %68 = vector.load %arg6[%c0_44, %c42] : memref<62x49xf32, #tpu.memory_space<vmem>>, vector<62x1xf32>
    %69 = vector.broadcast %68 : vector<62x1xf32> to vector<62x256xf32>
    %70 = arith.mulf %69, %67 : vector<62x256xf32>
    %71 = arith.addf %66, %70 : vector<62x256xf32>
    %c0_45 = arith.constant 0 : index
    %c0_46 = arith.constant 0 : index
    %72 = vector.load %arg8[%c0_45, %c0_46] : memref<7x256xf32, #tpu.memory_space<vmem>>, vector<1x256xf32>
    %73 = vector.broadcast %72 : vector<1x256xf32> to vector<62x256xf32>
    %74 = arith.mulf %71, %73 : vector<62x256xf32>
    %75 = arith.addf %35, %74 : vector<62x256xf32>
    %cst_47 = arith.constant 0.000000e+00 : f32
    %76 = vector.broadcast %cst_47 : f32 to vector<62x256xf32>
    %c0_48 = arith.constant 0 : index
    %c78 = arith.constant 78 : index
    %77 = vector.load %arg20[%c0_48, %c78] : memref<62x512xf32, #tpu.memory_space<vmem>>, vector<62x256xf32>
    %c0_49 = arith.constant 0 : index
    %c1_50 = arith.constant 1 : index
    %78 = vector.load %arg6[%c0_49, %c1_50] : memref<62x49xf32, #tpu.memory_space<vmem>>, vector<62x1xf32>
    %79 = vector.broadcast %78 : vector<62x1xf32> to vector<62x256xf32>
    %80 = arith.mulf %79, %77 : vector<62x256xf32>
    %81 = arith.addf %76, %80 : vector<62x256xf32>
    %c0_51 = arith.constant 0 : index
    %c94 = arith.constant 94 : index
    %82 = vector.load %arg20[%c0_51, %c94] : memref<62x512xf32, #tpu.memory_space<vmem>>, vector<62x256xf32>
    %c0_52 = arith.constant 0 : index
    %c8 = arith.constant 8 : index
    %83 = vector.load %arg6[%c0_52, %c8] : memref<62x49xf32, #tpu.memory_space<vmem>>, vector<62x1xf32>
    %84 = vector.broadcast %83 : vector<62x1xf32> to vector<62x256xf32>
    %85 = arith.mulf %84, %82 : vector<62x256xf32>
    %86 = arith.addf %81, %85 : vector<62x256xf32>
    %c0_53 = arith.constant 0 : index
    %c110 = arith.constant 110 : index
    %87 = vector.load %arg20[%c0_53, %c110] : memref<62x512xf32, #tpu.memory_space<vmem>>, vector<62x256xf32>
    %c0_54 = arith.constant 0 : index
    %c15 = arith.constant 15 : index
    %88 = vector.load %arg6[%c0_54, %c15] : memref<62x49xf32, #tpu.memory_space<vmem>>, vector<62x1xf32>
    %89 = vector.broadcast %88 : vector<62x1xf32> to vector<62x256xf32>
    %90 = arith.mulf %89, %87 : vector<62x256xf32>
    %91 = arith.addf %86, %90 : vector<62x256xf32>
    %c0_55 = arith.constant 0 : index
    %c126 = arith.constant 126 : index
    %92 = vector.load %arg20[%c0_55, %c126] : memref<62x512xf32, #tpu.memory_space<vmem>>, vector<62x256xf32>
    %c0_56 = arith.constant 0 : index
    %c22 = arith.constant 22 : index
    %93 = vector.load %arg6[%c0_56, %c22] : memref<62x49xf32, #tpu.memory_space<vmem>>, vector<62x1xf32>
    %94 = vector.broadcast %93 : vector<62x1xf32> to vector<62x256xf32>
    %95 = arith.mulf %94, %92 : vector<62x256xf32>
    %96 = arith.addf %91, %95 : vector<62x256xf32>
    %c0_57 = arith.constant 0 : index
    %c142 = arith.constant 142 : index
    %97 = vector.load %arg20[%c0_57, %c142] : memref<62x512xf32, #tpu.memory_space<vmem>>, vector<62x256xf32>
    %c0_58 = arith.constant 0 : index
    %c29 = arith.constant 29 : index
    %98 = vector.load %arg6[%c0_58, %c29] : memref<62x49xf32, #tpu.memory_space<vmem>>, vector<62x1xf32>
    %99 = vector.broadcast %98 : vector<62x1xf32> to vector<62x256xf32>
    %100 = arith.mulf %99, %97 : vector<62x256xf32>
    %101 = arith.addf %96, %100 : vector<62x256xf32>
    %c0_59 = arith.constant 0 : index
    %c158 = arith.constant 158 : index
    %102 = vector.load %arg20[%c0_59, %c158] : memref<62x512xf32, #tpu.memory_space<vmem>>, vector<62x256xf32>
    %c0_60 = arith.constant 0 : index
    %c36 = arith.constant 36 : index
    %103 = vector.load %arg6[%c0_60, %c36] : memref<62x49xf32, #tpu.memory_space<vmem>>, vector<62x1xf32>
    %104 = vector.broadcast %103 : vector<62x1xf32> to vector<62x256xf32>
    %105 = arith.mulf %104, %102 : vector<62x256xf32>
    %106 = arith.addf %101, %105 : vector<62x256xf32>
    %c0_61 = arith.constant 0 : index
    %c174 = arith.constant 174 : index
    %107 = vector.load %arg20[%c0_61, %c174] : memref<62x512xf32, #tpu.memory_space<vmem>>, vector<62x256xf32>
    %c0_62 = arith.constant 0 : index
    %c43 = arith.constant 43 : index
    %108 = vector.load %arg6[%c0_62, %c43] : memref<62x49xf32, #tpu.memory_space<vmem>>, vector<62x1xf32>
    %109 = vector.broadcast %108 : vector<62x1xf32> to vector<62x256xf32>
    %110 = arith.mulf %109, %107 : vector<62x256xf32>
    %111 = arith.addf %106, %110 : vector<62x256xf32>
    %c1_63 = arith.constant 1 : index
    %c0_64 = arith.constant 0 : index
    %112 = vector.load %arg8[%c1_63, %c0_64] : memref<7x256xf32, #tpu.memory_space<vmem>>, vector<1x256xf32>
    %113 = vector.broadcast %112 : vector<1x256xf32> to vector<62x256xf32>
    %114 = arith.mulf %111, %113 : vector<62x256xf32>
    %115 = arith.addf %75, %114 : vector<62x256xf32>
    %cst_65 = arith.constant 0.000000e+00 : f32
    %116 = vector.broadcast %cst_65 : f32 to vector<62x256xf32>
    %c0_66 = arith.constant 0 : index
    %c79 = arith.constant 79 : index
    %117 = vector.load %arg20[%c0_66, %c79] : memref<62x512xf32, #tpu.memory_space<vmem>>, vector<62x256xf32>
    %c0_67 = arith.constant 0 : index
    %c2 = arith.constant 2 : index
    %118 = vector.load %arg6[%c0_67, %c2] : memref<62x49xf32, #tpu.memory_space<vmem>>, vector<62x1xf32>
    %119 = vector.broadcast %118 : vector<62x1xf32> to vector<62x256xf32>
    %120 = arith.mulf %119, %117 : vector<62x256xf32>
    %121 = arith.addf %116, %120 : vector<62x256xf32>
    %c0_68 = arith.constant 0 : index
    %c95 = arith.constant 95 : index
    %122 = vector.load %arg20[%c0_68, %c95] : memref<62x512xf32, #tpu.memory_space<vmem>>, vector<62x256xf32>
    %c0_69 = arith.constant 0 : index
    %c9 = arith.constant 9 : index
    %123 = vector.load %arg6[%c0_69, %c9] : memref<62x49xf32, #tpu.memory_space<vmem>>, vector<62x1xf32>
    %124 = vector.broadcast %123 : vector<62x1xf32> to vector<62x256xf32>
    %125 = arith.mulf %124, %122 : vector<62x256xf32>
    %126 = arith.addf %121, %125 : vector<62x256xf32>
    %c0_70 = arith.constant 0 : index
    %c111 = arith.constant 111 : index
    %127 = vector.load %arg20[%c0_70, %c111] : memref<62x512xf32, #tpu.memory_space<vmem>>, vector<62x256xf32>
    %c0_71 = arith.constant 0 : index
    %c16 = arith.constant 16 : index
    %128 = vector.load %arg6[%c0_71, %c16] : memref<62x49xf32, #tpu.memory_space<vmem>>, vector<62x1xf32>
    %129 = vector.broadcast %128 : vector<62x1xf32> to vector<62x256xf32>
    %130 = arith.mulf %129, %127 : vector<62x256xf32>
    %131 = arith.addf %126, %130 : vector<62x256xf32>
    %c0_72 = arith.constant 0 : index
    %c127 = arith.constant 127 : index
    %132 = vector.load %arg20[%c0_72, %c127] : memref<62x512xf32, #tpu.memory_space<vmem>>, vector<62x256xf32>
    %c0_73 = arith.constant 0 : index
    %c23 = arith.constant 23 : index
    %133 = vector.load %arg6[%c0_73, %c23] : memref<62x49xf32, #tpu.memory_space<vmem>>, vector<62x1xf32>
    %134 = vector.broadcast %133 : vector<62x1xf32> to vector<62x256xf32>
    %135 = arith.mulf %134, %132 : vector<62x256xf32>
    %136 = arith.addf %131, %135 : vector<62x256xf32>
    %c0_74 = arith.constant 0 : index
    %c143 = arith.constant 143 : index
    %137 = vector.load %arg20[%c0_74, %c143] : memref<62x512xf32, #tpu.memory_space<vmem>>, vector<62x256xf32>
    %c0_75 = arith.constant 0 : index
    %c30 = arith.constant 30 : index
    %138 = vector.load %arg6[%c0_75, %c30] : memref<62x49xf32, #tpu.memory_space<vmem>>, vector<62x1xf32>
    %139 = vector.broadcast %138 : vector<62x1xf32> to vector<62x256xf32>
    %140 = arith.mulf %139, %137 : vector<62x256xf32>
    %141 = arith.addf %136, %140 : vector<62x256xf32>
    %c0_76 = arith.constant 0 : index
    %c159 = arith.constant 159 : index
    %142 = vector.load %arg20[%c0_76, %c159] : memref<62x512xf32, #tpu.memory_space<vmem>>, vector<62x256xf32>
    %c0_77 = arith.constant 0 : index
    %c37 = arith.constant 37 : index
    %143 = vector.load %arg6[%c0_77, %c37] : memref<62x49xf32, #tpu.memory_space<vmem>>, vector<62x1xf32>
    %144 = vector.broadcast %143 : vector<62x1xf32> to vector<62x256xf32>
    %145 = arith.mulf %144, %142 : vector<62x256xf32>
    %146 = arith.addf %141, %145 : vector<62x256xf32>
    %c0_78 = arith.constant 0 : index
    %c175 = arith.constant 175 : index
    %147 = vector.load %arg20[%c0_78, %c175] : memref<62x512xf32, #tpu.memory_space<vmem>>, vector<62x256xf32>
    %c0_79 = arith.constant 0 : index
    %c44 = arith.constant 44 : index
    %148 = vector.load %arg6[%c0_79, %c44] : memref<62x49xf32, #tpu.memory_space<vmem>>, vector<62x1xf32>
    %149 = vector.broadcast %148 : vector<62x1xf32> to vector<62x256xf32>
    %150 = arith.mulf %149, %147 : vector<62x256xf32>
    %151 = arith.addf %146, %150 : vector<62x256xf32>
    %c2_80 = arith.constant 2 : index
    %c0_81 = arith.constant 0 : index
    %152 = vector.load %arg8[%c2_80, %c0_81] : memref<7x256xf32, #tpu.memory_space<vmem>>, vector<1x256xf32>
    %153 = vector.broadcast %152 : vector<1x256xf32> to vector<62x256xf32>
    %154 = arith.mulf %151, %153 : vector<62x256xf32>
    %155 = arith.addf %115, %154 : vector<62x256xf32>
    %cst_82 = arith.constant 0.000000e+00 : f32
    %156 = vector.broadcast %cst_82 : f32 to vector<62x256xf32>
    %c0_83 = arith.constant 0 : index
    %c80 = arith.constant 80 : index
    %157 = vector.load %arg20[%c0_83, %c80] : memref<62x512xf32, #tpu.memory_space<vmem>>, vector<62x256xf32>
    %c0_84 = arith.constant 0 : index
    %c3 = arith.constant 3 : index
    %158 = vector.load %arg6[%c0_84, %c3] : memref<62x49xf32, #tpu.memory_space<vmem>>, vector<62x1xf32>
    %159 = vector.broadcast %158 : vector<62x1xf32> to vector<62x256xf32>
    %160 = arith.mulf %159, %157 : vector<62x256xf32>
    %161 = arith.addf %156, %160 : vector<62x256xf32>
    %c0_85 = arith.constant 0 : index
    %c96 = arith.constant 96 : index
    %162 = vector.load %arg20[%c0_85, %c96] : memref<62x512xf32, #tpu.memory_space<vmem>>, vector<62x256xf32>
    %c0_86 = arith.constant 0 : index
    %c10 = arith.constant 10 : index
    %163 = vector.load %arg6[%c0_86, %c10] : memref<62x49xf32, #tpu.memory_space<vmem>>, vector<62x1xf32>
    %164 = vector.broadcast %163 : vector<62x1xf32> to vector<62x256xf32>
    %165 = arith.mulf %164, %162 : vector<62x256xf32>
    %166 = arith.addf %161, %165 : vector<62x256xf32>
    %c0_87 = arith.constant 0 : index
    %c112 = arith.constant 112 : index
    %167 = vector.load %arg20[%c0_87, %c112] : memref<62x512xf32, #tpu.memory_space<vmem>>, vector<62x256xf32>
    %c0_88 = arith.constant 0 : index
    %c17 = arith.constant 17 : index
    %168 = vector.load %arg6[%c0_88, %c17] : memref<62x49xf32, #tpu.memory_space<vmem>>, vector<62x1xf32>
    %169 = vector.broadcast %168 : vector<62x1xf32> to vector<62x256xf32>
    %170 = arith.mulf %169, %167 : vector<62x256xf32>
    %171 = arith.addf %166, %170 : vector<62x256xf32>
    %c0_89 = arith.constant 0 : index
    %c128_90 = arith.constant 128 : index
    %172 = vector.load %arg20[%c0_89, %c128_90] : memref<62x512xf32, #tpu.memory_space<vmem>>, vector<62x256xf32>
    %c0_91 = arith.constant 0 : index
    %c24 = arith.constant 24 : index
    %173 = vector.load %arg6[%c0_91, %c24] : memref<62x49xf32, #tpu.memory_space<vmem>>, vector<62x1xf32>
    %174 = vector.broadcast %173 : vector<62x1xf32> to vector<62x256xf32>
    %175 = arith.mulf %174, %172 : vector<62x256xf32>
    %176 = arith.addf %171, %175 : vector<62x256xf32>
    %c0_92 = arith.constant 0 : index
    %c144 = arith.constant 144 : index
    %177 = vector.load %arg20[%c0_92, %c144] : memref<62x512xf32, #tpu.memory_space<vmem>>, vector<62x256xf32>
    %c0_93 = arith.constant 0 : index
    %c31 = arith.constant 31 : index
    %178 = vector.load %arg6[%c0_93, %c31] : memref<62x49xf32, #tpu.memory_space<vmem>>, vector<62x1xf32>
    %179 = vector.broadcast %178 : vector<62x1xf32> to vector<62x256xf32>
    %180 = arith.mulf %179, %177 : vector<62x256xf32>
    %181 = arith.addf %176, %180 : vector<62x256xf32>
    %c0_94 = arith.constant 0 : index
    %c160 = arith.constant 160 : index
    %182 = vector.load %arg20[%c0_94, %c160] : memref<62x512xf32, #tpu.memory_space<vmem>>, vector<62x256xf32>
    %c0_95 = arith.constant 0 : index
    %c38 = arith.constant 38 : index
    %183 = vector.load %arg6[%c0_95, %c38] : memref<62x49xf32, #tpu.memory_space<vmem>>, vector<62x1xf32>
    %184 = vector.broadcast %183 : vector<62x1xf32> to vector<62x256xf32>
    %185 = arith.mulf %184, %182 : vector<62x256xf32>
    %186 = arith.addf %181, %185 : vector<62x256xf32>
    %c0_96 = arith.constant 0 : index
    %c176 = arith.constant 176 : index
    %187 = vector.load %arg20[%c0_96, %c176] : memref<62x512xf32, #tpu.memory_space<vmem>>, vector<62x256xf32>
    %c0_97 = arith.constant 0 : index
    %c45 = arith.constant 45 : index
    %188 = vector.load %arg6[%c0_97, %c45] : memref<62x49xf32, #tpu.memory_space<vmem>>, vector<62x1xf32>
    %189 = vector.broadcast %188 : vector<62x1xf32> to vector<62x256xf32>
    %190 = arith.mulf %189, %187 : vector<62x256xf32>
    %191 = arith.addf %186, %190 : vector<62x256xf32>
    %192 = arith.addf %155, %191 : vector<62x256xf32>
    %cst_98 = arith.constant 0.000000e+00 : f32
    %193 = vector.broadcast %cst_98 : f32 to vector<62x256xf32>
    %c0_99 = arith.constant 0 : index
    %c81 = arith.constant 81 : index
    %194 = vector.load %arg20[%c0_99, %c81] : memref<62x512xf32, #tpu.memory_space<vmem>>, vector<62x256xf32>
    %c0_100 = arith.constant 0 : index
    %c4 = arith.constant 4 : index
    %195 = vector.load %arg6[%c0_100, %c4] : memref<62x49xf32, #tpu.memory_space<vmem>>, vector<62x1xf32>
    %196 = vector.broadcast %195 : vector<62x1xf32> to vector<62x256xf32>
    %197 = arith.mulf %196, %194 : vector<62x256xf32>
    %198 = arith.addf %193, %197 : vector<62x256xf32>
    %c0_101 = arith.constant 0 : index
    %c97 = arith.constant 97 : index
    %199 = vector.load %arg20[%c0_101, %c97] : memref<62x512xf32, #tpu.memory_space<vmem>>, vector<62x256xf32>
    %c0_102 = arith.constant 0 : index
    %c11 = arith.constant 11 : index
    %200 = vector.load %arg6[%c0_102, %c11] : memref<62x49xf32, #tpu.memory_space<vmem>>, vector<62x1xf32>
    %201 = vector.broadcast %200 : vector<62x1xf32> to vector<62x256xf32>
    %202 = arith.mulf %201, %199 : vector<62x256xf32>
    %203 = arith.addf %198, %202 : vector<62x256xf32>
    %c0_103 = arith.constant 0 : index
    %c113 = arith.constant 113 : index
    %204 = vector.load %arg20[%c0_103, %c113] : memref<62x512xf32, #tpu.memory_space<vmem>>, vector<62x256xf32>
    %c0_104 = arith.constant 0 : index
    %c18 = arith.constant 18 : index
    %205 = vector.load %arg6[%c0_104, %c18] : memref<62x49xf32, #tpu.memory_space<vmem>>, vector<62x1xf32>
    %206 = vector.broadcast %205 : vector<62x1xf32> to vector<62x256xf32>
    %207 = arith.mulf %206, %204 : vector<62x256xf32>
    %208 = arith.addf %203, %207 : vector<62x256xf32>
    %c0_105 = arith.constant 0 : index
    %c129 = arith.constant 129 : index
    %209 = vector.load %arg20[%c0_105, %c129] : memref<62x512xf32, #tpu.memory_space<vmem>>, vector<62x256xf32>
    %c0_106 = arith.constant 0 : index
    %c25 = arith.constant 25 : index
    %210 = vector.load %arg6[%c0_106, %c25] : memref<62x49xf32, #tpu.memory_space<vmem>>, vector<62x1xf32>
    %211 = vector.broadcast %210 : vector<62x1xf32> to vector<62x256xf32>
    %212 = arith.mulf %211, %209 : vector<62x256xf32>
    %213 = arith.addf %208, %212 : vector<62x256xf32>
    %c0_107 = arith.constant 0 : index
    %c145 = arith.constant 145 : index
    %214 = vector.load %arg20[%c0_107, %c145] : memref<62x512xf32, #tpu.memory_space<vmem>>, vector<62x256xf32>
    %c0_108 = arith.constant 0 : index
    %c32 = arith.constant 32 : index
    %215 = vector.load %arg6[%c0_108, %c32] : memref<62x49xf32, #tpu.memory_space<vmem>>, vector<62x1xf32>
    %216 = vector.broadcast %215 : vector<62x1xf32> to vector<62x256xf32>
    %217 = arith.mulf %216, %214 : vector<62x256xf32>
    %218 = arith.addf %213, %217 : vector<62x256xf32>
    %c0_109 = arith.constant 0 : index
    %c161 = arith.constant 161 : index
    %219 = vector.load %arg20[%c0_109, %c161] : memref<62x512xf32, #tpu.memory_space<vmem>>, vector<62x256xf32>
    %c0_110 = arith.constant 0 : index
    %c39 = arith.constant 39 : index
    %220 = vector.load %arg6[%c0_110, %c39] : memref<62x49xf32, #tpu.memory_space<vmem>>, vector<62x1xf32>
    %221 = vector.broadcast %220 : vector<62x1xf32> to vector<62x256xf32>
    %222 = arith.mulf %221, %219 : vector<62x256xf32>
    %223 = arith.addf %218, %222 : vector<62x256xf32>
    %c0_111 = arith.constant 0 : index
    %c177 = arith.constant 177 : index
    %224 = vector.load %arg20[%c0_111, %c177] : memref<62x512xf32, #tpu.memory_space<vmem>>, vector<62x256xf32>
    %c0_112 = arith.constant 0 : index
    %c46 = arith.constant 46 : index
    %225 = vector.load %arg6[%c0_112, %c46] : memref<62x49xf32, #tpu.memory_space<vmem>>, vector<62x1xf32>
    %226 = vector.broadcast %225 : vector<62x1xf32> to vector<62x256xf32>
    %227 = arith.mulf %226, %224 : vector<62x256xf32>
    %228 = arith.addf %223, %227 : vector<62x256xf32>
    %c4_113 = arith.constant 4 : index
    %c0_114 = arith.constant 0 : index
    %229 = vector.load %arg8[%c4_113, %c0_114] : memref<7x256xf32, #tpu.memory_space<vmem>>, vector<1x256xf32>
    %230 = vector.broadcast %229 : vector<1x256xf32> to vector<62x256xf32>
    %231 = arith.mulf %228, %230 : vector<62x256xf32>
    %232 = arith.addf %192, %231 : vector<62x256xf32>
    %cst_115 = arith.constant 0.000000e+00 : f32
    %233 = vector.broadcast %cst_115 : f32 to vector<62x256xf32>
    %c0_116 = arith.constant 0 : index
    %c82 = arith.constant 82 : index
    %234 = vector.load %arg20[%c0_116, %c82] : memref<62x512xf32, #tpu.memory_space<vmem>>, vector<62x256xf32>
    %c0_117 = arith.constant 0 : index
    %c5 = arith.constant 5 : index
    %235 = vector.load %arg6[%c0_117, %c5] : memref<62x49xf32, #tpu.memory_space<vmem>>, vector<62x1xf32>
    %236 = vector.broadcast %235 : vector<62x1xf32> to vector<62x256xf32>
    %237 = arith.mulf %236, %234 : vector<62x256xf32>
    %238 = arith.addf %233, %237 : vector<62x256xf32>
    %c0_118 = arith.constant 0 : index
    %c98 = arith.constant 98 : index
    %239 = vector.load %arg20[%c0_118, %c98] : memref<62x512xf32, #tpu.memory_space<vmem>>, vector<62x256xf32>
    %c0_119 = arith.constant 0 : index
    %c12 = arith.constant 12 : index
    %240 = vector.load %arg6[%c0_119, %c12] : memref<62x49xf32, #tpu.memory_space<vmem>>, vector<62x1xf32>
    %241 = vector.broadcast %240 : vector<62x1xf32> to vector<62x256xf32>
    %242 = arith.mulf %241, %239 : vector<62x256xf32>
    %243 = arith.addf %238, %242 : vector<62x256xf32>
    %c0_120 = arith.constant 0 : index
    %c114 = arith.constant 114 : index
    %244 = vector.load %arg20[%c0_120, %c114] : memref<62x512xf32, #tpu.memory_space<vmem>>, vector<62x256xf32>
    %c0_121 = arith.constant 0 : index
    %c19 = arith.constant 19 : index
    %245 = vector.load %arg6[%c0_121, %c19] : memref<62x49xf32, #tpu.memory_space<vmem>>, vector<62x1xf32>
    %246 = vector.broadcast %245 : vector<62x1xf32> to vector<62x256xf32>
    %247 = arith.mulf %246, %244 : vector<62x256xf32>
    %248 = arith.addf %243, %247 : vector<62x256xf32>
    %c0_122 = arith.constant 0 : index
    %c130 = arith.constant 130 : index
    %249 = vector.load %arg20[%c0_122, %c130] : memref<62x512xf32, #tpu.memory_space<vmem>>, vector<62x256xf32>
    %c0_123 = arith.constant 0 : index
    %c26 = arith.constant 26 : index
    %250 = vector.load %arg6[%c0_123, %c26] : memref<62x49xf32, #tpu.memory_space<vmem>>, vector<62x1xf32>
    %251 = vector.broadcast %250 : vector<62x1xf32> to vector<62x256xf32>
    %252 = arith.mulf %251, %249 : vector<62x256xf32>
    %253 = arith.addf %248, %252 : vector<62x256xf32>
    %c0_124 = arith.constant 0 : index
    %c146 = arith.constant 146 : index
    %254 = vector.load %arg20[%c0_124, %c146] : memref<62x512xf32, #tpu.memory_space<vmem>>, vector<62x256xf32>
    %c0_125 = arith.constant 0 : index
    %c33 = arith.constant 33 : index
    %255 = vector.load %arg6[%c0_125, %c33] : memref<62x49xf32, #tpu.memory_space<vmem>>, vector<62x1xf32>
    %256 = vector.broadcast %255 : vector<62x1xf32> to vector<62x256xf32>
    %257 = arith.mulf %256, %254 : vector<62x256xf32>
    %258 = arith.addf %253, %257 : vector<62x256xf32>
    %c0_126 = arith.constant 0 : index
    %c162 = arith.constant 162 : index
    %259 = vector.load %arg20[%c0_126, %c162] : memref<62x512xf32, #tpu.memory_space<vmem>>, vector<62x256xf32>
    %c0_127 = arith.constant 0 : index
    %c40 = arith.constant 40 : index
    %260 = vector.load %arg6[%c0_127, %c40] : memref<62x49xf32, #tpu.memory_space<vmem>>, vector<62x1xf32>
    %261 = vector.broadcast %260 : vector<62x1xf32> to vector<62x256xf32>
    %262 = arith.mulf %261, %259 : vector<62x256xf32>
    %263 = arith.addf %258, %262 : vector<62x256xf32>
    %c0_128 = arith.constant 0 : index
    %c178 = arith.constant 178 : index
    %264 = vector.load %arg20[%c0_128, %c178] : memref<62x512xf32, #tpu.memory_space<vmem>>, vector<62x256xf32>
    %c0_129 = arith.constant 0 : index
    %c47 = arith.constant 47 : index
    %265 = vector.load %arg6[%c0_129, %c47] : memref<62x49xf32, #tpu.memory_space<vmem>>, vector<62x1xf32>
    %266 = vector.broadcast %265 : vector<62x1xf32> to vector<62x256xf32>
    %267 = arith.mulf %266, %264 : vector<62x256xf32>
    %268 = arith.addf %263, %267 : vector<62x256xf32>
    %c5_130 = arith.constant 5 : index
    %c0_131 = arith.constant 0 : index
    %269 = vector.load %arg8[%c5_130, %c0_131] : memref<7x256xf32, #tpu.memory_space<vmem>>, vector<1x256xf32>
    %270 = vector.broadcast %269 : vector<1x256xf32> to vector<62x256xf32>
    %271 = arith.mulf %268, %270 : vector<62x256xf32>
    %272 = arith.addf %232, %271 : vector<62x256xf32>
    %cst_132 = arith.constant 0.000000e+00 : f32
    %273 = vector.broadcast %cst_132 : f32 to vector<62x256xf32>
    %c0_133 = arith.constant 0 : index
    %c83 = arith.constant 83 : index
    %274 = vector.load %arg20[%c0_133, %c83] : memref<62x512xf32, #tpu.memory_space<vmem>>, vector<62x256xf32>
    %c0_134 = arith.constant 0 : index
    %c6 = arith.constant 6 : index
    %275 = vector.load %arg6[%c0_134, %c6] : memref<62x49xf32, #tpu.memory_space<vmem>>, vector<62x1xf32>
    %276 = vector.broadcast %275 : vector<62x1xf32> to vector<62x256xf32>
    %277 = arith.mulf %276, %274 : vector<62x256xf32>
    %278 = arith.addf %273, %277 : vector<62x256xf32>
    %c0_135 = arith.constant 0 : index
    %c99 = arith.constant 99 : index
    %279 = vector.load %arg20[%c0_135, %c99] : memref<62x512xf32, #tpu.memory_space<vmem>>, vector<62x256xf32>
    %c0_136 = arith.constant 0 : index
    %c13 = arith.constant 13 : index
    %280 = vector.load %arg6[%c0_136, %c13] : memref<62x49xf32, #tpu.memory_space<vmem>>, vector<62x1xf32>
    %281 = vector.broadcast %280 : vector<62x1xf32> to vector<62x256xf32>
    %282 = arith.mulf %281, %279 : vector<62x256xf32>
    %283 = arith.addf %278, %282 : vector<62x256xf32>
    %c0_137 = arith.constant 0 : index
    %c115 = arith.constant 115 : index
    %284 = vector.load %arg20[%c0_137, %c115] : memref<62x512xf32, #tpu.memory_space<vmem>>, vector<62x256xf32>
    %c0_138 = arith.constant 0 : index
    %c20 = arith.constant 20 : index
    %285 = vector.load %arg6[%c0_138, %c20] : memref<62x49xf32, #tpu.memory_space<vmem>>, vector<62x1xf32>
    %286 = vector.broadcast %285 : vector<62x1xf32> to vector<62x256xf32>
    %287 = arith.mulf %286, %284 : vector<62x256xf32>
    %288 = arith.addf %283, %287 : vector<62x256xf32>
    %c0_139 = arith.constant 0 : index
    %c131 = arith.constant 131 : index
    %289 = vector.load %arg20[%c0_139, %c131] : memref<62x512xf32, #tpu.memory_space<vmem>>, vector<62x256xf32>
    %c0_140 = arith.constant 0 : index
    %c27 = arith.constant 27 : index
    %290 = vector.load %arg6[%c0_140, %c27] : memref<62x49xf32, #tpu.memory_space<vmem>>, vector<62x1xf32>
    %291 = vector.broadcast %290 : vector<62x1xf32> to vector<62x256xf32>
    %292 = arith.mulf %291, %289 : vector<62x256xf32>
    %293 = arith.addf %288, %292 : vector<62x256xf32>
    %c0_141 = arith.constant 0 : index
    %c147 = arith.constant 147 : index
    %294 = vector.load %arg20[%c0_141, %c147] : memref<62x512xf32, #tpu.memory_space<vmem>>, vector<62x256xf32>
    %c0_142 = arith.constant 0 : index
    %c34 = arith.constant 34 : index
    %295 = vector.load %arg6[%c0_142, %c34] : memref<62x49xf32, #tpu.memory_space<vmem>>, vector<62x1xf32>
    %296 = vector.broadcast %295 : vector<62x1xf32> to vector<62x256xf32>
    %297 = arith.mulf %296, %294 : vector<62x256xf32>
    %298 = arith.addf %293, %297 : vector<62x256xf32>
    %c0_143 = arith.constant 0 : index
    %c163 = arith.constant 163 : index
    %299 = vector.load %arg20[%c0_143, %c163] : memref<62x512xf32, #tpu.memory_space<vmem>>, vector<62x256xf32>
    %c0_144 = arith.constant 0 : index
    %c41 = arith.constant 41 : index
    %300 = vector.load %arg6[%c0_144, %c41] : memref<62x49xf32, #tpu.memory_space<vmem>>, vector<62x1xf32>
    %301 = vector.broadcast %300 : vector<62x1xf32> to vector<62x256xf32>
    %302 = arith.mulf %301, %299 : vector<62x256xf32>
    %303 = arith.addf %298, %302 : vector<62x256xf32>
    %c0_145 = arith.constant 0 : index
    %c179 = arith.constant 179 : index
    %304 = vector.load %arg20[%c0_145, %c179] : memref<62x512xf32, #tpu.memory_space<vmem>>, vector<62x256xf32>
    %c0_146 = arith.constant 0 : index
    %c48 = arith.constant 48 : index
    %305 = vector.load %arg6[%c0_146, %c48] : memref<62x49xf32, #tpu.memory_space<vmem>>, vector<62x1xf32>
    %306 = vector.broadcast %305 : vector<62x1xf32> to vector<62x256xf32>
    %307 = arith.mulf %306, %304 : vector<62x256xf32>
    %308 = arith.addf %303, %307 : vector<62x256xf32>
    %c6_147 = arith.constant 6 : index
    %c0_148 = arith.constant 0 : index
    %309 = vector.load %arg8[%c6_147, %c0_148] : memref<7x256xf32, #tpu.memory_space<vmem>>, vector<1x256xf32>
    %310 = vector.broadcast %309 : vector<1x256xf32> to vector<62x256xf32>
    %311 = arith.mulf %308, %310 : vector<62x256xf32>
    %312 = arith.addf %272, %311 : vector<62x256xf32>
    %c0_149 = arith.constant 0 : index
    %c0_150 = arith.constant 0 : index
    %313 = vector.load %arg7[%c0_149, %c0_150] : memref<62x1xf32, #tpu.memory_space<vmem>>, vector<62x1xf32>
    %314 = vector.broadcast %313 : vector<62x1xf32> to vector<62x256xf32>
    %315 = arith.addf %312, %314 : vector<62x256xf32>
    %c0_151 = arith.constant 0 : index
    %c0_152 = arith.constant 0 : index
    %316 = vector.load %arg21[%c0_151, %c0_152] : memref<62x256xf32, #tpu.memory_space<vmem>>, vector<62x256xf32>
    tpu.vector_store %arg21[%c0_151, %c0_152], %315 {strides = array<i32>} : memref<62x256xf32, #tpu.memory_space<vmem>>, vector<62x256xf32>,
    %c0_153 = arith.constant 0 : index
    %c0_154 = arith.constant 0 : index
    %317 = vector.load %arg21[%c0_153, %c0_154] : memref<62x256xf32, #tpu.memory_space<vmem>>, vector<2x256xf32>
    %318 = arith.mulf %21, %317 : vector<2x256xf32>
    %319 = arith.truncf %318 : vector<2x256xf32> to vector<2x256xbf16>
    %320 = arith.extf %319 : vector<2x256xbf16> to vector<2x256xf32>
    %321 = arith.subf %318, %320 : vector<2x256xf32>
    %322 = arith.truncf %321 : vector<2x256xf32> to vector<2x256xbf16>
    %c0_155 = arith.constant 0 : index
    %c0_156 = arith.constant 0 : index
    %c0_157 = arith.constant 0 : index
    %323 = vector.load %arg9[%c0_155, %c0_156, %c0_157] : memref<2x4x2xbf16, #tpu.memory_space<vmem>>, vector<1x4x2xbf16>
    %324 = vector.shape_cast %323 : vector<1x4x2xbf16> to vector<4x2xbf16>
    %c1_158 = arith.constant 1 : index
    %c0_159 = arith.constant 0 : index
    %c0_160 = arith.constant 0 : index
    %325 = vector.load %arg9[%c1_158, %c0_159, %c0_160] : memref<2x4x2xbf16, #tpu.memory_space<vmem>>, vector<1x4x2xbf16>
    %326 = vector.shape_cast %325 : vector<1x4x2xbf16> to vector<4x2xbf16>
    %cst_161 = arith.constant dense<0.000000e+00> : vector<4x256xf32>
    %327 = tpu.matmul %324, %319, %cst_161 {dimension_numbers = #tpu.dot_dimension_numbers<[1], [0], [0], [1], [0, 0, 1, 1], [], []>} : vector<4x2xbf16>, vector<2x256xbf16>, vector<4x256xf32> -> vector<4x256xf32>
    %cst_162 = arith.constant dense<0.000000e+00> : vector<4x256xf32>
    %328 = tpu.matmul %324, %322, %cst_162 {dimension_numbers = #tpu.dot_dimension_numbers<[1], [0], [0], [1], [0, 0, 1, 1], [], []>} : vector<4x2xbf16>, vector<2x256xbf16>, vector<4x256xf32> -> vector<4x256xf32>
    %329 = arith.addf %327, %328 : vector<4x256xf32>
    %cst_163 = arith.constant dense<0.000000e+00> : vector<4x256xf32>
    %330 = tpu.matmul %326, %319, %cst_163 {dimension_numbers = #tpu.dot_dimension_numbers<[1], [0], [0], [1], [0, 0, 1, 1], [], []>} : vector<4x2xbf16>, vector<2x256xbf16>, vector<4x256xf32> -> vector<4x256xf32>
    %331 = arith.addf %329, %330 : vector<4x256xf32>
    %c0_164 = arith.constant 0 : index
    %c0_165 = arith.constant 0 : index
    %332 = vector.load %arg13[%c0_164, %c0_165] : memref<4x1xf32, #tpu.memory_space<vmem>>, vector<4x1xf32>
    %333 = vector.broadcast %332 : vector<4x1xf32> to vector<4x256xf32>
    %334 = arith.addf %331, %333 : vector<4x256xf32>
    %c2_166 = arith.constant 2 : index
    %c0_167 = arith.constant 0 : index
    %335 = vector.load %arg21[%c2_166, %c0_167] : memref<62x256xf32, #tpu.memory_space<vmem>>, vector<4x256xf32>
    %336 = arith.mulf %334, %335 : vector<4x256xf32>
    %337 = arith.truncf %336 : vector<4x256xf32> to vector<4x256xbf16>
    %338 = arith.extf %337 : vector<4x256xbf16> to vector<4x256xf32>
    %339 = arith.subf %336, %338 : vector<4x256xf32>
    %340 = arith.truncf %339 : vector<4x256xf32> to vector<4x256xbf16>
    %c0_168 = arith.constant 0 : index
    %c0_169 = arith.constant 0 : index
    %c0_170 = arith.constant 0 : index
    %341 = vector.load %arg10[%c0_168, %c0_169, %c0_170] : memref<2x8x4xbf16, #tpu.memory_space<vmem>>, vector<1x8x4xbf16>
    %342 = vector.shape_cast %341 : vector<1x8x4xbf16> to vector<8x4xbf16>
    %c1_171 = arith.constant 1 : index
    %c0_172 = arith.constant 0 : index
    %c0_173 = arith.constant 0 : index
    %343 = vector.load %arg10[%c1_171, %c0_172, %c0_173] : memref<2x8x4xbf16, #tpu.memory_space<vmem>>, vector<1x8x4xbf16>
    %344 = vector.shape_cast %343 : vector<1x8x4xbf16> to vector<8x4xbf16>
    %cst_174 = arith.constant dense<0.000000e+00> : vector<8x256xf32>
    %345 = tpu.matmul %342, %337, %cst_174 {dimension_numbers = #tpu.dot_dimension_numbers<[1], [0], [0], [1], [0, 0, 1, 1], [], []>} : vector<8x4xbf16>, vector<4x256xbf16>, vector<8x256xf32> -> vector<8x256xf32>
    %cst_175 = arith.constant dense<0.000000e+00> : vector<8x256xf32>
    %346 = tpu.matmul %342, %340, %cst_175 {dimension_numbers = #tpu.dot_dimension_numbers<[1], [0], [0], [1], [0, 0, 1, 1], [], []>} : vector<8x4xbf16>, vector<4x256xbf16>, vector<8x256xf32> -> vector<8x256xf32>
    %347 = arith.addf %345, %346 : vector<8x256xf32>
    %cst_176 = arith.constant dense<0.000000e+00> : vector<8x256xf32>
    %348 = tpu.matmul %344, %337, %cst_176 {dimension_numbers = #tpu.dot_dimension_numbers<[1], [0], [0], [1], [0, 0, 1, 1], [], []>} : vector<8x4xbf16>, vector<4x256xbf16>, vector<8x256xf32> -> vector<8x256xf32>
    %349 = arith.addf %347, %348 : vector<8x256xf32>
    %c0_177 = arith.constant 0 : index
    %c0_178 = arith.constant 0 : index
    %350 = vector.load %arg14[%c0_177, %c0_178] : memref<8x1xf32, #tpu.memory_space<vmem>>, vector<8x1xf32>
    %351 = vector.broadcast %350 : vector<8x1xf32> to vector<8x256xf32>
    %352 = arith.addf %349, %351 : vector<8x256xf32>
    %c6_179 = arith.constant 6 : index
    %c0_180 = arith.constant 0 : index
    %353 = vector.load %arg21[%c6_179, %c0_180] : memref<62x256xf32, #tpu.memory_space<vmem>>, vector<8x256xf32>
    %354 = arith.mulf %352, %353 : vector<8x256xf32>
    %355 = arith.truncf %354 : vector<8x256xf32> to vector<8x256xbf16>
    %356 = arith.extf %355 : vector<8x256xbf16> to vector<8x256xf32>
    %357 = arith.subf %354, %356 : vector<8x256xf32>
    %358 = arith.truncf %357 : vector<8x256xf32> to vector<8x256xbf16>
    %c0_181 = arith.constant 0 : index
    %c0_182 = arith.constant 0 : index
    %c0_183 = arith.constant 0 : index
    %359 = vector.load %arg11[%c0_181, %c0_182, %c0_183] : memref<2x16x8xbf16, #tpu.memory_space<vmem>>, vector<1x16x8xbf16>
    %360 = vector.shape_cast %359 : vector<1x16x8xbf16> to vector<16x8xbf16>
    %c1_184 = arith.constant 1 : index
    %c0_185 = arith.constant 0 : index
    %c0_186 = arith.constant 0 : index
    %361 = vector.load %arg11[%c1_184, %c0_185, %c0_186] : memref<2x16x8xbf16, #tpu.memory_space<vmem>>, vector<1x16x8xbf16>
    %362 = vector.shape_cast %361 : vector<1x16x8xbf16> to vector<16x8xbf16>
    %cst_187 = arith.constant dense<0.000000e+00> : vector<16x256xf32>
    %363 = tpu.matmul %360, %355, %cst_187 {dimension_numbers = #tpu.dot_dimension_numbers<[1], [0], [0], [1], [0, 0, 1, 1], [], []>} : vector<16x8xbf16>, vector<8x256xbf16>, vector<16x256xf32> -> vector<16x256xf32>
    %cst_188 = arith.constant dense<0.000000e+00> : vector<16x256xf32>
    %364 = tpu.matmul %360, %358, %cst_188 {dimension_numbers = #tpu.dot_dimension_numbers<[1], [0], [0], [1], [0, 0, 1, 1], [], []>} : vector<16x8xbf16>, vector<8x256xbf16>, vector<16x256xf32> -> vector<16x256xf32>
    %365 = arith.addf %363, %364 : vector<16x256xf32>
    %cst_189 = arith.constant dense<0.000000e+00> : vector<16x256xf32>
    %366 = tpu.matmul %362, %355, %cst_189 {dimension_numbers = #tpu.dot_dimension_numbers<[1], [0], [0], [1], [0, 0, 1, 1], [], []>} : vector<16x8xbf16>, vector<8x256xbf16>, vector<16x256xf32> -> vector<16x256xf32>
    %367 = arith.addf %365, %366 : vector<16x256xf32>
    %c0_190 = arith.constant 0 : index
    %c0_191 = arith.constant 0 : index
    %368 = vector.load %arg15[%c0_190, %c0_191] : memref<16x1xf32, #tpu.memory_space<vmem>>, vector<16x1xf32>
    %369 = vector.broadcast %368 : vector<16x1xf32> to vector<16x256xf32>
    %370 = arith.addf %367, %369 : vector<16x256xf32>
    %c14_192 = arith.constant 14 : index
    %c0_193 = arith.constant 0 : index
    %371 = vector.load %arg21[%c14_192, %c0_193] : memref<62x256xf32, #tpu.memory_space<vmem>>, vector<16x256xf32>
    %372 = arith.mulf %370, %371 : vector<16x256xf32>
    %373 = arith.truncf %372 : vector<16x256xf32> to vector<16x256xbf16>
    %374 = arith.extf %373 : vector<16x256xbf16> to vector<16x256xf32>
    %375 = arith.subf %372, %374 : vector<16x256xf32>
    %376 = arith.truncf %375 : vector<16x256xf32> to vector<16x256xbf16>
    %c0_194 = arith.constant 0 : index
    %c0_195 = arith.constant 0 : index
    %c0_196 = arith.constant 0 : index
    %377 = vector.load %arg12[%c0_194, %c0_195, %c0_196] : memref<2x32x16xbf16, #tpu.memory_space<vmem>>, vector<1x32x16xbf16>
    %378 = vector.shape_cast %377 : vector<1x32x16xbf16> to vector<32x16xbf16>
    %c1_197 = arith.constant 1 : index
    %c0_198 = arith.constant 0 : index
    %c0_199 = arith.constant 0 : index
    %379 = vector.load %arg12[%c1_197, %c0_198, %c0_199] : memref<2x32x16xbf16, #tpu.memory_space<vmem>>, vector<1x32x16xbf16>
    %380 = vector.shape_cast %379 : vector<1x32x16xbf16> to vector<32x16xbf16>
    %cst_200 = arith.constant dense<0.000000e+00> : vector<32x256xf32>
    %381 = tpu.matmul %378, %373, %cst_200 {dimension_numbers = #tpu.dot_dimension_numbers<[1], [0], [0], [1], [0, 0, 1, 1], [], []>} : vector<32x16xbf16>, vector<16x256xbf16>, vector<32x256xf32> -> vector<32x256xf32>
    %cst_201 = arith.constant dense<0.000000e+00> : vector<32x256xf32>
    %382 = tpu.matmul %378, %376, %cst_201 {dimension_numbers = #tpu.dot_dimension_numbers<[1], [0], [0], [1], [0, 0, 1, 1], [], []>} : vector<32x16xbf16>, vector<16x256xbf16>, vector<32x256xf32> -> vector<32x256xf32>
    %383 = arith.addf %381, %382 : vector<32x256xf32>
    %cst_202 = arith.constant dense<0.000000e+00> : vector<32x256xf32>
    %384 = tpu.matmul %380, %373, %cst_202 {dimension_numbers = #tpu.dot_dimension_numbers<[1], [0], [0], [1], [0, 0, 1, 1], [], []>} : vector<32x16xbf16>, vector<16x256xbf16>, vector<32x256xf32> -> vector<32x256xf32>
    %385 = arith.addf %383, %384 : vector<32x256xf32>
    %c0_203 = arith.constant 0 : index
    %c0_204 = arith.constant 0 : index
    %386 = vector.load %arg16[%c0_203, %c0_204] : memref<32x1xf32, #tpu.memory_space<vmem>>, vector<32x1xf32>
    %387 = vector.broadcast %386 : vector<32x1xf32> to vector<32x256xf32>
    %388 = arith.addf %385, %387 : vector<32x256xf32>
    %c30_205 = arith.constant 30 : index
    %c0_206 = arith.constant 0 : index
    %389 = vector.load %arg21[%c30_205, %c0_206] : memref<62x256xf32, #tpu.memory_space<vmem>>, vector<32x256xf32>
    %390 = arith.mulf %388, %389 : vector<32x256xf32>
    %391 = arith.truncf %390 : vector<32x256xf32> to vector<32x256xbf16>
    %392 = arith.extf %391 : vector<32x256xbf16> to vector<32x256xf32>
    %393 = arith.subf %390, %392 : vector<32x256xf32>
    %394 = arith.truncf %393 : vector<32x256xf32> to vector<32x256xbf16>
    %c0_207 = arith.constant 0 : index
    %c0_208 = arith.constant 0 : index
    %c0_209 = arith.constant 0 : index
    %395 = vector.load %arg17[%c0_207, %c0_208, %c0_209] : memref<2x32x32xbf16, #tpu.memory_space<vmem>>, vector<1x32x32xbf16>
    %396 = vector.shape_cast %395 : vector<1x32x32xbf16> to vector<32x32xbf16>
    %c1_210 = arith.constant 1 : index
    %c0_211 = arith.constant 0 : index
    %c0_212 = arith.constant 0 : index
    %397 = vector.load %arg17[%c1_210, %c0_211, %c0_212] : memref<2x32x32xbf16, #tpu.memory_space<vmem>>, vector<1x32x32xbf16>
    %398 = vector.shape_cast %397 : vector<1x32x32xbf16> to vector<32x32xbf16>
    %cst_213 = arith.constant dense<0.000000e+00> : vector<32x256xf32>
    %399 = tpu.matmul %396, %391, %cst_213 {dimension_numbers = #tpu.dot_dimension_numbers<[1], [0], [0], [1], [0, 0, 1, 1], [], []>} : vector<32x32xbf16>, vector<32x256xbf16>, vector<32x256xf32> -> vector<32x256xf32>
    %cst_214 = arith.constant dense<0.000000e+00> : vector<32x256xf32>
    %400 = tpu.matmul %396, %394, %cst_214 {dimension_numbers = #tpu.dot_dimension_numbers<[1], [0], [0], [1], [0, 0, 1, 1], [], []>} : vector<32x32xbf16>, vector<32x256xbf16>, vector<32x256xf32> -> vector<32x256xf32>
    %401 = arith.addf %399, %400 : vector<32x256xf32>
    %cst_215 = arith.constant dense<0.000000e+00> : vector<32x256xf32>
    %402 = tpu.matmul %398, %391, %cst_215 {dimension_numbers = #tpu.dot_dimension_numbers<[1], [0], [0], [1], [0, 0, 1, 1], [], []>} : vector<32x32xbf16>, vector<32x256xbf16>, vector<32x256xf32> -> vector<32x256xf32>
    %403 = arith.addf %401, %402 : vector<32x256xf32>
    %c0_216 = arith.constant 0 : index
    %c0_217 = arith.constant 0 : index
    %404 = vector.load %arg18[%c0_216, %c0_217] : memref<32x1xf32, #tpu.memory_space<vmem>>, vector<32x1xf32>
    %405 = vector.broadcast %404 : vector<32x1xf32> to vector<32x256xf32>
    %406 = arith.addf %403, %405 : vector<32x256xf32>
    %c0_218 = arith.constant 0 : index
    %c0_219 = arith.constant 0 : index
    %c0_220 = arith.constant 0 : index
    %407 = vector.load %arg19[%c0_218, %c0_219, %c0_220] : memref<1x32x256xf32, #tpu.memory_space<vmem>>, vector<1x32x256xf32>
    %408 = vector.shape_cast %407 : vector<1x32x256xf32> to vector<32x256xf32>
    %409 = vector.shape_cast %406 : vector<32x256xf32> to vector<1x32x256xf32>
    tpu.vector_store %arg19[%c0_218, %c0_219, %c0_220], %409 {strides = array<i32>} : memref<1x32x256xf32, #tpu.memory_space<vmem>>, vector<1x32x256xf32>,
    return
  }
  func.func @transform_0(%arg0: i32) -> (i32, i32, i32) {
    %c0_i32 = arith.constant 0 : i32
    %c0_i32_0 = arith.constant 0 : i32
    %c0_i32_1 = arith.constant 0 : i32
    return %arg0, %c0_i32, %c0_i32_0 : i32, i32, i32
  }
  func.func @transform_1(%arg0: i32) -> (i32, i32, i32) {
    %c0_i32 = arith.constant 0 : i32
    %c0_i32_0 = arith.constant 0 : i32
    %c0_i32_1 = arith.constant 0 : i32
    %c0_i32_2 = arith.constant 0 : i32
    return %c0_i32, %c0_i32_0, %c0_i32_1 : i32, i32, i32
  }
  func.func @transform_2(%arg0: i32) -> (i32, i32, i32) {
    %c0_i32 = arith.constant 0 : i32
    %c0_i32_0 = arith.constant 0 : i32
    %c0_i32_1 = arith.constant 0 : i32
    %c0_i32_2 = arith.constant 0 : i32
    return %c0_i32, %c0_i32_0, %c0_i32_1 : i32, i32, i32
  }
  func.func @transform_3(%arg0: i32) -> (i32, i32) {
    %c0_i32 = arith.constant 0 : i32
    %c0_i32_0 = arith.constant 0 : i32
    %c0_i32_1 = arith.constant 0 : i32
    return %c0_i32, %c0_i32_0 : i32, i32
  }
  func.func @transform_4(%arg0: i32) -> (i32, i32) {
    %c0_i32 = arith.constant 0 : i32
    %c0_i32_0 = arith.constant 0 : i32
    %c0_i32_1 = arith.constant 0 : i32
    return %c0_i32, %c0_i32_0 : i32, i32
  }
  func.func @transform_5(%arg0: i32) -> (i32, i32) {
    %c0_i32 = arith.constant 0 : i32
    %c0_i32_0 = arith.constant 0 : i32
    %c0_i32_1 = arith.constant 0 : i32
    return %c0_i32, %c0_i32_0 : i32, i32
  }
  func.func @transform_6(%arg0: i32) -> (i32, i32) {
    %c0_i32 = arith.constant 0 : i32
    %c0_i32_0 = arith.constant 0 : i32
    %c0_i32_1 = arith.constant 0 : i32
    return %c0_i32, %c0_i32_0 : i32, i32
  }
  func.func @transform_7(%arg0: i32) -> (i32, i32) {
    %c0_i32 = arith.constant 0 : i32
    %c0_i32_0 = arith.constant 0 : i32
    %c0_i32_1 = arith.constant 0 : i32
    return %c0_i32, %c0_i32_0 : i32, i32
  }
  func.func @transform_8(%arg0: i32) -> (i32, i32, i32) {
    %c0_i32 = arith.constant 0 : i32
    %c0_i32_0 = arith.constant 0 : i32
    %c0_i32_1 = arith.constant 0 : i32
    %c0_i32_2 = arith.constant 0 : i32
    return %c0_i32, %c0_i32_0, %c0_i32_1 : i32, i32, i32
  }
  func.func @transform_9(%arg0: i32) -> (i32, i32, i32) {
    %c0_i32 = arith.constant 0 : i32
    %c0_i32_0 = arith.constant 0 : i32
    %c0_i32_1 = arith.constant 0 : i32
    %c0_i32_2 = arith.constant 0 : i32
    return %c0_i32, %c0_i32_0, %c0_i32_1 : i32, i32, i32
  }
  func.func @transform_10(%arg0: i32) -> (i32, i32, i32) {
    %c0_i32 = arith.constant 0 : i32
    %c0_i32_0 = arith.constant 0 : i32
    %c0_i32_1 = arith.constant 0 : i32
    %c0_i32_2 = arith.constant 0 : i32
    return %c0_i32, %c0_i32_0, %c0_i32_1 : i32, i32, i32
  }
  func.func @transform_11(%arg0: i32) -> (i32, i32, i32) {
    %c0_i32 = arith.constant 0 : i32
    %c0_i32_0 = arith.constant 0 : i32
    %c0_i32_1 = arith.constant 0 : i32
    %c0_i32_2 = arith.constant 0 : i32
    return %c0_i32, %c0_i32_0, %c0_i32_1 : i32, i32, i32
  }
  func.func @transform_12(%arg0: i32) -> (i32, i32) {
    %c0_i32 = arith.constant 0 : i32
    %c0_i32_0 = arith.constant 0 : i32
    %c0_i32_1 = arith.constant 0 : i32
    return %c0_i32, %c0_i32_0 : i32, i32
  }
  func.func @transform_13(%arg0: i32) -> (i32, i32) {
    %c0_i32 = arith.constant 0 : i32
    %c0_i32_0 = arith.constant 0 : i32
    %c0_i32_1 = arith.constant 0 : i32
    return %c0_i32, %c0_i32_0 : i32, i32
  }
  func.func @transform_14(%arg0: i32) -> (i32, i32) {
    %c0_i32 = arith.constant 0 : i32
    %c0_i32_0 = arith.constant 0 : i32
    %c0_i32_1 = arith.constant 0 : i32
    return %c0_i32, %c0_i32_0 : i32, i32
  }
  func.func @transform_15(%arg0: i32) -> (i32, i32) {
    %c0_i32 = arith.constant 0 : i32
    %c0_i32_0 = arith.constant 0 : i32
    %c0_i32_1 = arith.constant 0 : i32
    return %c0_i32, %c0_i32_0 : i32, i32
  }
  func.func @transform_16(%arg0: i32) -> (i32, i32, i32) {
    %c0_i32 = arith.constant 0 : i32
    %c0_i32_0 = arith.constant 0 : i32
    %c0_i32_1 = arith.constant 0 : i32
    %c0_i32_2 = arith.constant 0 : i32
    return %c0_i32, %c0_i32_0, %c0_i32_1 : i32, i32, i32
  }
  func.func @transform_17(%arg0: i32) -> (i32, i32) {
    %c0_i32 = arith.constant 0 : i32
    %c0_i32_0 = arith.constant 0 : i32
    %c0_i32_1 = arith.constant 0 : i32
    return %c0_i32, %c0_i32_0 : i32, i32
  }
  func.func @transform_18(%arg0: i32) -> (i32, i32, i32) {
    %c0_i32 = arith.constant 0 : i32
    %c0_i32_0 = arith.constant 0 : i32
    %c0_i32_1 = arith.constant 0 : i32
    return %arg0, %c0_i32, %c0_i32_0 : i32, i32, i32
  }
}

</mosaic_0001>

<llo_original>
// kernel: tpu_custom_call.1
$region0: #{tpu_custom_call.1}
  #allocation0 [shape = 'u32[]', space=smem, size = 0x4, offset = 0x4, fixed_abs, tag = 'smem constant byte address 0x4 - core index']
  #allocation1 [shape = 'u32[72,128]{1,0:T(1,128)}', space=vmem, size = 0x9000, scoped, tag = 'internal scratch']
  #allocation2 [shape = 'f32[62,512]{1,0:T(8,128)}', space=vmem, size = 0x20000, scoped, tag = 'scratch operand']
  #allocation3 [shape = 'f32[62,256]{1,0:T(8,128)}', space=vmem, size = 0x10000, scoped, tag = 'scratch operand']
  %s0 = inlined_call_operand.vmem [shape: f32[2,32,256], index: 0, kind: input, shape index: {}]
  %s1 = inlined_call_operand.vmem [shape: bf16[2,2,32], index: 1, kind: input, shape index: {}]
  %s2 = inlined_call_operand.vmem [shape: bf16[2,62,32], index: 2, kind: input, shape index: {}]
  %s3 = inlined_call_operand.vmem [shape: f32[2,1], index: 3, kind: input, shape index: {}]
  %s4 = inlined_call_operand.vmem [shape: f32[62,1], index: 4, kind: input, shape index: {}]
  %s5 = inlined_call_operand.vmem [shape: f32[62,49], index: 5, kind: input, shape index: {}]
  %s6 = inlined_call_operand.vmem [shape: f32[62,1], index: 6, kind: input, shape index: {}]
  %s7 = inlined_call_operand.vmem [shape: f32[7,256], index: 7, kind: input, shape index: {}]
  %s8 = inlined_call_operand.vmem [shape: bf16[2,4,2], index: 8, kind: input, shape index: {}]
  %s9 = inlined_call_operand.vmem [shape: bf16[2,8,4], index: 9, kind: input, shape index: {}]
  %s10 = inlined_call_operand.vmem [shape: bf16[2,16,8], index: 10, kind: input, shape index: {}]
  %s11 = inlined_call_operand.vmem [shape: bf16[2,32,16], index: 11, kind: input, shape index: {}]
  %s12 = inlined_call_operand.vmem [shape: f32[4,1], index: 12, kind: input, shape index: {}]
  %s13 = inlined_call_operand.vmem [shape: f32[8,1], index: 13, kind: input, shape index: {}]
  %s14 = inlined_call_operand.vmem [shape: f32[16,1], index: 14, kind: input, shape index: {}]
  %s15 = inlined_call_operand.vmem [shape: f32[32,1], index: 15, kind: input, shape index: {}]
  %s16 = inlined_call_operand.vmem [shape: bf16[2,32,32], index: 16, kind: input, shape index: {}]
  %s17 = inlined_call_operand.vmem [shape: f32[32,1], index: 17, kind: input, shape index: {}]
  %s18 = inlined_call_operand.hbm [shape: f32[2,32,256], index: 18, kind: output, shape index: {}]
  %s19 = sld [smem:[#allocation0]]
  $region105: #{tpu_custom_call.1} parent=0
    _
  %s21 = ssub.s32 1, %s19
  %s22 = scalar_select 0, %s21, %s19
  $region1: #{tpu_custom_call.1} parent=0
    #allocation4 [shape = 'u8[65536]{0}', space=vmem, size = 0x10000, scoped, tag = 'output window, operand 0']
    #allocation5 [shape = 's32[2]{0}', space=sflag, size = 0x8, scoped, tag = 'scoped memory for tpu_custom_call.1']
    %23 = vsyncpa [#allocation5], 0
    %s24 = scalar_lea.sflag [#allocation5], 1
    %25 = vsyncpa %s24, 0
    loop: start=0, step=1, limit=4
    $region2: #{tpu_custom_call.1} parent=1 // loop_pre_header
      _
    $region3: #{tpu_custom_call.1} parent=1 // loop_header
      %s27 = sphi 0, %s31
      %p28 = scmp.ge.s32.totalorder %s27, 4
      %s37 = sphi 0, %s39
      %s40 = sphi 0, %s37
      %s41 = sphi 0, %s40
      %s57 = sphi 0, %s41
      %s61 = sphi 0, %s61
      %s63 = sphi 0, %s61
      %s64 = sphi 0, %s63
      %s78 = sphi 0, %s64
      %s82 = sphi 0, %s82
      %s84 = sphi 0, %s82
      %s85 = sphi 0, %s84
      %s99 = sphi 0, %s85
      %s103 = sphi 0, %s103
      %s105 = sphi 0, %s103
      %s106 = sphi 0, %s105
      %s120 = sphi 0, %s106
      %s124 = sphi 0, %s124
      %s126 = sphi 0, %s124
      %s127 = sphi 0, %s126
      %s141 = sphi 0, %s127
      %s145 = sphi 0, %s145
      %s147 = sphi 0, %s145
      %s148 = sphi 0, %s147
      %s162 = sphi 0, %s148
      %s166 = sphi 0, %s166
      %s168 = sphi 0, %s166
      %s169 = sphi 0, %s168
      %s183 = sphi 0, %s169
      %s187 = sphi 0, %s187
      %s189 = sphi 0, %s187
      %s190 = sphi 0, %s189
      %s204 = sphi 0, %s190
      %s208 = sphi 0, %s208
      %s210 = sphi 0, %s208
      %s211 = sphi 0, %s210
      %s225 = sphi 0, %s211
      %s229 = sphi 0, %s229
      %s231 = sphi 0, %s229
      %s232 = sphi 0, %s231
      %s246 = sphi 0, %s232
      %s250 = sphi 0, %s250
      %s252 = sphi 0, %s250
      %s253 = sphi 0, %s252
      %s267 = sphi 0, %s253
      %s271 = sphi 0, %s271
      %s273 = sphi 0, %s271
      %s274 = sphi 0, %s273
      %s288 = sphi 0, %s274
      %s292 = sphi 0, %s292
      %s294 = sphi 0, %s292
      %s295 = sphi 0, %s294
      %s309 = sphi 0, %s295
      %s313 = sphi 0, %s313
      %s315 = sphi 0, %s313
      %s316 = sphi 0, %s315
      %s330 = sphi 0, %s316
      %s334 = sphi 0, %s334
      %s336 = sphi 0, %s334
      %s337 = sphi 0, %s336
      %s351 = sphi 0, %s337
      %s355 = sphi 0, %s355
      %s357 = sphi 0, %s355
      %s358 = sphi 0, %s357
      %s372 = sphi 0, %s358
      %s376 = sphi 0, %s376
      %s378 = sphi 0, %s376
      %s379 = sphi 0, %s378
      %s393 = sphi 0, %s379
      %s397 = sphi 0, %s397
      %s399 = sphi 0, %s397
      %s400 = sphi 0, %s399
      %s414 = sphi 0, %s400
      %s420 = sphi 0, %s422
      %s423 = sphi 0, %s420
      %s424 = sphi 0, %s423
      %s440 = sphi 0, %s424
    $region4: #{tpu_custom_call.1} parent=1 // loop_header_branch
      %30 = sbr.rel (%p28) target = $region8
    $region5: #{tpu_custom_call.1} parent=1 // loop_body
      %s32 = ssub.s32 %s27, 1
      %s33 = ssub.s32 %s27, 2
      %s34 = sadd.s32 %s27, 1
      %s35 = ssub.s32 %s27, %s34
      %p36 = scmp.eq.s32.totalorder %s35, 0
      %s38 = sadd.s32 %s37, 1
      %s39 = scalar_select %p36, %s37, %s38
      %p42 = pneg %p36
      %p43 = scmp.eq.s32.totalorder %s27, 1
      %p44 = por %p42, %p43
      %p45 = scmp.ne.s32.totalorder %s37, %s40
      %p46 = scmp.eq.s32.totalorder %s27, 0
      %p47 = por %p45, %p46
      %p48 = scmp.ne.s32.totalorder %s37, %s40
      %p49 = scmp.eq.s32.totalorder %s32, 1
      %p50 = por %p48, %p49
      %p51 = scmp.ne.s32.totalorder %s40, %s41
      %p52 = scmp.eq.s32.totalorder %s32, 0
      %p53 = por %p51, %p52
      %p54 = scmp.ne.s32.totalorder %s40, %s41
      %p55 = scmp.eq.s32.totalorder %s33, 1
      %p56 = por %p54, %p55
      %p58 = scmp.ne.s32.totalorder %s41, %s57
      %p59 = scmp.eq.s32.totalorder %s33, 0
      %p60 = por %p58, %p59
      %s62 = sadd.s32 %s61, 1
      %p65 = scmp.eq.s32.totalorder %s27, 1
      %p66 = scmp.ne.s32.totalorder %s61, %s63
      %p67 = scmp.eq.s32.totalorder %s27, 0
      %p68 = por %p66, %p67
      %p69 = scmp.ne.s32.totalorder %s61, %s63
      %p70 = scmp.eq.s32.totalorder %s32, 1
      %p71 = por %p69, %p70
      %p72 = scmp.ne.s32.totalorder %s63, %s64
      %p73 = scmp.eq.s32.totalorder %s32, 0
      %p74 = por %p72, %p73
      %p75 = scmp.ne.s32.totalorder %s63, %s64
      %p76 = scmp.eq.s32.totalorder %s33, 1
      %p77 = por %p75, %p76
      %p79 = scmp.ne.s32.totalorder %s64, %s78
      %p80 = scmp.eq.s32.totalorder %s33, 0
      %p81 = por %p79, %p80
      %s83 = sadd.s32 %s82, 1
      %p86 = scmp.eq.s32.totalorder %s27, 1
      %p87 = scmp.ne.s32.totalorder %s82, %s84
      %p88 = scmp.eq.s32.totalorder %s27, 0
      %p89 = por %p87, %p88
      %p90 = scmp.ne.s32.totalorder %s82, %s84
      %p91 = scmp.eq.s32.totalorder %s32, 1
      %p92 = por %p90, %p91
      %p93 = scmp.ne.s32.totalorder %s84, %s85
      %p94 = scmp.eq.s32.totalorder %s32, 0
      %p95 = por %p93, %p94
      %p96 = scmp.ne.s32.totalorder %s84, %s85
      %p97 = scmp.eq.s32.totalorder %s33, 1
      %p98 = por %p96, %p97
      %p100 = scmp.ne.s32.totalorder %s85, %s99
      %p101 = scmp.eq.s32.totalorder %s33, 0
      %p102 = por %p100, %p101
      %s104 = sadd.s32 %s103, 1
      %p107 = scmp.eq.s32.totalorder %s27, 1
      %p108 = scmp.ne.s32.totalorder %s103, %s105
      %p109 = scmp.eq.s32.totalorder %s27, 0
      %p110 = por %p108, %p109
      %p111 = scmp.ne.s32.totalorder %s103, %s105
      %p112 = scmp.eq.s32.totalorder %s32, 1
      %p113 = por %p111, %p112
      %p114 = scmp.ne.s32.totalorder %s105, %s106
      %p115 = scmp.eq.s32.totalorder %s32, 0
      %p116 = por %p114, %p115
      %p117 = scmp.ne.s32.totalorder %s105, %s106
      %p118 = scmp.eq.s32.totalorder %s33, 1
      %p119 = por %p117, %p118
      %p121 = scmp.ne.s32.totalorder %s106, %s120
      %p122 = scmp.eq.s32.totalorder %s33, 0
      %p123 = por %p121, %p122
      %s125 = sadd.s32 %s124, 1
      %p128 = scmp.eq.s32.totalorder %s27, 1
      %p129 = scmp.ne.s32.totalorder %s124, %s126
      %p130 = scmp.eq.s32.totalorder %s27, 0
      %p131 = por %p129, %p130
      %p132 = scmp.ne.s32.totalorder %s124, %s126
      %p133 = scmp.eq.s32.totalorder %s32, 1
      %p134 = por %p132, %p133
      %p135 = scmp.ne.s32.totalorder %s126, %s127
      %p136 = scmp.eq.s32.totalorder %s32, 0
      %p137 = por %p135, %p136
      %p138 = scmp.ne.s32.totalorder %s126, %s127
      %p139 = scmp.eq.s32.totalorder %s33, 1
      %p140 = por %p138, %p139
      %p142 = scmp.ne.s32.totalorder %s127, %s141
      %p143 = scmp.eq.s32.totalorder %s33, 0
      %p144 = por %p142, %p143
      %s146 = sadd.s32 %s145, 1
      %p149 = scmp.eq.s32.totalorder %s27, 1
      %p150 = scmp.ne.s32.totalorder %s145, %s147
      %p151 = scmp.eq.s32.totalorder %s27, 0
      %p152 = por %p150, %p151
      %p153 = scmp.ne.s32.totalorder %s145, %s147
      %p154 = scmp.eq.s32.totalorder %s32, 1
      %p155 = por %p153, %p154
      %p156 = scmp.ne.s32.totalorder %s147, %s148
      %p157 = scmp.eq.s32.totalorder %s32, 0
      %p158 = por %p156, %p157
      %p159 = scmp.ne.s32.totalorder %s147, %s148
      %p160 = scmp.eq.s32.totalorder %s33, 1
      %p161 = por %p159, %p160
      %p163 = scmp.ne.s32.totalorder %s148, %s162
      %p164 = scmp.eq.s32.totalorder %s33, 0
      %p165 = por %p163, %p164
      %s167 = sadd.s32 %s166, 1
      %p170 = scmp.eq.s32.totalorder %s27, 1
      %p171 = scmp.ne.s32.totalorder %s166, %s168
      %p172 = scmp.eq.s32.totalorder %s27, 0
      %p173 = por %p171, %p172
      %p174 = scmp.ne.s32.totalorder %s166, %s168
      %p175 = scmp.eq.s32.totalorder %s32, 1
      %p176 = por %p174, %p175
      %p177 = scmp.ne.s32.totalorder %s168, %s169
      %p178 = scmp.eq.s32.totalorder %s32, 0
      %p179 = por %p177, %p178
      %p180 = scmp.ne.s32.totalorder %s168, %s169
      %p181 = scmp.eq.s32.totalorder %s33, 1
      %p182 = por %p180, %p181
      %p184 = scmp.ne.s32.totalorder %s169, %s183
      %p185 = scmp.eq.s32.totalorder %s33, 0
      %p186 = por %p184, %p185
      %s188 = sadd.s32 %s187, 1
      %p191 = scmp.eq.s32.totalorder %s27, 1
      %p192 = scmp.ne.s32.totalorder %s187, %s189
      %p193 = scmp.eq.s32.totalorder %s27, 0
      %p194 = por %p192, %p193
      %p195 = scmp.ne.s32.totalorder %s187, %s189
      %p196 = scmp.eq.s32.totalorder %s32, 1
      %p197 = por %p195, %p196
      %p198 = scmp.ne.s32.totalorder %s189, %s190
      %p199 = scmp.eq.s32.totalorder %s32, 0
      %p200 = por %p198, %p199
      %p201 = scmp.ne.s32.totalorder %s189, %s190
      %p202 = scmp.eq.s32.totalorder %s33, 1
      %p203 = por %p201, %p202
      %p205 = scmp.ne.s32.totalorder %s190, %s204
      %p206 = scmp.eq.s32.totalorder %s33, 0
      %p207 = por %p205, %p206
      %s209 = sadd.s32 %s208, 1
      %p212 = scmp.eq.s32.totalorder %s27, 1
      %p213 = scmp.ne.s32.totalorder %s208, %s210
      %p214 = scmp.eq.s32.totalorder %s27, 0
      %p215 = por %p213, %p214
      %p216 = scmp.ne.s32.totalorder %s208, %s210
      %p217 = scmp.eq.s32.totalorder %s32, 1
      %p218 = por %p216, %p217
      %p219 = scmp.ne.s32.totalorder %s210, %s211
      %p220 = scmp.eq.s32.totalorder %s32, 0
      %p221 = por %p219, %p220
      %p222 = scmp.ne.s32.totalorder %s210, %s211
      %p223 = scmp.eq.s32.totalorder %s33, 1
      %p224 = por %p222, %p223
      %p226 = scmp.ne.s32.totalorder %s211, %s225
      %p227 = scmp.eq.s32.totalorder %s33, 0
      %p228 = por %p226, %p227
      %s230 = sadd.s32 %s229, 1
      %p233 = scmp.eq.s32.totalorder %s27, 1
      %p234 = scmp.ne.s32.totalorder %s229, %s231
      %p235 = scmp.eq.s32.totalorder %s27, 0
      %p236 = por %p234, %p235
      %p237 = scmp.ne.s32.totalorder %s229, %s231
      %p238 = scmp.eq.s32.totalorder %s32, 1
      %p239 = por %p237, %p238
      %p240 = scmp.ne.s32.totalorder %s231, %s232
      %p241 = scmp.eq.s32.totalorder %s32, 0
      %p242 = por %p240, %p241
      %p243 = scmp.ne.s32.totalorder %s231, %s232
      %p244 = scmp.eq.s32.totalorder %s33, 1
      %p245 = por %p243, %p244
      %p247 = scmp.ne.s32.totalorder %s232, %s246
      %p248 = scmp.eq.s32.totalorder %s33, 0
      %p249 = por %p247, %p248
      %s251 = sadd.s32 %s250, 1
      %p254 = scmp.eq.s32.totalorder %s27, 1
      %p255 = scmp.ne.s32.totalorder %s250, %s252
      %p256 = scmp.eq.s32.totalorder %s27, 0
      %p257 = por %p255, %p256
      %p258 = scmp.ne.s32.totalorder %s250, %s252
      %p259 = scmp.eq.s32.totalorder %s32, 1
      %p260 = por %p258, %p259
      %p261 = scmp.ne.s32.totalorder %s252, %s253
      %p262 = scmp.eq.s32.totalorder %s32, 0
      %p263 = por %p261, %p262
      %p264 = scmp.ne.s32.totalorder %s252, %s253
      %p265 = scmp.eq.s32.totalorder %s33, 1
      %p266 = por %p264, %p265
      %p268 = scmp.ne.s32.totalorder %s253, %s267
      %p269 = scmp.eq.s32.totalorder %s33, 0
      %p270 = por %p268, %p269
      %s272 = sadd.s32 %s271, 1
      %p275 = scmp.eq.s32.totalorder %s27, 1
      %p276 = scmp.ne.s32.totalorder %s271, %s273
      %p277 = scmp.eq.s32.totalorder %s27, 0
      %p278 = por %p276, %p277
      %p279 = scmp.ne.s32.totalorder %s271, %s273
      %p280 = scmp.eq.s32.totalorder %s32, 1
      %p281 = por %p279, %p280
      %p282 = scmp.ne.s32.totalorder %s273, %s274
      %p283 = scmp.eq.s32.totalorder %s32, 0
      %p284 = por %p282, %p283
      %p285 = scmp.ne.s32.totalorder %s273, %s274
      %p286 = scmp.eq.s32.totalorder %s33, 1
      %p287 = por %p285, %p286
      %p289 = scmp.ne.s32.totalorder %s274, %s288
      %p290 = scmp.eq.s32.totalorder %s33, 0
      %p291 = por %p289, %p290
      %s293 = sadd.s32 %s292, 1
      %p296 = scmp.eq.s32.totalorder %s27, 1
      %p297 = scmp.ne.s32.totalorder %s292, %s294
      %p298 = scmp.eq.s32.totalorder %s27, 0
      %p299 = por %p297, %p298
      %p300 = scmp.ne.s32.totalorder %s292, %s294
      %p301 = scmp.eq.s32.totalorder %s32, 1
      %p302 = por %p300, %p301
      %p303 = scmp.ne.s32.totalorder %s294, %s295
      %p304 = scmp.eq.s32.totalorder %s32, 0
      %p305 = por %p303, %p304
      %p306 = scmp.ne.s32.totalorder %s294, %s295
      %p307 = scmp.eq.s32.totalorder %s33, 1
      %p308 = por %p306, %p307
      %p310 = scmp.ne.s32.totalorder %s295, %s309
      %p311 = scmp.eq.s32.totalorder %s33, 0
      %p312 = por %p310, %p311
      %s314 = sadd.s32 %s313, 1
      %p317 = scmp.eq.s32.totalorder %s27, 1
      %p318 = scmp.ne.s32.totalorder %s313, %s315
      %p319 = scmp.eq.s32.totalorder %s27, 0
      %p320 = por %p318, %p319
      %p321 = scmp.ne.s32.totalorder %s313, %s315
      %p322 = scmp.eq.s32.totalorder %s32, 1
      %p323 = por %p321, %p322
      %p324 = scmp.ne.s32.totalorder %s315, %s316
      %p325 = scmp.eq.s32.totalorder %s32, 0
      %p326 = por %p324, %p325
      %p327 = scmp.ne.s32.totalorder %s315, %s316
      %p328 = scmp.eq.s32.totalorder %s33, 1
      %p329 = por %p327, %p328
      %p331 = scmp.ne.s32.totalorder %s316, %s330
      %p332 = scmp.eq.s32.totalorder %s33, 0
      %p333 = por %p331, %p332
      %s335 = sadd.s32 %s334, 1
      %p338 = scmp.eq.s32.totalorder %s27, 1
      %p339 = scmp.ne.s32.totalorder %s334, %s336
      %p340 = scmp.eq.s32.totalorder %s27, 0
      %p341 = por %p339, %p340
      %p342 = scmp.ne.s32.totalorder %s334, %s336
      %p343 = scmp.eq.s32.totalorder %s32, 1
      %p344 = por %p342, %p343
      %p345 = scmp.ne.s32.totalorder %s336, %s337
      %p346 = scmp.eq.s32.totalorder %s32, 0
      %p347 = por %p345, %p346
      %p348 = scmp.ne.s32.totalorder %s336, %s337
      %p349 = scmp.eq.s32.totalorder %s33, 1
      %p350 = por %p348, %p349
      %p352 = scmp.ne.s32.totalorder %s337, %s351
      %p353 = scmp.eq.s32.totalorder %s33, 0
      %p354 = por %p352, %p353
      %s356 = sadd.s32 %s355, 1
      %p359 = scmp.eq.s32.totalorder %s27, 1
      %p360 = scmp.ne.s32.totalorder %s355, %s357
      %p361 = scmp.eq.s32.totalorder %s27, 0
      %p362 = por %p360, %p361
      %p363 = scmp.ne.s32.totalorder %s355, %s357
      %p364 = scmp.eq.s32.totalorder %s32, 1
      %p365 = por %p363, %p364
      %p366 = scmp.ne.s32.totalorder %s357, %s358
      %p367 = scmp.eq.s32.totalorder %s32, 0
      %p368 = por %p366, %p367
      %p369 = scmp.ne.s32.totalorder %s357, %s358
      %p370 = scmp.eq.s32.totalorder %s33, 1
      %p371 = por %p369, %p370
      %p373 = scmp.ne.s32.totalorder %s358, %s372
      %p374 = scmp.eq.s32.totalorder %s33, 0
      %p375 = por %p373, %p374
      %s377 = sadd.s32 %s376, 1
      %p380 = scmp.eq.s32.totalorder %s27, 1
      %p381 = scmp.ne.s32.totalorder %s376, %s378
      %p382 = scmp.eq.s32.totalorder %s27, 0
      %p383 = por %p381, %p382
      %p384 = scmp.ne.s32.totalorder %s376, %s378
      %p385 = scmp.eq.s32.totalorder %s32, 1
      %p386 = por %p384, %p385
      %p387 = scmp.ne.s32.totalorder %s378, %s379
      %p388 = scmp.eq.s32.totalorder %s32, 0
      %p389 = por %p387, %p388
      %p390 = scmp.ne.s32.totalorder %s378, %s379
      %p391 = scmp.eq.s32.totalorder %s33, 1
      %p392 = por %p390, %p391
      %p394 = scmp.ne.s32.totalorder %s379, %s393
      %p395 = scmp.eq.s32.totalorder %s33, 0
      %p396 = por %p394, %p395
      %s398 = sadd.s32 %s397, 1
      %p401 = scmp.eq.s32.totalorder %s27, 1
      %p402 = scmp.ne.s32.totalorder %s397, %s399
      %p403 = scmp.eq.s32.totalorder %s27, 0
      %p404 = por %p402, %p403
      %p405 = scmp.ne.s32.totalorder %s397, %s399
      %p406 = scmp.eq.s32.totalorder %s32, 1
      %p407 = por %p405, %p406
      %p408 = scmp.ne.s32.totalorder %s399, %s400
      %p409 = scmp.eq.s32.totalorder %s32, 0
      %p410 = por %p408, %p409
      %p411 = scmp.ne.s32.totalorder %s399, %s400
      %p412 = scmp.eq.s32.totalorder %s33, 1
      %p413 = por %p411, %p412
      %p415 = scmp.ne.s32.totalorder %s400, %s414
      %p416 = scmp.eq.s32.totalorder %s33, 0
      %p417 = por %p415, %p416
      %s418 = ssub.s32 %s27, %s34
      %p419 = scmp.eq.s32.totalorder %s418, 0
      %s421 = sadd.s32 %s420, 1
      %s422 = scalar_select %p419, %s420, %s421
      %p425 = pneg %p419
      %p426 = scmp.eq.s32.totalorder %s27, 1
      %p427 = por %p425, %p426
      %p428 = scmp.ne.s32.totalorder %s420, %s423
      %p429 = scmp.eq.s32.totalorder %s27, 0
      %p430 = por %p428, %p429
      %p431 = scmp.ne.s32.totalorder %s420, %s423
      %p432 = scmp.eq.s32.totalorder %s32, 1
      %p433 = por %p431, %p432
      %p434 = scmp.ne.s32.totalorder %s423, %s424
      %p435 = scmp.eq.s32.totalorder %s32, 0
      %p436 = por %p434, %p435
      %p437 = scmp.ne.s32.totalorder %s423, %s424
      %p438 = scmp.eq.s32.totalorder %s33, 1
      %p439 = por %p437, %p438
      %p441 = scmp.ne.s32.totalorder %s424, %s440
      %p442 = scmp.eq.s32.totalorder %s33, 0
      %p443 = por %p441, %p442
      %p444 = scmp.le.s32.totalorder 1, %s27
      %p445 = scmp.lt.s32.totalorder %s27, 3
      %p446 = pnand %p444, %p445
      %p447 = pneg %p446
      // Predicated region
      $region9: #{tpu_custom_call.1} parent=5 // pred_check
        _
      $region10: #{tpu_custom_call.1} parent=5 // pred_check_branch
        %449 = sbr.rel (%p446) target = $region12
      $region11: #{tpu_custom_call.1} parent=5 // pred_region
        %s450 = ssub.s32 %s27, 1
        // Predicated region
        $region13: #{tpu_custom_call.1} parent=11 // pred_check
          %p451 = pneg %p74
        $region14: #{tpu_custom_call.1} parent=11 // pred_check_branch
          %453 = sbr.rel (%p451) target = $region16
        $region15: #{tpu_custom_call.1} parent=11 // pred_region
          _
        $region16: #{tpu_custom_call.1} parent=11 // pred_fallthru
          _
        // Predicated region
        $region17: #{tpu_custom_call.1} parent=11 // pred_check
          %p454 = pneg %p95
        $region18: #{tpu_custom_call.1} parent=11 // pred_check_branch
          %456 = sbr.rel (%p454) target = $region20
        $region19: #{tpu_custom_call.1} parent=11 // pred_region
          _
        $region20: #{tpu_custom_call.1} parent=11 // pred_fallthru
          _
        // Predicated region
        $region21: #{tpu_custom_call.1} parent=11 // pred_check
          %p457 = pneg %p116
        $region22: #{tpu_custom_call.1} parent=11 // pred_check_branch
          %459 = sbr.rel (%p457) target = $region24
        $region23: #{tpu_custom_call.1} parent=11 // pred_region
          _
        $region24: #{tpu_custom_call.1} parent=11 // pred_fallthru
          _
        // Predicated region
        $region25: #{tpu_custom_call.1} parent=11 // pred_check
          %p460 = pneg %p137
        $region26: #{tpu_custom_call.1} parent=11 // pred_check_branch
          %462 = sbr.rel (%p460) target = $region28
        $region27: #{tpu_custom_call.1} parent=11 // pred_region
          _
        $region28: #{tpu_custom_call.1} parent=11 // pred_fallthru
          _
        // Predicated region
        $region29: #{tpu_custom_call.1} parent=11 // pred_check
          %p463 = pneg %p158
        $region30: #{tpu_custom_call.1} parent=11 // pred_check_branch
          %465 = sbr.rel (%p463) target = $region32
        $region31: #{tpu_custom_call.1} parent=11 // pred_region
          _
        $region32: #{tpu_custom_call.1} parent=11 // pred_fallthru
          _
        // Predicated region
        $region33: #{tpu_custom_call.1} parent=11 // pred_check
          %p466 = pneg %p179
        $region34: #{tpu_custom_call.1} parent=11 // pred_check_branch
          %468 = sbr.rel (%p466) target = $region36
        $region35: #{tpu_custom_call.1} parent=11 // pred_region
          _
        $region36: #{tpu_custom_call.1} parent=11 // pred_fallthru
          _
        // Predicated region
        $region37: #{tpu_custom_call.1} parent=11 // pred_check
          %p469 = pneg %p200
        $region38: #{tpu_custom_call.1} parent=11 // pred_check_branch
          %471 = sbr.rel (%p469) target = $region40
        $region39: #{tpu_custom_call.1} parent=11 // pred_region
          _
        $region40: #{tpu_custom_call.1} parent=11 // pred_fallthru
          _
        // Predicated region
        $region41: #{tpu_custom_call.1} parent=11 // pred_check
          %p472 = pneg %p221
        $region42: #{tpu_custom_call.1} parent=11 // pred_check_branch
          %474 = sbr.rel (%p472) target = $region44
        $region43: #{tpu_custom_call.1} parent=11 // pred_region
          _
        $region44: #{tpu_custom_call.1} parent=11 // pred_fallthru
          _
        // Predicated region
        $region45: #{tpu_custom_call.1} parent=11 // pred_check
          %p475 = pneg %p242
        $region46: #{tpu_custom_call.1} parent=11 // pred_check_branch
          %477 = sbr.rel (%p475) target = $region48
        $region47: #{tpu_custom_call.1} parent=11 // pred_region
          _
        $region48: #{tpu_custom_call.1} parent=11 // pred_fallthru
          _
        // Predicated region
        $region49: #{tpu_custom_call.1} parent=11 // pred_check
          %p478 = pneg %p263
        $region50: #{tpu_custom_call.1} parent=11 // pred_check_branch
          %480 = sbr.rel (%p478) target = $region52
        $region51: #{tpu_custom_call.1} parent=11 // pred_region
          _
        $region52: #{tpu_custom_call.1} parent=11 // pred_fallthru
          _
        // Predicated region
        $region53: #{tpu_custom_call.1} parent=11 // pred_check
          %p481 = pneg %p284
        $region54: #{tpu_custom_call.1} parent=11 // pred_check_branch
          %483 = sbr.rel (%p481) target = $region56
        $region55: #{tpu_custom_call.1} parent=11 // pred_region
          _
        $region56: #{tpu_custom_call.1} parent=11 // pred_fallthru
          _
        // Predicated region
        $region57: #{tpu_custom_call.1} parent=11 // pred_check
          %p484 = pneg %p305
        $region58: #{tpu_custom_call.1} parent=11 // pred_check_branch
          %486 = sbr.rel (%p484) target = $region60
        $region59: #{tpu_custom_call.1} parent=11 // pred_region
          _
        $region60: #{tpu_custom_call.1} parent=11 // pred_fallthru
          _
        // Predicated region
        $region61: #{tpu_custom_call.1} parent=11 // pred_check
          %p487 = pneg %p326
        $region62: #{tpu_custom_call.1} parent=11 // pred_check_branch
          %489 = sbr.rel (%p487) target = $region64
        $region63: #{tpu_custom_call.1} parent=11 // pred_region
          _
        $region64: #{tpu_custom_call.1} parent=11 // pred_fallthru
          _
        // Predicated region
        $region65: #{tpu_custom_call.1} parent=11 // pred_check
          %p490 = pneg %p347
        $region66: #{tpu_custom_call.1} parent=11 // pred_check_branch
          %492 = sbr.rel (%p490) target = $region68
        $region67: #{tpu_custom_call.1} parent=11 // pred_region
          _
        $region68: #{tpu_custom_call.1} parent=11 // pred_fallthru
          _
        // Predicated region
        $region69: #{tpu_custom_call.1} parent=11 // pred_check
          %p493 = pneg %p368
        $region70: #{tpu_custom_call.1} parent=11 // pred_check_branch
          %495 = sbr.rel (%p493) target = $region72
        $region71: #{tpu_custom_call.1} parent=11 // pred_region
          _
        $region72: #{tpu_custom_call.1} parent=11 // pred_fallthru
          _
        // Predicated region
        $region73: #{tpu_custom_call.1} parent=11 // pred_check
          %p496 = pneg %p389
        $region74: #{tpu_custom_call.1} parent=11 // pred_check_branch
          %498 = sbr.rel (%p496) target = $region76
        $region75: #{tpu_custom_call.1} parent=11 // pred_region
          _
        $region76: #{tpu_custom_call.1} parent=11 // pred_fallthru
          _
        // Predicated region
        $region77: #{tpu_custom_call.1} parent=11 // pred_check
          %p499 = pneg %p410
        $region78: #{tpu_custom_call.1} parent=11 // pred_check_branch
          %501 = sbr.rel (%p499) target = $region80
        $region79: #{tpu_custom_call.1} parent=11 // pred_region
          _
        $region80: #{tpu_custom_call.1} parent=11 // pred_fallthru
          _
      $region12: #{tpu_custom_call.1} parent=5 // pred_fallthru
        _
      %p502 = scmp.lt.s32.totalorder %s27, 2
      // Predicated region
      $region81: #{tpu_custom_call.1} parent=5 // pred_check
        %p503 = pneg %p502
      $region82: #{tpu_custom_call.1} parent=5 // pred_check_branch
        %505 = sbr.rel (%p503) target = $region84
      $region83: #{tpu_custom_call.1} parent=5 // pred_region
        // Predicated region
        $region85: #{tpu_custom_call.1} parent=83 // pred_check
          %p506 = pneg %p47
        $region86: #{tpu_custom_call.1} parent=83 // pred_check_branch
          %508 = sbr.rel (%p506) target = $region88
        $region87: #{tpu_custom_call.1} parent=83 // pred_region
          %p509 = scmp.lt.s32.totalorder %s27, 1
          %s510 = scalar_select %p509, %s27, 1
          %s511 = smul.addr %s510, 8
          %s512 = smul.addr %s511, 8
          %s513 = scalar_lea.vmem %s0, %s512
        $region88: #{tpu_custom_call.1} parent=83 // pred_fallthru
          _
      $region84: #{tpu_custom_call.1} parent=5 // pred_fallthru
        _
      %p514 = scmp.le.s32.totalorder 1, %s27
      %p515 = scmp.lt.s32.totalorder %s27, 3
      %p516 = pnand %p514, %p515
      %p517 = pneg %p516
      // Predicated region
      $region89: #{tpu_custom_call.1} parent=5 // pred_check
        _
      $region90: #{tpu_custom_call.1} parent=5 // pred_check_branch
        %519 = sbr.rel (%p516) target = $region92
      $region91: #{tpu_custom_call.1} parent=5 // pred_region
        %s520 = ssub.s32 %s27, 1
        %p521 = scmp.lt.s32.totalorder %s32, 1
        %s522 = scalar_select %p521, %s32, 1
        %s523 = smul.addr %s522, 8
        %s524 = smul.addr %s523, 8
        %s525 = scalar_lea.vmem %s0, %s524
        %p526 = pneg %p53
        %p527 = pneg %p50
        %p528 = pneg %p74
        %p529 = pneg %p71
        %p530 = pneg %p95
        %p531 = pneg %p92
        %p532 = pneg %p116
        %p533 = pneg %p113
        %p534 = pneg %p137
        %p535 = pneg %p134
        %p536 = pneg %p158
        %p537 = pneg %p155
        %p538 = pneg %p179
        %p539 = pneg %p176
        %p540 = pneg %p200
        %p541 = pneg %p197
        %p542 = pneg %p221
        %p543 = pneg %p218
        %p544 = pneg %p242
        %p545 = pneg %p239
        %p546 = pneg %p263
        %p547 = pneg %p260
        %p548 = pneg %p284
        %p549 = pneg %p281
        %p550 = pneg %p305
        %p551 = pneg %p302
        %p552 = pneg %p326
        %p553 = pneg %p323
        %p554 = pneg %p347
        %p555 = pneg %p344
        %p556 = pneg %p368
        %p557 = pneg %p365
        %p558 = pneg %p389
        %p559 = pneg %p386
        %p560 = pneg %p410
        %p561 = pneg %p407
        %p562 = pneg %p436
        %p563 = pneg %p433
        %s564 = sand.u32 %s423, 1
        %s565 = scalar_lea.sflag [#allocation5], %s564
        %s566 = sand.u32 %s423, 1
        %s567 = smul.addr %s566, 64
        %s568 = scalar_lea.vmem [#allocation4], %s567
        %p569 = scmp.lt.s32.totalorder %s32, 1
        %s570 = scalar_select %p569, %s32, 1
        %s571 = smul.addr %s570, 8
        %s572 = smul.addr %s571, 8
        %s573 = scalar_lea.vmem %s0, %s572
        %575 = vst [vmem:[#allocation2] sm:$0xff] 0.0
        %576 = vst [vmem:[#allocation2 + $0x20] sm:$0xff] 0.0
        %577 = vst [vmem:[#allocation2 + $0x40] sm:$0xff] 0.0
        %578 = vst [vmem:[#allocation2 + $0x60] sm:$0xff] 0.0
        %579 = vst [vmem:[#allocation2 + $0x80] sm:$0xff] 0.0
        %580 = vst [vmem:[#allocation2 + $0xa0] sm:$0xff] 0.0
        %581 = vst [vmem:[#allocation2 + $0xc0] sm:$0xff] 0.0
        %582 = vst [vmem:[#allocation2 + $0xe0] sm:$0x3f] 0.0
        %583 = vst [vmem:[#allocation2 + $0x18] sm:$0xff] 0.0
        %584 = vst [vmem:[#allocation2 + $0x38] sm:$0xff] 0.0
        %585 = vst [vmem:[#allocation2 + $0x58] sm:$0xff] 0.0
        %586 = vst [vmem:[#allocation2 + $0x78] sm:$0xff] 0.0
        %587 = vst [vmem:[#allocation2 + $0x98] sm:$0xff] 0.0
        %588 = vst [vmem:[#allocation2 + $0xb8] sm:$0xff] 0.0
        %589 = vst [vmem:[#allocation2 + $0xd8] sm:$0xff] 0.0
        %590 = vst [vmem:[#allocation2 + $0xf8] sm:$0x3f] 0.0
        %v591 = vld [vmem:[%s573] sm:$0xff]
        %v592 = vld [vmem:[%s573 + $0x8] sm:$0xff]
        %v593 = vld [vmem:[%s573 + $0x10] sm:$0xff]
        %v594 = vld [vmem:[%s573 + $0x18] sm:$0xff]
        %v595 = vld [vmem:[%s573 + $0x20] sm:$0xff]
        %v596 = vld [vmem:[%s573 + $0x28] sm:$0xff]
        %v597 = vld [vmem:[%s573 + $0x30] sm:$0xff]
        %v598 = vld [vmem:[%s573 + $0x38] sm:$0xff]
        %v599 = vpack.c.bf16 %v592, %v591
        %v600 = vpack.c.bf16 %v594, %v593
        %v601 = vpack.c.bf16 %v596, %v595
        %v602 = vpack.c.bf16 %v598, %v597
        %v603 = vunpack.c.l.bf16 %v599
        %v604 = vunpack.c.h.bf16 %v599
        %v605 = vunpack.c.l.bf16 %v600
        %v606 = vunpack.c.h.bf16 %v600
        %v607 = vunpack.c.l.bf16 %v601
        %v608 = vunpack.c.h.bf16 %v601
        %v609 = vunpack.c.l.bf16 %v602
        %v610 = vunpack.c.h.bf16 %v602
        %v611 = vsub.f32 %v591, %v603
        %v612 = vsub.f32 %v592, %v604
        %v613 = vsub.f32 %v593, %v605
        %v614 = vsub.f32 %v594, %v606
        %v615 = vsub.f32 %v595, %v607
        %v616 = vsub.f32 %v596, %v608
        %v617 = vsub.f32 %v597, %v609
        %v618 = vsub.f32 %v598, %v610
        %v619 = vpack.c.bf16 %v613, %v611
        %v620 = vpack.c.bf16 %v614, %v612
        %v621 = vpack.c.bf16 %v617, %v615
        %v622 = vpack.c.bf16 %v618, %v616
        %v623 = vld [vmem:[%s1] sm:$0x1]
        %s624 = scalar_lea.vmem %s1, 1
        %v625 = vld [vmem:[%s624] sm:$0x1]
        %vm626 = vcmask 261120
        %v628 = vsel %vm626, %v623, 0
        %630 = vmatpush.bf16.msra.mxu0 0
        %631 = vmatpush.bf16.msra.mxu0 0
        %632 = vmatpush.bf16.msra.mxu0 0
        %633 = vmatpush.bf16.msra.mxu0 0
        %634 = vmatpush.bf16.msra.mxu0 0
        %635 = vmatpush.bf16.msra.mxu0 0
        %636 = vmatpush.bf16.msra.mxu0 %v621
        %637 = vmatpush.bf16.msra.mxu0 %v619
        %638 = vmatmul.bf16.gmra.mxu0 %v628
        %v639 = vpop.f32.mrf.mxu0
        %v640 = vadd.f32 0.0, %v639
        %v641 = vpop.f32.mrf.mxu0
        %642 = vdwg.mxu0
        %643 = vmatpush.bf16.msra.mxu0 0
        %644 = vmatpush.bf16.msra.mxu0 0
        %645 = vmatpush.bf16.msra.mxu0 0
        %646 = vmatpush.bf16.msra.mxu0 0
        %647 = vmatpush.bf16.msra.mxu0 0
        %648 = vmatpush.bf16.msra.mxu0 0
        %649 = vmatpush.bf16.msra.mxu0 %v622
        %650 = vmatpush.bf16.msra.mxu0 %v620
        %651 = vmatmul.bf16.gmra.mxu0 %v628
        %v652 = vpop.f32.mrf.mxu0
        %v653 = vadd.f32 0.0, %v652
        %v654 = vpop.f32.mrf.mxu0
        %655 = vdwg.mxu0
        %v660 = vunpack.c.l.b16 %v599
        %v661 = vunpack.c.h.b16 %v599
        %v662 = vunpack.c.l.b16 %v600
        %v663 = vunpack.c.h.b16 %v600
        %v664 = vunpack.c.l.b16 %v601
        %v665 = vunpack.c.h.b16 %v601
        %v666 = vunpack.c.l.b16 %v602
        %v667 = vunpack.c.h.b16 %v602
        %v668 = vpack.c.b16 %v662, %v660
        %v669 = vpack.c.b16 %v663, %v661
        %v670 = vpack.c.b16 %v666, %v664
        %v671 = vpack.c.b16 %v667, %v665
        %676 = vmatpush.bf16.msra.mxu0 0
        %677 = vmatpush.bf16.msra.mxu0 0
        %678 = vmatpush.bf16.msra.mxu0 0
        %679 = vmatpush.bf16.msra.mxu0 0
        %680 = vmatpush.bf16.msra.mxu0 0
        %681 = vmatpush.bf16.msra.mxu0 0
        %682 = vmatpush.bf16.msra.mxu0 %v670
        %683 = vmatpush.bf16.msra.mxu0 %v668
        %684 = vmatmul.bf16.gmra.mxu0 %v628
        %v685 = vpop.f32.mrf.mxu0
        %v686 = vadd.f32 %v640, %v685
        %v687 = vpop.f32.mrf.mxu0
        %688 = vdwg.mxu0
        %689 = vmatpush.bf16.msra.mxu0 0
        %690 = vmatpush.bf16.msra.mxu0 0
        %691 = vmatpush.bf16.msra.mxu0 0
        %692 = vmatpush.bf16.msra.mxu0 0
        %693 = vmatpush.bf16.msra.mxu0 0
        %694 = vmatpush.bf16.msra.mxu0 0
        %695 = vmatpush.bf16.msra.mxu0 %v671
        %696 = vmatpush.bf16.msra.mxu0 %v669
        %697 = vmatmul.bf16.gmra.mxu0 %v628
        %v698 = vpop.f32.mrf.mxu0
        %v699 = vadd.f32 %v653, %v698
        %v700 = vpop.f32.mrf.mxu0
        %701 = vdwg.mxu0
        %v703 = vsel %vm626, %v625, 0
        %705 = vmatpush.bf16.msra.mxu0 0
        %706 = vmatpush.bf16.msra.mxu0 0
        %707 = vmatpush.bf16.msra.mxu0 0
        %708 = vmatpush.bf16.msra.mxu0 0
        %709 = vmatpush.bf16.msra.mxu0 0
        %710 = vmatpush.bf16.msra.mxu0 0
        %711 = vmatpush.bf16.msra.mxu0 %v670
        %712 = vmatpush.bf16.msra.mxu0 %v668
        %713 = vmatmul.bf16.gmra.mxu0 %v703
        %v714 = vpop.f32.mrf.mxu0
        %v715 = vadd.f32 0.0, %v714
        %v716 = vpop.f32.mrf.mxu0
        %717 = vdwg.mxu0
        %718 = vmatpush.bf16.msra.mxu0 0
        %719 = vmatpush.bf16.msra.mxu0 0
        %720 = vmatpush.bf16.msra.mxu0 0
        %721 = vmatpush.bf16.msra.mxu0 0
        %722 = vmatpush.bf16.msra.mxu0 0
        %723 = vmatpush.bf16.msra.mxu0 0
        %724 = vmatpush.bf16.msra.mxu0 %v671
        %725 = vmatpush.bf16.msra.mxu0 %v669
        %726 = vmatmul.bf16.gmra.mxu0 %v703
        %v727 = vpop.f32.mrf.mxu0
        %v728 = vadd.f32 0.0, %v727
        %v729 = vpop.f32.mrf.mxu0
        %730 = vdwg.mxu0
        %v731 = vadd.f32 %v686, %v715
        %v732 = vadd.f32 %v699, %v728
        %v733 = vld [vmem:[%s3] sm:$0x3]
        %735 = vset.pattern.permute.xlu0 0
        %736 = vperm.xlu0 %735, %v733
        %v737 = vpop.permute.xlu0 %736
        %v739 = vadd.f32 %v731, %v737
        %v740 = vadd.f32 %v732, %v737
        %v741 = vld [vmem:[%s2] sm:$0xf]
        %v742 = vld [vmem:[%s2 + $0x4] sm:$0xf]
        %v743 = vld [vmem:[%s2 + $0x8] sm:$0xf]
        %v744 = vld [vmem:[%s2 + $0xc] sm:$0xf]
        %v745 = vld [vmem:[%s2 + $0x10] sm:$0xf]
        %v746 = vld [vmem:[%s2 + $0x14] sm:$0xf]
        %v747 = vld [vmem:[%s2 + $0x18] sm:$0xf]
        %v748 = vld [vmem:[%s2 + $0x1c] sm:$0x7]
        %s749 = scalar_lea.vmem %s2, 32
        %v750 = vld [vmem:[%s749] sm:$0xf]
        %v751 = vld [vmem:[%s749 + $0x4] sm:$0xf]
        %v752 = vld [vmem:[%s749 + $0x8] sm:$0xf]
        %v753 = vld [vmem:[%s749 + $0xc] sm:$0xf]
        %v754 = vld [vmem:[%s749 + $0x10] sm:$0xf]
        %v755 = vld [vmem:[%s749 + $0x14] sm:$0xf]
        %v756 = vld [vmem:[%s749 + $0x18] sm:$0xf]
        %v757 = vld [vmem:[%s749 + $0x1c] sm:$0x7]
        %v766 = vunpack.c.l.b16 %v741
        %v767 = vunpack.c.l.b16 %v742
        %v768 = vunpack.c.l.b16 %v743
        %v769 = vunpack.c.l.b16 %v744
        %v770 = vunpack.c.l.b16 %v745
        %v771 = vunpack.c.l.b16 %v746
        %v772 = vunpack.c.l.b16 %v747
        %v773 = vunpack.c.l.b16 %v748
        %v774 = vpack.c.b16 %v767, %v766
        %v775 = vpack.c.b16 %v769, %v768
        %v776 = vpack.c.b16 %v771, %v770
        %v777 = vpack.c.b16 %v773, %v772
        %v779 = vsel %vm626, %v774, 0
        %v782 = vsel %vm626, %v775, 0
        %v785 = vsel %vm626, %v776, 0
        %v788 = vsel %vm626, %v777, 0
        %790 = vmatpush.bf16.msra.mxu0 0
        %791 = vmatpush.bf16.msra.mxu0 0
        %792 = vmatpush.bf16.msra.mxu0 0
        %793 = vmatpush.bf16.msra.mxu0 0
        %794 = vmatpush.bf16.msra.mxu0 0
        %795 = vmatpush.bf16.msra.mxu0 0
        %796 = vmatpush.bf16.msra.mxu0 %v621
        %797 = vmatpush.bf16.msra.mxu0 %v619
        %798 = vmatmul.bf16.gmra.mxu0 %v779
        %v799 = vpop.f32.mrf.mxu0
        %v800 = vadd.f32 0.0, %v799
        %v801 = vpop.f32.mrf.mxu0
        %v802 = vadd.f32 0.0, %v801
        %803 = vmatmul.bf16.gmra.mxu0 %v782
        %v804 = vpop.f32.mrf.mxu0
        %v805 = vadd.f32 0.0, %v804
        %v806 = vpop.f32.mrf.mxu0
        %v807 = vadd.f32 0.0, %v806
        %808 = vmatmul.bf16.gmra.mxu0 %v785
        %v809 = vpop.f32.mrf.mxu0
        %v810 = vadd.f32 0.0, %v809
        %v811 = vpop.f32.mrf.mxu0
        %v812 = vadd.f32 0.0, %v811
        %813 = vmatmul.bf16.gmra.mxu0 %v788
        %v814 = vpop.f32.mrf.mxu0
        %v815 = vadd.f32 0.0, %v814
        %v816 = vpop.f32.mrf.mxu0
        %v817 = vadd.f32 0.0, %v816
        %818 = vdwg.mxu0
        %819 = vmatpush.bf16.msra.mxu0 0
        %820 = vmatpush.bf16.msra.mxu0 0
        %821 = vmatpush.bf16.msra.mxu0 0
        %822 = vmatpush.bf16.msra.mxu0 0
        %823 = vmatpush.bf16.msra.mxu0 0
        %824 = vmatpush.bf16.msra.mxu0 0
        %825 = vmatpush.bf16.msra.mxu0 %v622
        %826 = vmatpush.bf16.msra.mxu0 %v620
        %827 = vmatmul.bf16.gmra.mxu0 %v779
        %v828 = vpop.f32.mrf.mxu0
        %v829 = vadd.f32 0.0, %v828
        %v830 = vpop.f32.mrf.mxu0
        %v831 = vadd.f32 0.0, %v830
        %832 = vmatmul.bf16.gmra.mxu0 %v782
        %v833 = vpop.f32.mrf.mxu0
        %v834 = vadd.f32 0.0, %v833
        %v835 = vpop.f32.mrf.mxu0
        %v836 = vadd.f32 0.0, %v835
        %837 = vmatmul.bf16.gmra.mxu0 %v785
        %v838 = vpop.f32.mrf.mxu0
        %v839 = vadd.f32 0.0, %v838
        %v840 = vpop.f32.mrf.mxu0
        %v841 = vadd.f32 0.0, %v840
        %842 = vmatmul.bf16.gmra.mxu0 %v788
        %v843 = vpop.f32.mrf.mxu0
        %v844 = vadd.f32 0.0, %v843
        %v845 = vpop.f32.mrf.mxu0
        %v846 = vadd.f32 0.0, %v845
        %847 = vdwg.mxu0
        %848 = vmatpush.bf16.msra.mxu0 0
        %849 = vmatpush.bf16.msra.mxu0 0
        %850 = vmatpush.bf16.msra.mxu0 0
        %851 = vmatpush.bf16.msra.mxu0 0
        %852 = vmatpush.bf16.msra.mxu0 0
        %853 = vmatpush.bf16.msra.mxu0 0
        %854 = vmatpush.bf16.msra.mxu0 %v670
        %855 = vmatpush.bf16.msra.mxu0 %v668
        %856 = vmatmul.bf16.gmra.mxu0 %v779
        %v857 = vpop.f32.mrf.mxu0
        %v858 = vadd.f32 %v800, %v857
        %v859 = vpop.f32.mrf.mxu0
        %v860 = vadd.f32 %v802, %v859
        %861 = vmatmul.bf16.gmra.mxu0 %v782
        %v862 = vpop.f32.mrf.mxu0
        %v863 = vadd.f32 %v805, %v862
        %v864 = vpop.f32.mrf.mxu0
        %v865 = vadd.f32 %v807, %v864
        %866 = vmatmul.bf16.gmra.mxu0 %v785
        %v867 = vpop.f32.mrf.mxu0
        %v868 = vadd.f32 %v810, %v867
        %v869 = vpop.f32.mrf.mxu0
        %v870 = vadd.f32 %v812, %v869
        %871 = vmatmul.bf16.gmra.mxu0 %v788
        %v872 = vpop.f32.mrf.mxu0
        %v873 = vadd.f32 %v815, %v872
        %v874 = vpop.f32.mrf.mxu0
        %v875 = vadd.f32 %v817, %v874
        %876 = vdwg.mxu0
        %877 = vmatpush.bf16.msra.mxu0 0
        %878 = vmatpush.bf16.msra.mxu0 0
        %879 = vmatpush.bf16.msra.mxu0 0
        %880 = vmatpush.bf16.msra.mxu0 0
        %881 = vmatpush.bf16.msra.mxu0 0
        %882 = vmatpush.bf16.msra.mxu0 0
        %883 = vmatpush.bf16.msra.mxu0 %v671
        %884 = vmatpush.bf16.msra.mxu0 %v669
        %885 = vmatmul.bf16.gmra.mxu0 %v779
        %v886 = vpop.f32.mrf.mxu0
        %v887 = vadd.f32 %v829, %v886
        %v888 = vpop.f32.mrf.mxu0
        %v889 = vadd.f32 %v831, %v888
        %890 = vmatmul.bf16.gmra.mxu0 %v782
        %v891 = vpop.f32.mrf.mxu0
        %v892 = vadd.f32 %v834, %v891
        %v893 = vpop.f32.mrf.mxu0
        %v894 = vadd.f32 %v836, %v893
        %895 = vmatmul.bf16.gmra.mxu0 %v785
        %v896 = vpop.f32.mrf.mxu0
        %v897 = vadd.f32 %v839, %v896
        %v898 = vpop.f32.mrf.mxu0
        %v899 = vadd.f32 %v841, %v898
        %900 = vmatmul.bf16.gmra.mxu0 %v788
        %v901 = vpop.f32.mrf.mxu0
        %v902 = vadd.f32 %v844, %v901
        %v903 = vpop.f32.mrf.mxu0
        %v904 = vadd.f32 %v846, %v903
        %905 = vdwg.mxu0
        %v914 = vunpack.c.l.b16 %v750
        %v915 = vunpack.c.l.b16 %v751
        %v916 = vunpack.c.l.b16 %v752
        %v917 = vunpack.c.l.b16 %v753
        %v918 = vunpack.c.l.b16 %v754
        %v919 = vunpack.c.l.b16 %v755
        %v920 = vunpack.c.l.b16 %v756
        %v921 = vunpack.c.l.b16 %v757
        %v922 = vpack.c.b16 %v915, %v914
        %v923 = vpack.c.b16 %v917, %v916
        %v924 = vpack.c.b16 %v919, %v918
        %v925 = vpack.c.b16 %v921, %v920
        %v927 = vsel %vm626, %v922, 0
        %v930 = vsel %vm626, %v923, 0
        %v933 = vsel %vm626, %v924, 0
        %v936 = vsel %vm626, %v925, 0
        %938 = vmatpush.bf16.msra.mxu0 0
        %939 = vmatpush.bf16.msra.mxu0 0
        %940 = vmatpush.bf16.msra.mxu0 0
        %941 = vmatpush.bf16.msra.mxu0 0
        %942 = vmatpush.bf16.msra.mxu0 0
        %943 = vmatpush.bf16.msra.mxu0 0
        %944 = vmatpush.bf16.msra.mxu0 %v670
        %945 = vmatpush.bf16.msra.mxu0 %v668
        %946 = vmatmul.bf16.gmra.mxu0 %v927
        %v947 = vpop.f32.mrf.mxu0
        %v948 = vadd.f32 0.0, %v947
        %v949 = vpop.f32.mrf.mxu0
        %v950 = vadd.f32 0.0, %v949
        %951 = vmatmul.bf16.gmra.mxu0 %v930
        %v952 = vpop.f32.mrf.mxu0
        %v953 = vadd.f32 0.0, %v952
        %v954 = vpop.f32.mrf.mxu0
        %v955 = vadd.f32 0.0, %v954
        %956 = vmatmul.bf16.gmra.mxu0 %v933
        %v957 = vpop.f32.mrf.mxu0
        %v958 = vadd.f32 0.0, %v957
        %v959 = vpop.f32.mrf.mxu0
        %v960 = vadd.f32 0.0, %v959
        %961 = vmatmul.bf16.gmra.mxu0 %v936
        %v962 = vpop.f32.mrf.mxu0
        %v963 = vadd.f32 0.0, %v962
        %v964 = vpop.f32.mrf.mxu0
        %v965 = vadd.f32 0.0, %v964
        %966 = vdwg.mxu0
        %967 = vmatpush.bf16.msra.mxu0 0
        %968 = vmatpush.bf16.msra.mxu0 0
        %969 = vmatpush.bf16.msra.mxu0 0
        %970 = vmatpush.bf16.msra.mxu0 0
        %971 = vmatpush.bf16.msra.mxu0 0
        %972 = vmatpush.bf16.msra.mxu0 0
        %973 = vmatpush.bf16.msra.mxu0 %v671
        %974 = vmatpush.bf16.msra.mxu0 %v669
        %975 = vmatmul.bf16.gmra.mxu0 %v927
        %v976 = vpop.f32.mrf.mxu0
        %v977 = vadd.f32 0.0, %v976
        %v978 = vpop.f32.mrf.mxu0
        %v979 = vadd.f32 0.0, %v978
        %980 = vmatmul.bf16.gmra.mxu0 %v930
        %v981 = vpop.f32.mrf.mxu0
        %v982 = vadd.f32 0.0, %v981
        %v983 = vpop.f32.mrf.mxu0
        %v984 = vadd.f32 0.0, %v983
        %985 = vmatmul.bf16.gmra.mxu0 %v933
        %v986 = vpop.f32.mrf.mxu0
        %v987 = vadd.f32 0.0, %v986
        %v988 = vpop.f32.mrf.mxu0
        %v989 = vadd.f32 0.0, %v988
        %990 = vmatmul.bf16.gmra.mxu0 %v936
        %v991 = vpop.f32.mrf.mxu0
        %v992 = vadd.f32 0.0, %v991
        %v993 = vpop.f32.mrf.mxu0
        %v994 = vadd.f32 0.0, %v993
        %995 = vdwg.mxu0
        %v996 = vadd.f32 %v858, %v948
        %v997 = vadd.f32 %v887, %v977
        %v998 = vadd.f32 %v860, %v950
        %v999 = vadd.f32 %v889, %v979
        %v1000 = vadd.f32 %v863, %v953
        %v1001 = vadd.f32 %v892, %v982
        %v1002 = vadd.f32 %v865, %v955
        %v1003 = vadd.f32 %v894, %v984
        %v1004 = vadd.f32 %v868, %v958
        %v1005 = vadd.f32 %v897, %v987
        %v1006 = vadd.f32 %v870, %v960
        %v1007 = vadd.f32 %v899, %v989
        %v1008 = vadd.f32 %v873, %v963
        %v1009 = vadd.f32 %v902, %v992
        %v1010 = vadd.f32 %v875, %v965
        %v1011 = vadd.f32 %v904, %v994
        %v1012 = vld [vmem:[%s4] sm:$0xff]
        %v1013 = vld [vmem:[%s4 + $0x8] sm:$0xff]
        %v1014 = vld [vmem:[%s4 + $0x10] sm:$0xff]
        %v1015 = vld [vmem:[%s4 + $0x18] sm:$0xff]
        %v1016 = vld [vmem:[%s4 + $0x20] sm:$0xff]
        %v1017 = vld [vmem:[%s4 + $0x28] sm:$0xff]
        %v1018 = vld [vmem:[%s4 + $0x30] sm:$0xff]
        %v1019 = vld [vmem:[%s4 + $0x38] sm:$0x3f]
        %1021 = vset.pattern.permute.xlu0 0
        %1022 = vperm.xlu0 %1021, %v1012
        %v1023 = vpop.permute.xlu0 %1022
        %1026 = vset.pattern.permute.xlu0 0
        %1027 = vperm.xlu0 %1026, %v1013
        %v1028 = vpop.permute.xlu0 %1027
        %1031 = vset.pattern.permute.xlu0 0
        %1032 = vperm.xlu0 %1031, %v1014
        %v1033 = vpop.permute.xlu0 %1032
        %1036 = vset.pattern.permute.xlu0 0
        %1037 = vperm.xlu0 %1036, %v1015
        %v1038 = vpop.permute.xlu0 %1037
        %1041 = vset.pattern.permute.xlu0 0
        %1042 = vperm.xlu0 %1041, %v1016
        %v1043 = vpop.permute.xlu0 %1042
        %1046 = vset.pattern.permute.xlu0 0
        %1047 = vperm.xlu0 %1046, %v1017
        %v1048 = vpop.permute.xlu0 %1047
        %1051 = vset.pattern.permute.xlu0 0
        %1052 = vperm.xlu0 %1051, %v1018
        %v1053 = vpop.permute.xlu0 %1052
        %1056 = vset.pattern.permute.xlu0 0
        %1057 = vperm.xlu0 %1056, %v1019
        %v1058 = vpop.permute.xlu0 %1057
        %v1060 = vadd.f32 %v996, %v1023
        %v1061 = vadd.f32 %v997, %v1023
        %v1062 = vadd.f32 %v998, %v1028
        %v1063 = vadd.f32 %v999, %v1028
        %v1064 = vadd.f32 %v1000, %v1033
        %v1065 = vadd.f32 %v1001, %v1033
        %v1066 = vadd.f32 %v1002, %v1038
        %v1067 = vadd.f32 %v1003, %v1038
        %v1068 = vadd.f32 %v1004, %v1043
        %v1069 = vadd.f32 %v1005, %v1043
        %v1070 = vadd.f32 %v1006, %v1048
        %v1071 = vadd.f32 %v1007, %v1048
        %v1072 = vadd.f32 %v1008, %v1053
        %v1073 = vadd.f32 %v1009, %v1053
        %v1074 = vadd.f32 %v1010, %v1058
        %v1075 = vadd.f32 %v1011, %v1058
        %1076 = vst [vmem:[#allocation2 + $0x8] sm:$0xff] %v1060
        %1077 = vst [vmem:[#allocation2 + $0x10] sm:$0xff] %v1061
        %1078 = vst [vmem:[#allocation2 + $0x28] sm:$0xff] %v1062
        %1079 = vst [vmem:[#allocation2 + $0x30] sm:$0xff] %v1063
        %1080 = vst [vmem:[#allocation2 + $0x48] sm:$0xff] %v1064
        %1081 = vst [vmem:[#allocation2 + $0x50] sm:$0xff] %v1065
        %1082 = vst [vmem:[#allocation2 + $0x68] sm:$0xff] %v1066
        %1083 = vst [vmem:[#allocation2 + $0x70] sm:$0xff] %v1067
        %1084 = vst [vmem:[#allocation2 + $0x88] sm:$0xff] %v1068
        %1085 = vst [vmem:[#allocation2 + $0x90] sm:$0xff] %v1069
        %1086 = vst [vmem:[#allocation2 + $0xa8] sm:$0xff] %v1070
        %1087 = vst [vmem:[#allocation2 + $0xb0] sm:$0xff] %v1071
        %1088 = vst [vmem:[#allocation2 + $0xc8] sm:$0xff] %v1072
        %1089 = vst [vmem:[#allocation2 + $0xd0] sm:$0xff] %v1073
        %1090 = vst [vmem:[#allocation2 + $0xe8] sm:$0x3f] %v1074
        %1091 = vst [vmem:[#allocation2 + $0xf0] sm:$0x3f] %v1075
        %v1092 = vld [vmem:[#allocation2] sm:$0xff]
        %v1093 = vld [vmem:[#allocation2 + $0x8] sm:$0xff]
        %v1094 = vld [vmem:[#allocation2 + $0x10] sm:$0xff]
        %v1095 = vld [vmem:[#allocation2 + $0x20] sm:$0xff]
        %v1096 = vld [vmem:[#allocation2 + $0x28] sm:$0xff]
        %v1097 = vld [vmem:[#allocation2 + $0x30] sm:$0xff]
        %v1098 = vld [vmem:[#allocation2 + $0x40] sm:$0xff]
        %v1099 = vld [vmem:[#allocation2 + $0x48] sm:$0xff]
        %v1100 = vld [vmem:[#allocation2 + $0x50] sm:$0xff]
        %v1101 = vld [vmem:[#allocation2 + $0x60] sm:$0xff]
        %v1102 = vld [vmem:[#allocation2 + $0x68] sm:$0xff]
        %v1103 = vld [vmem:[#allocation2 + $0x70] sm:$0xff]
        %v1104 = vld [vmem:[#allocation2 + $0x80] sm:$0xff]
        %v1105 = vld [vmem:[#allocation2 + $0x88] sm:$0xff]
        %v1106 = vld [vmem:[#allocation2 + $0x90] sm:$0xff]
        %v1107 = vld [vmem:[#allocation2 + $0xa0] sm:$0xff]
        %v1108 = vld [vmem:[#allocation2 + $0xa8] sm:$0xff]
        %v1109 = vld [vmem:[#allocation2 + $0xb0] sm:$0xff]
        %v1110 = vld [vmem:[#allocation2 + $0xc0] sm:$0xff]
        %v1111 = vld [vmem:[#allocation2 + $0xc8] sm:$0xff]
        %v1112 = vld [vmem:[#allocation2 + $0xd0] sm:$0xff]
        %v1113 = vld [vmem:[#allocation2 + $0xe0] sm:$0x3f]
        %v1114 = vld [vmem:[#allocation2 + $0xe8] sm:$0x3f]
        %v1115 = vld [vmem:[#allocation2 + $0xf0] sm:$0x3f]
        %v1116 = vld [vmem:[%s5] sm:$0xff]
        %v1117 = vld [vmem:[%s5 + $0x8] sm:$0xff]
        %v1118 = vld [vmem:[%s5 + $0x10] sm:$0xff]
        %v1119 = vld [vmem:[%s5 + $0x18] sm:$0xff]
        %v1120 = vld [vmem:[%s5 + $0x20] sm:$0xff]
        %v1121 = vld [vmem:[%s5 + $0x28] sm:$0xff]
        %v1122 = vld [vmem:[%s5 + $0x30] sm:$0xff]
        %v1123 = vld [vmem:[%s5 + $0x38] sm:$0x3f]
        %1125 = vset.pattern.permute.xlu0 0
        %1126 = vperm.xlu0 %1125, %v1116
        %v1127 = vpop.permute.xlu0 %1126
        %1130 = vset.pattern.permute.xlu0 0
        %1131 = vperm.xlu0 %1130, %v1117
        %v1132 = vpop.permute.xlu0 %1131
        %1135 = vset.pattern.permute.xlu0 0
        %1136 = vperm.xlu0 %1135, %v1118
        %v1137 = vpop.permute.xlu0 %1136
        %1140 = vset.pattern.permute.xlu0 0
        %1141 = vperm.xlu0 %1140, %v1119
        %v1142 = vpop.permute.xlu0 %1141
        %1145 = vset.pattern.permute.xlu0 0
        %1146 = vperm.xlu0 %1145, %v1120
        %v1147 = vpop.permute.xlu0 %1146
        %1150 = vset.pattern.permute.xlu0 0
        %1151 = vperm.xlu0 %1150, %v1121
        %v1152 = vpop.permute.xlu0 %1151
        %1155 = vset.pattern.permute.xlu0 0
        %1156 = vperm.xlu0 %1155, %v1122
        %v1157 = vpop.permute.xlu0 %1156
        %1160 = vset.pattern.permute.xlu0 0
        %1161 = vperm.xlu0 %1160, %v1123
        %v1162 = vpop.permute.xlu0 %1161
        %v1164 = vmul.f32 %v1127, %v1092
        %v1165 = vmul.f32 %v1127, %v1093
        %v1166 = vmul.f32 %v1127, %v1094
        %v1167 = vmul.f32 %v1132, %v1095
        %v1168 = vmul.f32 %v1132, %v1096
        %v1169 = vmul.f32 %v1132, %v1097
        %v1170 = vmul.f32 %v1137, %v1098
        %v1171 = vmul.f32 %v1137, %v1099
        %v1172 = vmul.f32 %v1137, %v1100
        %v1173 = vmul.f32 %v1142, %v1101
        %v1174 = vmul.f32 %v1142, %v1102
        %v1175 = vmul.f32 %v1142, %v1103
        %v1176 = vmul.f32 %v1147, %v1104
        %v1177 = vmul.f32 %v1147, %v1105
        %v1178 = vmul.f32 %v1147, %v1106
        %v1179 = vmul.f32 %v1152, %v1107
        %v1180 = vmul.f32 %v1152, %v1108
        %v1181 = vmul.f32 %v1152, %v1109
        %v1182 = vmul.f32 %v1157, %v1110
        %v1183 = vmul.f32 %v1157, %v1111
        %v1184 = vmul.f32 %v1157, %v1112
        %v1185 = vmul.f32 %v1162, %v1113
        %v1186 = vmul.f32 %v1162, %v1114
        %v1187 = vmul.f32 %v1162, %v1115
        %v1188 = vadd.f32 %v1164, 0.0
        %v1189 = vadd.f32 %v1165, 0.0
        %v1190 = vadd.f32 %v1166, 0.0
        %v1191 = vadd.f32 %v1167, 0.0
        %v1192 = vadd.f32 %v1168, 0.0
        %v1193 = vadd.f32 %v1169, 0.0
        %v1194 = vadd.f32 %v1170, 0.0
        %v1195 = vadd.f32 %v1171, 0.0
        %v1196 = vadd.f32 %v1172, 0.0
        %v1197 = vadd.f32 %v1173, 0.0
        %v1198 = vadd.f32 %v1174, 0.0
        %v1199 = vadd.f32 %v1175, 0.0
        %v1200 = vadd.f32 %v1176, 0.0
        %v1201 = vadd.f32 %v1177, 0.0
        %v1202 = vadd.f32 %v1178, 0.0
        %v1203 = vadd.f32 %v1179, 0.0
        %v1204 = vadd.f32 %v1180, 0.0
        %v1205 = vadd.f32 %v1181, 0.0
        %v1206 = vadd.f32 %v1182, 0.0
        %v1207 = vadd.f32 %v1183, 0.0
        %v1208 = vadd.f32 %v1184, 0.0
        %v1209 = vadd.f32 %v1185, 0.0
        %v1210 = vadd.f32 %v1186, 0.0
        %v1211 = vadd.f32 %v1187, 0.0
        %1212 = vset.pattern.permute.xlu0 7
        %1213 = vperm.xlu0 %1212, %v1116
        %v1214 = vpop.permute.xlu0 %1213
        %1216 = vset.pattern.permute.xlu0 7
        %1217 = vperm.xlu0 %1216, %v1117
        %v1218 = vpop.permute.xlu0 %1217
        %1220 = vset.pattern.permute.xlu0 7
        %1221 = vperm.xlu0 %1220, %v1118
        %v1222 = vpop.permute.xlu0 %1221
        %1224 = vset.pattern.permute.xlu0 7
        %1225 = vperm.xlu0 %1224, %v1119
        %v1226 = vpop.permute.xlu0 %1225
        %1228 = vset.pattern.permute.xlu0 7
        %1229 = vperm.xlu0 %1228, %v1120
        %v1230 = vpop.permute.xlu0 %1229
        %1232 = vset.pattern.permute.xlu0 7
        %1233 = vperm.xlu0 %1232, %v1121
        %v1234 = vpop.permute.xlu0 %1233
        %1236 = vset.pattern.permute.xlu0 7
        %1237 = vperm.xlu0 %1236, %v1122
        %v1238 = vpop.permute.xlu0 %1237
        %1240 = vset.pattern.permute.xlu0 7
        %1241 = vperm.xlu0 %1240, %v1123
        %v1242 = vpop.permute.xlu0 %1241
        %v1244 = vmul.f32 %v1214, %v1092
        %v1245 = vmul.f32 %v1214, %v1093
        %v1246 = vmul.f32 %v1214, %v1094
        %v1247 = vmul.f32 %v1218, %v1095
        %v1248 = vmul.f32 %v1218, %v1096
        %v1249 = vmul.f32 %v1218, %v1097
        %v1250 = vmul.f32 %v1222, %v1098
        %v1251 = vmul.f32 %v1222, %v1099
        %v1252 = vmul.f32 %v1222, %v1100
        %v1253 = vmul.f32 %v1226, %v1101
        %v1254 = vmul.f32 %v1226, %v1102
        %v1255 = vmul.f32 %v1226, %v1103
        %v1256 = vmul.f32 %v1230, %v1104
        %v1257 = vmul.f32 %v1230, %v1105
        %v1258 = vmul.f32 %v1230, %v1106
        %v1259 = vmul.f32 %v1234, %v1107
        %v1260 = vmul.f32 %v1234, %v1108
        %v1261 = vmul.f32 %v1234, %v1109
        %v1262 = vmul.f32 %v1238, %v1110
        %v1263 = vmul.f32 %v1238, %v1111
        %v1264 = vmul.f32 %v1238, %v1112
        %v1265 = vmul.f32 %v1242, %v1113
        %v1266 = vmul.f32 %v1242, %v1114
        %v1267 = vmul.f32 %v1242, %v1115
        %1292 = vrot.lane.b32.xlu0 %v1244, 112
        %v1293 = vpop.permute.xlu0 %1292
        %1294 = vrot.lane.b32.xlu0 %v1245, 112
        %v1295 = vpop.permute.xlu0 %1294
        %1296 = vrot.lane.b32.xlu0 %v1246, 112
        %v1297 = vpop.permute.xlu0 %1296
        %1298 = vrot.lane.b32.xlu0 %v1247, 112
        %v1299 = vpop.permute.xlu0 %1298
        %1300 = vrot.lane.b32.xlu0 %v1248, 112
        %v1301 = vpop.permute.xlu0 %1300
        %1302 = vrot.lane.b32.xlu0 %v1249, 112
        %v1303 = vpop.permute.xlu0 %1302
        %1304 = vrot.lane.b32.xlu0 %v1250, 112
        %v1305 = vpop.permute.xlu0 %1304
        %1306 = vrot.lane.b32.xlu0 %v1251, 112
        %v1307 = vpop.permute.xlu0 %1306
        %1308 = vrot.lane.b32.xlu0 %v1252, 112
        %v1309 = vpop.permute.xlu0 %1308
        %1310 = vrot.lane.b32.xlu0 %v1253, 112
        %v1311 = vpop.permute.xlu0 %1310
        %1312 = vrot.lane.b32.xlu0 %v1254, 112
        %v1313 = vpop.permute.xlu0 %1312
        %1314 = vrot.lane.b32.xlu0 %v1255, 112
        %v1315 = vpop.permute.xlu0 %1314
        %1316 = vrot.lane.b32.xlu0 %v1256, 112
        %v1317 = vpop.permute.xlu0 %1316
        %1318 = vrot.lane.b32.xlu0 %v1257, 112
        %v1319 = vpop.permute.xlu0 %1318
        %1320 = vrot.lane.b32.xlu0 %v1258, 112
        %v1321 = vpop.permute.xlu0 %1320
        %1322 = vrot.lane.b32.xlu0 %v1259, 112
        %v1323 = vpop.permute.xlu0 %1322
        %1324 = vrot.lane.b32.xlu0 %v1260, 112
        %v1325 = vpop.permute.xlu0 %1324
        %1326 = vrot.lane.b32.xlu0 %v1261, 112
        %v1327 = vpop.permute.xlu0 %1326
        %1328 = vrot.lane.b32.xlu0 %v1262, 112
        %v1329 = vpop.permute.xlu0 %1328
        %1330 = vrot.lane.b32.xlu0 %v1263, 112
        %v1331 = vpop.permute.xlu0 %1330
        %1332 = vrot.lane.b32.xlu0 %v1264, 112
        %v1333 = vpop.permute.xlu0 %1332
        %1334 = vrot.lane.b32.xlu0 %v1265, 112
        %v1335 = vpop.permute.xlu0 %1334
        %1336 = vrot.lane.b32.xlu0 %v1266, 112
        %v1337 = vpop.permute.xlu0 %1336
        %1338 = vrot.lane.b32.xlu0 %v1267, 112
        %v1339 = vpop.permute.xlu0 %1338
        %vm1340 = vcmask 916480
        %v1341 = vsel %vm1340, %v1293, %v1295
        %v1342 = vsel %vm1340, %v1295, %v1297
        %v1343 = vsel %vm1340, %v1299, %v1301
        %v1344 = vsel %vm1340, %v1301, %v1303
        %v1345 = vsel %vm1340, %v1305, %v1307
        %v1346 = vsel %vm1340, %v1307, %v1309
        %v1347 = vsel %vm1340, %v1311, %v1313
        %v1348 = vsel %vm1340, %v1313, %v1315
        %v1349 = vsel %vm1340, %v1317, %v1319
        %v1350 = vsel %vm1340, %v1319, %v1321
        %v1351 = vsel %vm1340, %v1323, %v1325
        %v1352 = vsel %vm1340, %v1325, %v1327
        %v1353 = vsel %vm1340, %v1329, %v1331
        %v1354 = vsel %vm1340, %v1331, %v1333
        %v1355 = vsel %vm1340, %v1335, %v1337
        %v1356 = vsel %vm1340, %v1337, %v1339
        %v1381 = vadd.f32 %v1188, %v1341
        %v1382 = vadd.f32 %v1189, %v1342
        %v1383 = vadd.f32 %v1190, %v1297
        %v1384 = vadd.f32 %v1191, %v1343
        %v1385 = vadd.f32 %v1192, %v1344
        %v1386 = vadd.f32 %v1193, %v1303
        %v1387 = vadd.f32 %v1194, %v1345
        %v1388 = vadd.f32 %v1195, %v1346
        %v1389 = vadd.f32 %v1196, %v1309
        %v1390 = vadd.f32 %v1197, %v1347
        %v1391 = vadd.f32 %v1198, %v1348
        %v1392 = vadd.f32 %v1199, %v1315
        %v1393 = vadd.f32 %v1200, %v1349
        %v1394 = vadd.f32 %v1201, %v1350
        %v1395 = vadd.f32 %v1202, %v1321
        %v1396 = vadd.f32 %v1203, %v1351
        %v1397 = vadd.f32 %v1204, %v1352
        %v1398 = vadd.f32 %v1205, %v1327
        %v1399 = vadd.f32 %v1206, %v1353
        %v1400 = vadd.f32 %v1207, %v1354
        %v1401 = vadd.f32 %v1208, %v1333
        %v1402 = vadd.f32 %v1209, %v1355
        %v1403 = vadd.f32 %v1210, %v1356
        %v1404 = vadd.f32 %v1211, %v1339
        %1405 = vset.pattern.permute.xlu0 14
        %1406 = vperm.xlu0 %1405, %v1116
        %v1407 = vpop.permute.xlu0 %1406
        %1409 = vset.pattern.permute.xlu0 14
        %1410 = vperm.xlu0 %1409, %v1117
        %v1411 = vpop.permute.xlu0 %1410
        %1413 = vset.pattern.permute.xlu0 14
        %1414 = vperm.xlu0 %1413, %v1118
        %v1415 = vpop.permute.xlu0 %1414
        %1417 = vset.pattern.permute.xlu0 14
        %1418 = vperm.xlu0 %1417, %v1119
        %v1419 = vpop.permute.xlu0 %1418
        %1421 = vset.pattern.permute.xlu0 14
        %1422 = vperm.xlu0 %1421, %v1120
        %v1423 = vpop.permute.xlu0 %1422
        %1425 = vset.pattern.permute.xlu0 14
        %1426 = vperm.xlu0 %1425, %v1121
        %v1427 = vpop.permute.xlu0 %1426
        %1429 = vset.pattern.permute.xlu0 14
        %1430 = vperm.xlu0 %1429, %v1122
        %v1431 = vpop.permute.xlu0 %1430
        %1433 = vset.pattern.permute.xlu0 14
        %1434 = vperm.xlu0 %1433, %v1123
        %v1435 = vpop.permute.xlu0 %1434
        %v1437 = vmul.f32 %v1407, %v1092
        %v1438 = vmul.f32 %v1407, %v1093
        %v1439 = vmul.f32 %v1407, %v1094
        %v1440 = vmul.f32 %v1411, %v1095
        %v1441 = vmul.f32 %v1411, %v1096
        %v1442 = vmul.f32 %v1411, %v1097
        %v1443 = vmul.f32 %v1415, %v1098
        %v1444 = vmul.f32 %v1415, %v1099
        %v1445 = vmul.f32 %v1415, %v1100
        %v1446 = vmul.f32 %v1419, %v1101
        %v1447 = vmul.f32 %v1419, %v1102
        %v1448 = vmul.f32 %v1419, %v1103
        %v1449 = vmul.f32 %v1423, %v1104
        %v1450 = vmul.f32 %v1423, %v1105
        %v1451 = vmul.f32 %v1423, %v1106
        %v1452 = vmul.f32 %v1427, %v1107
        %v1453 = vmul.f32 %v1427, %v1108
        %v1454 = vmul.f32 %v1427, %v1109
        %v1455 = vmul.f32 %v1431, %v1110
        %v1456 = vmul.f32 %v1431, %v1111
        %v1457 = vmul.f32 %v1431, %v1112
        %v1458 = vmul.f32 %v1435, %v1113
        %v1459 = vmul.f32 %v1435, %v1114
        %v1460 = vmul.f32 %v1435, %v1115
        %1485 = vrot.lane.b32.xlu0 %v1437, 96
        %v1486 = vpop.permute.xlu0 %1485
        %1487 = vrot.lane.b32.xlu0 %v1438, 96
        %v1488 = vpop.permute.xlu0 %1487
        %1489 = vrot.lane.b32.xlu0 %v1439, 96
        %v1490 = vpop.permute.xlu0 %1489
        %1491 = vrot.lane.b32.xlu0 %v1440, 96
        %v1492 = vpop.permute.xlu0 %1491
        %1493 = vrot.lane.b32.xlu0 %v1441, 96
        %v1494 = vpop.permute.xlu0 %1493
        %1495 = vrot.lane.b32.xlu0 %v1442, 96
        %v1496 = vpop.permute.xlu0 %1495
        %1497 = vrot.lane.b32.xlu0 %v1443, 96
        %v1498 = vpop.permute.xlu0 %1497
        %1499 = vrot.lane.b32.xlu0 %v1444, 96
        %v1500 = vpop.permute.xlu0 %1499
        %1501 = vrot.lane.b32.xlu0 %v1445, 96
        %v1502 = vpop.permute.xlu0 %1501
        %1503 = vrot.lane.b32.xlu0 %v1446, 96
        %v1504 = vpop.permute.xlu0 %1503
        %1505 = vrot.lane.b32.xlu0 %v1447, 96
        %v1506 = vpop.permute.xlu0 %1505
        %1507 = vrot.lane.b32.xlu0 %v1448, 96
        %v1508 = vpop.permute.xlu0 %1507
        %1509 = vrot.lane.b32.xlu0 %v1449, 96
        %v1510 = vpop.permute.xlu0 %1509
        %1511 = vrot.lane.b32.xlu0 %v1450, 96
        %v1512 = vpop.permute.xlu0 %1511
        %1513 = vrot.lane.b32.xlu0 %v1451, 96
        %v1514 = vpop.permute.xlu0 %1513
        %1515 = vrot.lane.b32.xlu0 %v1452, 96
        %v1516 = vpop.permute.xlu0 %1515
        %1517 = vrot.lane.b32.xlu0 %v1453, 96
        %v1518 = vpop.permute.xlu0 %1517
        %1519 = vrot.lane.b32.xlu0 %v1454, 96
        %v1520 = vpop.permute.xlu0 %1519
        %1521 = vrot.lane.b32.xlu0 %v1455, 96
        %v1522 = vpop.permute.xlu0 %1521
        %1523 = vrot.lane.b32.xlu0 %v1456, 96
        %v1524 = vpop.permute.xlu0 %1523
        %1525 = vrot.lane.b32.xlu0 %v1457, 96
        %v1526 = vpop.permute.xlu0 %1525
        %1527 = vrot.lane.b32.xlu0 %v1458, 96
        %v1528 = vpop.permute.xlu0 %1527
        %1529 = vrot.lane.b32.xlu0 %v1459, 96
        %v1530 = vpop.permute.xlu0 %1529
        %1531 = vrot.lane.b32.xlu0 %v1460, 96
        %v1532 = vpop.permute.xlu0 %1531
        %vm1533 = vcmask 785408
        %v1534 = vsel %vm1533, %v1486, %v1488
        %v1535 = vsel %vm1533, %v1488, %v1490
        %v1536 = vsel %vm1533, %v1492, %v1494
        %v1537 = vsel %vm1533, %v1494, %v1496
        %v1538 = vsel %vm1533, %v1498, %v1500
        %v1539 = vsel %vm1533, %v1500, %v1502
        %v1540 = vsel %vm1533, %v1504, %v1506
        %v1541 = vsel %vm1533, %v1506, %v1508
        %v1542 = vsel %vm1533, %v1510, %v1512
        %v1543 = vsel %vm1533, %v1512, %v1514
        %v1544 = vsel %vm1533, %v1516, %v1518
        %v1545 = vsel %vm1533, %v1518, %v1520
        %v1546 = vsel %vm1533, %v1522, %v1524
        %v1547 = vsel %vm1533, %v1524, %v1526
        %v1548 = vsel %vm1533, %v1528, %v1530
        %v1549 = vsel %vm1533, %v1530, %v1532
        %v1574 = vadd.f32 %v1381, %v1534
        %v1575 = vadd.f32 %v1382, %v1535
        %v1576 = vadd.f32 %v1383, %v1490
        %v1577 = vadd.f32 %v1384, %v1536
        %v1578 = vadd.f32 %v1385, %v1537
        %v1579 = vadd.f32 %v1386, %v1496
        %v1580 = vadd.f32 %v1387, %v1538
        %v1581 = vadd.f32 %v1388, %v1539
        %v1582 = vadd.f32 %v1389, %v1502
        %v1583 = vadd.f32 %v1390, %v1540
        %v1584 = vadd.f32 %v1391, %v1541
        %v1585 = vadd.f32 %v1392, %v1508
        %v1586 = vadd.f32 %v1393, %v1542
        %v1587 = vadd.f32 %v1394, %v1543
        %v1588 = vadd.f32 %v1395, %v1514
        %v1589 = vadd.f32 %v1396, %v1544
        %v1590 = vadd.f32 %v1397, %v1545
        %v1591 = vadd.f32 %v1398, %v1520
        %v1592 = vadd.f32 %v1399, %v1546
        %v1593 = vadd.f32 %v1400, %v1547
        %v1594 = vadd.f32 %v1401, %v1526
        %v1595 = vadd.f32 %v1402, %v1548
        %v1596 = vadd.f32 %v1403, %v1549
        %v1597 = vadd.f32 %v1404, %v1532
        %1598 = vset.pattern.permute.xlu0 21
        %1599 = vperm.xlu0 %1598, %v1116
        %v1600 = vpop.permute.xlu0 %1599
        %1602 = vset.pattern.permute.xlu0 21
        %1603 = vperm.xlu0 %1602, %v1117
        %v1604 = vpop.permute.xlu0 %1603
        %1606 = vset.pattern.permute.xlu0 21
        %1607 = vperm.xlu0 %1606, %v1118
        %v1608 = vpop.permute.xlu0 %1607
        %1610 = vset.pattern.permute.xlu0 21
        %1611 = vperm.xlu0 %1610, %v1119
        %v1612 = vpop.permute.xlu0 %1611
        %1614 = vset.pattern.permute.xlu0 21
        %1615 = vperm.xlu0 %1614, %v1120
        %v1616 = vpop.permute.xlu0 %1615
        %1618 = vset.pattern.permute.xlu0 21
        %1619 = vperm.xlu0 %1618, %v1121
        %v1620 = vpop.permute.xlu0 %1619
        %1622 = vset.pattern.permute.xlu0 21
        %1623 = vperm.xlu0 %1622, %v1122
        %v1624 = vpop.permute.xlu0 %1623
        %1626 = vset.pattern.permute.xlu0 21
        %1627 = vperm.xlu0 %1626, %v1123
        %v1628 = vpop.permute.xlu0 %1627
        %v1630 = vmul.f32 %v1600, %v1092
        %v1631 = vmul.f32 %v1600, %v1093
        %v1632 = vmul.f32 %v1600, %v1094
        %v1633 = vmul.f32 %v1604, %v1095
        %v1634 = vmul.f32 %v1604, %v1096
        %v1635 = vmul.f32 %v1604, %v1097
        %v1636 = vmul.f32 %v1608, %v1098
        %v1637 = vmul.f32 %v1608, %v1099
        %v1638 = vmul.f32 %v1608, %v1100
        %v1639 = vmul.f32 %v1612, %v1101
        %v1640 = vmul.f32 %v1612, %v1102
        %v1641 = vmul.f32 %v1612, %v1103
        %v1642 = vmul.f32 %v1616, %v1104
        %v1643 = vmul.f32 %v1616, %v1105
        %v1644 = vmul.f32 %v1616, %v1106
        %v1645 = vmul.f32 %v1620, %v1107
        %v1646 = vmul.f32 %v1620, %v1108
        %v1647 = vmul.f32 %v1620, %v1109
        %v1648 = vmul.f32 %v1624, %v1110
        %v1649 = vmul.f32 %v1624, %v1111
        %v1650 = vmul.f32 %v1624, %v1112
        %v1651 = vmul.f32 %v1628, %v1113
        %v1652 = vmul.f32 %v1628, %v1114
        %v1653 = vmul.f32 %v1628, %v1115
        %1678 = vrot.lane.b32.xlu0 %v1630, 80
        %v1679 = vpop.permute.xlu0 %1678
        %1680 = vrot.lane.b32.xlu0 %v1631, 80
        %v1681 = vpop.permute.xlu0 %1680
        %1682 = vrot.lane.b32.xlu0 %v1632, 80
        %v1683 = vpop.permute.xlu0 %1682
        %1684 = vrot.lane.b32.xlu0 %v1633, 80
        %v1685 = vpop.permute.xlu0 %1684
        %1686 = vrot.lane.b32.xlu0 %v1634, 80
        %v1687 = vpop.permute.xlu0 %1686
        %1688 = vrot.lane.b32.xlu0 %v1635, 80
        %v1689 = vpop.permute.xlu0 %1688
        %1690 = vrot.lane.b32.xlu0 %v1636, 80
        %v1691 = vpop.permute.xlu0 %1690
        %1692 = vrot.lane.b32.xlu0 %v1637, 80
        %v1693 = vpop.permute.xlu0 %1692
        %1694 = vrot.lane.b32.xlu0 %v1638, 80
        %v1695 = vpop.permute.xlu0 %1694
        %1696 = vrot.lane.b32.xlu0 %v1639, 80
        %v1697 = vpop.permute.xlu0 %1696
        %1698 = vrot.lane.b32.xlu0 %v1640, 80
        %v1699 = vpop.permute.xlu0 %1698
        %1700 = vrot.lane.b32.xlu0 %v1641, 80
        %v1701 = vpop.permute.xlu0 %1700
        %1702 = vrot.lane.b32.xlu0 %v1642, 80
        %v1703 = vpop.permute.xlu0 %1702
        %1704 = vrot.lane.b32.xlu0 %v1643, 80
        %v1705 = vpop.permute.xlu0 %1704
        %1706 = vrot.lane.b32.xlu0 %v1644, 80
        %v1707 = vpop.permute.xlu0 %1706
        %1708 = vrot.lane.b32.xlu0 %v1645, 80
        %v1709 = vpop.permute.xlu0 %1708
        %1710 = vrot.lane.b32.xlu0 %v1646, 80
        %v1711 = vpop.permute.xlu0 %1710
        %1712 = vrot.lane.b32.xlu0 %v1647, 80
        %v1713 = vpop.permute.xlu0 %1712
        %1714 = vrot.lane.b32.xlu0 %v1648, 80
        %v1715 = vpop.permute.xlu0 %1714
        %1716 = vrot.lane.b32.xlu0 %v1649, 80
        %v1717 = vpop.permute.xlu0 %1716
        %1718 = vrot.lane.b32.xlu0 %v1650, 80
        %v1719 = vpop.permute.xlu0 %1718
        %1720 = vrot.lane.b32.xlu0 %v1651, 80
        %v1721 = vpop.permute.xlu0 %1720
        %1722 = vrot.lane.b32.xlu0 %v1652, 80
        %v1723 = vpop.permute.xlu0 %1722
        %1724 = vrot.lane.b32.xlu0 %v1653, 80
        %v1725 = vpop.permute.xlu0 %1724
        %vm1726 = vcmask 654336
        %v1727 = vsel %vm1726, %v1679, %v1681
        %v1728 = vsel %vm1726, %v1681, %v1683
        %v1729 = vsel %vm1726, %v1685, %v1687
        %v1730 = vsel %vm1726, %v1687, %v1689
        %v1731 = vsel %vm1726, %v1691, %v1693
        %v1732 = vsel %vm1726, %v1693, %v1695
        %v1733 = vsel %vm1726, %v1697, %v1699
        %v1734 = vsel %vm1726, %v1699, %v1701
        %v1735 = vsel %vm1726, %v1703, %v1705
        %v1736 = vsel %vm1726, %v1705, %v1707
        %v1737 = vsel %vm1726, %v1709, %v1711
        %v1738 = vsel %vm1726, %v1711, %v1713
        %v1739 = vsel %vm1726, %v1715, %v1717
        %v1740 = vsel %vm1726, %v1717, %v1719
        %v1741 = vsel %vm1726, %v1721, %v1723
        %v1742 = vsel %vm1726, %v1723, %v1725
        %v1767 = vadd.f32 %v1574, %v1727
        %v1768 = vadd.f32 %v1575, %v1728
        %v1769 = vadd.f32 %v1576, %v1683
        %v1770 = vadd.f32 %v1577, %v1729
        %v1771 = vadd.f32 %v1578, %v1730
        %v1772 = vadd.f32 %v1579, %v1689
        %v1773 = vadd.f32 %v1580, %v1731
        %v1774 = vadd.f32 %v1581, %v1732
        %v1775 = vadd.f32 %v1582, %v1695
        %v1776 = vadd.f32 %v1583, %v1733
        %v1777 = vadd.f32 %v1584, %v1734
        %v1778 = vadd.f32 %v1585, %v1701
        %v1779 = vadd.f32 %v1586, %v1735
        %v1780 = vadd.f32 %v1587, %v1736
        %v1781 = vadd.f32 %v1588, %v1707
        %v1782 = vadd.f32 %v1589, %v1737
        %v1783 = vadd.f32 %v1590, %v1738
        %v1784 = vadd.f32 %v1591, %v1713
        %v1785 = vadd.f32 %v1592, %v1739
        %v1786 = vadd.f32 %v1593, %v1740
        %v1787 = vadd.f32 %v1594, %v1719
        %v1788 = vadd.f32 %v1595, %v1741
        %v1789 = vadd.f32 %v1596, %v1742
        %v1790 = vadd.f32 %v1597, %v1725
        %v1791 = vld [vmem:[#allocation2 + $0x8] sm:$0xff]
        %v1792 = vld [vmem:[#allocation2 + $0x10] sm:$0xff]
        %v1793 = vld [vmem:[#allocation2 + $0x18] sm:$0xff]
        %v1794 = vld [vmem:[#allocation2 + $0x28] sm:$0xff]
        %v1795 = vld [vmem:[#allocation2 + $0x30] sm:$0xff]
        %v1796 = vld [vmem:[#allocation2 + $0x38] sm:$0xff]
        %v1797 = vld [vmem:[#allocation2 + $0x48] sm:$0xff]
        %v1798 = vld [vmem:[#allocation2 + $0x50] sm:$0xff]
        %v1799 = vld [vmem:[#allocation2 + $0x58] sm:$0xff]
        %v1800 = vld [vmem:[#allocation2 + $0x68] sm:$0xff]
        %v1801 = vld [vmem:[#allocation2 + $0x70] sm:$0xff]
        %v1802 = vld [vmem:[#allocation2 + $0x78] sm:$0xff]
        %v1803 = vld [vmem:[#allocation2 + $0x88] sm:$0xff]
        %v1804 = vld [vmem:[#allocation2 + $0x90] sm:$0xff]
        %v1805 = vld [vmem:[#allocation2 + $0x98] sm:$0xff]
        %v1806 = vld [vmem:[#allocation2 + $0xa8] sm:$0xff]
        %v1807 = vld [vmem:[#allocation2 + $0xb0] sm:$0xff]
        %v1808 = vld [vmem:[#allocation2 + $0xb8] sm:$0xff]
        %v1809 = vld [vmem:[#allocation2 + $0xc8] sm:$0xff]
        %v1810 = vld [vmem:[#allocation2 + $0xd0] sm:$0xff]
        %v1811 = vld [vmem:[#allocation2 + $0xd8] sm:$0xff]
        %v1812 = vld [vmem:[#allocation2 + $0xe8] sm:$0x3f]
        %v1813 = vld [vmem:[#allocation2 + $0xf0] sm:$0x3f]
        %v1814 = vld [vmem:[#allocation2 + $0xf8] sm:$0x3f]
        %1815 = vset.pattern.permute.xlu0 28
        %1816 = vperm.xlu0 %1815, %v1116
        %v1817 = vpop.permute.xlu0 %1816
        %1819 = vset.pattern.permute.xlu0 28
        %1820 = vperm.xlu0 %1819, %v1117
        %v1821 = vpop.permute.xlu0 %1820
        %1823 = vset.pattern.permute.xlu0 28
        %1824 = vperm.xlu0 %1823, %v1118
        %v1825 = vpop.permute.xlu0 %1824
        %1827 = vset.pattern.permute.xlu0 28
        %1828 = vperm.xlu0 %1827, %v1119
        %v1829 = vpop.permute.xlu0 %1828
        %1831 = vset.pattern.permute.xlu0 28
        %1832 = vperm.xlu0 %1831, %v1120
        %v1833 = vpop.permute.xlu0 %1832
        %1835 = vset.pattern.permute.xlu0 28
        %1836 = vperm.xlu0 %1835, %v1121
        %v1837 = vpop.permute.xlu0 %1836
        %1839 = vset.pattern.permute.xlu0 28
        %1840 = vperm.xlu0 %1839, %v1122
        %v1841 = vpop.permute.xlu0 %1840
        %1843 = vset.pattern.permute.xlu0 28
        %1844 = vperm.xlu0 %1843, %v1123
        %v1845 = vpop.permute.xlu0 %1844
        %v1847 = vmul.f32 %v1817, %v1791
        %v1848 = vmul.f32 %v1817, %v1792
        %v1849 = vmul.f32 %v1817, %v1793
        %v1850 = vmul.f32 %v1821, %v1794
        %v1851 = vmul.f32 %v1821, %v1795
        %v1852 = vmul.f32 %v1821, %v1796
        %v1853 = vmul.f32 %v1825, %v1797
        %v1854 = vmul.f32 %v1825, %v1798
        %v1855 = vmul.f32 %v1825, %v1799
        %v1856 = vmul.f32 %v1829, %v1800
        %v1857 = vmul.f32 %v1829, %v1801
        %v1858 = vmul.f32 %v1829, %v1802
        %v1859 = vmul.f32 %v1833, %v1803
        %v1860 = vmul.f32 %v1833, %v1804
        %v1861 = vmul.f32 %v1833, %v1805
        %v1862 = vmul.f32 %v1837, %v1806
        %v1863 = vmul.f32 %v1837, %v1807
        %v1864 = vmul.f32 %v1837, %v1808
        %v1865 = vmul.f32 %v1841, %v1809
        %v1866 = vmul.f32 %v1841, %v1810
        %v1867 = vmul.f32 %v1841, %v1811
        %v1868 = vmul.f32 %v1845, %v1812
        %v1869 = vmul.f32 %v1845, %v1813
        %v1870 = vmul.f32 %v1845, %v1814
        %1895 = vrot.lane.b32.xlu0 %v1847, 64
        %v1896 = vpop.permute.xlu0 %1895
        %1897 = vrot.lane.b32.xlu0 %v1848, 64
        %v1898 = vpop.permute.xlu0 %1897
        %1899 = vrot.lane.b32.xlu0 %v1849, 64
        %v1900 = vpop.permute.xlu0 %1899
        %1901 = vrot.lane.b32.xlu0 %v1850, 64
        %v1902 = vpop.permute.xlu0 %1901
        %1903 = vrot.lane.b32.xlu0 %v1851, 64
        %v1904 = vpop.permute.xlu0 %1903
        %1905 = vrot.lane.b32.xlu0 %v1852, 64
        %v1906 = vpop.permute.xlu0 %1905
        %1907 = vrot.lane.b32.xlu0 %v1853, 64
        %v1908 = vpop.permute.xlu0 %1907
        %1909 = vrot.lane.b32.xlu0 %v1854, 64
        %v1910 = vpop.permute.xlu0 %1909
        %1911 = vrot.lane.b32.xlu0 %v1855, 64
        %v1912 = vpop.permute.xlu0 %1911
        %1913 = vrot.lane.b32.xlu0 %v1856, 64
        %v1914 = vpop.permute.xlu0 %1913
        %1915 = vrot.lane.b32.xlu0 %v1857, 64
        %v1916 = vpop.permute.xlu0 %1915
        %1917 = vrot.lane.b32.xlu0 %v1858, 64
        %v1918 = vpop.permute.xlu0 %1917
        %1919 = vrot.lane.b32.xlu0 %v1859, 64
        %v1920 = vpop.permute.xlu0 %1919
        %1921 = vrot.lane.b32.xlu0 %v1860, 64
        %v1922 = vpop.permute.xlu0 %1921
        %1923 = vrot.lane.b32.xlu0 %v1861, 64
        %v1924 = vpop.permute.xlu0 %1923
        %1925 = vrot.lane.b32.xlu0 %v1862, 64
        %v1926 = vpop.permute.xlu0 %1925
        %1927 = vrot.lane.b32.xlu0 %v1863, 64
        %v1928 = vpop.permute.xlu0 %1927
        %1929 = vrot.lane.b32.xlu0 %v1864, 64
        %v1930 = vpop.permute.xlu0 %1929
        %1931 = vrot.lane.b32.xlu0 %v1865, 64
        %v1932 = vpop.permute.xlu0 %1931
        %1933 = vrot.lane.b32.xlu0 %v1866, 64
        %v1934 = vpop.permute.xlu0 %1933
        %1935 = vrot.lane.b32.xlu0 %v1867, 64
        %v1936 = vpop.permute.xlu0 %1935
        %1937 = vrot.lane.b32.xlu0 %v1868, 64
        %v1938 = vpop.permute.xlu0 %1937
        %1939 = vrot.lane.b32.xlu0 %v1869, 64
        %v1940 = vpop.permute.xlu0 %1939
        %1941 = vrot.lane.b32.xlu0 %v1870, 64
        %v1942 = vpop.permute.xlu0 %1941
        %vm1943 = vcmask 523264
        %v1944 = vsel %vm1943, %v1896, %v1898
        %v1945 = vsel %vm1943, %v1898, %v1900
        %v1946 = vsel %vm1943, %v1902, %v1904
        %v1947 = vsel %vm1943, %v1904, %v1906
        %v1948 = vsel %vm1943, %v1908, %v1910
        %v1949 = vsel %vm1943, %v1910, %v1912
        %v1950 = vsel %vm1943, %v1914, %v1916
        %v1951 = vsel %vm1943, %v1916, %v1918
        %v1952 = vsel %vm1943, %v1920, %v1922
        %v1953 = vsel %vm1943, %v1922, %v1924
        %v1954 = vsel %vm1943, %v1926, %v1928
        %v1955 = vsel %vm1943, %v1928, %v1930
        %v1956 = vsel %vm1943, %v1932, %v1934
        %v1957 = vsel %vm1943, %v1934, %v1936
        %v1958 = vsel %vm1943, %v1938, %v1940
        %v1959 = vsel %vm1943, %v1940, %v1942
        %v1984 = vadd.f32 %v1767, %v1896
        %v1985 = vadd.f32 %v1768, %v1944
        %v1986 = vadd.f32 %v1769, %v1945
        %v1987 = vadd.f32 %v1770, %v1902
        %v1988 = vadd.f32 %v1771, %v1946
        %v1989 = vadd.f32 %v1772, %v1947
        %v1990 = vadd.f32 %v1773, %v1908
        %v1991 = vadd.f32 %v1774, %v1948
        %v1992 = vadd.f32 %v1775, %v1949
        %v1993 = vadd.f32 %v1776, %v1914
        %v1994 = vadd.f32 %v1777, %v1950
        %v1995 = vadd.f32 %v1778, %v1951
        %v1996 = vadd.f32 %v1779, %v1920
        %v1997 = vadd.f32 %v1780, %v1952
        %v1998 = vadd.f32 %v1781, %v1953
        %v1999 = vadd.f32 %v1782, %v1926
        %v2000 = vadd.f32 %v1783, %v1954
        %v2001 = vadd.f32 %v1784, %v1955
        %v2002 = vadd.f32 %v1785, %v1932
        %v2003 = vadd.f32 %v1786, %v1956
        %v2004 = vadd.f32 %v1787, %v1957
        %v2005 = vadd.f32 %v1788, %v1938
        %v2006 = vadd.f32 %v1789, %v1958
        %v2007 = vadd.f32 %v1790, %v1959
        %2008 = vset.pattern.permute.xlu0 35
        %2009 = vperm.xlu0 %2008, %v1116
        %v2010 = vpop.permute.xlu0 %2009
        %2012 = vset.pattern.permute.xlu0 35
        %2013 = vperm.xlu0 %2012, %v1117
        %v2014 = vpop.permute.xlu0 %2013
        %2016 = vset.pattern.permute.xlu0 35
        %2017 = vperm.xlu0 %2016, %v1118
        %v2018 = vpop.permute.xlu0 %2017
        %2020 = vset.pattern.permute.xlu0 35
        %2021 = vperm.xlu0 %2020, %v1119
        %v2022 = vpop.permute.xlu0 %2021
        %2024 = vset.pattern.permute.xlu0 35
        %2025 = vperm.xlu0 %2024, %v1120
        %v2026 = vpop.permute.xlu0 %2025
        %2028 = vset.pattern.permute.xlu0 35
        %2029 = vperm.xlu0 %2028, %v1121
        %v2030 = vpop.permute.xlu0 %2029
        %2032 = vset.pattern.permute.xlu0 35
        %2033 = vperm.xlu0 %2032, %v1122
        %v2034 = vpop.permute.xlu0 %2033
        %2036 = vset.pattern.permute.xlu0 35
        %2037 = vperm.xlu0 %2036, %v1123
        %v2038 = vpop.permute.xlu0 %2037
        %v2040 = vmul.f32 %v2010, %v1791
        %v2041 = vmul.f32 %v2010, %v1792
        %v2042 = vmul.f32 %v2010, %v1793
        %v2043 = vmul.f32 %v2014, %v1794
        %v2044 = vmul.f32 %v2014, %v1795
        %v2045 = vmul.f32 %v2014, %v1796
        %v2046 = vmul.f32 %v2018, %v1797
        %v2047 = vmul.f32 %v2018, %v1798
        %v2048 = vmul.f32 %v2018, %v1799
        %v2049 = vmul.f32 %v2022, %v1800
        %v2050 = vmul.f32 %v2022, %v1801
        %v2051 = vmul.f32 %v2022, %v1802
        %v2052 = vmul.f32 %v2026, %v1803
        %v2053 = vmul.f32 %v2026, %v1804
        %v2054 = vmul.f32 %v2026, %v1805
        %v2055 = vmul.f32 %v2030, %v1806
        %v2056 = vmul.f32 %v2030, %v1807
        %v2057 = vmul.f32 %v2030, %v1808
        %v2058 = vmul.f32 %v2034, %v1809
        %v2059 = vmul.f32 %v2034, %v1810
        %v2060 = vmul.f32 %v2034, %v1811
        %v2061 = vmul.f32 %v2038, %v1812
        %v2062 = vmul.f32 %v2038, %v1813
        %v2063 = vmul.f32 %v2038, %v1814
        %2088 = vrot.lane.b32.xlu0 %v2040, 48
        %v2089 = vpop.permute.xlu0 %2088
        %2090 = vrot.lane.b32.xlu0 %v2041, 48
        %v2091 = vpop.permute.xlu0 %2090
        %2092 = vrot.lane.b32.xlu0 %v2042, 48
        %v2093 = vpop.permute.xlu0 %2092
        %2094 = vrot.lane.b32.xlu0 %v2043, 48
        %v2095 = vpop.permute.xlu0 %2094
        %2096 = vrot.lane.b32.xlu0 %v2044, 48
        %v2097 = vpop.permute.xlu0 %2096
        %2098 = vrot.lane.b32.xlu0 %v2045, 48
        %v2099 = vpop.permute.xlu0 %2098
        %2100 = vrot.lane.b32.xlu0 %v2046, 48
        %v2101 = vpop.permute.xlu0 %2100
        %2102 = vrot.lane.b32.xlu0 %v2047, 48
        %v2103 = vpop.permute.xlu0 %2102
        %2104 = vrot.lane.b32.xlu0 %v2048, 48
        %v2105 = vpop.permute.xlu0 %2104
        %2106 = vrot.lane.b32.xlu0 %v2049, 48
        %v2107 = vpop.permute.xlu0 %2106
        %2108 = vrot.lane.b32.xlu0 %v2050, 48
        %v2109 = vpop.permute.xlu0 %2108
        %2110 = vrot.lane.b32.xlu0 %v2051, 48
        %v2111 = vpop.permute.xlu0 %2110
        %2112 = vrot.lane.b32.xlu0 %v2052, 48
        %v2113 = vpop.permute.xlu0 %2112
        %2114 = vrot.lane.b32.xlu0 %v2053, 48
        %v2115 = vpop.permute.xlu0 %2114
        %2116 = vrot.lane.b32.xlu0 %v2054, 48
        %v2117 = vpop.permute.xlu0 %2116
        %2118 = vrot.lane.b32.xlu0 %v2055, 48
        %v2119 = vpop.permute.xlu0 %2118
        %2120 = vrot.lane.b32.xlu0 %v2056, 48
        %v2121 = vpop.permute.xlu0 %2120
        %2122 = vrot.lane.b32.xlu0 %v2057, 48
        %v2123 = vpop.permute.xlu0 %2122
        %2124 = vrot.lane.b32.xlu0 %v2058, 48
        %v2125 = vpop.permute.xlu0 %2124
        %2126 = vrot.lane.b32.xlu0 %v2059, 48
        %v2127 = vpop.permute.xlu0 %2126
        %2128 = vrot.lane.b32.xlu0 %v2060, 48
        %v2129 = vpop.permute.xlu0 %2128
        %2130 = vrot.lane.b32.xlu0 %v2061, 48
        %v2131 = vpop.permute.xlu0 %2130
        %2132 = vrot.lane.b32.xlu0 %v2062, 48
        %v2133 = vpop.permute.xlu0 %2132
        %2134 = vrot.lane.b32.xlu0 %v2063, 48
        %v2135 = vpop.permute.xlu0 %2134
        %vm2136 = vcmask 392192
        %v2137 = vsel %vm2136, %v2089, %v2091
        %v2138 = vsel %vm2136, %v2091, %v2093
        %v2139 = vsel %vm2136, %v2095, %v2097
        %v2140 = vsel %vm2136, %v2097, %v2099
        %v2141 = vsel %vm2136, %v2101, %v2103
        %v2142 = vsel %vm2136, %v2103, %v2105
        %v2143 = vsel %vm2136, %v2107, %v2109
        %v2144 = vsel %vm2136, %v2109, %v2111
        %v2145 = vsel %vm2136, %v2113, %v2115
        %v2146 = vsel %vm2136, %v2115, %v2117
        %v2147 = vsel %vm2136, %v2119, %v2121
        %v2148 = vsel %vm2136, %v2121, %v2123
        %v2149 = vsel %vm2136, %v2125, %v2127
        %v2150 = vsel %vm2136, %v2127, %v2129
        %v2151 = vsel %vm2136, %v2131, %v2133
        %v2152 = vsel %vm2136, %v2133, %v2135
        %v2177 = vadd.f32 %v1984, %v2089
        %v2178 = vadd.f32 %v1985, %v2137
        %v2179 = vadd.f32 %v1986, %v2138
        %v2180 = vadd.f32 %v1987, %v2095
        %v2181 = vadd.f32 %v1988, %v2139
        %v2182 = vadd.f32 %v1989, %v2140
        %v2183 = vadd.f32 %v1990, %v2101
        %v2184 = vadd.f32 %v1991, %v2141
        %v2185 = vadd.f32 %v1992, %v2142
        %v2186 = vadd.f32 %v1993, %v2107
        %v2187 = vadd.f32 %v1994, %v2143
        %v2188 = vadd.f32 %v1995, %v2144
        %v2189 = vadd.f32 %v1996, %v2113
        %v2190 = vadd.f32 %v1997, %v2145
        %v2191 = vadd.f32 %v1998, %v2146
        %v2192 = vadd.f32 %v1999, %v2119
        %v2193 = vadd.f32 %v2000, %v2147
        %v2194 = vadd.f32 %v2001, %v2148
        %v2195 = vadd.f32 %v2002, %v2125
        %v2196 = vadd.f32 %v2003, %v2149
        %v2197 = vadd.f32 %v2004, %v2150
        %v2198 = vadd.f32 %v2005, %v2131
        %v2199 = vadd.f32 %v2006, %v2151
        %v2200 = vadd.f32 %v2007, %v2152
        %2201 = vset.pattern.permute.xlu0 42
        %2202 = vperm.xlu0 %2201, %v1116
        %v2203 = vpop.permute.xlu0 %2202
        %2205 = vset.pattern.permute.xlu0 42
        %2206 = vperm.xlu0 %2205, %v1117
        %v2207 = vpop.permute.xlu0 %2206
        %2209 = vset.pattern.permute.xlu0 42
        %2210 = vperm.xlu0 %2209, %v1118
        %v2211 = vpop.permute.xlu0 %2210
        %2213 = vset.pattern.permute.xlu0 42
        %2214 = vperm.xlu0 %2213, %v1119
        %v2215 = vpop.permute.xlu0 %2214
        %2217 = vset.pattern.permute.xlu0 42
        %2218 = vperm.xlu0 %2217, %v1120
        %v2219 = vpop.permute.xlu0 %2218
        %2221 = vset.pattern.permute.xlu0 42
        %2222 = vperm.xlu0 %2221, %v1121
        %v2223 = vpop.permute.xlu0 %2222
        %2225 = vset.pattern.permute.xlu0 42
        %2226 = vperm.xlu0 %2225, %v1122
        %v2227 = vpop.permute.xlu0 %2226
        %2229 = vset.pattern.permute.xlu0 42
        %2230 = vperm.xlu0 %2229, %v1123
        %v2231 = vpop.permute.xlu0 %2230
        %v2233 = vmul.f32 %v2203, %v1791
        %v2234 = vmul.f32 %v2203, %v1792
        %v2235 = vmul.f32 %v2203, %v1793
        %v2236 = vmul.f32 %v2207, %v1794
        %v2237 = vmul.f32 %v2207, %v1795
        %v2238 = vmul.f32 %v2207, %v1796
        %v2239 = vmul.f32 %v2211, %v1797
        %v2240 = vmul.f32 %v2211, %v1798
        %v2241 = vmul.f32 %v2211, %v1799
        %v2242 = vmul.f32 %v2215, %v1800
        %v2243 = vmul.f32 %v2215, %v1801
        %v2244 = vmul.f32 %v2215, %v1802
        %v2245 = vmul.f32 %v2219, %v1803
        %v2246 = vmul.f32 %v2219, %v1804
        %v2247 = vmul.f32 %v2219, %v1805
        %v2248 = vmul.f32 %v2223, %v1806
        %v2249 = vmul.f32 %v2223, %v1807
        %v2250 = vmul.f32 %v2223, %v1808
        %v2251 = vmul.f32 %v2227, %v1809
        %v2252 = vmul.f32 %v2227, %v1810
        %v2253 = vmul.f32 %v2227, %v1811
        %v2254 = vmul.f32 %v2231, %v1812
        %v2255 = vmul.f32 %v2231, %v1813
        %v2256 = vmul.f32 %v2231, %v1814
        %2281 = vrot.lane.b32.xlu0 %v2233, 32
        %v2282 = vpop.permute.xlu0 %2281
        %2283 = vrot.lane.b32.xlu0 %v2234, 32
        %v2284 = vpop.permute.xlu0 %2283
        %2285 = vrot.lane.b32.xlu0 %v2235, 32
        %v2286 = vpop.permute.xlu0 %2285
        %2287 = vrot.lane.b32.xlu0 %v2236, 32
        %v2288 = vpop.permute.xlu0 %2287
        %2289 = vrot.lane.b32.xlu0 %v2237, 32
        %v2290 = vpop.permute.xlu0 %2289
        %2291 = vrot.lane.b32.xlu0 %v2238, 32
        %v2292 = vpop.permute.xlu0 %2291
        %2293 = vrot.lane.b32.xlu0 %v2239, 32
        %v2294 = vpop.permute.xlu0 %2293
        %2295 = vrot.lane.b32.xlu0 %v2240, 32
        %v2296 = vpop.permute.xlu0 %2295
        %2297 = vrot.lane.b32.xlu0 %v2241, 32
        %v2298 = vpop.permute.xlu0 %2297
        %2299 = vrot.lane.b32.xlu0 %v2242, 32
        %v2300 = vpop.permute.xlu0 %2299
        %2301 = vrot.lane.b32.xlu0 %v2243, 32
        %v2302 = vpop.permute.xlu0 %2301
        %2303 = vrot.lane.b32.xlu0 %v2244, 32
        %v2304 = vpop.permute.xlu0 %2303
        %2305 = vrot.lane.b32.xlu0 %v2245, 32
        %v2306 = vpop.permute.xlu0 %2305
        %2307 = vrot.lane.b32.xlu0 %v2246, 32
        %v2308 = vpop.permute.xlu0 %2307
        %2309 = vrot.lane.b32.xlu0 %v2247, 32
        %v2310 = vpop.permute.xlu0 %2309
        %2311 = vrot.lane.b32.xlu0 %v2248, 32
        %v2312 = vpop.permute.xlu0 %2311
        %2313 = vrot.lane.b32.xlu0 %v2249, 32
        %v2314 = vpop.permute.xlu0 %2313
        %2315 = vrot.lane.b32.xlu0 %v2250, 32
        %v2316 = vpop.permute.xlu0 %2315
        %2317 = vrot.lane.b32.xlu0 %v2251, 32
        %v2318 = vpop.permute.xlu0 %2317
        %2319 = vrot.lane.b32.xlu0 %v2252, 32
        %v2320 = vpop.permute.xlu0 %2319
        %2321 = vrot.lane.b32.xlu0 %v2253, 32
        %v2322 = vpop.permute.xlu0 %2321
        %2323 = vrot.lane.b32.xlu0 %v2254, 32
        %v2324 = vpop.permute.xlu0 %2323
        %2325 = vrot.lane.b32.xlu0 %v2255, 32
        %v2326 = vpop.permute.xlu0 %2325
        %2327 = vrot.lane.b32.xlu0 %v2256, 32
        %v2328 = vpop.permute.xlu0 %2327
        %v2329 = vsel %vm626, %v2282, %v2284
        %v2330 = vsel %vm626, %v2284, %v2286
        %v2331 = vsel %vm626, %v2288, %v2290
        %v2332 = vsel %vm626, %v2290, %v2292
        %v2333 = vsel %vm626, %v2294, %v2296
        %v2334 = vsel %vm626, %v2296, %v2298
        %v2335 = vsel %vm626, %v2300, %v2302
        %v2336 = vsel %vm626, %v2302, %v2304
        %v2337 = vsel %vm626, %v2306, %v2308
        %v2338 = vsel %vm626, %v2308, %v2310
        %v2339 = vsel %vm626, %v2312, %v2314
        %v2340 = vsel %vm626, %v2314, %v2316
        %v2341 = vsel %vm626, %v2318, %v2320
        %v2342 = vsel %vm626, %v2320, %v2322
        %v2343 = vsel %vm626, %v2324, %v2326
        %v2344 = vsel %vm626, %v2326, %v2328
        %v2369 = vadd.f32 %v2177, %v2282
        %v2370 = vadd.f32 %v2178, %v2329
        %v2371 = vadd.f32 %v2179, %v2330
        %v2372 = vadd.f32 %v2180, %v2288
        %v2373 = vadd.f32 %v2181, %v2331
        %v2374 = vadd.f32 %v2182, %v2332
        %v2375 = vadd.f32 %v2183, %v2294
        %v2376 = vadd.f32 %v2184, %v2333
        %v2377 = vadd.f32 %v2185, %v2334
        %v2378 = vadd.f32 %v2186, %v2300
        %v2379 = vadd.f32 %v2187, %v2335
        %v2380 = vadd.f32 %v2188, %v2336
        %v2381 = vadd.f32 %v2189, %v2306
        %v2382 = vadd.f32 %v2190, %v2337
        %v2383 = vadd.f32 %v2191, %v2338
        %v2384 = vadd.f32 %v2192, %v2312
        %v2385 = vadd.f32 %v2193, %v2339
        %v2386 = vadd.f32 %v2194, %v2340
        %v2387 = vadd.f32 %v2195, %v2318
        %v2388 = vadd.f32 %v2196, %v2341
        %v2389 = vadd.f32 %v2197, %v2342
        %v2390 = vadd.f32 %v2198, %v2324
        %v2391 = vadd.f32 %v2199, %v2343
        %v2392 = vadd.f32 %v2200, %v2344
        %v2393 = vld [vmem:[%s7] ss:$8 sm:$0x3]
        %v2395 = vperm.slane %v2393, 0
        %v2396 = vperm.slane %v2393, 1
        %2397 = vrot.lane.b32.xlu0 %v2395, 77
        %v2398 = vpop.permute.xlu0 %2397
        %2399 = vrot.lane.b32.xlu0 %v2396, 77
        %v2400 = vpop.permute.xlu0 %2399
        %vm2401 = vcmask 629760
        %v2402 = vsel %vm2401, %v2398, %v2400
        %v2406 = vmul.f32 %v2369, %v2398
        %v2407 = vmul.f32 %v2370, %v2402
        %v2408 = vmul.f32 %v2371, %v2400
        %v2409 = vmul.f32 %v2372, %v2398
        %v2410 = vmul.f32 %v2373, %v2402
        %v2411 = vmul.f32 %v2374, %v2400
        %v2412 = vmul.f32 %v2375, %v2398
        %v2413 = vmul.f32 %v2376, %v2402
        %v2414 = vmul.f32 %v2377, %v2400
        %v2415 = vmul.f32 %v2378, %v2398
        %v2416 = vmul.f32 %v2379, %v2402
        %v2417 = vmul.f32 %v2380, %v2400
        %v2418 = vmul.f32 %v2381, %v2398
        %v2419 = vmul.f32 %v2382, %v2402
        %v2420 = vmul.f32 %v2383, %v2400
        %v2421 = vmul.f32 %v2384, %v2398
        %v2422 = vmul.f32 %v2385, %v2402
        %v2423 = vmul.f32 %v2386, %v2400
        %v2424 = vmul.f32 %v2387, %v2398
        %v2425 = vmul.f32 %v2388, %v2402
        %v2426 = vmul.f32 %v2389, %v2400
        %v2427 = vmul.f32 %v2390, %v2398
        %v2428 = vmul.f32 %v2391, %v2402
        %v2429 = vmul.f32 %v2392, %v2400
        %v2430 = vadd.f32 %v2406, 0.0
        %v2431 = vadd.f32 %v2407, 0.0
        %v2432 = vadd.f32 %v2408, 0.0
        %v2433 = vadd.f32 %v2409, 0.0
        %v2434 = vadd.f32 %v2410, 0.0
        %v2435 = vadd.f32 %v2411, 0.0
        %v2436 = vadd.f32 %v2412, 0.0
        %v2437 = vadd.f32 %v2413, 0.0
        %v2438 = vadd.f32 %v2414, 0.0
        %v2439 = vadd.f32 %v2415, 0.0
        %v2440 = vadd.f32 %v2416, 0.0
        %v2441 = vadd.f32 %v2417, 0.0
        %v2442 = vadd.f32 %v2418, 0.0
        %v2443 = vadd.f32 %v2419, 0.0
        %v2444 = vadd.f32 %v2420, 0.0
        %v2445 = vadd.f32 %v2421, 0.0
        %v2446 = vadd.f32 %v2422, 0.0
        %v2447 = vadd.f32 %v2423, 0.0
        %v2448 = vadd.f32 %v2424, 0.0
        %v2449 = vadd.f32 %v2425, 0.0
        %v2450 = vadd.f32 %v2426, 0.0
        %v2451 = vadd.f32 %v2427, 0.0
        %v2452 = vadd.f32 %v2428, 0.0
        %v2453 = vadd.f32 %v2429, 0.0
        %2454 = vset.pattern.permute.xlu0 1
        %2455 = vperm.xlu0 %2454, %v1116
        %v2456 = vpop.permute.xlu0 %2455
        %2458 = vset.pattern.permute.xlu0 1
        %2459 = vperm.xlu0 %2458, %v1117
        %v2460 = vpop.permute.xlu0 %2459
        %2462 = vset.pattern.permute.xlu0 1
        %2463 = vperm.xlu0 %2462, %v1118
        %v2464 = vpop.permute.xlu0 %2463
        %2466 = vset.pattern.permute.xlu0 1
        %2467 = vperm.xlu0 %2466, %v1119
        %v2468 = vpop.permute.xlu0 %2467
        %2470 = vset.pattern.permute.xlu0 1
        %2471 = vperm.xlu0 %2470, %v1120
        %v2472 = vpop.permute.xlu0 %2471
        %2474 = vset.pattern.permute.xlu0 1
        %2475 = vperm.xlu0 %2474, %v1121
        %v2476 = vpop.permute.xlu0 %2475
        %2478 = vset.pattern.permute.xlu0 1
        %2479 = vperm.xlu0 %2478, %v1122
        %v2480 = vpop.permute.xlu0 %2479
        %2482 = vset.pattern.permute.xlu0 1
        %2483 = vperm.xlu0 %2482, %v1123
        %v2484 = vpop.permute.xlu0 %2483
        %v2486 = vmul.f32 %v2456, %v1092
        %v2487 = vmul.f32 %v2456, %v1093
        %v2488 = vmul.f32 %v2456, %v1094
        %v2489 = vmul.f32 %v2460, %v1095
        %v2490 = vmul.f32 %v2460, %v1096
        %v2491 = vmul.f32 %v2460, %v1097
        %v2492 = vmul.f32 %v2464, %v1098
        %v2493 = vmul.f32 %v2464, %v1099
        %v2494 = vmul.f32 %v2464, %v1100
        %v2495 = vmul.f32 %v2468, %v1101
        %v2496 = vmul.f32 %v2468, %v1102
        %v2497 = vmul.f32 %v2468, %v1103
        %v2498 = vmul.f32 %v2472, %v1104
        %v2499 = vmul.f32 %v2472, %v1105
        %v2500 = vmul.f32 %v2472, %v1106
        %v2501 = vmul.f32 %v2476, %v1107
        %v2502 = vmul.f32 %v2476, %v1108
        %v2503 = vmul.f32 %v2476, %v1109
        %v2504 = vmul.f32 %v2480, %v1110
        %v2505 = vmul.f32 %v2480, %v1111
        %v2506 = vmul.f32 %v2480, %v1112
        %v2507 = vmul.f32 %v2484, %v1113
        %v2508 = vmul.f32 %v2484, %v1114
        %v2509 = vmul.f32 %v2484, %v1115
        %v2510 = vadd.f32 %v2486, 0.0
        %v2511 = vadd.f32 %v2487, 0.0
        %v2512 = vadd.f32 %v2488, 0.0
        %v2513 = vadd.f32 %v2489, 0.0
        %v2514 = vadd.f32 %v2490, 0.0
        %v2515 = vadd.f32 %v2491, 0.0
        %v2516 = vadd.f32 %v2492, 0.0
        %v2517 = vadd.f32 %v2493, 0.0
        %v2518 = vadd.f32 %v2494, 0.0
        %v2519 = vadd.f32 %v2495, 0.0
        %v2520 = vadd.f32 %v2496, 0.0
        %v2521 = vadd.f32 %v2497, 0.0
        %v2522 = vadd.f32 %v2498, 0.0
        %v2523 = vadd.f32 %v2499, 0.0
        %v2524 = vadd.f32 %v2500, 0.0
        %v2525 = vadd.f32 %v2501, 0.0
        %v2526 = vadd.f32 %v2502, 0.0
        %v2527 = vadd.f32 %v2503, 0.0
        %v2528 = vadd.f32 %v2504, 0.0
        %v2529 = vadd.f32 %v2505, 0.0
        %v2530 = vadd.f32 %v2506, 0.0
        %v2531 = vadd.f32 %v2507, 0.0
        %v2532 = vadd.f32 %v2508, 0.0
        %v2533 = vadd.f32 %v2509, 0.0
        %2534 = vset.pattern.permute.xlu0 8
        %2535 = vperm.xlu0 %2534, %v1116
        %v2536 = vpop.permute.xlu0 %2535
        %2538 = vset.pattern.permute.xlu0 8
        %2539 = vperm.xlu0 %2538, %v1117
        %v2540 = vpop.permute.xlu0 %2539
        %2542 = vset.pattern.permute.xlu0 8
        %2543 = vperm.xlu0 %2542, %v1118
        %v2544 = vpop.permute.xlu0 %2543
        %2546 = vset.pattern.permute.xlu0 8
        %2547 = vperm.xlu0 %2546, %v1119
        %v2548 = vpop.permute.xlu0 %2547
        %2550 = vset.pattern.permute.xlu0 8
        %2551 = vperm.xlu0 %2550, %v1120
        %v2552 = vpop.permute.xlu0 %2551
        %2554 = vset.pattern.permute.xlu0 8
        %2555 = vperm.xlu0 %2554, %v1121
        %v2556 = vpop.permute.xlu0 %2555
        %2558 = vset.pattern.permute.xlu0 8
        %2559 = vperm.xlu0 %2558, %v1122
        %v2560 = vpop.permute.xlu0 %2559
        %2562 = vset.pattern.permute.xlu0 8
        %2563 = vperm.xlu0 %2562, %v1123
        %v2564 = vpop.permute.xlu0 %2563
        %v2566 = vmul.f32 %v2536, %v1092
        %v2567 = vmul.f32 %v2536, %v1093
        %v2568 = vmul.f32 %v2536, %v1094
        %v2569 = vmul.f32 %v2540, %v1095
        %v2570 = vmul.f32 %v2540, %v1096
        %v2571 = vmul.f32 %v2540, %v1097
        %v2572 = vmul.f32 %v2544, %v1098
        %v2573 = vmul.f32 %v2544, %v1099
        %v2574 = vmul.f32 %v2544, %v1100
        %v2575 = vmul.f32 %v2548, %v1101
        %v2576 = vmul.f32 %v2548, %v1102
        %v2577 = vmul.f32 %v2548, %v1103
        %v2578 = vmul.f32 %v2552, %v1104
        %v2579 = vmul.f32 %v2552, %v1105
        %v2580 = vmul.f32 %v2552, %v1106
        %v2581 = vmul.f32 %v2556, %v1107
        %v2582 = vmul.f32 %v2556, %v1108
        %v2583 = vmul.f32 %v2556, %v1109
        %v2584 = vmul.f32 %v2560, %v1110
        %v2585 = vmul.f32 %v2560, %v1111
        %v2586 = vmul.f32 %v2560, %v1112
        %v2587 = vmul.f32 %v2564, %v1113
        %v2588 = vmul.f32 %v2564, %v1114
        %v2589 = vmul.f32 %v2564, %v1115
        %2614 = vrot.lane.b32.xlu0 %v2566, 112
        %v2615 = vpop.permute.xlu0 %2614
        %2616 = vrot.lane.b32.xlu0 %v2567, 112
        %v2617 = vpop.permute.xlu0 %2616
        %2618 = vrot.lane.b32.xlu0 %v2568, 112
        %v2619 = vpop.permute.xlu0 %2618
        %2620 = vrot.lane.b32.xlu0 %v2569, 112
        %v2621 = vpop.permute.xlu0 %2620
        %2622 = vrot.lane.b32.xlu0 %v2570, 112
        %v2623 = vpop.permute.xlu0 %2622
        %2624 = vrot.lane.b32.xlu0 %v2571, 112
        %v2625 = vpop.permute.xlu0 %2624
        %2626 = vrot.lane.b32.xlu0 %v2572, 112
        %v2627 = vpop.permute.xlu0 %2626
        %2628 = vrot.lane.b32.xlu0 %v2573, 112
        %v2629 = vpop.permute.xlu0 %2628
        %2630 = vrot.lane.b32.xlu0 %v2574, 112
        %v2631 = vpop.permute.xlu0 %2630
        %2632 = vrot.lane.b32.xlu0 %v2575, 112
        %v2633 = vpop.permute.xlu0 %2632
        %2634 = vrot.lane.b32.xlu0 %v2576, 112
        %v2635 = vpop.permute.xlu0 %2634
        %2636 = vrot.lane.b32.xlu0 %v2577, 112
        %v2637 = vpop.permute.xlu0 %2636
        %2638 = vrot.lane.b32.xlu0 %v2578, 112
        %v2639 = vpop.permute.xlu0 %2638
        %2640 = vrot.lane.b32.xlu0 %v2579, 112
        %v2641 = vpop.permute.xlu0 %2640
        %2642 = vrot.lane.b32.xlu0 %v2580, 112
        %v2643 = vpop.permute.xlu0 %2642
        %2644 = vrot.lane.b32.xlu0 %v2581, 112
        %v2645 = vpop.permute.xlu0 %2644
        %2646 = vrot.lane.b32.xlu0 %v2582, 112
        %v2647 = vpop.permute.xlu0 %2646
        %2648 = vrot.lane.b32.xlu0 %v2583, 112
        %v2649 = vpop.permute.xlu0 %2648
        %2650 = vrot.lane.b32.xlu0 %v2584, 112
        %v2651 = vpop.permute.xlu0 %2650
        %2652 = vrot.lane.b32.xlu0 %v2585, 112
        %v2653 = vpop.permute.xlu0 %2652
        %2654 = vrot.lane.b32.xlu0 %v2586, 112
        %v2655 = vpop.permute.xlu0 %2654
        %2656 = vrot.lane.b32.xlu0 %v2587, 112
        %v2657 = vpop.permute.xlu0 %2656
        %2658 = vrot.lane.b32.xlu0 %v2588, 112
        %v2659 = vpop.permute.xlu0 %2658
        %2660 = vrot.lane.b32.xlu0 %v2589, 112
        %v2661 = vpop.permute.xlu0 %2660
        %v2662 = vsel %vm1340, %v2615, %v2617
        %v2663 = vsel %vm1340, %v2617, %v2619
        %v2664 = vsel %vm1340, %v2621, %v2623
        %v2665 = vsel %vm1340, %v2623, %v2625
        %v2666 = vsel %vm1340, %v2627, %v2629
        %v2667 = vsel %vm1340, %v2629, %v2631
        %v2668 = vsel %vm1340, %v2633, %v2635
        %v2669 = vsel %vm1340, %v2635, %v2637
        %v2670 = vsel %vm1340, %v2639, %v2641
        %v2671 = vsel %vm1340, %v2641, %v2643
        %v2672 = vsel %vm1340, %v2645, %v2647
        %v2673 = vsel %vm1340, %v2647, %v2649
        %v2674 = vsel %vm1340, %v2651, %v2653
        %v2675 = vsel %vm1340, %v2653, %v2655
        %v2676 = vsel %vm1340, %v2657, %v2659
        %v2677 = vsel %vm1340, %v2659, %v2661
        %v2702 = vadd.f32 %v2510, %v2662
        %v2703 = vadd.f32 %v2511, %v2663
        %v2704 = vadd.f32 %v2512, %v2619
        %v2705 = vadd.f32 %v2513, %v2664
        %v2706 = vadd.f32 %v2514, %v2665
        %v2707 = vadd.f32 %v2515, %v2625
        %v2708 = vadd.f32 %v2516, %v2666
        %v2709 = vadd.f32 %v2517, %v2667
        %v2710 = vadd.f32 %v2518, %v2631
        %v2711 = vadd.f32 %v2519, %v2668
        %v2712 = vadd.f32 %v2520, %v2669
        %v2713 = vadd.f32 %v2521, %v2637
        %v2714 = vadd.f32 %v2522, %v2670
        %v2715 = vadd.f32 %v2523, %v2671
        %v2716 = vadd.f32 %v2524, %v2643
        %v2717 = vadd.f32 %v2525, %v2672
        %v2718 = vadd.f32 %v2526, %v2673
        %v2719 = vadd.f32 %v2527, %v2649
        %v2720 = vadd.f32 %v2528, %v2674
        %v2721 = vadd.f32 %v2529, %v2675
        %v2722 = vadd.f32 %v2530, %v2655
        %v2723 = vadd.f32 %v2531, %v2676
        %v2724 = vadd.f32 %v2532, %v2677
        %v2725 = vadd.f32 %v2533, %v2661
        %2726 = vset.pattern.permute.xlu0 15
        %2727 = vperm.xlu0 %2726, %v1116
        %v2728 = vpop.permute.xlu0 %2727
        %2730 = vset.pattern.permute.xlu0 15
        %2731 = vperm.xlu0 %2730, %v1117
        %v2732 = vpop.permute.xlu0 %2731
        %2734 = vset.pattern.permute.xlu0 15
        %2735 = vperm.xlu0 %2734, %v1118
        %v2736 = vpop.permute.xlu0 %2735
        %2738 = vset.pattern.permute.xlu0 15
        %2739 = vperm.xlu0 %2738, %v1119
        %v2740 = vpop.permute.xlu0 %2739
        %2742 = vset.pattern.permute.xlu0 15
        %2743 = vperm.xlu0 %2742, %v1120
        %v2744 = vpop.permute.xlu0 %2743
        %2746 = vset.pattern.permute.xlu0 15
        %2747 = vperm.xlu0 %2746, %v1121
        %v2748 = vpop.permute.xlu0 %2747
        %2750 = vset.pattern.permute.xlu0 15
        %2751 = vperm.xlu0 %2750, %v1122
        %v2752 = vpop.permute.xlu0 %2751
        %2754 = vset.pattern.permute.xlu0 15
        %2755 = vperm.xlu0 %2754, %v1123
        %v2756 = vpop.permute.xlu0 %2755
        %v2758 = vmul.f32 %v2728, %v1092
        %v2759 = vmul.f32 %v2728, %v1093
        %v2760 = vmul.f32 %v2728, %v1094
        %v2761 = vmul.f32 %v2732, %v1095
        %v2762 = vmul.f32 %v2732, %v1096
        %v2763 = vmul.f32 %v2732, %v1097
        %v2764 = vmul.f32 %v2736, %v1098
        %v2765 = vmul.f32 %v2736, %v1099
        %v2766 = vmul.f32 %v2736, %v1100
        %v2767 = vmul.f32 %v2740, %v1101
        %v2768 = vmul.f32 %v2740, %v1102
        %v2769 = vmul.f32 %v2740, %v1103
        %v2770 = vmul.f32 %v2744, %v1104
        %v2771 = vmul.f32 %v2744, %v1105
        %v2772 = vmul.f32 %v2744, %v1106
        %v2773 = vmul.f32 %v2748, %v1107
        %v2774 = vmul.f32 %v2748, %v1108
        %v2775 = vmul.f32 %v2748, %v1109
        %v2776 = vmul.f32 %v2752, %v1110
        %v2777 = vmul.f32 %v2752, %v1111
        %v2778 = vmul.f32 %v2752, %v1112
        %v2779 = vmul.f32 %v2756, %v1113
        %v2780 = vmul.f32 %v2756, %v1114
        %v2781 = vmul.f32 %v2756, %v1115
        %2806 = vrot.lane.b32.xlu0 %v2758, 96
        %v2807 = vpop.permute.xlu0 %2806
        %2808 = vrot.lane.b32.xlu0 %v2759, 96
        %v2809 = vpop.permute.xlu0 %2808
        %2810 = vrot.lane.b32.xlu0 %v2760, 96
        %v2811 = vpop.permute.xlu0 %2810
        %2812 = vrot.lane.b32.xlu0 %v2761, 96
        %v2813 = vpop.permute.xlu0 %2812
        %2814 = vrot.lane.b32.xlu0 %v2762, 96
        %v2815 = vpop.permute.xlu0 %2814
        %2816 = vrot.lane.b32.xlu0 %v2763, 96
        %v2817 = vpop.permute.xlu0 %2816
        %2818 = vrot.lane.b32.xlu0 %v2764, 96
        %v2819 = vpop.permute.xlu0 %2818
        %2820 = vrot.lane.b32.xlu0 %v2765, 96
        %v2821 = vpop.permute.xlu0 %2820
        %2822 = vrot.lane.b32.xlu0 %v2766, 96
        %v2823 = vpop.permute.xlu0 %2822
        %2824 = vrot.lane.b32.xlu0 %v2767, 96
        %v2825 = vpop.permute.xlu0 %2824
        %2826 = vrot.lane.b32.xlu0 %v2768, 96
        %v2827 = vpop.permute.xlu0 %2826
        %2828 = vrot.lane.b32.xlu0 %v2769, 96
        %v2829 = vpop.permute.xlu0 %2828
        %2830 = vrot.lane.b32.xlu0 %v2770, 96
        %v2831 = vpop.permute.xlu0 %2830
        %2832 = vrot.lane.b32.xlu0 %v2771, 96
        %v2833 = vpop.permute.xlu0 %2832
        %2834 = vrot.lane.b32.xlu0 %v2772, 96
        %v2835 = vpop.permute.xlu0 %2834
        %2836 = vrot.lane.b32.xlu0 %v2773, 96
        %v2837 = vpop.permute.xlu0 %2836
        %2838 = vrot.lane.b32.xlu0 %v2774, 96
        %v2839 = vpop.permute.xlu0 %2838
        %2840 = vrot.lane.b32.xlu0 %v2775, 96
        %v2841 = vpop.permute.xlu0 %2840
        %2842 = vrot.lane.b32.xlu0 %v2776, 96
        %v2843 = vpop.permute.xlu0 %2842
        %2844 = vrot.lane.b32.xlu0 %v2777, 96
        %v2845 = vpop.permute.xlu0 %2844
        %2846 = vrot.lane.b32.xlu0 %v2778, 96
        %v2847 = vpop.permute.xlu0 %2846
        %2848 = vrot.lane.b32.xlu0 %v2779, 96
        %v2849 = vpop.permute.xlu0 %2848
        %2850 = vrot.lane.b32.xlu0 %v2780, 96
        %v2851 = vpop.permute.xlu0 %2850
        %2852 = vrot.lane.b32.xlu0 %v2781, 96
        %v2853 = vpop.permute.xlu0 %2852
        %v2854 = vsel %vm1533, %v2807, %v2809
        %v2855 = vsel %vm1533, %v2809, %v2811
        %v2856 = vsel %vm1533, %v2813, %v2815
        %v2857 = vsel %vm1533, %v2815, %v2817
        %v2858 = vsel %vm1533, %v2819, %v2821
        %v2859 = vsel %vm1533, %v2821, %v2823
        %v2860 = vsel %vm1533, %v2825, %v2827
        %v2861 = vsel %vm1533, %v2827, %v2829
        %v2862 = vsel %vm1533, %v2831, %v2833
        %v2863 = vsel %vm1533, %v2833, %v2835
        %v2864 = vsel %vm1533, %v2837, %v2839
        %v2865 = vsel %vm1533, %v2839, %v2841
        %v2866 = vsel %vm1533, %v2843, %v2845
        %v2867 = vsel %vm1533, %v2845, %v2847
        %v2868 = vsel %vm1533, %v2849, %v2851
        %v2869 = vsel %vm1533, %v2851, %v2853
        %v2894 = vadd.f32 %v2702, %v2854
        %v2895 = vadd.f32 %v2703, %v2855
        %v2896 = vadd.f32 %v2704, %v2811
        %v2897 = vadd.f32 %v2705, %v2856
        %v2898 = vadd.f32 %v2706, %v2857
        %v2899 = vadd.f32 %v2707, %v2817
        %v2900 = vadd.f32 %v2708, %v2858
        %v2901 = vadd.f32 %v2709, %v2859
        %v2902 = vadd.f32 %v2710, %v2823
        %v2903 = vadd.f32 %v2711, %v2860
        %v2904 = vadd.f32 %v2712, %v2861
        %v2905 = vadd.f32 %v2713, %v2829
        %v2906 = vadd.f32 %v2714, %v2862
        %v2907 = vadd.f32 %v2715, %v2863
        %v2908 = vadd.f32 %v2716, %v2835
        %v2909 = vadd.f32 %v2717, %v2864
        %v2910 = vadd.f32 %v2718, %v2865
        %v2911 = vadd.f32 %v2719, %v2841
        %v2912 = vadd.f32 %v2720, %v2866
        %v2913 = vadd.f32 %v2721, %v2867
        %v2914 = vadd.f32 %v2722, %v2847
        %v2915 = vadd.f32 %v2723, %v2868
        %v2916 = vadd.f32 %v2724, %v2869
        %v2917 = vadd.f32 %v2725, %v2853
        %2918 = vset.pattern.permute.xlu0 22
        %2919 = vperm.xlu0 %2918, %v1116
        %v2920 = vpop.permute.xlu0 %2919
        %2922 = vset.pattern.permute.xlu0 22
        %2923 = vperm.xlu0 %2922, %v1117
        %v2924 = vpop.permute.xlu0 %2923
        %2926 = vset.pattern.permute.xlu0 22
        %2927 = vperm.xlu0 %2926, %v1118
        %v2928 = vpop.permute.xlu0 %2927
        %2930 = vset.pattern.permute.xlu0 22
        %2931 = vperm.xlu0 %2930, %v1119
        %v2932 = vpop.permute.xlu0 %2931
        %2934 = vset.pattern.permute.xlu0 22
        %2935 = vperm.xlu0 %2934, %v1120
        %v2936 = vpop.permute.xlu0 %2935
        %2938 = vset.pattern.permute.xlu0 22
        %2939 = vperm.xlu0 %2938, %v1121
        %v2940 = vpop.permute.xlu0 %2939
        %2942 = vset.pattern.permute.xlu0 22
        %2943 = vperm.xlu0 %2942, %v1122
        %v2944 = vpop.permute.xlu0 %2943
        %2946 = vset.pattern.permute.xlu0 22
        %2947 = vperm.xlu0 %2946, %v1123
        %v2948 = vpop.permute.xlu0 %2947
        %v2950 = vmul.f32 %v2920, %v1092
        %v2951 = vmul.f32 %v2920, %v1093
        %v2952 = vmul.f32 %v2920, %v1094
        %v2953 = vmul.f32 %v2924, %v1095
        %v2954 = vmul.f32 %v2924, %v1096
        %v2955 = vmul.f32 %v2924, %v1097
        %v2956 = vmul.f32 %v2928, %v1098
        %v2957 = vmul.f32 %v2928, %v1099
        %v2958 = vmul.f32 %v2928, %v1100
        %v2959 = vmul.f32 %v2932, %v1101
        %v2960 = vmul.f32 %v2932, %v1102
        %v2961 = vmul.f32 %v2932, %v1103
        %v2962 = vmul.f32 %v2936, %v1104
        %v2963 = vmul.f32 %v2936, %v1105
        %v2964 = vmul.f32 %v2936, %v1106
        %v2965 = vmul.f32 %v2940, %v1107
        %v2966 = vmul.f32 %v2940, %v1108
        %v2967 = vmul.f32 %v2940, %v1109
        %v2968 = vmul.f32 %v2944, %v1110
        %v2969 = vmul.f32 %v2944, %v1111
        %v2970 = vmul.f32 %v2944, %v1112
        %v2971 = vmul.f32 %v2948, %v1113
        %v2972 = vmul.f32 %v2948, %v1114
        %v2973 = vmul.f32 %v2948, %v1115
        %2998 = vrot.lane.b32.xlu0 %v2950, 80
        %v2999 = vpop.permute.xlu0 %2998
        %3000 = vrot.lane.b32.xlu0 %v2951, 80
        %v3001 = vpop.permute.xlu0 %3000
        %3002 = vrot.lane.b32.xlu0 %v2952, 80
        %v3003 = vpop.permute.xlu0 %3002
        %3004 = vrot.lane.b32.xlu0 %v2953, 80
        %v3005 = vpop.permute.xlu0 %3004
        %3006 = vrot.lane.b32.xlu0 %v2954, 80
        %v3007 = vpop.permute.xlu0 %3006
        %3008 = vrot.lane.b32.xlu0 %v2955, 80
        %v3009 = vpop.permute.xlu0 %3008
        %3010 = vrot.lane.b32.xlu0 %v2956, 80
        %v3011 = vpop.permute.xlu0 %3010
        %3012 = vrot.lane.b32.xlu0 %v2957, 80
        %v3013 = vpop.permute.xlu0 %3012
        %3014 = vrot.lane.b32.xlu0 %v2958, 80
        %v3015 = vpop.permute.xlu0 %3014
        %3016 = vrot.lane.b32.xlu0 %v2959, 80
        %v3017 = vpop.permute.xlu0 %3016
        %3018 = vrot.lane.b32.xlu0 %v2960, 80
        %v3019 = vpop.permute.xlu0 %3018
        %3020 = vrot.lane.b32.xlu0 %v2961, 80
        %v3021 = vpop.permute.xlu0 %3020
        %3022 = vrot.lane.b32.xlu0 %v2962, 80
        %v3023 = vpop.permute.xlu0 %3022
        %3024 = vrot.lane.b32.xlu0 %v2963, 80
        %v3025 = vpop.permute.xlu0 %3024
        %3026 = vrot.lane.b32.xlu0 %v2964, 80
        %v3027 = vpop.permute.xlu0 %3026
        %3028 = vrot.lane.b32.xlu0 %v2965, 80
        %v3029 = vpop.permute.xlu0 %3028
        %3030 = vrot.lane.b32.xlu0 %v2966, 80
        %v3031 = vpop.permute.xlu0 %3030
        %3032 = vrot.lane.b32.xlu0 %v2967, 80
        %v3033 = vpop.permute.xlu0 %3032
        %3034 = vrot.lane.b32.xlu0 %v2968, 80
        %v3035 = vpop.permute.xlu0 %3034
        %3036 = vrot.lane.b32.xlu0 %v2969, 80
        %v3037 = vpop.permute.xlu0 %3036
        %3038 = vrot.lane.b32.xlu0 %v2970, 80
        %v3039 = vpop.permute.xlu0 %3038
        %3040 = vrot.lane.b32.xlu0 %v2971, 80
        %v3041 = vpop.permute.xlu0 %3040
        %3042 = vrot.lane.b32.xlu0 %v2972, 80
        %v3043 = vpop.permute.xlu0 %3042
        %3044 = vrot.lane.b32.xlu0 %v2973, 80
        %v3045 = vpop.permute.xlu0 %3044
        %v3046 = vsel %vm1726, %v2999, %v3001
        %v3047 = vsel %vm1726, %v3001, %v3003
        %v3048 = vsel %vm1726, %v3005, %v3007
        %v3049 = vsel %vm1726, %v3007, %v3009
        %v3050 = vsel %vm1726, %v3011, %v3013
        %v3051 = vsel %vm1726, %v3013, %v3015
        %v3052 = vsel %vm1726, %v3017, %v3019
        %v3053 = vsel %vm1726, %v3019, %v3021
        %v3054 = vsel %vm1726, %v3023, %v3025
        %v3055 = vsel %vm1726, %v3025, %v3027
        %v3056 = vsel %vm1726, %v3029, %v3031
        %v3057 = vsel %vm1726, %v3031, %v3033
        %v3058 = vsel %vm1726, %v3035, %v3037
        %v3059 = vsel %vm1726, %v3037, %v3039
        %v3060 = vsel %vm1726, %v3041, %v3043
        %v3061 = vsel %vm1726, %v3043, %v3045
        %v3086 = vadd.f32 %v2894, %v3046
        %v3087 = vadd.f32 %v2895, %v3047
        %v3088 = vadd.f32 %v2896, %v3003
        %v3089 = vadd.f32 %v2897, %v3048
        %v3090 = vadd.f32 %v2898, %v3049
        %v3091 = vadd.f32 %v2899, %v3009
        %v3092 = vadd.f32 %v2900, %v3050
        %v3093 = vadd.f32 %v2901, %v3051
        %v3094 = vadd.f32 %v2902, %v3015
        %v3095 = vadd.f32 %v2903, %v3052
        %v3096 = vadd.f32 %v2904, %v3053
        %v3097 = vadd.f32 %v2905, %v3021
        %v3098 = vadd.f32 %v2906, %v3054
        %v3099 = vadd.f32 %v2907, %v3055
        %v3100 = vadd.f32 %v2908, %v3027
        %v3101 = vadd.f32 %v2909, %v3056
        %v3102 = vadd.f32 %v2910, %v3057
        %v3103 = vadd.f32 %v2911, %v3033
        %v3104 = vadd.f32 %v2912, %v3058
        %v3105 = vadd.f32 %v2913, %v3059
        %v3106 = vadd.f32 %v2914, %v3039
        %v3107 = vadd.f32 %v2915, %v3060
        %v3108 = vadd.f32 %v2916, %v3061
        %v3109 = vadd.f32 %v2917, %v3045
        %3110 = vset.pattern.permute.xlu0 29
        %3111 = vperm.xlu0 %3110, %v1116
        %v3112 = vpop.permute.xlu0 %3111
        %3114 = vset.pattern.permute.xlu0 29
        %3115 = vperm.xlu0 %3114, %v1117
        %v3116 = vpop.permute.xlu0 %3115
        %3118 = vset.pattern.permute.xlu0 29
        %3119 = vperm.xlu0 %3118, %v1118
        %v3120 = vpop.permute.xlu0 %3119
        %3122 = vset.pattern.permute.xlu0 29
        %3123 = vperm.xlu0 %3122, %v1119
        %v3124 = vpop.permute.xlu0 %3123
        %3126 = vset.pattern.permute.xlu0 29
        %3127 = vperm.xlu0 %3126, %v1120
        %v3128 = vpop.permute.xlu0 %3127
        %3130 = vset.pattern.permute.xlu0 29
        %3131 = vperm.xlu0 %3130, %v1121
        %v3132 = vpop.permute.xlu0 %3131
        %3134 = vset.pattern.permute.xlu0 29
        %3135 = vperm.xlu0 %3134, %v1122
        %v3136 = vpop.permute.xlu0 %3135
        %3138 = vset.pattern.permute.xlu0 29
        %3139 = vperm.xlu0 %3138, %v1123
        %v3140 = vpop.permute.xlu0 %3139
        %v3142 = vmul.f32 %v3112, %v1791
        %v3143 = vmul.f32 %v3112, %v1792
        %v3144 = vmul.f32 %v3112, %v1793
        %v3145 = vmul.f32 %v3116, %v1794
        %v3146 = vmul.f32 %v3116, %v1795
        %v3147 = vmul.f32 %v3116, %v1796
        %v3148 = vmul.f32 %v3120, %v1797
        %v3149 = vmul.f32 %v3120, %v1798
        %v3150 = vmul.f32 %v3120, %v1799
        %v3151 = vmul.f32 %v3124, %v1800
        %v3152 = vmul.f32 %v3124, %v1801
        %v3153 = vmul.f32 %v3124, %v1802
        %v3154 = vmul.f32 %v3128, %v1803
        %v3155 = vmul.f32 %v3128, %v1804
        %v3156 = vmul.f32 %v3128, %v1805
        %v3157 = vmul.f32 %v3132, %v1806
        %v3158 = vmul.f32 %v3132, %v1807
        %v3159 = vmul.f32 %v3132, %v1808
        %v3160 = vmul.f32 %v3136, %v1809
        %v3161 = vmul.f32 %v3136, %v1810
        %v3162 = vmul.f32 %v3136, %v1811
        %v3163 = vmul.f32 %v3140, %v1812
        %v3164 = vmul.f32 %v3140, %v1813
        %v3165 = vmul.f32 %v3140, %v1814
        %3190 = vrot.lane.b32.xlu0 %v3142, 64
        %v3191 = vpop.permute.xlu0 %3190
        %3192 = vrot.lane.b32.xlu0 %v3143, 64
        %v3193 = vpop.permute.xlu0 %3192
        %3194 = vrot.lane.b32.xlu0 %v3144, 64
        %v3195 = vpop.permute.xlu0 %3194
        %3196 = vrot.lane.b32.xlu0 %v3145, 64
        %v3197 = vpop.permute.xlu0 %3196
        %3198 = vrot.lane.b32.xlu0 %v3146, 64
        %v3199 = vpop.permute.xlu0 %3198
        %3200 = vrot.lane.b32.xlu0 %v3147, 64
        %v3201 = vpop.permute.xlu0 %3200
        %3202 = vrot.lane.b32.xlu0 %v3148, 64
        %v3203 = vpop.permute.xlu0 %3202
        %3204 = vrot.lane.b32.xlu0 %v3149, 64
        %v3205 = vpop.permute.xlu0 %3204
        %3206 = vrot.lane.b32.xlu0 %v3150, 64
        %v3207 = vpop.permute.xlu0 %3206
        %3208 = vrot.lane.b32.xlu0 %v3151, 64
        %v3209 = vpop.permute.xlu0 %3208
        %3210 = vrot.lane.b32.xlu0 %v3152, 64
        %v3211 = vpop.permute.xlu0 %3210
        %3212 = vrot.lane.b32.xlu0 %v3153, 64
        %v3213 = vpop.permute.xlu0 %3212
        %3214 = vrot.lane.b32.xlu0 %v3154, 64
        %v3215 = vpop.permute.xlu0 %3214
        %3216 = vrot.lane.b32.xlu0 %v3155, 64
        %v3217 = vpop.permute.xlu0 %3216
        %3218 = vrot.lane.b32.xlu0 %v3156, 64
        %v3219 = vpop.permute.xlu0 %3218
        %3220 = vrot.lane.b32.xlu0 %v3157, 64
        %v3221 = vpop.permute.xlu0 %3220
        %3222 = vrot.lane.b32.xlu0 %v3158, 64
        %v3223 = vpop.permute.xlu0 %3222
        %3224 = vrot.lane.b32.xlu0 %v3159, 64
        %v3225 = vpop.permute.xlu0 %3224
        %3226 = vrot.lane.b32.xlu0 %v3160, 64
        %v3227 = vpop.permute.xlu0 %3226
        %3228 = vrot.lane.b32.xlu0 %v3161, 64
        %v3229 = vpop.permute.xlu0 %3228
        %3230 = vrot.lane.b32.xlu0 %v3162, 64
        %v3231 = vpop.permute.xlu0 %3230
        %3232 = vrot.lane.b32.xlu0 %v3163, 64
        %v3233 = vpop.permute.xlu0 %3232
        %3234 = vrot.lane.b32.xlu0 %v3164, 64
        %v3235 = vpop.permute.xlu0 %3234
        %3236 = vrot.lane.b32.xlu0 %v3165, 64
        %v3237 = vpop.permute.xlu0 %3236
        %v3238 = vsel %vm1943, %v3191, %v3193
        %v3239 = vsel %vm1943, %v3193, %v3195
        %v3240 = vsel %vm1943, %v3197, %v3199
        %v3241 = vsel %vm1943, %v3199, %v3201
        %v3242 = vsel %vm1943, %v3203, %v3205
        %v3243 = vsel %vm1943, %v3205, %v3207
        %v3244 = vsel %vm1943, %v3209, %v3211
        %v3245 = vsel %vm1943, %v3211, %v3213
        %v3246 = vsel %vm1943, %v3215, %v3217
        %v3247 = vsel %vm1943, %v3217, %v3219
        %v3248 = vsel %vm1943, %v3221, %v3223
        %v3249 = vsel %vm1943, %v3223, %v3225
        %v3250 = vsel %vm1943, %v3227, %v3229
        %v3251 = vsel %vm1943, %v3229, %v3231
        %v3252 = vsel %vm1943, %v3233, %v3235
        %v3253 = vsel %vm1943, %v3235, %v3237
        %v3278 = vadd.f32 %v3086, %v3191
        %v3279 = vadd.f32 %v3087, %v3238
        %v3280 = vadd.f32 %v3088, %v3239
        %v3281 = vadd.f32 %v3089, %v3197
        %v3282 = vadd.f32 %v3090, %v3240
        %v3283 = vadd.f32 %v3091, %v3241
        %v3284 = vadd.f32 %v3092, %v3203
        %v3285 = vadd.f32 %v3093, %v3242
        %v3286 = vadd.f32 %v3094, %v3243
        %v3287 = vadd.f32 %v3095, %v3209
        %v3288 = vadd.f32 %v3096, %v3244
        %v3289 = vadd.f32 %v3097, %v3245
        %v3290 = vadd.f32 %v3098, %v3215
        %v3291 = vadd.f32 %v3099, %v3246
        %v3292 = vadd.f32 %v3100, %v3247
        %v3293 = vadd.f32 %v3101, %v3221
        %v3294 = vadd.f32 %v3102, %v3248
        %v3295 = vadd.f32 %v3103, %v3249
        %v3296 = vadd.f32 %v3104, %v3227
        %v3297 = vadd.f32 %v3105, %v3250
        %v3298 = vadd.f32 %v3106, %v3251
        %v3299 = vadd.f32 %v3107, %v3233
        %v3300 = vadd.f32 %v3108, %v3252
        %v3301 = vadd.f32 %v3109, %v3253
        %3302 = vset.pattern.permute.xlu0 36
        %3303 = vperm.xlu0 %3302, %v1116
        %v3304 = vpop.permute.xlu0 %3303
        %3306 = vset.pattern.permute.xlu0 36
        %3307 = vperm.xlu0 %3306, %v1117
        %v3308 = vpop.permute.xlu0 %3307
        %3310 = vset.pattern.permute.xlu0 36
        %3311 = vperm.xlu0 %3310, %v1118
        %v3312 = vpop.permute.xlu0 %3311
        %3314 = vset.pattern.permute.xlu0 36
        %3315 = vperm.xlu0 %3314, %v1119
        %v3316 = vpop.permute.xlu0 %3315
        %3318 = vset.pattern.permute.xlu0 36
        %3319 = vperm.xlu0 %3318, %v1120
        %v3320 = vpop.permute.xlu0 %3319
        %3322 = vset.pattern.permute.xlu0 36
        %3323 = vperm.xlu0 %3322, %v1121
        %v3324 = vpop.permute.xlu0 %3323
        %3326 = vset.pattern.permute.xlu0 36
        %3327 = vperm.xlu0 %3326, %v1122
        %v3328 = vpop.permute.xlu0 %3327
        %3330 = vset.pattern.permute.xlu0 36
        %3331 = vperm.xlu0 %3330, %v1123
        %v3332 = vpop.permute.xlu0 %3331
        %v3334 = vmul.f32 %v3304, %v1791
        %v3335 = vmul.f32 %v3304, %v1792
        %v3336 = vmul.f32 %v3304, %v1793
        %v3337 = vmul.f32 %v3308, %v1794
        %v3338 = vmul.f32 %v3308, %v1795
        %v3339 = vmul.f32 %v3308, %v1796
        %v3340 = vmul.f32 %v3312, %v1797
        %v3341 = vmul.f32 %v3312, %v1798
        %v3342 = vmul.f32 %v3312, %v1799
        %v3343 = vmul.f32 %v3316, %v1800
        %v3344 = vmul.f32 %v3316, %v1801
        %v3345 = vmul.f32 %v3316, %v1802
        %v3346 = vmul.f32 %v3320, %v1803
        %v3347 = vmul.f32 %v3320, %v1804
        %v3348 = vmul.f32 %v3320, %v1805
        %v3349 = vmul.f32 %v3324, %v1806
        %v3350 = vmul.f32 %v3324, %v1807
        %v3351 = vmul.f32 %v3324, %v1808
        %v3352 = vmul.f32 %v3328, %v1809
        %v3353 = vmul.f32 %v3328, %v1810
        %v3354 = vmul.f32 %v3328, %v1811
        %v3355 = vmul.f32 %v3332, %v1812
        %v3356 = vmul.f32 %v3332, %v1813
        %v3357 = vmul.f32 %v3332, %v1814
        %3382 = vrot.lane.b32.xlu0 %v3334, 48
        %v3383 = vpop.permute.xlu0 %3382
        %3384 = vrot.lane.b32.xlu0 %v3335, 48
        %v3385 = vpop.permute.xlu0 %3384
        %3386 = vrot.lane.b32.xlu0 %v3336, 48
        %v3387 = vpop.permute.xlu0 %3386
        %3388 = vrot.lane.b32.xlu0 %v3337, 48
        %v3389 = vpop.permute.xlu0 %3388
        %3390 = vrot.lane.b32.xlu0 %v3338, 48
        %v3391 = vpop.permute.xlu0 %3390
        %3392 = vrot.lane.b32.xlu0 %v3339, 48
        %v3393 = vpop.permute.xlu0 %3392
        %3394 = vrot.lane.b32.xlu0 %v3340, 48
        %v3395 = vpop.permute.xlu0 %3394
        %3396 = vrot.lane.b32.xlu0 %v3341, 48
        %v3397 = vpop.permute.xlu0 %3396
        %3398 = vrot.lane.b32.xlu0 %v3342, 48
        %v3399 = vpop.permute.xlu0 %3398
        %3400 = vrot.lane.b32.xlu0 %v3343, 48
        %v3401 = vpop.permute.xlu0 %3400
        %3402 = vrot.lane.b32.xlu0 %v3344, 48
        %v3403 = vpop.permute.xlu0 %3402
        %3404 = vrot.lane.b32.xlu0 %v3345, 48
        %v3405 = vpop.permute.xlu0 %3404
        %3406 = vrot.lane.b32.xlu0 %v3346, 48
        %v3407 = vpop.permute.xlu0 %3406
        %3408 = vrot.lane.b32.xlu0 %v3347, 48
        %v3409 = vpop.permute.xlu0 %3408
        %3410 = vrot.lane.b32.xlu0 %v3348, 48
        %v3411 = vpop.permute.xlu0 %3410
        %3412 = vrot.lane.b32.xlu0 %v3349, 48
        %v3413 = vpop.permute.xlu0 %3412
        %3414 = vrot.lane.b32.xlu0 %v3350, 48
        %v3415 = vpop.permute.xlu0 %3414
        %3416 = vrot.lane.b32.xlu0 %v3351, 48
        %v3417 = vpop.permute.xlu0 %3416
        %3418 = vrot.lane.b32.xlu0 %v3352, 48
        %v3419 = vpop.permute.xlu0 %3418
        %3420 = vrot.lane.b32.xlu0 %v3353, 48
        %v3421 = vpop.permute.xlu0 %3420
        %3422 = vrot.lane.b32.xlu0 %v3354, 48
        %v3423 = vpop.permute.xlu0 %3422
        %3424 = vrot.lane.b32.xlu0 %v3355, 48
        %v3425 = vpop.permute.xlu0 %3424
        %3426 = vrot.lane.b32.xlu0 %v3356, 48
        %v3427 = vpop.permute.xlu0 %3426
        %3428 = vrot.lane.b32.xlu0 %v3357, 48
        %v3429 = vpop.permute.xlu0 %3428
        %v3430 = vsel %vm2136, %v3383, %v3385
        %v3431 = vsel %vm2136, %v3385, %v3387
        %v3432 = vsel %vm2136, %v3389, %v3391
        %v3433 = vsel %vm2136, %v3391, %v3393
        %v3434 = vsel %vm2136, %v3395, %v3397
        %v3435 = vsel %vm2136, %v3397, %v3399
        %v3436 = vsel %vm2136, %v3401, %v3403
        %v3437 = vsel %vm2136, %v3403, %v3405
        %v3438 = vsel %vm2136, %v3407, %v3409
        %v3439 = vsel %vm2136, %v3409, %v3411
        %v3440 = vsel %vm2136, %v3413, %v3415
        %v3441 = vsel %vm2136, %v3415, %v3417
        %v3442 = vsel %vm2136, %v3419, %v3421
        %v3443 = vsel %vm2136, %v3421, %v3423
        %v3444 = vsel %vm2136, %v3425, %v3427
        %v3445 = vsel %vm2136, %v3427, %v3429
        %v3470 = vadd.f32 %v3278, %v3383
        %v3471 = vadd.f32 %v3279, %v3430
        %v3472 = vadd.f32 %v3280, %v3431
        %v3473 = vadd.f32 %v3281, %v3389
        %v3474 = vadd.f32 %v3282, %v3432
        %v3475 = vadd.f32 %v3283, %v3433
        %v3476 = vadd.f32 %v3284, %v3395
        %v3477 = vadd.f32 %v3285, %v3434
        %v3478 = vadd.f32 %v3286, %v3435
        %v3479 = vadd.f32 %v3287, %v3401
        %v3480 = vadd.f32 %v3288, %v3436
        %v3481 = vadd.f32 %v3289, %v3437
        %v3482 = vadd.f32 %v3290, %v3407
        %v3483 = vadd.f32 %v3291, %v3438
        %v3484 = vadd.f32 %v3292, %v3439
        %v3485 = vadd.f32 %v3293, %v3413
        %v3486 = vadd.f32 %v3294, %v3440
        %v3487 = vadd.f32 %v3295, %v3441
        %v3488 = vadd.f32 %v3296, %v3419
        %v3489 = vadd.f32 %v3297, %v3442
        %v3490 = vadd.f32 %v3298, %v3443
        %v3491 = vadd.f32 %v3299, %v3425
        %v3492 = vadd.f32 %v3300, %v3444
        %v3493 = vadd.f32 %v3301, %v3445
        %3494 = vset.pattern.permute.xlu0 43
        %3495 = vperm.xlu0 %3494, %v1116
        %v3496 = vpop.permute.xlu0 %3495
        %3498 = vset.pattern.permute.xlu0 43
        %3499 = vperm.xlu0 %3498, %v1117
        %v3500 = vpop.permute.xlu0 %3499
        %3502 = vset.pattern.permute.xlu0 43
        %3503 = vperm.xlu0 %3502, %v1118
        %v3504 = vpop.permute.xlu0 %3503
        %3506 = vset.pattern.permute.xlu0 43
        %3507 = vperm.xlu0 %3506, %v1119
        %v3508 = vpop.permute.xlu0 %3507
        %3510 = vset.pattern.permute.xlu0 43
        %3511 = vperm.xlu0 %3510, %v1120
        %v3512 = vpop.permute.xlu0 %3511
        %3514 = vset.pattern.permute.xlu0 43
        %3515 = vperm.xlu0 %3514, %v1121
        %v3516 = vpop.permute.xlu0 %3515
        %3518 = vset.pattern.permute.xlu0 43
        %3519 = vperm.xlu0 %3518, %v1122
        %v3520 = vpop.permute.xlu0 %3519
        %3522 = vset.pattern.permute.xlu0 43
        %3523 = vperm.xlu0 %3522, %v1123
        %v3524 = vpop.permute.xlu0 %3523
        %v3526 = vmul.f32 %v3496, %v1791
        %v3527 = vmul.f32 %v3496, %v1792
        %v3528 = vmul.f32 %v3496, %v1793
        %v3529 = vmul.f32 %v3500, %v1794
        %v3530 = vmul.f32 %v3500, %v1795
        %v3531 = vmul.f32 %v3500, %v1796
        %v3532 = vmul.f32 %v3504, %v1797
        %v3533 = vmul.f32 %v3504, %v1798
        %v3534 = vmul.f32 %v3504, %v1799
        %v3535 = vmul.f32 %v3508, %v1800
        %v3536 = vmul.f32 %v3508, %v1801
        %v3537 = vmul.f32 %v3508, %v1802
        %v3538 = vmul.f32 %v3512, %v1803
        %v3539 = vmul.f32 %v3512, %v1804
        %v3540 = vmul.f32 %v3512, %v1805
        %v3541 = vmul.f32 %v3516, %v1806
        %v3542 = vmul.f32 %v3516, %v1807
        %v3543 = vmul.f32 %v3516, %v1808
        %v3544 = vmul.f32 %v3520, %v1809
        %v3545 = vmul.f32 %v3520, %v1810
        %v3546 = vmul.f32 %v3520, %v1811
        %v3547 = vmul.f32 %v3524, %v1812
        %v3548 = vmul.f32 %v3524, %v1813
        %v3549 = vmul.f32 %v3524, %v1814
        %3574 = vrot.lane.b32.xlu0 %v3526, 32
        %v3575 = vpop.permute.xlu0 %3574
        %3576 = vrot.lane.b32.xlu0 %v3527, 32
        %v3577 = vpop.permute.xlu0 %3576
        %3578 = vrot.lane.b32.xlu0 %v3528, 32
        %v3579 = vpop.permute.xlu0 %3578
        %3580 = vrot.lane.b32.xlu0 %v3529, 32
        %v3581 = vpop.permute.xlu0 %3580
        %3582 = vrot.lane.b32.xlu0 %v3530, 32
        %v3583 = vpop.permute.xlu0 %3582
        %3584 = vrot.lane.b32.xlu0 %v3531, 32
        %v3585 = vpop.permute.xlu0 %3584
        %3586 = vrot.lane.b32.xlu0 %v3532, 32
        %v3587 = vpop.permute.xlu0 %3586
        %3588 = vrot.lane.b32.xlu0 %v3533, 32
        %v3589 = vpop.permute.xlu0 %3588
        %3590 = vrot.lane.b32.xlu0 %v3534, 32
        %v3591 = vpop.permute.xlu0 %3590
        %3592 = vrot.lane.b32.xlu0 %v3535, 32
        %v3593 = vpop.permute.xlu0 %3592
        %3594 = vrot.lane.b32.xlu0 %v3536, 32
        %v3595 = vpop.permute.xlu0 %3594
        %3596 = vrot.lane.b32.xlu0 %v3537, 32
        %v3597 = vpop.permute.xlu0 %3596
        %3598 = vrot.lane.b32.xlu0 %v3538, 32
        %v3599 = vpop.permute.xlu0 %3598
        %3600 = vrot.lane.b32.xlu0 %v3539, 32
        %v3601 = vpop.permute.xlu0 %3600
        %3602 = vrot.lane.b32.xlu0 %v3540, 32
        %v3603 = vpop.permute.xlu0 %3602
        %3604 = vrot.lane.b32.xlu0 %v3541, 32
        %v3605 = vpop.permute.xlu0 %3604
        %3606 = vrot.lane.b32.xlu0 %v3542, 32
        %v3607 = vpop.permute.xlu0 %3606
        %3608 = vrot.lane.b32.xlu0 %v3543, 32
        %v3609 = vpop.permute.xlu0 %3608
        %3610 = vrot.lane.b32.xlu0 %v3544, 32
        %v3611 = vpop.permute.xlu0 %3610
        %3612 = vrot.lane.b32.xlu0 %v3545, 32
        %v3613 = vpop.permute.xlu0 %3612
        %3614 = vrot.lane.b32.xlu0 %v3546, 32
        %v3615 = vpop.permute.xlu0 %3614
        %3616 = vrot.lane.b32.xlu0 %v3547, 32
        %v3617 = vpop.permute.xlu0 %3616
        %3618 = vrot.lane.b32.xlu0 %v3548, 32
        %v3619 = vpop.permute.xlu0 %3618
        %3620 = vrot.lane.b32.xlu0 %v3549, 32
        %v3621 = vpop.permute.xlu0 %3620
        %v3622 = vsel %vm626, %v3575, %v3577
        %v3623 = vsel %vm626, %v3577, %v3579
        %v3624 = vsel %vm626, %v3581, %v3583
        %v3625 = vsel %vm626, %v3583, %v3585
        %v3626 = vsel %vm626, %v3587, %v3589
        %v3627 = vsel %vm626, %v3589, %v3591
        %v3628 = vsel %vm626, %v3593, %v3595
        %v3629 = vsel %vm626, %v3595, %v3597
        %v3630 = vsel %vm626, %v3599, %v3601
        %v3631 = vsel %vm626, %v3601, %v3603
        %v3632 = vsel %vm626, %v3605, %v3607
        %v3633 = vsel %vm626, %v3607, %v3609
        %v3634 = vsel %vm626, %v3611, %v3613
        %v3635 = vsel %vm626, %v3613, %v3615
        %v3636 = vsel %vm626, %v3617, %v3619
        %v3637 = vsel %vm626, %v3619, %v3621
        %v3662 = vadd.f32 %v3470, %v3575
        %v3663 = vadd.f32 %v3471, %v3622
        %v3664 = vadd.f32 %v3472, %v3623
        %v3665 = vadd.f32 %v3473, %v3581
        %v3666 = vadd.f32 %v3474, %v3624
        %v3667 = vadd.f32 %v3475, %v3625
        %v3668 = vadd.f32 %v3476, %v3587
        %v3669 = vadd.f32 %v3477, %v3626
        %v3670 = vadd.f32 %v3478, %v3627
        %v3671 = vadd.f32 %v3479, %v3593
        %v3672 = vadd.f32 %v3480, %v3628
        %v3673 = vadd.f32 %v3481, %v3629
        %v3674 = vadd.f32 %v3482, %v3599
        %v3675 = vadd.f32 %v3483, %v3630
        %v3676 = vadd.f32 %v3484, %v3631
        %v3677 = vadd.f32 %v3485, %v3605
        %v3678 = vadd.f32 %v3486, %v3632
        %v3679 = vadd.f32 %v3487, %v3633
        %v3680 = vadd.f32 %v3488, %v3611
        %v3681 = vadd.f32 %v3489, %v3634
        %v3682 = vadd.f32 %v3490, %v3635
        %v3683 = vadd.f32 %v3491, %v3617
        %v3684 = vadd.f32 %v3492, %v3636
        %v3685 = vadd.f32 %v3493, %v3637
        %s3686 = scalar_lea.vmem %s7, 1
        %v3687 = vld [vmem:[%s3686] ss:$8 sm:$0x3]
        %v3689 = vperm.slane %v3687, 0
        %v3690 = vperm.slane %v3687, 1
        %3691 = vrot.lane.b32.xlu0 %v3689, 78
        %v3692 = vpop.permute.xlu0 %3691
        %3693 = vrot.lane.b32.xlu0 %v3690, 78
        %v3694 = vpop.permute.xlu0 %3693
        %vm3695 = vcmask 637952
        %v3696 = vsel %vm3695, %v3692, %v3694
        %v3700 = vmul.f32 %v3662, %v3692
        %v3701 = vmul.f32 %v3663, %v3696
        %v3702 = vmul.f32 %v3664, %v3694
        %v3703 = vmul.f32 %v3665, %v3692
        %v3704 = vmul.f32 %v3666, %v3696
        %v3705 = vmul.f32 %v3667, %v3694
        %v3706 = vmul.f32 %v3668, %v3692
        %v3707 = vmul.f32 %v3669, %v3696
        %v3708 = vmul.f32 %v3670, %v3694
        %v3709 = vmul.f32 %v3671, %v3692
        %v3710 = vmul.f32 %v3672, %v3696
        %v3711 = vmul.f32 %v3673, %v3694
        %v3712 = vmul.f32 %v3674, %v3692
        %v3713 = vmul.f32 %v3675, %v3696
        %v3714 = vmul.f32 %v3676, %v3694
        %v3715 = vmul.f32 %v3677, %v3692
        %v3716 = vmul.f32 %v3678, %v3696
        %v3717 = vmul.f32 %v3679, %v3694
        %v3718 = vmul.f32 %v3680, %v3692
        %v3719 = vmul.f32 %v3681, %v3696
        %v3720 = vmul.f32 %v3682, %v3694
        %v3721 = vmul.f32 %v3683, %v3692
        %v3722 = vmul.f32 %v3684, %v3696
        %v3723 = vmul.f32 %v3685, %v3694
        %3748 = vrot.lane.b32.xlu0 %v3700, 127
        %v3749 = vpop.permute.xlu0 %3748
        %3750 = vrot.lane.b32.xlu0 %v3701, 127
        %v3751 = vpop.permute.xlu0 %3750
        %3752 = vrot.lane.b32.xlu0 %v3702, 127
        %v3753 = vpop.permute.xlu0 %3752
        %3754 = vrot.lane.b32.xlu0 %v3703, 127
        %v3755 = vpop.permute.xlu0 %3754
        %3756 = vrot.lane.b32.xlu0 %v3704, 127
        %v3757 = vpop.permute.xlu0 %3756
        %3758 = vrot.lane.b32.xlu0 %v3705, 127
        %v3759 = vpop.permute.xlu0 %3758
        %3760 = vrot.lane.b32.xlu0 %v3706, 127
        %v3761 = vpop.permute.xlu0 %3760
        %3762 = vrot.lane.b32.xlu0 %v3707, 127
        %v3763 = vpop.permute.xlu0 %3762
        %3764 = vrot.lane.b32.xlu0 %v3708, 127
        %v3765 = vpop.permute.xlu0 %3764
        %3766 = vrot.lane.b32.xlu0 %v3709, 127
        %v3767 = vpop.permute.xlu0 %3766
        %3768 = vrot.lane.b32.xlu0 %v3710, 127
        %v3769 = vpop.permute.xlu0 %3768
        %3770 = vrot.lane.b32.xlu0 %v3711, 127
        %v3771 = vpop.permute.xlu0 %3770
        %3772 = vrot.lane.b32.xlu0 %v3712, 127
        %v3773 = vpop.permute.xlu0 %3772
        %3774 = vrot.lane.b32.xlu0 %v3713, 127
        %v3775 = vpop.permute.xlu0 %3774
        %3776 = vrot.lane.b32.xlu0 %v3714, 127
        %v3777 = vpop.permute.xlu0 %3776
        %3778 = vrot.lane.b32.xlu0 %v3715, 127
        %v3779 = vpop.permute.xlu0 %3778
        %3780 = vrot.lane.b32.xlu0 %v3716, 127
        %v3781 = vpop.permute.xlu0 %3780
        %3782 = vrot.lane.b32.xlu0 %v3717, 127
        %v3783 = vpop.permute.xlu0 %3782
        %3784 = vrot.lane.b32.xlu0 %v3718, 127
        %v3785 = vpop.permute.xlu0 %3784
        %3786 = vrot.lane.b32.xlu0 %v3719, 127
        %v3787 = vpop.permute.xlu0 %3786
        %3788 = vrot.lane.b32.xlu0 %v3720, 127
        %v3789 = vpop.permute.xlu0 %3788
        %3790 = vrot.lane.b32.xlu0 %v3721, 127
        %v3791 = vpop.permute.xlu0 %3790
        %3792 = vrot.lane.b32.xlu0 %v3722, 127
        %v3793 = vpop.permute.xlu0 %3792
        %3794 = vrot.lane.b32.xlu0 %v3723, 127
        %v3795 = vpop.permute.xlu0 %3794
        %vm3796 = vcmask 1039360
        %v3797 = vsel %vm3796, %v3749, %v3751
        %v3798 = vsel %vm3796, %v3751, %v3753
        %v3799 = vsel %vm3796, %v3755, %v3757
        %v3800 = vsel %vm3796, %v3757, %v3759
        %v3801 = vsel %vm3796, %v3761, %v3763
        %v3802 = vsel %vm3796, %v3763, %v3765
        %v3803 = vsel %vm3796, %v3767, %v3769
        %v3804 = vsel %vm3796, %v3769, %v3771
        %v3805 = vsel %vm3796, %v3773, %v3775
        %v3806 = vsel %vm3796, %v3775, %v3777
        %v3807 = vsel %vm3796, %v3779, %v3781
        %v3808 = vsel %vm3796, %v3781, %v3783
        %v3809 = vsel %vm3796, %v3785, %v3787
        %v3810 = vsel %vm3796, %v3787, %v3789
        %v3811 = vsel %vm3796, %v3791, %v3793
        %v3812 = vsel %vm3796, %v3793, %v3795
        %v3837 = vadd.f32 %v2430, %v3797
        %v3838 = vadd.f32 %v2431, %v3798
        %v3839 = vadd.f32 %v2432, %v3753
        %v3840 = vadd.f32 %v2433, %v3799
        %v3841 = vadd.f32 %v2434, %v3800
        %v3842 = vadd.f32 %v2435, %v3759
        %v3843 = vadd.f32 %v2436, %v3801
        %v3844 = vadd.f32 %v2437, %v3802
        %v3845 = vadd.f32 %v2438, %v3765
        %v3846 = vadd.f32 %v2439, %v3803
        %v3847 = vadd.f32 %v2440, %v3804
        %v3848 = vadd.f32 %v2441, %v3771
        %v3849 = vadd.f32 %v2442, %v3805
        %v3850 = vadd.f32 %v2443, %v3806
        %v3851 = vadd.f32 %v2444, %v3777
        %v3852 = vadd.f32 %v2445, %v3807
        %v3853 = vadd.f32 %v2446, %v3808
        %v3854 = vadd.f32 %v2447, %v3783
        %v3855 = vadd.f32 %v2448, %v3809
        %v3856 = vadd.f32 %v2449, %v3810
        %v3857 = vadd.f32 %v2450, %v3789
        %v3858 = vadd.f32 %v2451, %v3811
        %v3859 = vadd.f32 %v2452, %v3812
        %v3860 = vadd.f32 %v2453, %v3795
        %3861 = vset.pattern.permute.xlu0 2
        %3862 = vperm.xlu0 %3861, %v1116
        %v3863 = vpop.permute.xlu0 %3862
        %3865 = vset.pattern.permute.xlu0 2
        %3866 = vperm.xlu0 %3865, %v1117
        %v3867 = vpop.permute.xlu0 %3866
        %3869 = vset.pattern.permute.xlu0 2
        %3870 = vperm.xlu0 %3869, %v1118
        %v3871 = vpop.permute.xlu0 %3870
        %3873 = vset.pattern.permute.xlu0 2
        %3874 = vperm.xlu0 %3873, %v1119
        %v3875 = vpop.permute.xlu0 %3874
        %3877 = vset.pattern.permute.xlu0 2
        %3878 = vperm.xlu0 %3877, %v1120
        %v3879 = vpop.permute.xlu0 %3878
        %3881 = vset.pattern.permute.xlu0 2
        %3882 = vperm.xlu0 %3881, %v1121
        %v3883 = vpop.permute.xlu0 %3882
        %3885 = vset.pattern.permute.xlu0 2
        %3886 = vperm.xlu0 %3885, %v1122
        %v3887 = vpop.permute.xlu0 %3886
        %3889 = vset.pattern.permute.xlu0 2
        %3890 = vperm.xlu0 %3889, %v1123
        %v3891 = vpop.permute.xlu0 %3890
        %v3893 = vmul.f32 %v3863, %v1092
        %v3894 = vmul.f32 %v3863, %v1093
        %v3895 = vmul.f32 %v3863, %v1094
        %v3896 = vmul.f32 %v3867, %v1095
        %v3897 = vmul.f32 %v3867, %v1096
        %v3898 = vmul.f32 %v3867, %v1097
        %v3899 = vmul.f32 %v3871, %v1098
        %v3900 = vmul.f32 %v3871, %v1099
        %v3901 = vmul.f32 %v3871, %v1100
        %v3902 = vmul.f32 %v3875, %v1101
        %v3903 = vmul.f32 %v3875, %v1102
        %v3904 = vmul.f32 %v3875, %v1103
        %v3905 = vmul.f32 %v3879, %v1104
        %v3906 = vmul.f32 %v3879, %v1105
        %v3907 = vmul.f32 %v3879, %v1106
        %v3908 = vmul.f32 %v3883, %v1107
        %v3909 = vmul.f32 %v3883, %v1108
        %v3910 = vmul.f32 %v3883, %v1109
        %v3911 = vmul.f32 %v3887, %v1110
        %v3912 = vmul.f32 %v3887, %v1111
        %v3913 = vmul.f32 %v3887, %v1112
        %v3914 = vmul.f32 %v3891, %v1113
        %v3915 = vmul.f32 %v3891, %v1114
        %v3916 = vmul.f32 %v3891, %v1115
        %v3917 = vadd.f32 %v3893, 0.0
        %v3918 = vadd.f32 %v3894, 0.0
        %v3919 = vadd.f32 %v3895, 0.0
        %v3920 = vadd.f32 %v3896, 0.0
        %v3921 = vadd.f32 %v3897, 0.0
        %v3922 = vadd.f32 %v3898, 0.0
        %v3923 = vadd.f32 %v3899, 0.0
        %v3924 = vadd.f32 %v3900, 0.0
        %v3925 = vadd.f32 %v3901, 0.0
        %v3926 = vadd.f32 %v3902, 0.0
        %v3927 = vadd.f32 %v3903, 0.0
        %v3928 = vadd.f32 %v3904, 0.0
        %v3929 = vadd.f32 %v3905, 0.0
        %v3930 = vadd.f32 %v3906, 0.0
        %v3931 = vadd.f32 %v3907, 0.0
        %v3932 = vadd.f32 %v3908, 0.0
        %v3933 = vadd.f32 %v3909, 0.0
        %v3934 = vadd.f32 %v3910, 0.0
        %v3935 = vadd.f32 %v3911, 0.0
        %v3936 = vadd.f32 %v3912, 0.0
        %v3937 = vadd.f32 %v3913, 0.0
        %v3938 = vadd.f32 %v3914, 0.0
        %v3939 = vadd.f32 %v3915, 0.0
        %v3940 = vadd.f32 %v3916, 0.0
        %3941 = vset.pattern.permute.xlu0 9
        %3942 = vperm.xlu0 %3941, %v1116
        %v3943 = vpop.permute.xlu0 %3942
        %3945 = vset.pattern.permute.xlu0 9
        %3946 = vperm.xlu0 %3945, %v1117
        %v3947 = vpop.permute.xlu0 %3946
        %3949 = vset.pattern.permute.xlu0 9
        %3950 = vperm.xlu0 %3949, %v1118
        %v3951 = vpop.permute.xlu0 %3950
        %3953 = vset.pattern.permute.xlu0 9
        %3954 = vperm.xlu0 %3953, %v1119
        %v3955 = vpop.permute.xlu0 %3954
        %3957 = vset.pattern.permute.xlu0 9
        %3958 = vperm.xlu0 %3957, %v1120
        %v3959 = vpop.permute.xlu0 %3958
        %3961 = vset.pattern.permute.xlu0 9
        %3962 = vperm.xlu0 %3961, %v1121
        %v3963 = vpop.permute.xlu0 %3962
        %3965 = vset.pattern.permute.xlu0 9
        %3966 = vperm.xlu0 %3965, %v1122
        %v3967 = vpop.permute.xlu0 %3966
        %3969 = vset.pattern.permute.xlu0 9
        %3970 = vperm.xlu0 %3969, %v1123
        %v3971 = vpop.permute.xlu0 %3970
        %v3973 = vmul.f32 %v3943, %v1092
        %v3974 = vmul.f32 %v3943, %v1093
        %v3975 = vmul.f32 %v3943, %v1094
        %v3976 = vmul.f32 %v3947, %v1095
        %v3977 = vmul.f32 %v3947, %v1096
        %v3978 = vmul.f32 %v3947, %v1097
        %v3979 = vmul.f32 %v3951, %v1098
        %v3980 = vmul.f32 %v3951, %v1099
        %v3981 = vmul.f32 %v3951, %v1100
        %v3982 = vmul.f32 %v3955, %v1101
        %v3983 = vmul.f32 %v3955, %v1102
        %v3984 = vmul.f32 %v3955, %v1103
        %v3985 = vmul.f32 %v3959, %v1104
        %v3986 = vmul.f32 %v3959, %v1105
        %v3987 = vmul.f32 %v3959, %v1106
        %v3988 = vmul.f32 %v3963, %v1107
        %v3989 = vmul.f32 %v3963, %v1108
        %v3990 = vmul.f32 %v3963, %v1109
        %v3991 = vmul.f32 %v3967, %v1110
        %v3992 = vmul.f32 %v3967, %v1111
        %v3993 = vmul.f32 %v3967, %v1112
        %v3994 = vmul.f32 %v3971, %v1113
        %v3995 = vmul.f32 %v3971, %v1114
        %v3996 = vmul.f32 %v3971, %v1115
        %4021 = vrot.lane.b32.xlu0 %v3973, 112
        %v4022 = vpop.permute.xlu0 %4021
        %4023 = vrot.lane.b32.xlu0 %v3974, 112
        %v4024 = vpop.permute.xlu0 %4023
        %4025 = vrot.lane.b32.xlu0 %v3975, 112
        %v4026 = vpop.permute.xlu0 %4025
        %4027 = vrot.lane.b32.xlu0 %v3976, 112
        %v4028 = vpop.permute.xlu0 %4027
        %4029 = vrot.lane.b32.xlu0 %v3977, 112
        %v4030 = vpop.permute.xlu0 %4029
        %4031 = vrot.lane.b32.xlu0 %v3978, 112
        %v4032 = vpop.permute.xlu0 %4031
        %4033 = vrot.lane.b32.xlu0 %v3979, 112
        %v4034 = vpop.permute.xlu0 %4033
        %4035 = vrot.lane.b32.xlu0 %v3980, 112
        %v4036 = vpop.permute.xlu0 %4035
        %4037 = vrot.lane.b32.xlu0 %v3981, 112
        %v4038 = vpop.permute.xlu0 %4037
        %4039 = vrot.lane.b32.xlu0 %v3982, 112
        %v4040 = vpop.permute.xlu0 %4039
        %4041 = vrot.lane.b32.xlu0 %v3983, 112
        %v4042 = vpop.permute.xlu0 %4041
        %4043 = vrot.lane.b32.xlu0 %v3984, 112
        %v4044 = vpop.permute.xlu0 %4043
        %4045 = vrot.lane.b32.xlu0 %v3985, 112
        %v4046 = vpop.permute.xlu0 %4045
        %4047 = vrot.lane.b32.xlu0 %v3986, 112
        %v4048 = vpop.permute.xlu0 %4047
        %4049 = vrot.lane.b32.xlu0 %v3987, 112
        %v4050 = vpop.permute.xlu0 %4049
        %4051 = vrot.lane.b32.xlu0 %v3988, 112
        %v4052 = vpop.permute.xlu0 %4051
        %4053 = vrot.lane.b32.xlu0 %v3989, 112
        %v4054 = vpop.permute.xlu0 %4053
        %4055 = vrot.lane.b32.xlu0 %v3990, 112
        %v4056 = vpop.permute.xlu0 %4055
        %4057 = vrot.lane.b32.xlu0 %v3991, 112
        %v4058 = vpop.permute.xlu0 %4057
        %4059 = vrot.lane.b32.xlu0 %v3992, 112
        %v4060 = vpop.permute.xlu0 %4059
        %4061 = vrot.lane.b32.xlu0 %v3993, 112
        %v4062 = vpop.permute.xlu0 %4061
        %4063 = vrot.lane.b32.xlu0 %v3994, 112
        %v4064 = vpop.permute.xlu0 %4063
        %4065 = vrot.lane.b32.xlu0 %v3995, 112
        %v4066 = vpop.permute.xlu0 %4065
        %4067 = vrot.lane.b32.xlu0 %v3996, 112
        %v4068 = vpop.permute.xlu0 %4067
        %v4069 = vsel %vm1340, %v4022, %v4024
        %v4070 = vsel %vm1340, %v4024, %v4026
        %v4071 = vsel %vm1340, %v4028, %v4030
        %v4072 = vsel %vm1340, %v4030, %v4032
        %v4073 = vsel %vm1340, %v4034, %v4036
        %v4074 = vsel %vm1340, %v4036, %v4038
        %v4075 = vsel %vm1340, %v4040, %v4042
        %v4076 = vsel %vm1340, %v4042, %v4044
        %v4077 = vsel %vm1340, %v4046, %v4048
        %v4078 = vsel %vm1340, %v4048, %v4050
        %v4079 = vsel %vm1340, %v4052, %v4054
        %v4080 = vsel %vm1340, %v4054, %v4056
        %v4081 = vsel %vm1340, %v4058, %v4060
        %v4082 = vsel %vm1340, %v4060, %v4062
        %v4083 = vsel %vm1340, %v4064, %v4066
        %v4084 = vsel %vm1340, %v4066, %v4068
        %v4109 = vadd.f32 %v3917, %v4069
        %v4110 = vadd.f32 %v3918, %v4070
        %v4111 = vadd.f32 %v3919, %v4026
        %v4112 = vadd.f32 %v3920, %v4071
        %v4113 = vadd.f32 %v3921, %v4072
        %v4114 = vadd.f32 %v3922, %v4032
        %v4115 = vadd.f32 %v3923, %v4073
        %v4116 = vadd.f32 %v3924, %v4074
        %v4117 = vadd.f32 %v3925, %v4038
        %v4118 = vadd.f32 %v3926, %v4075
        %v4119 = vadd.f32 %v3927, %v4076
        %v4120 = vadd.f32 %v3928, %v4044
        %v4121 = vadd.f32 %v3929, %v4077
        %v4122 = vadd.f32 %v3930, %v4078
        %v4123 = vadd.f32 %v3931, %v4050
        %v4124 = vadd.f32 %v3932, %v4079
        %v4125 = vadd.f32 %v3933, %v4080
        %v4126 = vadd.f32 %v3934, %v4056
        %v4127 = vadd.f32 %v3935, %v4081
        %v4128 = vadd.f32 %v3936, %v4082
        %v4129 = vadd.f32 %v3937, %v4062
        %v4130 = vadd.f32 %v3938, %v4083
        %v4131 = vadd.f32 %v3939, %v4084
        %v4132 = vadd.f32 %v3940, %v4068
        %4133 = vset.pattern.permute.xlu0 16
        %4134 = vperm.xlu0 %4133, %v1116
        %v4135 = vpop.permute.xlu0 %4134
        %4137 = vset.pattern.permute.xlu0 16
        %4138 = vperm.xlu0 %4137, %v1117
        %v4139 = vpop.permute.xlu0 %4138
        %4141 = vset.pattern.permute.xlu0 16
        %4142 = vperm.xlu0 %4141, %v1118
        %v4143 = vpop.permute.xlu0 %4142
        %4145 = vset.pattern.permute.xlu0 16
        %4146 = vperm.xlu0 %4145, %v1119
        %v4147 = vpop.permute.xlu0 %4146
        %4149 = vset.pattern.permute.xlu0 16
        %4150 = vperm.xlu0 %4149, %v1120
        %v4151 = vpop.permute.xlu0 %4150
        %4153 = vset.pattern.permute.xlu0 16
        %4154 = vperm.xlu0 %4153, %v1121
        %v4155 = vpop.permute.xlu0 %4154
        %4157 = vset.pattern.permute.xlu0 16
        %4158 = vperm.xlu0 %4157, %v1122
        %v4159 = vpop.permute.xlu0 %4158
        %4161 = vset.pattern.permute.xlu0 16
        %4162 = vperm.xlu0 %4161, %v1123
        %v4163 = vpop.permute.xlu0 %4162
        %v4165 = vmul.f32 %v4135, %v1092
        %v4166 = vmul.f32 %v4135, %v1093
        %v4167 = vmul.f32 %v4135, %v1094
        %v4168 = vmul.f32 %v4139, %v1095
        %v4169 = vmul.f32 %v4139, %v1096
        %v4170 = vmul.f32 %v4139, %v1097
        %v4171 = vmul.f32 %v4143, %v1098
        %v4172 = vmul.f32 %v4143, %v1099
        %v4173 = vmul.f32 %v4143, %v1100
        %v4174 = vmul.f32 %v4147, %v1101
        %v4175 = vmul.f32 %v4147, %v1102
        %v4176 = vmul.f32 %v4147, %v1103
        %v4177 = vmul.f32 %v4151, %v1104
        %v4178 = vmul.f32 %v4151, %v1105
        %v4179 = vmul.f32 %v4151, %v1106
        %v4180 = vmul.f32 %v4155, %v1107
        %v4181 = vmul.f32 %v4155, %v1108
        %v4182 = vmul.f32 %v4155, %v1109
        %v4183 = vmul.f32 %v4159, %v1110
        %v4184 = vmul.f32 %v4159, %v1111
        %v4185 = vmul.f32 %v4159, %v1112
        %v4186 = vmul.f32 %v4163, %v1113
        %v4187 = vmul.f32 %v4163, %v1114
        %v4188 = vmul.f32 %v4163, %v1115
        %4213 = vrot.lane.b32.xlu0 %v4165, 96
        %v4214 = vpop.permute.xlu0 %4213
        %4215 = vrot.lane.b32.xlu0 %v4166, 96
        %v4216 = vpop.permute.xlu0 %4215
        %4217 = vrot.lane.b32.xlu0 %v4167, 96
        %v4218 = vpop.permute.xlu0 %4217
        %4219 = vrot.lane.b32.xlu0 %v4168, 96
        %v4220 = vpop.permute.xlu0 %4219
        %4221 = vrot.lane.b32.xlu0 %v4169, 96
        %v4222 = vpop.permute.xlu0 %4221
        %4223 = vrot.lane.b32.xlu0 %v4170, 96
        %v4224 = vpop.permute.xlu0 %4223
        %4225 = vrot.lane.b32.xlu0 %v4171, 96
        %v4226 = vpop.permute.xlu0 %4225
        %4227 = vrot.lane.b32.xlu0 %v4172, 96
        %v4228 = vpop.permute.xlu0 %4227
        %4229 = vrot.lane.b32.xlu0 %v4173, 96
        %v4230 = vpop.permute.xlu0 %4229
        %4231 = vrot.lane.b32.xlu0 %v4174, 96
        %v4232 = vpop.permute.xlu0 %4231
        %4233 = vrot.lane.b32.xlu0 %v4175, 96
        %v4234 = vpop.permute.xlu0 %4233
        %4235 = vrot.lane.b32.xlu0 %v4176, 96
        %v4236 = vpop.permute.xlu0 %4235
        %4237 = vrot.lane.b32.xlu0 %v4177, 96
        %v4238 = vpop.permute.xlu0 %4237
        %4239 = vrot.lane.b32.xlu0 %v4178, 96
        %v4240 = vpop.permute.xlu0 %4239
        %4241 = vrot.lane.b32.xlu0 %v4179, 96
        %v4242 = vpop.permute.xlu0 %4241
        %4243 = vrot.lane.b32.xlu0 %v4180, 96
        %v4244 = vpop.permute.xlu0 %4243
        %4245 = vrot.lane.b32.xlu0 %v4181, 96
        %v4246 = vpop.permute.xlu0 %4245
        %4247 = vrot.lane.b32.xlu0 %v4182, 96
        %v4248 = vpop.permute.xlu0 %4247
        %4249 = vrot.lane.b32.xlu0 %v4183, 96
        %v4250 = vpop.permute.xlu0 %4249
        %4251 = vrot.lane.b32.xlu0 %v4184, 96
        %v4252 = vpop.permute.xlu0 %4251
        %4253 = vrot.lane.b32.xlu0 %v4185, 96
        %v4254 = vpop.permute.xlu0 %4253
        %4255 = vrot.lane.b32.xlu0 %v4186, 96
        %v4256 = vpop.permute.xlu0 %4255
        %4257 = vrot.lane.b32.xlu0 %v4187, 96
        %v4258 = vpop.permute.xlu0 %4257
        %4259 = vrot.lane.b32.xlu0 %v4188, 96
        %v4260 = vpop.permute.xlu0 %4259
        %v4261 = vsel %vm1533, %v4214, %v4216
        %v4262 = vsel %vm1533, %v4216, %v4218
        %v4263 = vsel %vm1533, %v4220, %v4222
        %v4264 = vsel %vm1533, %v4222, %v4224
        %v4265 = vsel %vm1533, %v4226, %v4228
        %v4266 = vsel %vm1533, %v4228, %v4230
        %v4267 = vsel %vm1533, %v4232, %v4234
        %v4268 = vsel %vm1533, %v4234, %v4236
        %v4269 = vsel %vm1533, %v4238, %v4240
        %v4270 = vsel %vm1533, %v4240, %v4242
        %v4271 = vsel %vm1533, %v4244, %v4246
        %v4272 = vsel %vm1533, %v4246, %v4248
        %v4273 = vsel %vm1533, %v4250, %v4252
        %v4274 = vsel %vm1533, %v4252, %v4254
        %v4275 = vsel %vm1533, %v4256, %v4258
        %v4276 = vsel %vm1533, %v4258, %v4260
        %v4301 = vadd.f32 %v4109, %v4261
        %v4302 = vadd.f32 %v4110, %v4262
        %v4303 = vadd.f32 %v4111, %v4218
        %v4304 = vadd.f32 %v4112, %v4263
        %v4305 = vadd.f32 %v4113, %v4264
        %v4306 = vadd.f32 %v4114, %v4224
        %v4307 = vadd.f32 %v4115, %v4265
        %v4308 = vadd.f32 %v4116, %v4266
        %v4309 = vadd.f32 %v4117, %v4230
        %v4310 = vadd.f32 %v4118, %v4267
        %v4311 = vadd.f32 %v4119, %v4268
        %v4312 = vadd.f32 %v4120, %v4236
        %v4313 = vadd.f32 %v4121, %v4269
        %v4314 = vadd.f32 %v4122, %v4270
        %v4315 = vadd.f32 %v4123, %v4242
        %v4316 = vadd.f32 %v4124, %v4271
        %v4317 = vadd.f32 %v4125, %v4272
        %v4318 = vadd.f32 %v4126, %v4248
        %v4319 = vadd.f32 %v4127, %v4273
        %v4320 = vadd.f32 %v4128, %v4274
        %v4321 = vadd.f32 %v4129, %v4254
        %v4322 = vadd.f32 %v4130, %v4275
        %v4323 = vadd.f32 %v4131, %v4276
        %v4324 = vadd.f32 %v4132, %v4260
        %4325 = vset.pattern.permute.xlu0 23
        %4326 = vperm.xlu0 %4325, %v1116
        %v4327 = vpop.permute.xlu0 %4326
        %4329 = vset.pattern.permute.xlu0 23
        %4330 = vperm.xlu0 %4329, %v1117
        %v4331 = vpop.permute.xlu0 %4330
        %4333 = vset.pattern.permute.xlu0 23
        %4334 = vperm.xlu0 %4333, %v1118
        %v4335 = vpop.permute.xlu0 %4334
        %4337 = vset.pattern.permute.xlu0 23
        %4338 = vperm.xlu0 %4337, %v1119
        %v4339 = vpop.permute.xlu0 %4338
        %4341 = vset.pattern.permute.xlu0 23
        %4342 = vperm.xlu0 %4341, %v1120
        %v4343 = vpop.permute.xlu0 %4342
        %4345 = vset.pattern.permute.xlu0 23
        %4346 = vperm.xlu0 %4345, %v1121
        %v4347 = vpop.permute.xlu0 %4346
        %4349 = vset.pattern.permute.xlu0 23
        %4350 = vperm.xlu0 %4349, %v1122
        %v4351 = vpop.permute.xlu0 %4350
        %4353 = vset.pattern.permute.xlu0 23
        %4354 = vperm.xlu0 %4353, %v1123
        %v4355 = vpop.permute.xlu0 %4354
        %v4357 = vmul.f32 %v4327, %v1092
        %v4358 = vmul.f32 %v4327, %v1093
        %v4359 = vmul.f32 %v4327, %v1094
        %v4360 = vmul.f32 %v4331, %v1095
        %v4361 = vmul.f32 %v4331, %v1096
        %v4362 = vmul.f32 %v4331, %v1097
        %v4363 = vmul.f32 %v4335, %v1098
        %v4364 = vmul.f32 %v4335, %v1099
        %v4365 = vmul.f32 %v4335, %v1100
        %v4366 = vmul.f32 %v4339, %v1101
        %v4367 = vmul.f32 %v4339, %v1102
        %v4368 = vmul.f32 %v4339, %v1103
        %v4369 = vmul.f32 %v4343, %v1104
        %v4370 = vmul.f32 %v4343, %v1105
        %v4371 = vmul.f32 %v4343, %v1106
        %v4372 = vmul.f32 %v4347, %v1107
        %v4373 = vmul.f32 %v4347, %v1108
        %v4374 = vmul.f32 %v4347, %v1109
        %v4375 = vmul.f32 %v4351, %v1110
        %v4376 = vmul.f32 %v4351, %v1111
        %v4377 = vmul.f32 %v4351, %v1112
        %v4378 = vmul.f32 %v4355, %v1113
        %v4379 = vmul.f32 %v4355, %v1114
        %v4380 = vmul.f32 %v4355, %v1115
        %4405 = vrot.lane.b32.xlu0 %v4357, 80
        %v4406 = vpop.permute.xlu0 %4405
        %4407 = vrot.lane.b32.xlu0 %v4358, 80
        %v4408 = vpop.permute.xlu0 %4407
        %4409 = vrot.lane.b32.xlu0 %v4359, 80
        %v4410 = vpop.permute.xlu0 %4409
        %4411 = vrot.lane.b32.xlu0 %v4360, 80
        %v4412 = vpop.permute.xlu0 %4411
        %4413 = vrot.lane.b32.xlu0 %v4361, 80
        %v4414 = vpop.permute.xlu0 %4413
        %4415 = vrot.lane.b32.xlu0 %v4362, 80
        %v4416 = vpop.permute.xlu0 %4415
        %4417 = vrot.lane.b32.xlu0 %v4363, 80
        %v4418 = vpop.permute.xlu0 %4417
        %4419 = vrot.lane.b32.xlu0 %v4364, 80
        %v4420 = vpop.permute.xlu0 %4419
        %4421 = vrot.lane.b32.xlu0 %v4365, 80
        %v4422 = vpop.permute.xlu0 %4421
        %4423 = vrot.lane.b32.xlu0 %v4366, 80
        %v4424 = vpop.permute.xlu0 %4423
        %4425 = vrot.lane.b32.xlu0 %v4367, 80
        %v4426 = vpop.permute.xlu0 %4425
        %4427 = vrot.lane.b32.xlu0 %v4368, 80
        %v4428 = vpop.permute.xlu0 %4427
        %4429 = vrot.lane.b32.xlu0 %v4369, 80
        %v4430 = vpop.permute.xlu0 %4429
        %4431 = vrot.lane.b32.xlu0 %v4370, 80
        %v4432 = vpop.permute.xlu0 %4431
        %4433 = vrot.lane.b32.xlu0 %v4371, 80
        %v4434 = vpop.permute.xlu0 %4433
        %4435 = vrot.lane.b32.xlu0 %v4372, 80
        %v4436 = vpop.permute.xlu0 %4435
        %4437 = vrot.lane.b32.xlu0 %v4373, 80
        %v4438 = vpop.permute.xlu0 %4437
        %4439 = vrot.lane.b32.xlu0 %v4374, 80
        %v4440 = vpop.permute.xlu0 %4439
        %4441 = vrot.lane.b32.xlu0 %v4375, 80
        %v4442 = vpop.permute.xlu0 %4441
        %4443 = vrot.lane.b32.xlu0 %v4376, 80
        %v4444 = vpop.permute.xlu0 %4443
        %4445 = vrot.lane.b32.xlu0 %v4377, 80
        %v4446 = vpop.permute.xlu0 %4445
        %4447 = vrot.lane.b32.xlu0 %v4378, 80
        %v4448 = vpop.permute.xlu0 %4447
        %4449 = vrot.lane.b32.xlu0 %v4379, 80
        %v4450 = vpop.permute.xlu0 %4449
        %4451 = vrot.lane.b32.xlu0 %v4380, 80
        %v4452 = vpop.permute.xlu0 %4451
        %v4453 = vsel %vm1726, %v4406, %v4408
        %v4454 = vsel %vm1726, %v4408, %v4410
        %v4455 = vsel %vm1726, %v4412, %v4414
        %v4456 = vsel %vm1726, %v4414, %v4416
        %v4457 = vsel %vm1726, %v4418, %v4420
        %v4458 = vsel %vm1726, %v4420, %v4422
        %v4459 = vsel %vm1726, %v4424, %v4426
        %v4460 = vsel %vm1726, %v4426, %v4428
        %v4461 = vsel %vm1726, %v4430, %v4432
        %v4462 = vsel %vm1726, %v4432, %v4434
        %v4463 = vsel %vm1726, %v4436, %v4438
        %v4464 = vsel %vm1726, %v4438, %v4440
        %v4465 = vsel %vm1726, %v4442, %v4444
        %v4466 = vsel %vm1726, %v4444, %v4446
        %v4467 = vsel %vm1726, %v4448, %v4450
        %v4468 = vsel %vm1726, %v4450, %v4452
        %v4493 = vadd.f32 %v4301, %v4453
        %v4494 = vadd.f32 %v4302, %v4454
        %v4495 = vadd.f32 %v4303, %v4410
        %v4496 = vadd.f32 %v4304, %v4455
        %v4497 = vadd.f32 %v4305, %v4456
        %v4498 = vadd.f32 %v4306, %v4416
        %v4499 = vadd.f32 %v4307, %v4457
        %v4500 = vadd.f32 %v4308, %v4458
        %v4501 = vadd.f32 %v4309, %v4422
        %v4502 = vadd.f32 %v4310, %v4459
        %v4503 = vadd.f32 %v4311, %v4460
        %v4504 = vadd.f32 %v4312, %v4428
        %v4505 = vadd.f32 %v4313, %v4461
        %v4506 = vadd.f32 %v4314, %v4462
        %v4507 = vadd.f32 %v4315, %v4434
        %v4508 = vadd.f32 %v4316, %v4463
        %v4509 = vadd.f32 %v4317, %v4464
        %v4510 = vadd.f32 %v4318, %v4440
        %v4511 = vadd.f32 %v4319, %v4465
        %v4512 = vadd.f32 %v4320, %v4466
        %v4513 = vadd.f32 %v4321, %v4446
        %v4514 = vadd.f32 %v4322, %v4467
        %v4515 = vadd.f32 %v4323, %v4468
        %v4516 = vadd.f32 %v4324, %v4452
        %4517 = vset.pattern.permute.xlu0 30
        %4518 = vperm.xlu0 %4517, %v1116
        %v4519 = vpop.permute.xlu0 %4518
        %4521 = vset.pattern.permute.xlu0 30
        %4522 = vperm.xlu0 %4521, %v1117
        %v4523 = vpop.permute.xlu0 %4522
        %4525 = vset.pattern.permute.xlu0 30
        %4526 = vperm.xlu0 %4525, %v1118
        %v4527 = vpop.permute.xlu0 %4526
        %4529 = vset.pattern.permute.xlu0 30
        %4530 = vperm.xlu0 %4529, %v1119
        %v4531 = vpop.permute.xlu0 %4530
        %4533 = vset.pattern.permute.xlu0 30
        %4534 = vperm.xlu0 %4533, %v1120
        %v4535 = vpop.permute.xlu0 %4534
        %4537 = vset.pattern.permute.xlu0 30
        %4538 = vperm.xlu0 %4537, %v1121
        %v4539 = vpop.permute.xlu0 %4538
        %4541 = vset.pattern.permute.xlu0 30
        %4542 = vperm.xlu0 %4541, %v1122
        %v4543 = vpop.permute.xlu0 %4542
        %4545 = vset.pattern.permute.xlu0 30
        %4546 = vperm.xlu0 %4545, %v1123
        %v4547 = vpop.permute.xlu0 %4546
        %v4549 = vmul.f32 %v4519, %v1791
        %v4550 = vmul.f32 %v4519, %v1792
        %v4551 = vmul.f32 %v4519, %v1793
        %v4552 = vmul.f32 %v4523, %v1794
        %v4553 = vmul.f32 %v4523, %v1795
        %v4554 = vmul.f32 %v4523, %v1796
        %v4555 = vmul.f32 %v4527, %v1797
        %v4556 = vmul.f32 %v4527, %v1798
        %v4557 = vmul.f32 %v4527, %v1799
        %v4558 = vmul.f32 %v4531, %v1800
        %v4559 = vmul.f32 %v4531, %v1801
        %v4560 = vmul.f32 %v4531, %v1802
        %v4561 = vmul.f32 %v4535, %v1803
        %v4562 = vmul.f32 %v4535, %v1804
        %v4563 = vmul.f32 %v4535, %v1805
        %v4564 = vmul.f32 %v4539, %v1806
        %v4565 = vmul.f32 %v4539, %v1807
        %v4566 = vmul.f32 %v4539, %v1808
        %v4567 = vmul.f32 %v4543, %v1809
        %v4568 = vmul.f32 %v4543, %v1810
        %v4569 = vmul.f32 %v4543, %v1811
        %v4570 = vmul.f32 %v4547, %v1812
        %v4571 = vmul.f32 %v4547, %v1813
        %v4572 = vmul.f32 %v4547, %v1814
        %4597 = vrot.lane.b32.xlu0 %v4549, 64
        %v4598 = vpop.permute.xlu0 %4597
        %4599 = vrot.lane.b32.xlu0 %v4550, 64
        %v4600 = vpop.permute.xlu0 %4599
        %4601 = vrot.lane.b32.xlu0 %v4551, 64
        %v4602 = vpop.permute.xlu0 %4601
        %4603 = vrot.lane.b32.xlu0 %v4552, 64
        %v4604 = vpop.permute.xlu0 %4603
        %4605 = vrot.lane.b32.xlu0 %v4553, 64
        %v4606 = vpop.permute.xlu0 %4605
        %4607 = vrot.lane.b32.xlu0 %v4554, 64
        %v4608 = vpop.permute.xlu0 %4607
        %4609 = vrot.lane.b32.xlu0 %v4555, 64
        %v4610 = vpop.permute.xlu0 %4609
        %4611 = vrot.lane.b32.xlu0 %v4556, 64
        %v4612 = vpop.permute.xlu0 %4611
        %4613 = vrot.lane.b32.xlu0 %v4557, 64
        %v4614 = vpop.permute.xlu0 %4613
        %4615 = vrot.lane.b32.xlu0 %v4558, 64
        %v4616 = vpop.permute.xlu0 %4615
        %4617 = vrot.lane.b32.xlu0 %v4559, 64
        %v4618 = vpop.permute.xlu0 %4617
        %4619 = vrot.lane.b32.xlu0 %v4560, 64
        %v4620 = vpop.permute.xlu0 %4619
        %4621 = vrot.lane.b32.xlu0 %v4561, 64
        %v4622 = vpop.permute.xlu0 %4621
        %4623 = vrot.lane.b32.xlu0 %v4562, 64
        %v4624 = vpop.permute.xlu0 %4623
        %4625 = vrot.lane.b32.xlu0 %v4563, 64
        %v4626 = vpop.permute.xlu0 %4625
        %4627 = vrot.lane.b32.xlu0 %v4564, 64
        %v4628 = vpop.permute.xlu0 %4627
        %4629 = vrot.lane.b32.xlu0 %v4565, 64
        %v4630 = vpop.permute.xlu0 %4629
        %4631 = vrot.lane.b32.xlu0 %v4566, 64
        %v4632 = vpop.permute.xlu0 %4631
        %4633 = vrot.lane.b32.xlu0 %v4567, 64
        %v4634 = vpop.permute.xlu0 %4633
        %4635 = vrot.lane.b32.xlu0 %v4568, 64
        %v4636 = vpop.permute.xlu0 %4635
        %4637 = vrot.lane.b32.xlu0 %v4569, 64
        %v4638 = vpop.permute.xlu0 %4637
        %4639 = vrot.lane.b32.xlu0 %v4570, 64
        %v4640 = vpop.permute.xlu0 %4639
        %4641 = vrot.lane.b32.xlu0 %v4571, 64
        %v4642 = vpop.permute.xlu0 %4641
        %4643 = vrot.lane.b32.xlu0 %v4572, 64
        %v4644 = vpop.permute.xlu0 %4643
        %v4645 = vsel %vm1943, %v4598, %v4600
        %v4646 = vsel %vm1943, %v4600, %v4602
        %v4647 = vsel %vm1943, %v4604, %v4606
        %v4648 = vsel %vm1943, %v4606, %v4608
        %v4649 = vsel %vm1943, %v4610, %v4612
        %v4650 = vsel %vm1943, %v4612, %v4614
        %v4651 = vsel %vm1943, %v4616, %v4618
        %v4652 = vsel %vm1943, %v4618, %v4620
        %v4653 = vsel %vm1943, %v4622, %v4624
        %v4654 = vsel %vm1943, %v4624, %v4626
        %v4655 = vsel %vm1943, %v4628, %v4630
        %v4656 = vsel %vm1943, %v4630, %v4632
        %v4657 = vsel %vm1943, %v4634, %v4636
        %v4658 = vsel %vm1943, %v4636, %v4638
        %v4659 = vsel %vm1943, %v4640, %v4642
        %v4660 = vsel %vm1943, %v4642, %v4644
        %v4685 = vadd.f32 %v4493, %v4598
        %v4686 = vadd.f32 %v4494, %v4645
        %v4687 = vadd.f32 %v4495, %v4646
        %v4688 = vadd.f32 %v4496, %v4604
        %v4689 = vadd.f32 %v4497, %v4647
        %v4690 = vadd.f32 %v4498, %v4648
        %v4691 = vadd.f32 %v4499, %v4610
        %v4692 = vadd.f32 %v4500, %v4649
        %v4693 = vadd.f32 %v4501, %v4650
        %v4694 = vadd.f32 %v4502, %v4616
        %v4695 = vadd.f32 %v4503, %v4651
        %v4696 = vadd.f32 %v4504, %v4652
        %v4697 = vadd.f32 %v4505, %v4622
        %v4698 = vadd.f32 %v4506, %v4653
        %v4699 = vadd.f32 %v4507, %v4654
        %v4700 = vadd.f32 %v4508, %v4628
        %v4701 = vadd.f32 %v4509, %v4655
        %v4702 = vadd.f32 %v4510, %v4656
        %v4703 = vadd.f32 %v4511, %v4634
        %v4704 = vadd.f32 %v4512, %v4657
        %v4705 = vadd.f32 %v4513, %v4658
        %v4706 = vadd.f32 %v4514, %v4640
        %v4707 = vadd.f32 %v4515, %v4659
        %v4708 = vadd.f32 %v4516, %v4660
        %4709 = vset.pattern.permute.xlu0 37
        %4710 = vperm.xlu0 %4709, %v1116
        %v4711 = vpop.permute.xlu0 %4710
        %4713 = vset.pattern.permute.xlu0 37
        %4714 = vperm.xlu0 %4713, %v1117
        %v4715 = vpop.permute.xlu0 %4714
        %4717 = vset.pattern.permute.xlu0 37
        %4718 = vperm.xlu0 %4717, %v1118
        %v4719 = vpop.permute.xlu0 %4718
        %4721 = vset.pattern.permute.xlu0 37
        %4722 = vperm.xlu0 %4721, %v1119
        %v4723 = vpop.permute.xlu0 %4722
        %4725 = vset.pattern.permute.xlu0 37
        %4726 = vperm.xlu0 %4725, %v1120
        %v4727 = vpop.permute.xlu0 %4726
        %4729 = vset.pattern.permute.xlu0 37
        %4730 = vperm.xlu0 %4729, %v1121
        %v4731 = vpop.permute.xlu0 %4730
        %4733 = vset.pattern.permute.xlu0 37
        %4734 = vperm.xlu0 %4733, %v1122
        %v4735 = vpop.permute.xlu0 %4734
        %4737 = vset.pattern.permute.xlu0 37
        %4738 = vperm.xlu0 %4737, %v1123
        %v4739 = vpop.permute.xlu0 %4738
        %v4741 = vmul.f32 %v4711, %v1791
        %v4742 = vmul.f32 %v4711, %v1792
        %v4743 = vmul.f32 %v4711, %v1793
        %v4744 = vmul.f32 %v4715, %v1794
        %v4745 = vmul.f32 %v4715, %v1795
        %v4746 = vmul.f32 %v4715, %v1796
        %v4747 = vmul.f32 %v4719, %v1797
        %v4748 = vmul.f32 %v4719, %v1798
        %v4749 = vmul.f32 %v4719, %v1799
        %v4750 = vmul.f32 %v4723, %v1800
        %v4751 = vmul.f32 %v4723, %v1801
        %v4752 = vmul.f32 %v4723, %v1802
        %v4753 = vmul.f32 %v4727, %v1803
        %v4754 = vmul.f32 %v4727, %v1804
        %v4755 = vmul.f32 %v4727, %v1805
        %v4756 = vmul.f32 %v4731, %v1806
        %v4757 = vmul.f32 %v4731, %v1807
        %v4758 = vmul.f32 %v4731, %v1808
        %v4759 = vmul.f32 %v4735, %v1809
        %v4760 = vmul.f32 %v4735, %v1810
        %v4761 = vmul.f32 %v4735, %v1811
        %v4762 = vmul.f32 %v4739, %v1812
        %v4763 = vmul.f32 %v4739, %v1813
        %v4764 = vmul.f32 %v4739, %v1814
        %4789 = vrot.lane.b32.xlu0 %v4741, 48
        %v4790 = vpop.permute.xlu0 %4789
        %4791 = vrot.lane.b32.xlu0 %v4742, 48
        %v4792 = vpop.permute.xlu0 %4791
        %4793 = vrot.lane.b32.xlu0 %v4743, 48
        %v4794 = vpop.permute.xlu0 %4793
        %4795 = vrot.lane.b32.xlu0 %v4744, 48
        %v4796 = vpop.permute.xlu0 %4795
        %4797 = vrot.lane.b32.xlu0 %v4745, 48
        %v4798 = vpop.permute.xlu0 %4797
        %4799 = vrot.lane.b32.xlu0 %v4746, 48
        %v4800 = vpop.permute.xlu0 %4799
        %4801 = vrot.lane.b32.xlu0 %v4747, 48
        %v4802 = vpop.permute.xlu0 %4801
        %4803 = vrot.lane.b32.xlu0 %v4748, 48
        %v4804 = vpop.permute.xlu0 %4803
        %4805 = vrot.lane.b32.xlu0 %v4749, 48
        %v4806 = vpop.permute.xlu0 %4805
        %4807 = vrot.lane.b32.xlu0 %v4750, 48
        %v4808 = vpop.permute.xlu0 %4807
        %4809 = vrot.lane.b32.xlu0 %v4751, 48
        %v4810 = vpop.permute.xlu0 %4809
        %4811 = vrot.lane.b32.xlu0 %v4752, 48
        %v4812 = vpop.permute.xlu0 %4811
        %4813 = vrot.lane.b32.xlu0 %v4753, 48
        %v4814 = vpop.permute.xlu0 %4813
        %4815 = vrot.lane.b32.xlu0 %v4754, 48
        %v4816 = vpop.permute.xlu0 %4815
        %4817 = vrot.lane.b32.xlu0 %v4755, 48
        %v4818 = vpop.permute.xlu0 %4817
        %4819 = vrot.lane.b32.xlu0 %v4756, 48
        %v4820 = vpop.permute.xlu0 %4819
        %4821 = vrot.lane.b32.xlu0 %v4757, 48
        %v4822 = vpop.permute.xlu0 %4821
        %4823 = vrot.lane.b32.xlu0 %v4758, 48
        %v4824 = vpop.permute.xlu0 %4823
        %4825 = vrot.lane.b32.xlu0 %v4759, 48
        %v4826 = vpop.permute.xlu0 %4825
        %4827 = vrot.lane.b32.xlu0 %v4760, 48
        %v4828 = vpop.permute.xlu0 %4827
        %4829 = vrot.lane.b32.xlu0 %v4761, 48
        %v4830 = vpop.permute.xlu0 %4829
        %4831 = vrot.lane.b32.xlu0 %v4762, 48
        %v4832 = vpop.permute.xlu0 %4831
        %4833 = vrot.lane.b32.xlu0 %v4763, 48
        %v4834 = vpop.permute.xlu0 %4833
        %4835 = vrot.lane.b32.xlu0 %v4764, 48
        %v4836 = vpop.permute.xlu0 %4835
        %v4837 = vsel %vm2136, %v4790, %v4792
        %v4838 = vsel %vm2136, %v4792, %v4794
        %v4839 = vsel %vm2136, %v4796, %v4798
        %v4840 = vsel %vm2136, %v4798, %v4800
        %v4841 = vsel %vm2136, %v4802, %v4804
        %v4842 = vsel %vm2136, %v4804, %v4806
        %v4843 = vsel %vm2136, %v4808, %v4810
        %v4844 = vsel %vm2136, %v4810, %v4812
        %v4845 = vsel %vm2136, %v4814, %v4816
        %v4846 = vsel %vm2136, %v4816, %v4818
        %v4847 = vsel %vm2136, %v4820, %v4822
        %v4848 = vsel %vm2136, %v4822, %v4824
        %v4849 = vsel %vm2136, %v4826, %v4828
        %v4850 = vsel %vm2136, %v4828, %v4830
        %v4851 = vsel %vm2136, %v4832, %v4834
        %v4852 = vsel %vm2136, %v4834, %v4836
        %v4877 = vadd.f32 %v4685, %v4790
        %v4878 = vadd.f32 %v4686, %v4837
        %v4879 = vadd.f32 %v4687, %v4838
        %v4880 = vadd.f32 %v4688, %v4796
        %v4881 = vadd.f32 %v4689, %v4839
        %v4882 = vadd.f32 %v4690, %v4840
        %v4883 = vadd.f32 %v4691, %v4802
        %v4884 = vadd.f32 %v4692, %v4841
        %v4885 = vadd.f32 %v4693, %v4842
        %v4886 = vadd.f32 %v4694, %v4808
        %v4887 = vadd.f32 %v4695, %v4843
        %v4888 = vadd.f32 %v4696, %v4844
        %v4889 = vadd.f32 %v4697, %v4814
        %v4890 = vadd.f32 %v4698, %v4845
        %v4891 = vadd.f32 %v4699, %v4846
        %v4892 = vadd.f32 %v4700, %v4820
        %v4893 = vadd.f32 %v4701, %v4847
        %v4894 = vadd.f32 %v4702, %v4848
        %v4895 = vadd.f32 %v4703, %v4826
        %v4896 = vadd.f32 %v4704, %v4849
        %v4897 = vadd.f32 %v4705, %v4850
        %v4898 = vadd.f32 %v4706, %v4832
        %v4899 = vadd.f32 %v4707, %v4851
        %v4900 = vadd.f32 %v4708, %v4852
        %4901 = vset.pattern.permute.xlu0 44
        %4902 = vperm.xlu0 %4901, %v1116
        %v4903 = vpop.permute.xlu0 %4902
        %4905 = vset.pattern.permute.xlu0 44
        %4906 = vperm.xlu0 %4905, %v1117
        %v4907 = vpop.permute.xlu0 %4906
        %4909 = vset.pattern.permute.xlu0 44
        %4910 = vperm.xlu0 %4909, %v1118
        %v4911 = vpop.permute.xlu0 %4910
        %4913 = vset.pattern.permute.xlu0 44
        %4914 = vperm.xlu0 %4913, %v1119
        %v4915 = vpop.permute.xlu0 %4914
        %4917 = vset.pattern.permute.xlu0 44
        %4918 = vperm.xlu0 %4917, %v1120
        %v4919 = vpop.permute.xlu0 %4918
        %4921 = vset.pattern.permute.xlu0 44
        %4922 = vperm.xlu0 %4921, %v1121
        %v4923 = vpop.permute.xlu0 %4922
        %4925 = vset.pattern.permute.xlu0 44
        %4926 = vperm.xlu0 %4925, %v1122
        %v4927 = vpop.permute.xlu0 %4926
        %4929 = vset.pattern.permute.xlu0 44
        %4930 = vperm.xlu0 %4929, %v1123
        %v4931 = vpop.permute.xlu0 %4930
        %v4933 = vmul.f32 %v4903, %v1791
        %v4934 = vmul.f32 %v4903, %v1792
        %v4935 = vmul.f32 %v4903, %v1793
        %v4936 = vmul.f32 %v4907, %v1794
        %v4937 = vmul.f32 %v4907, %v1795
        %v4938 = vmul.f32 %v4907, %v1796
        %v4939 = vmul.f32 %v4911, %v1797
        %v4940 = vmul.f32 %v4911, %v1798
        %v4941 = vmul.f32 %v4911, %v1799
        %v4942 = vmul.f32 %v4915, %v1800
        %v4943 = vmul.f32 %v4915, %v1801
        %v4944 = vmul.f32 %v4915, %v1802
        %v4945 = vmul.f32 %v4919, %v1803
        %v4946 = vmul.f32 %v4919, %v1804
        %v4947 = vmul.f32 %v4919, %v1805
        %v4948 = vmul.f32 %v4923, %v1806
        %v4949 = vmul.f32 %v4923, %v1807
        %v4950 = vmul.f32 %v4923, %v1808
        %v4951 = vmul.f32 %v4927, %v1809
        %v4952 = vmul.f32 %v4927, %v1810
        %v4953 = vmul.f32 %v4927, %v1811
        %v4954 = vmul.f32 %v4931, %v1812
        %v4955 = vmul.f32 %v4931, %v1813
        %v4956 = vmul.f32 %v4931, %v1814
        %4981 = vrot.lane.b32.xlu0 %v4933, 32
        %v4982 = vpop.permute.xlu0 %4981
        %4983 = vrot.lane.b32.xlu0 %v4934, 32
        %v4984 = vpop.permute.xlu0 %4983
        %4985 = vrot.lane.b32.xlu0 %v4935, 32
        %v4986 = vpop.permute.xlu0 %4985
        %4987 = vrot.lane.b32.xlu0 %v4936, 32
        %v4988 = vpop.permute.xlu0 %4987
        %4989 = vrot.lane.b32.xlu0 %v4937, 32
        %v4990 = vpop.permute.xlu0 %4989
        %4991 = vrot.lane.b32.xlu0 %v4938, 32
        %v4992 = vpop.permute.xlu0 %4991
        %4993 = vrot.lane.b32.xlu0 %v4939, 32
        %v4994 = vpop.permute.xlu0 %4993
        %4995 = vrot.lane.b32.xlu0 %v4940, 32
        %v4996 = vpop.permute.xlu0 %4995
        %4997 = vrot.lane.b32.xlu0 %v4941, 32
        %v4998 = vpop.permute.xlu0 %4997
        %4999 = vrot.lane.b32.xlu0 %v4942, 32
        %v5000 = vpop.permute.xlu0 %4999
        %5001 = vrot.lane.b32.xlu0 %v4943, 32
        %v5002 = vpop.permute.xlu0 %5001
        %5003 = vrot.lane.b32.xlu0 %v4944, 32
        %v5004 = vpop.permute.xlu0 %5003
        %5005 = vrot.lane.b32.xlu0 %v4945, 32
        %v5006 = vpop.permute.xlu0 %5005
        %5007 = vrot.lane.b32.xlu0 %v4946, 32
        %v5008 = vpop.permute.xlu0 %5007
        %5009 = vrot.lane.b32.xlu0 %v4947, 32
        %v5010 = vpop.permute.xlu0 %5009
        %5011 = vrot.lane.b32.xlu0 %v4948, 32
        %v5012 = vpop.permute.xlu0 %5011
        %5013 = vrot.lane.b32.xlu0 %v4949, 32
        %v5014 = vpop.permute.xlu0 %5013
        %5015 = vrot.lane.b32.xlu0 %v4950, 32
        %v5016 = vpop.permute.xlu0 %5015
        %5017 = vrot.lane.b32.xlu0 %v4951, 32
        %v5018 = vpop.permute.xlu0 %5017
        %5019 = vrot.lane.b32.xlu0 %v4952, 32
        %v5020 = vpop.permute.xlu0 %5019
        %5021 = vrot.lane.b32.xlu0 %v4953, 32
        %v5022 = vpop.permute.xlu0 %5021
        %5023 = vrot.lane.b32.xlu0 %v4954, 32
        %v5024 = vpop.permute.xlu0 %5023
        %5025 = vrot.lane.b32.xlu0 %v4955, 32
        %v5026 = vpop.permute.xlu0 %5025
        %5027 = vrot.lane.b32.xlu0 %v4956, 32
        %v5028 = vpop.permute.xlu0 %5027
        %v5029 = vsel %vm626, %v4982, %v4984
        %v5030 = vsel %vm626, %v4984, %v4986
        %v5031 = vsel %vm626, %v4988, %v4990
        %v5032 = vsel %vm626, %v4990, %v4992
        %v5033 = vsel %vm626, %v4994, %v4996
        %v5034 = vsel %vm626, %v4996, %v4998
        %v5035 = vsel %vm626, %v5000, %v5002
        %v5036 = vsel %vm626, %v5002, %v5004
        %v5037 = vsel %vm626, %v5006, %v5008
        %v5038 = vsel %vm626, %v5008, %v5010
        %v5039 = vsel %vm626, %v5012, %v5014
        %v5040 = vsel %vm626, %v5014, %v5016
        %v5041 = vsel %vm626, %v5018, %v5020
        %v5042 = vsel %vm626, %v5020, %v5022
        %v5043 = vsel %vm626, %v5024, %v5026
        %v5044 = vsel %vm626, %v5026, %v5028
        %v5069 = vadd.f32 %v4877, %v4982
        %v5070 = vadd.f32 %v4878, %v5029
        %v5071 = vadd.f32 %v4879, %v5030
        %v5072 = vadd.f32 %v4880, %v4988
        %v5073 = vadd.f32 %v4881, %v5031
        %v5074 = vadd.f32 %v4882, %v5032
        %v5075 = vadd.f32 %v4883, %v4994
        %v5076 = vadd.f32 %v4884, %v5033
        %v5077 = vadd.f32 %v4885, %v5034
        %v5078 = vadd.f32 %v4886, %v5000
        %v5079 = vadd.f32 %v4887, %v5035
        %v5080 = vadd.f32 %v4888, %v5036
        %v5081 = vadd.f32 %v4889, %v5006
        %v5082 = vadd.f32 %v4890, %v5037
        %v5083 = vadd.f32 %v4891, %v5038
        %v5084 = vadd.f32 %v4892, %v5012
        %v5085 = vadd.f32 %v4893, %v5039
        %v5086 = vadd.f32 %v4894, %v5040
        %v5087 = vadd.f32 %v4895, %v5018
        %v5088 = vadd.f32 %v4896, %v5041
        %v5089 = vadd.f32 %v4897, %v5042
        %v5090 = vadd.f32 %v4898, %v5024
        %v5091 = vadd.f32 %v4899, %v5043
        %v5092 = vadd.f32 %v4900, %v5044
        %s5093 = scalar_lea.vmem %s7, 2
        %v5094 = vld [vmem:[%s5093] ss:$8 sm:$0x3]
        %v5096 = vperm.slane %v5094, 0
        %v5097 = vperm.slane %v5094, 1
        %5098 = vrot.lane.b32.xlu0 %v5096, 79
        %v5099 = vpop.permute.xlu0 %5098
        %5100 = vrot.lane.b32.xlu0 %v5097, 79
        %v5101 = vpop.permute.xlu0 %5100
        %vm5102 = vcmask 646144
        %v5103 = vsel %vm5102, %v5099, %v5101
        %v5107 = vmul.f32 %v5069, %v5099
        %v5108 = vmul.f32 %v5070, %v5103
        %v5109 = vmul.f32 %v5071, %v5101
        %v5110 = vmul.f32 %v5072, %v5099
        %v5111 = vmul.f32 %v5073, %v5103
        %v5112 = vmul.f32 %v5074, %v5101
        %v5113 = vmul.f32 %v5075, %v5099
        %v5114 = vmul.f32 %v5076, %v5103
        %v5115 = vmul.f32 %v5077, %v5101
        %v5116 = vmul.f32 %v5078, %v5099
        %v5117 = vmul.f32 %v5079, %v5103
        %v5118 = vmul.f32 %v5080, %v5101
        %v5119 = vmul.f32 %v5081, %v5099
        %v5120 = vmul.f32 %v5082, %v5103
        %v5121 = vmul.f32 %v5083, %v5101
        %v5122 = vmul.f32 %v5084, %v5099
        %v5123 = vmul.f32 %v5085, %v5103
        %v5124 = vmul.f32 %v5086, %v5101
        %v5125 = vmul.f32 %v5087, %v5099
        %v5126 = vmul.f32 %v5088, %v5103
        %v5127 = vmul.f32 %v5089, %v5101
        %v5128 = vmul.f32 %v5090, %v5099
        %v5129 = vmul.f32 %v5091, %v5103
        %v5130 = vmul.f32 %v5092, %v5101
        %5155 = vrot.lane.b32.xlu0 %v5107, 126
        %v5156 = vpop.permute.xlu0 %5155
        %5157 = vrot.lane.b32.xlu0 %v5108, 126
        %v5158 = vpop.permute.xlu0 %5157
        %5159 = vrot.lane.b32.xlu0 %v5109, 126
        %v5160 = vpop.permute.xlu0 %5159
        %5161 = vrot.lane.b32.xlu0 %v5110, 126
        %v5162 = vpop.permute.xlu0 %5161
        %5163 = vrot.lane.b32.xlu0 %v5111, 126
        %v5164 = vpop.permute.xlu0 %5163
        %5165 = vrot.lane.b32.xlu0 %v5112, 126
        %v5166 = vpop.permute.xlu0 %5165
        %5167 = vrot.lane.b32.xlu0 %v5113, 126
        %v5168 = vpop.permute.xlu0 %5167
        %5169 = vrot.lane.b32.xlu0 %v5114, 126
        %v5170 = vpop.permute.xlu0 %5169
        %5171 = vrot.lane.b32.xlu0 %v5115, 126
        %v5172 = vpop.permute.xlu0 %5171
        %5173 = vrot.lane.b32.xlu0 %v5116, 126
        %v5174 = vpop.permute.xlu0 %5173
        %5175 = vrot.lane.b32.xlu0 %v5117, 126
        %v5176 = vpop.permute.xlu0 %5175
        %5177 = vrot.lane.b32.xlu0 %v5118, 126
        %v5178 = vpop.permute.xlu0 %5177
        %5179 = vrot.lane.b32.xlu0 %v5119, 126
        %v5180 = vpop.permute.xlu0 %5179
        %5181 = vrot.lane.b32.xlu0 %v5120, 126
        %v5182 = vpop.permute.xlu0 %5181
        %5183 = vrot.lane.b32.xlu0 %v5121, 126
        %v5184 = vpop.permute.xlu0 %5183
        %5185 = vrot.lane.b32.xlu0 %v5122, 126
        %v5186 = vpop.permute.xlu0 %5185
        %5187 = vrot.lane.b32.xlu0 %v5123, 126
        %v5188 = vpop.permute.xlu0 %5187
        %5189 = vrot.lane.b32.xlu0 %v5124, 126
        %v5190 = vpop.permute.xlu0 %5189
        %5191 = vrot.lane.b32.xlu0 %v5125, 126
        %v5192 = vpop.permute.xlu0 %5191
        %5193 = vrot.lane.b32.xlu0 %v5126, 126
        %v5194 = vpop.permute.xlu0 %5193
        %5195 = vrot.lane.b32.xlu0 %v5127, 126
        %v5196 = vpop.permute.xlu0 %5195
        %5197 = vrot.lane.b32.xlu0 %v5128, 126
        %v5198 = vpop.permute.xlu0 %5197
        %5199 = vrot.lane.b32.xlu0 %v5129, 126
        %v5200 = vpop.permute.xlu0 %5199
        %5201 = vrot.lane.b32.xlu0 %v5130, 126
        %v5202 = vpop.permute.xlu0 %5201
        %vm5203 = vcmask 1031168
        %v5204 = vsel %vm5203, %v5156, %v5158
        %v5205 = vsel %vm5203, %v5158, %v5160
        %v5206 = vsel %vm5203, %v5162, %v5164
        %v5207 = vsel %vm5203, %v5164, %v5166
        %v5208 = vsel %vm5203, %v5168, %v5170
        %v5209 = vsel %vm5203, %v5170, %v5172
        %v5210 = vsel %vm5203, %v5174, %v5176
        %v5211 = vsel %vm5203, %v5176, %v5178
        %v5212 = vsel %vm5203, %v5180, %v5182
        %v5213 = vsel %vm5203, %v5182, %v5184
        %v5214 = vsel %vm5203, %v5186, %v5188
        %v5215 = vsel %vm5203, %v5188, %v5190
        %v5216 = vsel %vm5203, %v5192, %v5194
        %v5217 = vsel %vm5203, %v5194, %v5196
        %v5218 = vsel %vm5203, %v5198, %v5200
        %v5219 = vsel %vm5203, %v5200, %v5202
        %v5244 = vadd.f32 %v3837, %v5204
        %v5245 = vadd.f32 %v3838, %v5205
        %v5246 = vadd.f32 %v3839, %v5160
        %v5247 = vadd.f32 %v3840, %v5206
        %v5248 = vadd.f32 %v3841, %v5207
        %v5249 = vadd.f32 %v3842, %v5166
        %v5250 = vadd.f32 %v3843, %v5208
        %v5251 = vadd.f32 %v3844, %v5209
        %v5252 = vadd.f32 %v3845, %v5172
        %v5253 = vadd.f32 %v3846, %v5210
        %v5254 = vadd.f32 %v3847, %v5211
        %v5255 = vadd.f32 %v3848, %v5178
        %v5256 = vadd.f32 %v3849, %v5212
        %v5257 = vadd.f32 %v3850, %v5213
        %v5258 = vadd.f32 %v3851, %v5184
        %v5259 = vadd.f32 %v3852, %v5214
        %v5260 = vadd.f32 %v3853, %v5215
        %v5261 = vadd.f32 %v3854, %v5190
        %v5262 = vadd.f32 %v3855, %v5216
        %v5263 = vadd.f32 %v3856, %v5217
        %v5264 = vadd.f32 %v3857, %v5196
        %v5265 = vadd.f32 %v3858, %v5218
        %v5266 = vadd.f32 %v3859, %v5219
        %v5267 = vadd.f32 %v3860, %v5202
        %5268 = vset.pattern.permute.xlu0 3
        %5269 = vperm.xlu0 %5268, %v1116
        %v5270 = vpop.permute.xlu0 %5269
        %5272 = vset.pattern.permute.xlu0 3
        %5273 = vperm.xlu0 %5272, %v1117
        %v5274 = vpop.permute.xlu0 %5273
        %5276 = vset.pattern.permute.xlu0 3
        %5277 = vperm.xlu0 %5276, %v1118
        %v5278 = vpop.permute.xlu0 %5277
        %5280 = vset.pattern.permute.xlu0 3
        %5281 = vperm.xlu0 %5280, %v1119
        %v5282 = vpop.permute.xlu0 %5281
        %5284 = vset.pattern.permute.xlu0 3
        %5285 = vperm.xlu0 %5284, %v1120
        %v5286 = vpop.permute.xlu0 %5285
        %5288 = vset.pattern.permute.xlu0 3
        %5289 = vperm.xlu0 %5288, %v1121
        %v5290 = vpop.permute.xlu0 %5289
        %5292 = vset.pattern.permute.xlu0 3
        %5293 = vperm.xlu0 %5292, %v1122
        %v5294 = vpop.permute.xlu0 %5293
        %5296 = vset.pattern.permute.xlu0 3
        %5297 = vperm.xlu0 %5296, %v1123
        %v5298 = vpop.permute.xlu0 %5297
        %v5300 = vmul.f32 %v5270, %v1092
        %v5301 = vmul.f32 %v5270, %v1093
        %v5302 = vmul.f32 %v5270, %v1094
        %v5303 = vmul.f32 %v5274, %v1095
        %v5304 = vmul.f32 %v5274, %v1096
        %v5305 = vmul.f32 %v5274, %v1097
        %v5306 = vmul.f32 %v5278, %v1098
        %v5307 = vmul.f32 %v5278, %v1099
        %v5308 = vmul.f32 %v5278, %v1100
        %v5309 = vmul.f32 %v5282, %v1101
        %v5310 = vmul.f32 %v5282, %v1102
        %v5311 = vmul.f32 %v5282, %v1103
        %v5312 = vmul.f32 %v5286, %v1104
        %v5313 = vmul.f32 %v5286, %v1105
        %v5314 = vmul.f32 %v5286, %v1106
        %v5315 = vmul.f32 %v5290, %v1107
        %v5316 = vmul.f32 %v5290, %v1108
        %v5317 = vmul.f32 %v5290, %v1109
        %v5318 = vmul.f32 %v5294, %v1110
        %v5319 = vmul.f32 %v5294, %v1111
        %v5320 = vmul.f32 %v5294, %v1112
        %v5321 = vmul.f32 %v5298, %v1113
        %v5322 = vmul.f32 %v5298, %v1114
        %v5323 = vmul.f32 %v5298, %v1115
        %v5324 = vadd.f32 %v5300, 0.0
        %v5325 = vadd.f32 %v5301, 0.0
        %v5326 = vadd.f32 %v5302, 0.0
        %v5327 = vadd.f32 %v5303, 0.0
        %v5328 = vadd.f32 %v5304, 0.0
        %v5329 = vadd.f32 %v5305, 0.0
        %v5330 = vadd.f32 %v5306, 0.0
        %v5331 = vadd.f32 %v5307, 0.0
        %v5332 = vadd.f32 %v5308, 0.0
        %v5333 = vadd.f32 %v5309, 0.0
        %v5334 = vadd.f32 %v5310, 0.0
        %v5335 = vadd.f32 %v5311, 0.0
        %v5336 = vadd.f32 %v5312, 0.0
        %v5337 = vadd.f32 %v5313, 0.0
        %v5338 = vadd.f32 %v5314, 0.0
        %v5339 = vadd.f32 %v5315, 0.0
        %v5340 = vadd.f32 %v5316, 0.0
        %v5341 = vadd.f32 %v5317, 0.0
        %v5342 = vadd.f32 %v5318, 0.0
        %v5343 = vadd.f32 %v5319, 0.0
        %v5344 = vadd.f32 %v5320, 0.0
        %v5345 = vadd.f32 %v5321, 0.0
        %v5346 = vadd.f32 %v5322, 0.0
        %v5347 = vadd.f32 %v5323, 0.0
        %5348 = vset.pattern.permute.xlu0 10
        %5349 = vperm.xlu0 %5348, %v1116
        %v5350 = vpop.permute.xlu0 %5349
        %5352 = vset.pattern.permute.xlu0 10
        %5353 = vperm.xlu0 %5352, %v1117
        %v5354 = vpop.permute.xlu0 %5353
        %5356 = vset.pattern.permute.xlu0 10
        %5357 = vperm.xlu0 %5356, %v1118
        %v5358 = vpop.permute.xlu0 %5357
        %5360 = vset.pattern.permute.xlu0 10
        %5361 = vperm.xlu0 %5360, %v1119
        %v5362 = vpop.permute.xlu0 %5361
        %5364 = vset.pattern.permute.xlu0 10
        %5365 = vperm.xlu0 %5364, %v1120
        %v5366 = vpop.permute.xlu0 %5365
        %5368 = vset.pattern.permute.xlu0 10
        %5369 = vperm.xlu0 %5368, %v1121
        %v5370 = vpop.permute.xlu0 %5369
        %5372 = vset.pattern.permute.xlu0 10
        %5373 = vperm.xlu0 %5372, %v1122
        %v5374 = vpop.permute.xlu0 %5373
        %5376 = vset.pattern.permute.xlu0 10
        %5377 = vperm.xlu0 %5376, %v1123
        %v5378 = vpop.permute.xlu0 %5377
        %v5380 = vmul.f32 %v5350, %v1092
        %v5381 = vmul.f32 %v5350, %v1093
        %v5382 = vmul.f32 %v5350, %v1094
        %v5383 = vmul.f32 %v5354, %v1095
        %v5384 = vmul.f32 %v5354, %v1096
        %v5385 = vmul.f32 %v5354, %v1097
        %v5386 = vmul.f32 %v5358, %v1098
        %v5387 = vmul.f32 %v5358, %v1099
        %v5388 = vmul.f32 %v5358, %v1100
        %v5389 = vmul.f32 %v5362, %v1101
        %v5390 = vmul.f32 %v5362, %v1102
        %v5391 = vmul.f32 %v5362, %v1103
        %v5392 = vmul.f32 %v5366, %v1104
        %v5393 = vmul.f32 %v5366, %v1105
        %v5394 = vmul.f32 %v5366, %v1106
        %v5395 = vmul.f32 %v5370, %v1107
        %v5396 = vmul.f32 %v5370, %v1108
        %v5397 = vmul.f32 %v5370, %v1109
        %v5398 = vmul.f32 %v5374, %v1110
        %v5399 = vmul.f32 %v5374, %v1111
        %v5400 = vmul.f32 %v5374, %v1112
        %v5401 = vmul.f32 %v5378, %v1113
        %v5402 = vmul.f32 %v5378, %v1114
        %v5403 = vmul.f32 %v5378, %v1115
        %5428 = vrot.lane.b32.xlu0 %v5380, 112
        %v5429 = vpop.permute.xlu0 %5428
        %5430 = vrot.lane.b32.xlu0 %v5381, 112
        %v5431 = vpop.permute.xlu0 %5430
        %5432 = vrot.lane.b32.xlu0 %v5382, 112
        %v5433 = vpop.permute.xlu0 %5432
        %5434 = vrot.lane.b32.xlu0 %v5383, 112
        %v5435 = vpop.permute.xlu0 %5434
        %5436 = vrot.lane.b32.xlu0 %v5384, 112
        %v5437 = vpop.permute.xlu0 %5436
        %5438 = vrot.lane.b32.xlu0 %v5385, 112
        %v5439 = vpop.permute.xlu0 %5438
        %5440 = vrot.lane.b32.xlu0 %v5386, 112
        %v5441 = vpop.permute.xlu0 %5440
        %5442 = vrot.lane.b32.xlu0 %v5387, 112
        %v5443 = vpop.permute.xlu0 %5442
        %5444 = vrot.lane.b32.xlu0 %v5388, 112
        %v5445 = vpop.permute.xlu0 %5444
        %5446 = vrot.lane.b32.xlu0 %v5389, 112
        %v5447 = vpop.permute.xlu0 %5446
        %5448 = vrot.lane.b32.xlu0 %v5390, 112
        %v5449 = vpop.permute.xlu0 %5448
        %5450 = vrot.lane.b32.xlu0 %v5391, 112
        %v5451 = vpop.permute.xlu0 %5450
        %5452 = vrot.lane.b32.xlu0 %v5392, 112
        %v5453 = vpop.permute.xlu0 %5452
        %5454 = vrot.lane.b32.xlu0 %v5393, 112
        %v5455 = vpop.permute.xlu0 %5454
        %5456 = vrot.lane.b32.xlu0 %v5394, 112
        %v5457 = vpop.permute.xlu0 %5456
        %5458 = vrot.lane.b32.xlu0 %v5395, 112
        %v5459 = vpop.permute.xlu0 %5458
        %5460 = vrot.lane.b32.xlu0 %v5396, 112
        %v5461 = vpop.permute.xlu0 %5460
        %5462 = vrot.lane.b32.xlu0 %v5397, 112
        %v5463 = vpop.permute.xlu0 %5462
        %5464 = vrot.lane.b32.xlu0 %v5398, 112
        %v5465 = vpop.permute.xlu0 %5464
        %5466 = vrot.lane.b32.xlu0 %v5399, 112
        %v5467 = vpop.permute.xlu0 %5466
        %5468 = vrot.lane.b32.xlu0 %v5400, 112
        %v5469 = vpop.permute.xlu0 %5468
        %5470 = vrot.lane.b32.xlu0 %v5401, 112
        %v5471 = vpop.permute.xlu0 %5470
        %5472 = vrot.lane.b32.xlu0 %v5402, 112
        %v5473 = vpop.permute.xlu0 %5472
        %5474 = vrot.lane.b32.xlu0 %v5403, 112
        %v5475 = vpop.permute.xlu0 %5474
        %v5476 = vsel %vm1340, %v5429, %v5431
        %v5477 = vsel %vm1340, %v5431, %v5433
        %v5478 = vsel %vm1340, %v5435, %v5437
        %v5479 = vsel %vm1340, %v5437, %v5439
        %v5480 = vsel %vm1340, %v5441, %v5443
        %v5481 = vsel %vm1340, %v5443, %v5445
        %v5482 = vsel %vm1340, %v5447, %v5449
        %v5483 = vsel %vm1340, %v5449, %v5451
        %v5484 = vsel %vm1340, %v5453, %v5455
        %v5485 = vsel %vm1340, %v5455, %v5457
        %v5486 = vsel %vm1340, %v5459, %v5461
        %v5487 = vsel %vm1340, %v5461, %v5463
        %v5488 = vsel %vm1340, %v5465, %v5467
        %v5489 = vsel %vm1340, %v5467, %v5469
        %v5490 = vsel %vm1340, %v5471, %v5473
        %v5491 = vsel %vm1340, %v5473, %v5475
        %v5516 = vadd.f32 %v5324, %v5476
        %v5517 = vadd.f32 %v5325, %v5477
        %v5518 = vadd.f32 %v5326, %v5433
        %v5519 = vadd.f32 %v5327, %v5478
        %v5520 = vadd.f32 %v5328, %v5479
        %v5521 = vadd.f32 %v5329, %v5439
        %v5522 = vadd.f32 %v5330, %v5480
        %v5523 = vadd.f32 %v5331, %v5481
        %v5524 = vadd.f32 %v5332, %v5445
        %v5525 = vadd.f32 %v5333, %v5482
        %v5526 = vadd.f32 %v5334, %v5483
        %v5527 = vadd.f32 %v5335, %v5451
        %v5528 = vadd.f32 %v5336, %v5484
        %v5529 = vadd.f32 %v5337, %v5485
        %v5530 = vadd.f32 %v5338, %v5457
        %v5531 = vadd.f32 %v5339, %v5486
        %v5532 = vadd.f32 %v5340, %v5487
        %v5533 = vadd.f32 %v5341, %v5463
        %v5534 = vadd.f32 %v5342, %v5488
        %v5535 = vadd.f32 %v5343, %v5489
        %v5536 = vadd.f32 %v5344, %v5469
        %v5537 = vadd.f32 %v5345, %v5490
        %v5538 = vadd.f32 %v5346, %v5491
        %v5539 = vadd.f32 %v5347, %v5475
        %5540 = vset.pattern.permute.xlu0 17
        %5541 = vperm.xlu0 %5540, %v1116
        %v5542 = vpop.permute.xlu0 %5541
        %5544 = vset.pattern.permute.xlu0 17
        %5545 = vperm.xlu0 %5544, %v1117
        %v5546 = vpop.permute.xlu0 %5545
        %5548 = vset.pattern.permute.xlu0 17
        %5549 = vperm.xlu0 %5548, %v1118
        %v5550 = vpop.permute.xlu0 %5549
        %5552 = vset.pattern.permute.xlu0 17
        %5553 = vperm.xlu0 %5552, %v1119
        %v5554 = vpop.permute.xlu0 %5553
        %5556 = vset.pattern.permute.xlu0 17
        %5557 = vperm.xlu0 %5556, %v1120
        %v5558 = vpop.permute.xlu0 %5557
        %5560 = vset.pattern.permute.xlu0 17
        %5561 = vperm.xlu0 %5560, %v1121
        %v5562 = vpop.permute.xlu0 %5561
        %5564 = vset.pattern.permute.xlu0 17
        %5565 = vperm.xlu0 %5564, %v1122
        %v5566 = vpop.permute.xlu0 %5565
        %5568 = vset.pattern.permute.xlu0 17
        %5569 = vperm.xlu0 %5568, %v1123
        %v5570 = vpop.permute.xlu0 %5569
        %v5572 = vmul.f32 %v5542, %v1092
        %v5573 = vmul.f32 %v5542, %v1093
        %v5574 = vmul.f32 %v5542, %v1094
        %v5575 = vmul.f32 %v5546, %v1095
        %v5576 = vmul.f32 %v5546, %v1096
        %v5577 = vmul.f32 %v5546, %v1097
        %v5578 = vmul.f32 %v5550, %v1098
        %v5579 = vmul.f32 %v5550, %v1099
        %v5580 = vmul.f32 %v5550, %v1100
        %v5581 = vmul.f32 %v5554, %v1101
        %v5582 = vmul.f32 %v5554, %v1102
        %v5583 = vmul.f32 %v5554, %v1103
        %v5584 = vmul.f32 %v5558, %v1104
        %v5585 = vmul.f32 %v5558, %v1105
        %v5586 = vmul.f32 %v5558, %v1106
        %v5587 = vmul.f32 %v5562, %v1107
        %v5588 = vmul.f32 %v5562, %v1108
        %v5589 = vmul.f32 %v5562, %v1109
        %v5590 = vmul.f32 %v5566, %v1110
        %v5591 = vmul.f32 %v5566, %v1111
        %v5592 = vmul.f32 %v5566, %v1112
        %v5593 = vmul.f32 %v5570, %v1113
        %v5594 = vmul.f32 %v5570, %v1114
        %v5595 = vmul.f32 %v5570, %v1115
        %5620 = vrot.lane.b32.xlu0 %v5572, 96
        %v5621 = vpop.permute.xlu0 %5620
        %5622 = vrot.lane.b32.xlu0 %v5573, 96
        %v5623 = vpop.permute.xlu0 %5622
        %5624 = vrot.lane.b32.xlu0 %v5574, 96
        %v5625 = vpop.permute.xlu0 %5624
        %5626 = vrot.lane.b32.xlu0 %v5575, 96
        %v5627 = vpop.permute.xlu0 %5626
        %5628 = vrot.lane.b32.xlu0 %v5576, 96
        %v5629 = vpop.permute.xlu0 %5628
        %5630 = vrot.lane.b32.xlu0 %v5577, 96
        %v5631 = vpop.permute.xlu0 %5630
        %5632 = vrot.lane.b32.xlu0 %v5578, 96
        %v5633 = vpop.permute.xlu0 %5632
        %5634 = vrot.lane.b32.xlu0 %v5579, 96
        %v5635 = vpop.permute.xlu0 %5634
        %5636 = vrot.lane.b32.xlu0 %v5580, 96
        %v5637 = vpop.permute.xlu0 %5636
        %5638 = vrot.lane.b32.xlu0 %v5581, 96
        %v5639 = vpop.permute.xlu0 %5638
        %5640 = vrot.lane.b32.xlu0 %v5582, 96
        %v5641 = vpop.permute.xlu0 %5640
        %5642 = vrot.lane.b32.xlu0 %v5583, 96
        %v5643 = vpop.permute.xlu0 %5642
        %5644 = vrot.lane.b32.xlu0 %v5584, 96
        %v5645 = vpop.permute.xlu0 %5644
        %5646 = vrot.lane.b32.xlu0 %v5585, 96
        %v5647 = vpop.permute.xlu0 %5646
        %5648 = vrot.lane.b32.xlu0 %v5586, 96
        %v5649 = vpop.permute.xlu0 %5648
        %5650 = vrot.lane.b32.xlu0 %v5587, 96
        %v5651 = vpop.permute.xlu0 %5650
        %5652 = vrot.lane.b32.xlu0 %v5588, 96
        %v5653 = vpop.permute.xlu0 %5652
        %5654 = vrot.lane.b32.xlu0 %v5589, 96
        %v5655 = vpop.permute.xlu0 %5654
        %5656 = vrot.lane.b32.xlu0 %v5590, 96
        %v5657 = vpop.permute.xlu0 %5656
        %5658 = vrot.lane.b32.xlu0 %v5591, 96
        %v5659 = vpop.permute.xlu0 %5658
        %5660 = vrot.lane.b32.xlu0 %v5592, 96
        %v5661 = vpop.permute.xlu0 %5660
        %5662 = vrot.lane.b32.xlu0 %v5593, 96
        %v5663 = vpop.permute.xlu0 %5662
        %5664 = vrot.lane.b32.xlu0 %v5594, 96
        %v5665 = vpop.permute.xlu0 %5664
        %5666 = vrot.lane.b32.xlu0 %v5595, 96
        %v5667 = vpop.permute.xlu0 %5666
        %v5668 = vsel %vm1533, %v5621, %v5623
        %v5669 = vsel %vm1533, %v5623, %v5625
        %v5670 = vsel %vm1533, %v5627, %v5629
        %v5671 = vsel %vm1533, %v5629, %v5631
        %v5672 = vsel %vm1533, %v5633, %v5635
        %v5673 = vsel %vm1533, %v5635, %v5637
        %v5674 = vsel %vm1533, %v5639, %v5641
        %v5675 = vsel %vm1533, %v5641, %v5643
        %v5676 = vsel %vm1533, %v5645, %v5647
        %v5677 = vsel %vm1533, %v5647, %v5649
        %v5678 = vsel %vm1533, %v5651, %v5653
        %v5679 = vsel %vm1533, %v5653, %v5655
        %v5680 = vsel %vm1533, %v5657, %v5659
        %v5681 = vsel %vm1533, %v5659, %v5661
        %v5682 = vsel %vm1533, %v5663, %v5665
        %v5683 = vsel %vm1533, %v5665, %v5667
        %v5708 = vadd.f32 %v5516, %v5668
        %v5709 = vadd.f32 %v5517, %v5669
        %v5710 = vadd.f32 %v5518, %v5625
        %v5711 = vadd.f32 %v5519, %v5670
        %v5712 = vadd.f32 %v5520, %v5671
        %v5713 = vadd.f32 %v5521, %v5631
        %v5714 = vadd.f32 %v5522, %v5672
        %v5715 = vadd.f32 %v5523, %v5673
        %v5716 = vadd.f32 %v5524, %v5637
        %v5717 = vadd.f32 %v5525, %v5674
        %v5718 = vadd.f32 %v5526, %v5675
        %v5719 = vadd.f32 %v5527, %v5643
        %v5720 = vadd.f32 %v5528, %v5676
        %v5721 = vadd.f32 %v5529, %v5677
        %v5722 = vadd.f32 %v5530, %v5649
        %v5723 = vadd.f32 %v5531, %v5678
        %v5724 = vadd.f32 %v5532, %v5679
        %v5725 = vadd.f32 %v5533, %v5655
        %v5726 = vadd.f32 %v5534, %v5680
        %v5727 = vadd.f32 %v5535, %v5681
        %v5728 = vadd.f32 %v5536, %v5661
        %v5729 = vadd.f32 %v5537, %v5682
        %v5730 = vadd.f32 %v5538, %v5683
        %v5731 = vadd.f32 %v5539, %v5667
        %5732 = vset.pattern.permute.xlu0 24
        %5733 = vperm.xlu0 %5732, %v1116
        %v5734 = vpop.permute.xlu0 %5733
        %5736 = vset.pattern.permute.xlu0 24
        %5737 = vperm.xlu0 %5736, %v1117
        %v5738 = vpop.permute.xlu0 %5737
        %5740 = vset.pattern.permute.xlu0 24
        %5741 = vperm.xlu0 %5740, %v1118
        %v5742 = vpop.permute.xlu0 %5741
        %5744 = vset.pattern.permute.xlu0 24
        %5745 = vperm.xlu0 %5744, %v1119
        %v5746 = vpop.permute.xlu0 %5745
        %5748 = vset.pattern.permute.xlu0 24
        %5749 = vperm.xlu0 %5748, %v1120
        %v5750 = vpop.permute.xlu0 %5749
        %5752 = vset.pattern.permute.xlu0 24
        %5753 = vperm.xlu0 %5752, %v1121
        %v5754 = vpop.permute.xlu0 %5753
        %5756 = vset.pattern.permute.xlu0 24
        %5757 = vperm.xlu0 %5756, %v1122
        %v5758 = vpop.permute.xlu0 %5757
        %5760 = vset.pattern.permute.xlu0 24
        %5761 = vperm.xlu0 %5760, %v1123
        %v5762 = vpop.permute.xlu0 %5761
        %v5764 = vmul.f32 %v5734, %v1093
        %v5765 = vmul.f32 %v5734, %v1094
        %v5766 = vmul.f32 %v5738, %v1096
        %v5767 = vmul.f32 %v5738, %v1097
        %v5768 = vmul.f32 %v5742, %v1099
        %v5769 = vmul.f32 %v5742, %v1100
        %v5770 = vmul.f32 %v5746, %v1102
        %v5771 = vmul.f32 %v5746, %v1103
        %v5772 = vmul.f32 %v5750, %v1105
        %v5773 = vmul.f32 %v5750, %v1106
        %v5774 = vmul.f32 %v5754, %v1108
        %v5775 = vmul.f32 %v5754, %v1109
        %v5776 = vmul.f32 %v5758, %v1111
        %v5777 = vmul.f32 %v5758, %v1112
        %v5778 = vmul.f32 %v5762, %v1114
        %v5779 = vmul.f32 %v5762, %v1115
        %5796 = vrot.lane.b32.xlu0 %v5764, 80
        %v5797 = vpop.permute.xlu0 %5796
        %5798 = vrot.lane.b32.xlu0 %v5765, 80
        %v5799 = vpop.permute.xlu0 %5798
        %5800 = vrot.lane.b32.xlu0 %v5766, 80
        %v5801 = vpop.permute.xlu0 %5800
        %5802 = vrot.lane.b32.xlu0 %v5767, 80
        %v5803 = vpop.permute.xlu0 %5802
        %5804 = vrot.lane.b32.xlu0 %v5768, 80
        %v5805 = vpop.permute.xlu0 %5804
        %5806 = vrot.lane.b32.xlu0 %v5769, 80
        %v5807 = vpop.permute.xlu0 %5806
        %5808 = vrot.lane.b32.xlu0 %v5770, 80
        %v5809 = vpop.permute.xlu0 %5808
        %5810 = vrot.lane.b32.xlu0 %v5771, 80
        %v5811 = vpop.permute.xlu0 %5810
        %5812 = vrot.lane.b32.xlu0 %v5772, 80
        %v5813 = vpop.permute.xlu0 %5812
        %5814 = vrot.lane.b32.xlu0 %v5773, 80
        %v5815 = vpop.permute.xlu0 %5814
        %5816 = vrot.lane.b32.xlu0 %v5774, 80
        %v5817 = vpop.permute.xlu0 %5816
        %5818 = vrot.lane.b32.xlu0 %v5775, 80
        %v5819 = vpop.permute.xlu0 %5818
        %5820 = vrot.lane.b32.xlu0 %v5776, 80
        %v5821 = vpop.permute.xlu0 %5820
        %5822 = vrot.lane.b32.xlu0 %v5777, 80
        %v5823 = vpop.permute.xlu0 %5822
        %5824 = vrot.lane.b32.xlu0 %v5778, 80
        %v5825 = vpop.permute.xlu0 %5824
        %5826 = vrot.lane.b32.xlu0 %v5779, 80
        %v5827 = vpop.permute.xlu0 %5826
        %v5828 = vsel %vm1726, %v5797, %v5799
        %v5829 = vsel %vm1726, %v5801, %v5803
        %v5830 = vsel %vm1726, %v5805, %v5807
        %v5831 = vsel %vm1726, %v5809, %v5811
        %v5832 = vsel %vm1726, %v5813, %v5815
        %v5833 = vsel %vm1726, %v5817, %v5819
        %v5834 = vsel %vm1726, %v5821, %v5823
        %v5835 = vsel %vm1726, %v5825, %v5827
        %v5860 = vadd.f32 %v5708, %v5797
        %v5861 = vadd.f32 %v5709, %v5828
        %v5862 = vadd.f32 %v5710, %v5799
        %v5863 = vadd.f32 %v5711, %v5801
        %v5864 = vadd.f32 %v5712, %v5829
        %v5865 = vadd.f32 %v5713, %v5803
        %v5866 = vadd.f32 %v5714, %v5805
        %v5867 = vadd.f32 %v5715, %v5830
        %v5868 = vadd.f32 %v5716, %v5807
        %v5869 = vadd.f32 %v5717, %v5809
        %v5870 = vadd.f32 %v5718, %v5831
        %v5871 = vadd.f32 %v5719, %v5811
        %v5872 = vadd.f32 %v5720, %v5813
        %v5873 = vadd.f32 %v5721, %v5832
        %v5874 = vadd.f32 %v5722, %v5815
        %v5875 = vadd.f32 %v5723, %v5817
        %v5876 = vadd.f32 %v5724, %v5833
        %v5877 = vadd.f32 %v5725, %v5819
        %v5878 = vadd.f32 %v5726, %v5821
        %v5879 = vadd.f32 %v5727, %v5834
        %v5880 = vadd.f32 %v5728, %v5823
        %v5881 = vadd.f32 %v5729, %v5825
        %v5882 = vadd.f32 %v5730, %v5835
        %v5883 = vadd.f32 %v5731, %v5827
        %5884 = vset.pattern.permute.xlu0 31
        %5885 = vperm.xlu0 %5884, %v1116
        %v5886 = vpop.permute.xlu0 %5885
        %5888 = vset.pattern.permute.xlu0 31
        %5889 = vperm.xlu0 %5888, %v1117
        %v5890 = vpop.permute.xlu0 %5889
        %5892 = vset.pattern.permute.xlu0 31
        %5893 = vperm.xlu0 %5892, %v1118
        %v5894 = vpop.permute.xlu0 %5893
        %5896 = vset.pattern.permute.xlu0 31
        %5897 = vperm.xlu0 %5896, %v1119
        %v5898 = vpop.permute.xlu0 %5897
        %5900 = vset.pattern.permute.xlu0 31
        %5901 = vperm.xlu0 %5900, %v1120
        %v5902 = vpop.permute.xlu0 %5901
        %5904 = vset.pattern.permute.xlu0 31
        %5905 = vperm.xlu0 %5904, %v1121
        %v5906 = vpop.permute.xlu0 %5905
        %5908 = vset.pattern.permute.xlu0 31
        %5909 = vperm.xlu0 %5908, %v1122
        %v5910 = vpop.permute.xlu0 %5909
        %5912 = vset.pattern.permute.xlu0 31
        %5913 = vperm.xlu0 %5912, %v1123
        %v5914 = vpop.permute.xlu0 %5913
        %v5916 = vmul.f32 %v5886, %v1791
        %v5917 = vmul.f32 %v5886, %v1792
        %v5918 = vmul.f32 %v5886, %v1793
        %v5919 = vmul.f32 %v5890, %v1794
        %v5920 = vmul.f32 %v5890, %v1795
        %v5921 = vmul.f32 %v5890, %v1796
        %v5922 = vmul.f32 %v5894, %v1797
        %v5923 = vmul.f32 %v5894, %v1798
        %v5924 = vmul.f32 %v5894, %v1799
        %v5925 = vmul.f32 %v5898, %v1800
        %v5926 = vmul.f32 %v5898, %v1801
        %v5927 = vmul.f32 %v5898, %v1802
        %v5928 = vmul.f32 %v5902, %v1803
        %v5929 = vmul.f32 %v5902, %v1804
        %v5930 = vmul.f32 %v5902, %v1805
        %v5931 = vmul.f32 %v5906, %v1806
        %v5932 = vmul.f32 %v5906, %v1807
        %v5933 = vmul.f32 %v5906, %v1808
        %v5934 = vmul.f32 %v5910, %v1809
        %v5935 = vmul.f32 %v5910, %v1810
        %v5936 = vmul.f32 %v5910, %v1811
        %v5937 = vmul.f32 %v5914, %v1812
        %v5938 = vmul.f32 %v5914, %v1813
        %v5939 = vmul.f32 %v5914, %v1814
        %5964 = vrot.lane.b32.xlu0 %v5916, 64
        %v5965 = vpop.permute.xlu0 %5964
        %5966 = vrot.lane.b32.xlu0 %v5917, 64
        %v5967 = vpop.permute.xlu0 %5966
        %5968 = vrot.lane.b32.xlu0 %v5918, 64
        %v5969 = vpop.permute.xlu0 %5968
        %5970 = vrot.lane.b32.xlu0 %v5919, 64
        %v5971 = vpop.permute.xlu0 %5970
        %5972 = vrot.lane.b32.xlu0 %v5920, 64
        %v5973 = vpop.permute.xlu0 %5972
        %5974 = vrot.lane.b32.xlu0 %v5921, 64
        %v5975 = vpop.permute.xlu0 %5974
        %5976 = vrot.lane.b32.xlu0 %v5922, 64
        %v5977 = vpop.permute.xlu0 %5976
        %5978 = vrot.lane.b32.xlu0 %v5923, 64
        %v5979 = vpop.permute.xlu0 %5978
        %5980 = vrot.lane.b32.xlu0 %v5924, 64
        %v5981 = vpop.permute.xlu0 %5980
        %5982 = vrot.lane.b32.xlu0 %v5925, 64
        %v5983 = vpop.permute.xlu0 %5982
        %5984 = vrot.lane.b32.xlu0 %v5926, 64
        %v5985 = vpop.permute.xlu0 %5984
        %5986 = vrot.lane.b32.xlu0 %v5927, 64
        %v5987 = vpop.permute.xlu0 %5986
        %5988 = vrot.lane.b32.xlu0 %v5928, 64
        %v5989 = vpop.permute.xlu0 %5988
        %5990 = vrot.lane.b32.xlu0 %v5929, 64
        %v5991 = vpop.permute.xlu0 %5990
        %5992 = vrot.lane.b32.xlu0 %v5930, 64
        %v5993 = vpop.permute.xlu0 %5992
        %5994 = vrot.lane.b32.xlu0 %v5931, 64
        %v5995 = vpop.permute.xlu0 %5994
        %5996 = vrot.lane.b32.xlu0 %v5932, 64
        %v5997 = vpop.permute.xlu0 %5996
        %5998 = vrot.lane.b32.xlu0 %v5933, 64
        %v5999 = vpop.permute.xlu0 %5998
        %6000 = vrot.lane.b32.xlu0 %v5934, 64
        %v6001 = vpop.permute.xlu0 %6000
        %6002 = vrot.lane.b32.xlu0 %v5935, 64
        %v6003 = vpop.permute.xlu0 %6002
        %6004 = vrot.lane.b32.xlu0 %v5936, 64
        %v6005 = vpop.permute.xlu0 %6004
        %6006 = vrot.lane.b32.xlu0 %v5937, 64
        %v6007 = vpop.permute.xlu0 %6006
        %6008 = vrot.lane.b32.xlu0 %v5938, 64
        %v6009 = vpop.permute.xlu0 %6008
        %6010 = vrot.lane.b32.xlu0 %v5939, 64
        %v6011 = vpop.permute.xlu0 %6010
        %v6012 = vsel %vm1943, %v5965, %v5967
        %v6013 = vsel %vm1943, %v5967, %v5969
        %v6014 = vsel %vm1943, %v5971, %v5973
        %v6015 = vsel %vm1943, %v5973, %v5975
        %v6016 = vsel %vm1943, %v5977, %v5979
        %v6017 = vsel %vm1943, %v5979, %v5981
        %v6018 = vsel %vm1943, %v5983, %v5985
        %v6019 = vsel %vm1943, %v5985, %v5987
        %v6020 = vsel %vm1943, %v5989, %v5991
        %v6021 = vsel %vm1943, %v5991, %v5993
        %v6022 = vsel %vm1943, %v5995, %v5997
        %v6023 = vsel %vm1943, %v5997, %v5999
        %v6024 = vsel %vm1943, %v6001, %v6003
        %v6025 = vsel %vm1943, %v6003, %v6005
        %v6026 = vsel %vm1943, %v6007, %v6009
        %v6027 = vsel %vm1943, %v6009, %v6011
        %v6052 = vadd.f32 %v5860, %v5965
        %v6053 = vadd.f32 %v5861, %v6012
        %v6054 = vadd.f32 %v5862, %v6013
        %v6055 = vadd.f32 %v5863, %v5971
        %v6056 = vadd.f32 %v5864, %v6014
        %v6057 = vadd.f32 %v5865, %v6015
        %v6058 = vadd.f32 %v5866, %v5977
        %v6059 = vadd.f32 %v5867, %v6016
        %v6060 = vadd.f32 %v5868, %v6017
        %v6061 = vadd.f32 %v5869, %v5983
        %v6062 = vadd.f32 %v5870, %v6018
        %v6063 = vadd.f32 %v5871, %v6019
        %v6064 = vadd.f32 %v5872, %v5989
        %v6065 = vadd.f32 %v5873, %v6020
        %v6066 = vadd.f32 %v5874, %v6021
        %v6067 = vadd.f32 %v5875, %v5995
        %v6068 = vadd.f32 %v5876, %v6022
        %v6069 = vadd.f32 %v5877, %v6023
        %v6070 = vadd.f32 %v5878, %v6001
        %v6071 = vadd.f32 %v5879, %v6024
        %v6072 = vadd.f32 %v5880, %v6025
        %v6073 = vadd.f32 %v5881, %v6007
        %v6074 = vadd.f32 %v5882, %v6026
        %v6075 = vadd.f32 %v5883, %v6027
        %6076 = vset.pattern.permute.xlu0 38
        %6077 = vperm.xlu0 %6076, %v1116
        %v6078 = vpop.permute.xlu0 %6077
        %6080 = vset.pattern.permute.xlu0 38
        %6081 = vperm.xlu0 %6080, %v1117
        %v6082 = vpop.permute.xlu0 %6081
        %6084 = vset.pattern.permute.xlu0 38
        %6085 = vperm.xlu0 %6084, %v1118
        %v6086 = vpop.permute.xlu0 %6085
        %6088 = vset.pattern.permute.xlu0 38
        %6089 = vperm.xlu0 %6088, %v1119
        %v6090 = vpop.permute.xlu0 %6089
        %6092 = vset.pattern.permute.xlu0 38
        %6093 = vperm.xlu0 %6092, %v1120
        %v6094 = vpop.permute.xlu0 %6093
        %6096 = vset.pattern.permute.xlu0 38
        %6097 = vperm.xlu0 %6096, %v1121
        %v6098 = vpop.permute.xlu0 %6097
        %6100 = vset.pattern.permute.xlu0 38
        %6101 = vperm.xlu0 %6100, %v1122
        %v6102 = vpop.permute.xlu0 %6101
        %6104 = vset.pattern.permute.xlu0 38
        %6105 = vperm.xlu0 %6104, %v1123
        %v6106 = vpop.permute.xlu0 %6105
        %v6108 = vmul.f32 %v6078, %v1791
        %v6109 = vmul.f32 %v6078, %v1792
        %v6110 = vmul.f32 %v6078, %v1793
        %v6111 = vmul.f32 %v6082, %v1794
        %v6112 = vmul.f32 %v6082, %v1795
        %v6113 = vmul.f32 %v6082, %v1796
        %v6114 = vmul.f32 %v6086, %v1797
        %v6115 = vmul.f32 %v6086, %v1798
        %v6116 = vmul.f32 %v6086, %v1799
        %v6117 = vmul.f32 %v6090, %v1800
        %v6118 = vmul.f32 %v6090, %v1801
        %v6119 = vmul.f32 %v6090, %v1802
        %v6120 = vmul.f32 %v6094, %v1803
        %v6121 = vmul.f32 %v6094, %v1804
        %v6122 = vmul.f32 %v6094, %v1805
        %v6123 = vmul.f32 %v6098, %v1806
        %v6124 = vmul.f32 %v6098, %v1807
        %v6125 = vmul.f32 %v6098, %v1808
        %v6126 = vmul.f32 %v6102, %v1809
        %v6127 = vmul.f32 %v6102, %v1810
        %v6128 = vmul.f32 %v6102, %v1811
        %v6129 = vmul.f32 %v6106, %v1812
        %v6130 = vmul.f32 %v6106, %v1813
        %v6131 = vmul.f32 %v6106, %v1814
        %6156 = vrot.lane.b32.xlu0 %v6108, 48
        %v6157 = vpop.permute.xlu0 %6156
        %6158 = vrot.lane.b32.xlu0 %v6109, 48
        %v6159 = vpop.permute.xlu0 %6158
        %6160 = vrot.lane.b32.xlu0 %v6110, 48
        %v6161 = vpop.permute.xlu0 %6160
        %6162 = vrot.lane.b32.xlu0 %v6111, 48
        %v6163 = vpop.permute.xlu0 %6162
        %6164 = vrot.lane.b32.xlu0 %v6112, 48
        %v6165 = vpop.permute.xlu0 %6164
        %6166 = vrot.lane.b32.xlu0 %v6113, 48
        %v6167 = vpop.permute.xlu0 %6166
        %6168 = vrot.lane.b32.xlu0 %v6114, 48
        %v6169 = vpop.permute.xlu0 %6168
        %6170 = vrot.lane.b32.xlu0 %v6115, 48
        %v6171 = vpop.permute.xlu0 %6170
        %6172 = vrot.lane.b32.xlu0 %v6116, 48
        %v6173 = vpop.permute.xlu0 %6172
        %6174 = vrot.lane.b32.xlu0 %v6117, 48
        %v6175 = vpop.permute.xlu0 %6174
        %6176 = vrot.lane.b32.xlu0 %v6118, 48
        %v6177 = vpop.permute.xlu0 %6176
        %6178 = vrot.lane.b32.xlu0 %v6119, 48
        %v6179 = vpop.permute.xlu0 %6178
        %6180 = vrot.lane.b32.xlu0 %v6120, 48
        %v6181 = vpop.permute.xlu0 %6180
        %6182 = vrot.lane.b32.xlu0 %v6121, 48
        %v6183 = vpop.permute.xlu0 %6182
        %6184 = vrot.lane.b32.xlu0 %v6122, 48
        %v6185 = vpop.permute.xlu0 %6184
        %6186 = vrot.lane.b32.xlu0 %v6123, 48
        %v6187 = vpop.permute.xlu0 %6186
        %6188 = vrot.lane.b32.xlu0 %v6124, 48
        %v6189 = vpop.permute.xlu0 %6188
        %6190 = vrot.lane.b32.xlu0 %v6125, 48
        %v6191 = vpop.permute.xlu0 %6190
        %6192 = vrot.lane.b32.xlu0 %v6126, 48
        %v6193 = vpop.permute.xlu0 %6192
        %6194 = vrot.lane.b32.xlu0 %v6127, 48
        %v6195 = vpop.permute.xlu0 %6194
        %6196 = vrot.lane.b32.xlu0 %v6128, 48
        %v6197 = vpop.permute.xlu0 %6196
        %6198 = vrot.lane.b32.xlu0 %v6129, 48
        %v6199 = vpop.permute.xlu0 %6198
        %6200 = vrot.lane.b32.xlu0 %v6130, 48
        %v6201 = vpop.permute.xlu0 %6200
        %6202 = vrot.lane.b32.xlu0 %v6131, 48
        %v6203 = vpop.permute.xlu0 %6202
        %v6204 = vsel %vm2136, %v6157, %v6159
        %v6205 = vsel %vm2136, %v6159, %v6161
        %v6206 = vsel %vm2136, %v6163, %v6165
        %v6207 = vsel %vm2136, %v6165, %v6167
        %v6208 = vsel %vm2136, %v6169, %v6171
        %v6209 = vsel %vm2136, %v6171, %v6173
        %v6210 = vsel %vm2136, %v6175, %v6177
        %v6211 = vsel %vm2136, %v6177, %v6179
        %v6212 = vsel %vm2136, %v6181, %v6183
        %v6213 = vsel %vm2136, %v6183, %v6185
        %v6214 = vsel %vm2136, %v6187, %v6189
        %v6215 = vsel %vm2136, %v6189, %v6191
        %v6216 = vsel %vm2136, %v6193, %v6195
        %v6217 = vsel %vm2136, %v6195, %v6197
        %v6218 = vsel %vm2136, %v6199, %v6201
        %v6219 = vsel %vm2136, %v6201, %v6203
        %v6244 = vadd.f32 %v6052, %v6157
        %v6245 = vadd.f32 %v6053, %v6204
        %v6246 = vadd.f32 %v6054, %v6205
        %v6247 = vadd.f32 %v6055, %v6163
        %v6248 = vadd.f32 %v6056, %v6206
        %v6249 = vadd.f32 %v6057, %v6207
        %v6250 = vadd.f32 %v6058, %v6169
        %v6251 = vadd.f32 %v6059, %v6208
        %v6252 = vadd.f32 %v6060, %v6209
        %v6253 = vadd.f32 %v6061, %v6175
        %v6254 = vadd.f32 %v6062, %v6210
        %v6255 = vadd.f32 %v6063, %v6211
        %v6256 = vadd.f32 %v6064, %v6181
        %v6257 = vadd.f32 %v6065, %v6212
        %v6258 = vadd.f32 %v6066, %v6213
        %v6259 = vadd.f32 %v6067, %v6187
        %v6260 = vadd.f32 %v6068, %v6214
        %v6261 = vadd.f32 %v6069, %v6215
        %v6262 = vadd.f32 %v6070, %v6193
        %v6263 = vadd.f32 %v6071, %v6216
        %v6264 = vadd.f32 %v6072, %v6217
        %v6265 = vadd.f32 %v6073, %v6199
        %v6266 = vadd.f32 %v6074, %v6218
        %v6267 = vadd.f32 %v6075, %v6219
        %6268 = vset.pattern.permute.xlu0 45
        %6269 = vperm.xlu0 %6268, %v1116
        %v6270 = vpop.permute.xlu0 %6269
        %6272 = vset.pattern.permute.xlu0 45
        %6273 = vperm.xlu0 %6272, %v1117
        %v6274 = vpop.permute.xlu0 %6273
        %6276 = vset.pattern.permute.xlu0 45
        %6277 = vperm.xlu0 %6276, %v1118
        %v6278 = vpop.permute.xlu0 %6277
        %6280 = vset.pattern.permute.xlu0 45
        %6281 = vperm.xlu0 %6280, %v1119
        %v6282 = vpop.permute.xlu0 %6281
        %6284 = vset.pattern.permute.xlu0 45
        %6285 = vperm.xlu0 %6284, %v1120
        %v6286 = vpop.permute.xlu0 %6285
        %6288 = vset.pattern.permute.xlu0 45
        %6289 = vperm.xlu0 %6288, %v1121
        %v6290 = vpop.permute.xlu0 %6289
        %6292 = vset.pattern.permute.xlu0 45
        %6293 = vperm.xlu0 %6292, %v1122
        %v6294 = vpop.permute.xlu0 %6293
        %6296 = vset.pattern.permute.xlu0 45
        %6297 = vperm.xlu0 %6296, %v1123
        %v6298 = vpop.permute.xlu0 %6297
        %v6300 = vmul.f32 %v6270, %v1791
        %v6301 = vmul.f32 %v6270, %v1792
        %v6302 = vmul.f32 %v6270, %v1793
        %v6303 = vmul.f32 %v6274, %v1794
        %v6304 = vmul.f32 %v6274, %v1795
        %v6305 = vmul.f32 %v6274, %v1796
        %v6306 = vmul.f32 %v6278, %v1797
        %v6307 = vmul.f32 %v6278, %v1798
        %v6308 = vmul.f32 %v6278, %v1799
        %v6309 = vmul.f32 %v6282, %v1800
        %v6310 = vmul.f32 %v6282, %v1801
        %v6311 = vmul.f32 %v6282, %v1802
        %v6312 = vmul.f32 %v6286, %v1803
        %v6313 = vmul.f32 %v6286, %v1804
        %v6314 = vmul.f32 %v6286, %v1805
        %v6315 = vmul.f32 %v6290, %v1806
        %v6316 = vmul.f32 %v6290, %v1807
        %v6317 = vmul.f32 %v6290, %v1808
        %v6318 = vmul.f32 %v6294, %v1809
        %v6319 = vmul.f32 %v6294, %v1810
        %v6320 = vmul.f32 %v6294, %v1811
        %v6321 = vmul.f32 %v6298, %v1812
        %v6322 = vmul.f32 %v6298, %v1813
        %v6323 = vmul.f32 %v6298, %v1814
        %6348 = vrot.lane.b32.xlu0 %v6300, 32
        %v6349 = vpop.permute.xlu0 %6348
        %6350 = vrot.lane.b32.xlu0 %v6301, 32
        %v6351 = vpop.permute.xlu0 %6350
        %6352 = vrot.lane.b32.xlu0 %v6302, 32
        %v6353 = vpop.permute.xlu0 %6352
        %6354 = vrot.lane.b32.xlu0 %v6303, 32
        %v6355 = vpop.permute.xlu0 %6354
        %6356 = vrot.lane.b32.xlu0 %v6304, 32
        %v6357 = vpop.permute.xlu0 %6356
        %6358 = vrot.lane.b32.xlu0 %v6305, 32
        %v6359 = vpop.permute.xlu0 %6358
        %6360 = vrot.lane.b32.xlu0 %v6306, 32
        %v6361 = vpop.permute.xlu0 %6360
        %6362 = vrot.lane.b32.xlu0 %v6307, 32
        %v6363 = vpop.permute.xlu0 %6362
        %6364 = vrot.lane.b32.xlu0 %v6308, 32
        %v6365 = vpop.permute.xlu0 %6364
        %6366 = vrot.lane.b32.xlu0 %v6309, 32
        %v6367 = vpop.permute.xlu0 %6366
        %6368 = vrot.lane.b32.xlu0 %v6310, 32
        %v6369 = vpop.permute.xlu0 %6368
        %6370 = vrot.lane.b32.xlu0 %v6311, 32
        %v6371 = vpop.permute.xlu0 %6370
        %6372 = vrot.lane.b32.xlu0 %v6312, 32
        %v6373 = vpop.permute.xlu0 %6372
        %6374 = vrot.lane.b32.xlu0 %v6313, 32
        %v6375 = vpop.permute.xlu0 %6374
        %6376 = vrot.lane.b32.xlu0 %v6314, 32
        %v6377 = vpop.permute.xlu0 %6376
        %6378 = vrot.lane.b32.xlu0 %v6315, 32
        %v6379 = vpop.permute.xlu0 %6378
        %6380 = vrot.lane.b32.xlu0 %v6316, 32
        %v6381 = vpop.permute.xlu0 %6380
        %6382 = vrot.lane.b32.xlu0 %v6317, 32
        %v6383 = vpop.permute.xlu0 %6382
        %6384 = vrot.lane.b32.xlu0 %v6318, 32
        %v6385 = vpop.permute.xlu0 %6384
        %6386 = vrot.lane.b32.xlu0 %v6319, 32
        %v6387 = vpop.permute.xlu0 %6386
        %6388 = vrot.lane.b32.xlu0 %v6320, 32
        %v6389 = vpop.permute.xlu0 %6388
        %6390 = vrot.lane.b32.xlu0 %v6321, 32
        %v6391 = vpop.permute.xlu0 %6390
        %6392 = vrot.lane.b32.xlu0 %v6322, 32
        %v6393 = vpop.permute.xlu0 %6392
        %6394 = vrot.lane.b32.xlu0 %v6323, 32
        %v6395 = vpop.permute.xlu0 %6394
        %v6396 = vsel %vm626, %v6349, %v6351
        %v6397 = vsel %vm626, %v6351, %v6353
        %v6398 = vsel %vm626, %v6355, %v6357
        %v6399 = vsel %vm626, %v6357, %v6359
        %v6400 = vsel %vm626, %v6361, %v6363
        %v6401 = vsel %vm626, %v6363, %v6365
        %v6402 = vsel %vm626, %v6367, %v6369
        %v6403 = vsel %vm626, %v6369, %v6371
        %v6404 = vsel %vm626, %v6373, %v6375
        %v6405 = vsel %vm626, %v6375, %v6377
        %v6406 = vsel %vm626, %v6379, %v6381
        %v6407 = vsel %vm626, %v6381, %v6383
        %v6408 = vsel %vm626, %v6385, %v6387
        %v6409 = vsel %vm626, %v6387, %v6389
        %v6410 = vsel %vm626, %v6391, %v6393
        %v6411 = vsel %vm626, %v6393, %v6395
        %v6436 = vadd.f32 %v6244, %v6349
        %v6437 = vadd.f32 %v6245, %v6396
        %v6438 = vadd.f32 %v6246, %v6397
        %v6439 = vadd.f32 %v6247, %v6355
        %v6440 = vadd.f32 %v6248, %v6398
        %v6441 = vadd.f32 %v6249, %v6399
        %v6442 = vadd.f32 %v6250, %v6361
        %v6443 = vadd.f32 %v6251, %v6400
        %v6444 = vadd.f32 %v6252, %v6401
        %v6445 = vadd.f32 %v6253, %v6367
        %v6446 = vadd.f32 %v6254, %v6402
        %v6447 = vadd.f32 %v6255, %v6403
        %v6448 = vadd.f32 %v6256, %v6373
        %v6449 = vadd.f32 %v6257, %v6404
        %v6450 = vadd.f32 %v6258, %v6405
        %v6451 = vadd.f32 %v6259, %v6379
        %v6452 = vadd.f32 %v6260, %v6406
        %v6453 = vadd.f32 %v6261, %v6407
        %v6454 = vadd.f32 %v6262, %v6385
        %v6455 = vadd.f32 %v6263, %v6408
        %v6456 = vadd.f32 %v6264, %v6409
        %v6457 = vadd.f32 %v6265, %v6391
        %v6458 = vadd.f32 %v6266, %v6410
        %v6459 = vadd.f32 %v6267, %v6411
        %6484 = vrot.lane.b32.xlu0 %v6436, 125
        %v6485 = vpop.permute.xlu0 %6484
        %6486 = vrot.lane.b32.xlu0 %v6437, 125
        %v6487 = vpop.permute.xlu0 %6486
        %6488 = vrot.lane.b32.xlu0 %v6438, 125
        %v6489 = vpop.permute.xlu0 %6488
        %6490 = vrot.lane.b32.xlu0 %v6439, 125
        %v6491 = vpop.permute.xlu0 %6490
        %6492 = vrot.lane.b32.xlu0 %v6440, 125
        %v6493 = vpop.permute.xlu0 %6492
        %6494 = vrot.lane.b32.xlu0 %v6441, 125
        %v6495 = vpop.permute.xlu0 %6494
        %6496 = vrot.lane.b32.xlu0 %v6442, 125
        %v6497 = vpop.permute.xlu0 %6496
        %6498 = vrot.lane.b32.xlu0 %v6443, 125
        %v6499 = vpop.permute.xlu0 %6498
        %6500 = vrot.lane.b32.xlu0 %v6444, 125
        %v6501 = vpop.permute.xlu0 %6500
        %6502 = vrot.lane.b32.xlu0 %v6445, 125
        %v6503 = vpop.permute.xlu0 %6502
        %6504 = vrot.lane.b32.xlu0 %v6446, 125
        %v6505 = vpop.permute.xlu0 %6504
        %6506 = vrot.lane.b32.xlu0 %v6447, 125
        %v6507 = vpop.permute.xlu0 %6506
        %6508 = vrot.lane.b32.xlu0 %v6448, 125
        %v6509 = vpop.permute.xlu0 %6508
        %6510 = vrot.lane.b32.xlu0 %v6449, 125
        %v6511 = vpop.permute.xlu0 %6510
        %6512 = vrot.lane.b32.xlu0 %v6450, 125
        %v6513 = vpop.permute.xlu0 %6512
        %6514 = vrot.lane.b32.xlu0 %v6451, 125
        %v6515 = vpop.permute.xlu0 %6514
        %6516 = vrot.lane.b32.xlu0 %v6452, 125
        %v6517 = vpop.permute.xlu0 %6516
        %6518 = vrot.lane.b32.xlu0 %v6453, 125
        %v6519 = vpop.permute.xlu0 %6518
        %6520 = vrot.lane.b32.xlu0 %v6454, 125
        %v6521 = vpop.permute.xlu0 %6520
        %6522 = vrot.lane.b32.xlu0 %v6455, 125
        %v6523 = vpop.permute.xlu0 %6522
        %6524 = vrot.lane.b32.xlu0 %v6456, 125
        %v6525 = vpop.permute.xlu0 %6524
        %6526 = vrot.lane.b32.xlu0 %v6457, 125
        %v6527 = vpop.permute.xlu0 %6526
        %6528 = vrot.lane.b32.xlu0 %v6458, 125
        %v6529 = vpop.permute.xlu0 %6528
        %6530 = vrot.lane.b32.xlu0 %v6459, 125
        %v6531 = vpop.permute.xlu0 %6530
        %vm6532 = vcmask 1022976
        %v6533 = vsel %vm6532, %v6485, %v6487
        %v6534 = vsel %vm6532, %v6487, %v6489
        %v6535 = vsel %vm6532, %v6491, %v6493
        %v6536 = vsel %vm6532, %v6493, %v6495
        %v6537 = vsel %vm6532, %v6497, %v6499
        %v6538 = vsel %vm6532, %v6499, %v6501
        %v6539 = vsel %vm6532, %v6503, %v6505
        %v6540 = vsel %vm6532, %v6505, %v6507
        %v6541 = vsel %vm6532, %v6509, %v6511
        %v6542 = vsel %vm6532, %v6511, %v6513
        %v6543 = vsel %vm6532, %v6515, %v6517
        %v6544 = vsel %vm6532, %v6517, %v6519
        %v6545 = vsel %vm6532, %v6521, %v6523
        %v6546 = vsel %vm6532, %v6523, %v6525
        %v6547 = vsel %vm6532, %v6527, %v6529
        %v6548 = vsel %vm6532, %v6529, %v6531
        %v6573 = vadd.f32 %v5244, %v6533
        %v6574 = vadd.f32 %v5245, %v6534
        %v6575 = vadd.f32 %v5246, %v6489
        %v6576 = vadd.f32 %v5247, %v6535
        %v6577 = vadd.f32 %v5248, %v6536
        %v6578 = vadd.f32 %v5249, %v6495
        %v6579 = vadd.f32 %v5250, %v6537
        %v6580 = vadd.f32 %v5251, %v6538
        %v6581 = vadd.f32 %v5252, %v6501
        %v6582 = vadd.f32 %v5253, %v6539
        %v6583 = vadd.f32 %v5254, %v6540
        %v6584 = vadd.f32 %v5255, %v6507
        %v6585 = vadd.f32 %v5256, %v6541
        %v6586 = vadd.f32 %v5257, %v6542
        %v6587 = vadd.f32 %v5258, %v6513
        %v6588 = vadd.f32 %v5259, %v6543
        %v6589 = vadd.f32 %v5260, %v6544
        %v6590 = vadd.f32 %v5261, %v6519
        %v6591 = vadd.f32 %v5262, %v6545
        %v6592 = vadd.f32 %v5263, %v6546
        %v6593 = vadd.f32 %v5264, %v6525
        %v6594 = vadd.f32 %v5265, %v6547
        %v6595 = vadd.f32 %v5266, %v6548
        %v6596 = vadd.f32 %v5267, %v6531
        %6597 = vset.pattern.permute.xlu0 4
        %6598 = vperm.xlu0 %6597, %v1116
        %v6599 = vpop.permute.xlu0 %6598
        %6601 = vset.pattern.permute.xlu0 4
        %6602 = vperm.xlu0 %6601, %v1117
        %v6603 = vpop.permute.xlu0 %6602
        %6605 = vset.pattern.permute.xlu0 4
        %6606 = vperm.xlu0 %6605, %v1118
        %v6607 = vpop.permute.xlu0 %6606
        %6609 = vset.pattern.permute.xlu0 4
        %6610 = vperm.xlu0 %6609, %v1119
        %v6611 = vpop.permute.xlu0 %6610
        %6613 = vset.pattern.permute.xlu0 4
        %6614 = vperm.xlu0 %6613, %v1120
        %v6615 = vpop.permute.xlu0 %6614
        %6617 = vset.pattern.permute.xlu0 4
        %6618 = vperm.xlu0 %6617, %v1121
        %v6619 = vpop.permute.xlu0 %6618
        %6621 = vset.pattern.permute.xlu0 4
        %6622 = vperm.xlu0 %6621, %v1122
        %v6623 = vpop.permute.xlu0 %6622
        %6625 = vset.pattern.permute.xlu0 4
        %6626 = vperm.xlu0 %6625, %v1123
        %v6627 = vpop.permute.xlu0 %6626
        %v6629 = vmul.f32 %v6599, %v1092
        %v6630 = vmul.f32 %v6599, %v1093
        %v6631 = vmul.f32 %v6599, %v1094
        %v6632 = vmul.f32 %v6603, %v1095
        %v6633 = vmul.f32 %v6603, %v1096
        %v6634 = vmul.f32 %v6603, %v1097
        %v6635 = vmul.f32 %v6607, %v1098
        %v6636 = vmul.f32 %v6607, %v1099
        %v6637 = vmul.f32 %v6607, %v1100
        %v6638 = vmul.f32 %v6611, %v1101
        %v6639 = vmul.f32 %v6611, %v1102
        %v6640 = vmul.f32 %v6611, %v1103
        %v6641 = vmul.f32 %v6615, %v1104
        %v6642 = vmul.f32 %v6615, %v1105
        %v6643 = vmul.f32 %v6615, %v1106
        %v6644 = vmul.f32 %v6619, %v1107
        %v6645 = vmul.f32 %v6619, %v1108
        %v6646 = vmul.f32 %v6619, %v1109
        %v6647 = vmul.f32 %v6623, %v1110
        %v6648 = vmul.f32 %v6623, %v1111
        %v6649 = vmul.f32 %v6623, %v1112
        %v6650 = vmul.f32 %v6627, %v1113
        %v6651 = vmul.f32 %v6627, %v1114
        %v6652 = vmul.f32 %v6627, %v1115
        %v6653 = vadd.f32 %v6629, 0.0
        %v6654 = vadd.f32 %v6630, 0.0
        %v6655 = vadd.f32 %v6631, 0.0
        %v6656 = vadd.f32 %v6632, 0.0
        %v6657 = vadd.f32 %v6633, 0.0
        %v6658 = vadd.f32 %v6634, 0.0
        %v6659 = vadd.f32 %v6635, 0.0
        %v6660 = vadd.f32 %v6636, 0.0
        %v6661 = vadd.f32 %v6637, 0.0
        %v6662 = vadd.f32 %v6638, 0.0
        %v6663 = vadd.f32 %v6639, 0.0
        %v6664 = vadd.f32 %v6640, 0.0
        %v6665 = vadd.f32 %v6641, 0.0
        %v6666 = vadd.f32 %v6642, 0.0
        %v6667 = vadd.f32 %v6643, 0.0
        %v6668 = vadd.f32 %v6644, 0.0
        %v6669 = vadd.f32 %v6645, 0.0
        %v6670 = vadd.f32 %v6646, 0.0
        %v6671 = vadd.f32 %v6647, 0.0
        %v6672 = vadd.f32 %v6648, 0.0
        %v6673 = vadd.f32 %v6649, 0.0
        %v6674 = vadd.f32 %v6650, 0.0
        %v6675 = vadd.f32 %v6651, 0.0
        %v6676 = vadd.f32 %v6652, 0.0
        %6677 = vset.pattern.permute.xlu0 11
        %6678 = vperm.xlu0 %6677, %v1116
        %v6679 = vpop.permute.xlu0 %6678
        %6681 = vset.pattern.permute.xlu0 11
        %6682 = vperm.xlu0 %6681, %v1117
        %v6683 = vpop.permute.xlu0 %6682
        %6685 = vset.pattern.permute.xlu0 11
        %6686 = vperm.xlu0 %6685, %v1118
        %v6687 = vpop.permute.xlu0 %6686
        %6689 = vset.pattern.permute.xlu0 11
        %6690 = vperm.xlu0 %6689, %v1119
        %v6691 = vpop.permute.xlu0 %6690
        %6693 = vset.pattern.permute.xlu0 11
        %6694 = vperm.xlu0 %6693, %v1120
        %v6695 = vpop.permute.xlu0 %6694
        %6697 = vset.pattern.permute.xlu0 11
        %6698 = vperm.xlu0 %6697, %v1121
        %v6699 = vpop.permute.xlu0 %6698
        %6701 = vset.pattern.permute.xlu0 11
        %6702 = vperm.xlu0 %6701, %v1122
        %v6703 = vpop.permute.xlu0 %6702
        %6705 = vset.pattern.permute.xlu0 11
        %6706 = vperm.xlu0 %6705, %v1123
        %v6707 = vpop.permute.xlu0 %6706
        %v6709 = vmul.f32 %v6679, %v1092
        %v6710 = vmul.f32 %v6679, %v1093
        %v6711 = vmul.f32 %v6679, %v1094
        %v6712 = vmul.f32 %v6683, %v1095
        %v6713 = vmul.f32 %v6683, %v1096
        %v6714 = vmul.f32 %v6683, %v1097
        %v6715 = vmul.f32 %v6687, %v1098
        %v6716 = vmul.f32 %v6687, %v1099
        %v6717 = vmul.f32 %v6687, %v1100
        %v6718 = vmul.f32 %v6691, %v1101
        %v6719 = vmul.f32 %v6691, %v1102
        %v6720 = vmul.f32 %v6691, %v1103
        %v6721 = vmul.f32 %v6695, %v1104
        %v6722 = vmul.f32 %v6695, %v1105
        %v6723 = vmul.f32 %v6695, %v1106
        %v6724 = vmul.f32 %v6699, %v1107
        %v6725 = vmul.f32 %v6699, %v1108
        %v6726 = vmul.f32 %v6699, %v1109
        %v6727 = vmul.f32 %v6703, %v1110
        %v6728 = vmul.f32 %v6703, %v1111
        %v6729 = vmul.f32 %v6703, %v1112
        %v6730 = vmul.f32 %v6707, %v1113
        %v6731 = vmul.f32 %v6707, %v1114
        %v6732 = vmul.f32 %v6707, %v1115
        %6757 = vrot.lane.b32.xlu0 %v6709, 112
        %v6758 = vpop.permute.xlu0 %6757
        %6759 = vrot.lane.b32.xlu0 %v6710, 112
        %v6760 = vpop.permute.xlu0 %6759
        %6761 = vrot.lane.b32.xlu0 %v6711, 112
        %v6762 = vpop.permute.xlu0 %6761
        %6763 = vrot.lane.b32.xlu0 %v6712, 112
        %v6764 = vpop.permute.xlu0 %6763
        %6765 = vrot.lane.b32.xlu0 %v6713, 112
        %v6766 = vpop.permute.xlu0 %6765
        %6767 = vrot.lane.b32.xlu0 %v6714, 112
        %v6768 = vpop.permute.xlu0 %6767
        %6769 = vrot.lane.b32.xlu0 %v6715, 112
        %v6770 = vpop.permute.xlu0 %6769
        %6771 = vrot.lane.b32.xlu0 %v6716, 112
        %v6772 = vpop.permute.xlu0 %6771
        %6773 = vrot.lane.b32.xlu0 %v6717, 112
        %v6774 = vpop.permute.xlu0 %6773
        %6775 = vrot.lane.b32.xlu0 %v6718, 112
        %v6776 = vpop.permute.xlu0 %6775
        %6777 = vrot.lane.b32.xlu0 %v6719, 112
        %v6778 = vpop.permute.xlu0 %6777
        %6779 = vrot.lane.b32.xlu0 %v6720, 112
        %v6780 = vpop.permute.xlu0 %6779
        %6781 = vrot.lane.b32.xlu0 %v6721, 112
        %v6782 = vpop.permute.xlu0 %6781
        %6783 = vrot.lane.b32.xlu0 %v6722, 112
        %v6784 = vpop.permute.xlu0 %6783
        %6785 = vrot.lane.b32.xlu0 %v6723, 112
        %v6786 = vpop.permute.xlu0 %6785
        %6787 = vrot.lane.b32.xlu0 %v6724, 112
        %v6788 = vpop.permute.xlu0 %6787
        %6789 = vrot.lane.b32.xlu0 %v6725, 112
        %v6790 = vpop.permute.xlu0 %6789
        %6791 = vrot.lane.b32.xlu0 %v6726, 112
        %v6792 = vpop.permute.xlu0 %6791
        %6793 = vrot.lane.b32.xlu0 %v6727, 112
        %v6794 = vpop.permute.xlu0 %6793
        %6795 = vrot.lane.b32.xlu0 %v6728, 112
        %v6796 = vpop.permute.xlu0 %6795
        %6797 = vrot.lane.b32.xlu0 %v6729, 112
        %v6798 = vpop.permute.xlu0 %6797
        %6799 = vrot.lane.b32.xlu0 %v6730, 112
        %v6800 = vpop.permute.xlu0 %6799
        %6801 = vrot.lane.b32.xlu0 %v6731, 112
        %v6802 = vpop.permute.xlu0 %6801
        %6803 = vrot.lane.b32.xlu0 %v6732, 112
        %v6804 = vpop.permute.xlu0 %6803
        %v6805 = vsel %vm1340, %v6758, %v6760
        %v6806 = vsel %vm1340, %v6760, %v6762
        %v6807 = vsel %vm1340, %v6764, %v6766
        %v6808 = vsel %vm1340, %v6766, %v6768
        %v6809 = vsel %vm1340, %v6770, %v6772
        %v6810 = vsel %vm1340, %v6772, %v6774
        %v6811 = vsel %vm1340, %v6776, %v6778
        %v6812 = vsel %vm1340, %v6778, %v6780
        %v6813 = vsel %vm1340, %v6782, %v6784
        %v6814 = vsel %vm1340, %v6784, %v6786
        %v6815 = vsel %vm1340, %v6788, %v6790
        %v6816 = vsel %vm1340, %v6790, %v6792
        %v6817 = vsel %vm1340, %v6794, %v6796
        %v6818 = vsel %vm1340, %v6796, %v6798
        %v6819 = vsel %vm1340, %v6800, %v6802
        %v6820 = vsel %vm1340, %v6802, %v6804
        %v6845 = vadd.f32 %v6653, %v6805
        %v6846 = vadd.f32 %v6654, %v6806
        %v6847 = vadd.f32 %v6655, %v6762
        %v6848 = vadd.f32 %v6656, %v6807
        %v6849 = vadd.f32 %v6657, %v6808
        %v6850 = vadd.f32 %v6658, %v6768
        %v6851 = vadd.f32 %v6659, %v6809
        %v6852 = vadd.f32 %v6660, %v6810
        %v6853 = vadd.f32 %v6661, %v6774
        %v6854 = vadd.f32 %v6662, %v6811
        %v6855 = vadd.f32 %v6663, %v6812
        %v6856 = vadd.f32 %v6664, %v6780
        %v6857 = vadd.f32 %v6665, %v6813
        %v6858 = vadd.f32 %v6666, %v6814
        %v6859 = vadd.f32 %v6667, %v6786
        %v6860 = vadd.f32 %v6668, %v6815
        %v6861 = vadd.f32 %v6669, %v6816
        %v6862 = vadd.f32 %v6670, %v6792
        %v6863 = vadd.f32 %v6671, %v6817
        %v6864 = vadd.f32 %v6672, %v6818
        %v6865 = vadd.f32 %v6673, %v6798
        %v6866 = vadd.f32 %v6674, %v6819
        %v6867 = vadd.f32 %v6675, %v6820
        %v6868 = vadd.f32 %v6676, %v6804
        %6869 = vset.pattern.permute.xlu0 18
        %6870 = vperm.xlu0 %6869, %v1116
        %v6871 = vpop.permute.xlu0 %6870
        %6873 = vset.pattern.permute.xlu0 18
        %6874 = vperm.xlu0 %6873, %v1117
        %v6875 = vpop.permute.xlu0 %6874
        %6877 = vset.pattern.permute.xlu0 18
        %6878 = vperm.xlu0 %6877, %v1118
        %v6879 = vpop.permute.xlu0 %6878
        %6881 = vset.pattern.permute.xlu0 18
        %6882 = vperm.xlu0 %6881, %v1119
        %v6883 = vpop.permute.xlu0 %6882
        %6885 = vset.pattern.permute.xlu0 18
        %6886 = vperm.xlu0 %6885, %v1120
        %v6887 = vpop.permute.xlu0 %6886
        %6889 = vset.pattern.permute.xlu0 18
        %6890 = vperm.xlu0 %6889, %v1121
        %v6891 = vpop.permute.xlu0 %6890
        %6893 = vset.pattern.permute.xlu0 18
        %6894 = vperm.xlu0 %6893, %v1122
        %v6895 = vpop.permute.xlu0 %6894
        %6897 = vset.pattern.permute.xlu0 18
        %6898 = vperm.xlu0 %6897, %v1123
        %v6899 = vpop.permute.xlu0 %6898
        %v6901 = vmul.f32 %v6871, %v1092
        %v6902 = vmul.f32 %v6871, %v1093
        %v6903 = vmul.f32 %v6871, %v1094
        %v6904 = vmul.f32 %v6875, %v1095
        %v6905 = vmul.f32 %v6875, %v1096
        %v6906 = vmul.f32 %v6875, %v1097
        %v6907 = vmul.f32 %v6879, %v1098
        %v6908 = vmul.f32 %v6879, %v1099
        %v6909 = vmul.f32 %v6879, %v1100
        %v6910 = vmul.f32 %v6883, %v1101
        %v6911 = vmul.f32 %v6883, %v1102
        %v6912 = vmul.f32 %v6883, %v1103
        %v6913 = vmul.f32 %v6887, %v1104
        %v6914 = vmul.f32 %v6887, %v1105
        %v6915 = vmul.f32 %v6887, %v1106
        %v6916 = vmul.f32 %v6891, %v1107
        %v6917 = vmul.f32 %v6891, %v1108
        %v6918 = vmul.f32 %v6891, %v1109
        %v6919 = vmul.f32 %v6895, %v1110
        %v6920 = vmul.f32 %v6895, %v1111
        %v6921 = vmul.f32 %v6895, %v1112
        %v6922 = vmul.f32 %v6899, %v1113
        %v6923 = vmul.f32 %v6899, %v1114
        %v6924 = vmul.f32 %v6899, %v1115
        %6949 = vrot.lane.b32.xlu0 %v6901, 96
        %v6950 = vpop.permute.xlu0 %6949
        %6951 = vrot.lane.b32.xlu0 %v6902, 96
        %v6952 = vpop.permute.xlu0 %6951
        %6953 = vrot.lane.b32.xlu0 %v6903, 96
        %v6954 = vpop.permute.xlu0 %6953
        %6955 = vrot.lane.b32.xlu0 %v6904, 96
        %v6956 = vpop.permute.xlu0 %6955
        %6957 = vrot.lane.b32.xlu0 %v6905, 96
        %v6958 = vpop.permute.xlu0 %6957
        %6959 = vrot.lane.b32.xlu0 %v6906, 96
        %v6960 = vpop.permute.xlu0 %6959
        %6961 = vrot.lane.b32.xlu0 %v6907, 96
        %v6962 = vpop.permute.xlu0 %6961
        %6963 = vrot.lane.b32.xlu0 %v6908, 96
        %v6964 = vpop.permute.xlu0 %6963
        %6965 = vrot.lane.b32.xlu0 %v6909, 96
        %v6966 = vpop.permute.xlu0 %6965
        %6967 = vrot.lane.b32.xlu0 %v6910, 96
        %v6968 = vpop.permute.xlu0 %6967
        %6969 = vrot.lane.b32.xlu0 %v6911, 96
        %v6970 = vpop.permute.xlu0 %6969
        %6971 = vrot.lane.b32.xlu0 %v6912, 96
        %v6972 = vpop.permute.xlu0 %6971
        %6973 = vrot.lane.b32.xlu0 %v6913, 96
        %v6974 = vpop.permute.xlu0 %6973
        %6975 = vrot.lane.b32.xlu0 %v6914, 96
        %v6976 = vpop.permute.xlu0 %6975
        %6977 = vrot.lane.b32.xlu0 %v6915, 96
        %v6978 = vpop.permute.xlu0 %6977
        %6979 = vrot.lane.b32.xlu0 %v6916, 96
        %v6980 = vpop.permute.xlu0 %6979
        %6981 = vrot.lane.b32.xlu0 %v6917, 96
        %v6982 = vpop.permute.xlu0 %6981
        %6983 = vrot.lane.b32.xlu0 %v6918, 96
        %v6984 = vpop.permute.xlu0 %6983
        %6985 = vrot.lane.b32.xlu0 %v6919, 96
        %v6986 = vpop.permute.xlu0 %6985
        %6987 = vrot.lane.b32.xlu0 %v6920, 96
        %v6988 = vpop.permute.xlu0 %6987
        %6989 = vrot.lane.b32.xlu0 %v6921, 96
        %v6990 = vpop.permute.xlu0 %6989
        %6991 = vrot.lane.b32.xlu0 %v6922, 96
        %v6992 = vpop.permute.xlu0 %6991
        %6993 = vrot.lane.b32.xlu0 %v6923, 96
        %v6994 = vpop.permute.xlu0 %6993
        %6995 = vrot.lane.b32.xlu0 %v6924, 96
        %v6996 = vpop.permute.xlu0 %6995
        %v6997 = vsel %vm1533, %v6950, %v6952
        %v6998 = vsel %vm1533, %v6952, %v6954
        %v6999 = vsel %vm1533, %v6956, %v6958
        %v7000 = vsel %vm1533, %v6958, %v6960
        %v7001 = vsel %vm1533, %v6962, %v6964
        %v7002 = vsel %vm1533, %v6964, %v6966
        %v7003 = vsel %vm1533, %v6968, %v6970
        %v7004 = vsel %vm1533, %v6970, %v6972
        %v7005 = vsel %vm1533, %v6974, %v6976
        %v7006 = vsel %vm1533, %v6976, %v6978
        %v7007 = vsel %vm1533, %v6980, %v6982
        %v7008 = vsel %vm1533, %v6982, %v6984
        %v7009 = vsel %vm1533, %v6986, %v6988
        %v7010 = vsel %vm1533, %v6988, %v6990
        %v7011 = vsel %vm1533, %v6992, %v6994
        %v7012 = vsel %vm1533, %v6994, %v6996
        %v7037 = vadd.f32 %v6845, %v6997
        %v7038 = vadd.f32 %v6846, %v6998
        %v7039 = vadd.f32 %v6847, %v6954
        %v7040 = vadd.f32 %v6848, %v6999
        %v7041 = vadd.f32 %v6849, %v7000
        %v7042 = vadd.f32 %v6850, %v6960
        %v7043 = vadd.f32 %v6851, %v7001
        %v7044 = vadd.f32 %v6852, %v7002
        %v7045 = vadd.f32 %v6853, %v6966
        %v7046 = vadd.f32 %v6854, %v7003
        %v7047 = vadd.f32 %v6855, %v7004
        %v7048 = vadd.f32 %v6856, %v6972
        %v7049 = vadd.f32 %v6857, %v7005
        %v7050 = vadd.f32 %v6858, %v7006
        %v7051 = vadd.f32 %v6859, %v6978
        %v7052 = vadd.f32 %v6860, %v7007
        %v7053 = vadd.f32 %v6861, %v7008
        %v7054 = vadd.f32 %v6862, %v6984
        %v7055 = vadd.f32 %v6863, %v7009
        %v7056 = vadd.f32 %v6864, %v7010
        %v7057 = vadd.f32 %v6865, %v6990
        %v7058 = vadd.f32 %v6866, %v7011
        %v7059 = vadd.f32 %v6867, %v7012
        %v7060 = vadd.f32 %v6868, %v6996
        %7061 = vset.pattern.permute.xlu0 25
        %7062 = vperm.xlu0 %7061, %v1116
        %v7063 = vpop.permute.xlu0 %7062
        %7065 = vset.pattern.permute.xlu0 25
        %7066 = vperm.xlu0 %7065, %v1117
        %v7067 = vpop.permute.xlu0 %7066
        %7069 = vset.pattern.permute.xlu0 25
        %7070 = vperm.xlu0 %7069, %v1118
        %v7071 = vpop.permute.xlu0 %7070
        %7073 = vset.pattern.permute.xlu0 25
        %7074 = vperm.xlu0 %7073, %v1119
        %v7075 = vpop.permute.xlu0 %7074
        %7077 = vset.pattern.permute.xlu0 25
        %7078 = vperm.xlu0 %7077, %v1120
        %v7079 = vpop.permute.xlu0 %7078
        %7081 = vset.pattern.permute.xlu0 25
        %7082 = vperm.xlu0 %7081, %v1121
        %v7083 = vpop.permute.xlu0 %7082
        %7085 = vset.pattern.permute.xlu0 25
        %7086 = vperm.xlu0 %7085, %v1122
        %v7087 = vpop.permute.xlu0 %7086
        %7089 = vset.pattern.permute.xlu0 25
        %7090 = vperm.xlu0 %7089, %v1123
        %v7091 = vpop.permute.xlu0 %7090
        %v7093 = vmul.f32 %v7063, %v1791
        %v7094 = vmul.f32 %v7063, %v1792
        %v7095 = vmul.f32 %v7063, %v1793
        %v7096 = vmul.f32 %v7067, %v1794
        %v7097 = vmul.f32 %v7067, %v1795
        %v7098 = vmul.f32 %v7067, %v1796
        %v7099 = vmul.f32 %v7071, %v1797
        %v7100 = vmul.f32 %v7071, %v1798
        %v7101 = vmul.f32 %v7071, %v1799
        %v7102 = vmul.f32 %v7075, %v1800
        %v7103 = vmul.f32 %v7075, %v1801
        %v7104 = vmul.f32 %v7075, %v1802
        %v7105 = vmul.f32 %v7079, %v1803
        %v7106 = vmul.f32 %v7079, %v1804
        %v7107 = vmul.f32 %v7079, %v1805
        %v7108 = vmul.f32 %v7083, %v1806
        %v7109 = vmul.f32 %v7083, %v1807
        %v7110 = vmul.f32 %v7083, %v1808
        %v7111 = vmul.f32 %v7087, %v1809
        %v7112 = vmul.f32 %v7087, %v1810
        %v7113 = vmul.f32 %v7087, %v1811
        %v7114 = vmul.f32 %v7091, %v1812
        %v7115 = vmul.f32 %v7091, %v1813
        %v7116 = vmul.f32 %v7091, %v1814
        %7141 = vrot.lane.b32.xlu0 %v7093, 80
        %v7142 = vpop.permute.xlu0 %7141
        %7143 = vrot.lane.b32.xlu0 %v7094, 80
        %v7144 = vpop.permute.xlu0 %7143
        %7145 = vrot.lane.b32.xlu0 %v7095, 80
        %v7146 = vpop.permute.xlu0 %7145
        %7147 = vrot.lane.b32.xlu0 %v7096, 80
        %v7148 = vpop.permute.xlu0 %7147
        %7149 = vrot.lane.b32.xlu0 %v7097, 80
        %v7150 = vpop.permute.xlu0 %7149
        %7151 = vrot.lane.b32.xlu0 %v7098, 80
        %v7152 = vpop.permute.xlu0 %7151
        %7153 = vrot.lane.b32.xlu0 %v7099, 80
        %v7154 = vpop.permute.xlu0 %7153
        %7155 = vrot.lane.b32.xlu0 %v7100, 80
        %v7156 = vpop.permute.xlu0 %7155
        %7157 = vrot.lane.b32.xlu0 %v7101, 80
        %v7158 = vpop.permute.xlu0 %7157
        %7159 = vrot.lane.b32.xlu0 %v7102, 80
        %v7160 = vpop.permute.xlu0 %7159
        %7161 = vrot.lane.b32.xlu0 %v7103, 80
        %v7162 = vpop.permute.xlu0 %7161
        %7163 = vrot.lane.b32.xlu0 %v7104, 80
        %v7164 = vpop.permute.xlu0 %7163
        %7165 = vrot.lane.b32.xlu0 %v7105, 80
        %v7166 = vpop.permute.xlu0 %7165
        %7167 = vrot.lane.b32.xlu0 %v7106, 80
        %v7168 = vpop.permute.xlu0 %7167
        %7169 = vrot.lane.b32.xlu0 %v7107, 80
        %v7170 = vpop.permute.xlu0 %7169
        %7171 = vrot.lane.b32.xlu0 %v7108, 80
        %v7172 = vpop.permute.xlu0 %7171
        %7173 = vrot.lane.b32.xlu0 %v7109, 80
        %v7174 = vpop.permute.xlu0 %7173
        %7175 = vrot.lane.b32.xlu0 %v7110, 80
        %v7176 = vpop.permute.xlu0 %7175
        %7177 = vrot.lane.b32.xlu0 %v7111, 80
        %v7178 = vpop.permute.xlu0 %7177
        %7179 = vrot.lane.b32.xlu0 %v7112, 80
        %v7180 = vpop.permute.xlu0 %7179
        %7181 = vrot.lane.b32.xlu0 %v7113, 80
        %v7182 = vpop.permute.xlu0 %7181
        %7183 = vrot.lane.b32.xlu0 %v7114, 80
        %v7184 = vpop.permute.xlu0 %7183
        %7185 = vrot.lane.b32.xlu0 %v7115, 80
        %v7186 = vpop.permute.xlu0 %7185
        %7187 = vrot.lane.b32.xlu0 %v7116, 80
        %v7188 = vpop.permute.xlu0 %7187
        %v7189 = vsel %vm1726, %v7142, %v7144
        %v7190 = vsel %vm1726, %v7144, %v7146
        %v7191 = vsel %vm1726, %v7148, %v7150
        %v7192 = vsel %vm1726, %v7150, %v7152
        %v7193 = vsel %vm1726, %v7154, %v7156
        %v7194 = vsel %vm1726, %v7156, %v7158
        %v7195 = vsel %vm1726, %v7160, %v7162
        %v7196 = vsel %vm1726, %v7162, %v7164
        %v7197 = vsel %vm1726, %v7166, %v7168
        %v7198 = vsel %vm1726, %v7168, %v7170
        %v7199 = vsel %vm1726, %v7172, %v7174
        %v7200 = vsel %vm1726, %v7174, %v7176
        %v7201 = vsel %vm1726, %v7178, %v7180
        %v7202 = vsel %vm1726, %v7180, %v7182
        %v7203 = vsel %vm1726, %v7184, %v7186
        %v7204 = vsel %vm1726, %v7186, %v7188
        %v7229 = vadd.f32 %v7037, %v7142
        %v7230 = vadd.f32 %v7038, %v7189
        %v7231 = vadd.f32 %v7039, %v7190
        %v7232 = vadd.f32 %v7040, %v7148
        %v7233 = vadd.f32 %v7041, %v7191
        %v7234 = vadd.f32 %v7042, %v7192
        %v7235 = vadd.f32 %v7043, %v7154
        %v7236 = vadd.f32 %v7044, %v7193
        %v7237 = vadd.f32 %v7045, %v7194
        %v7238 = vadd.f32 %v7046, %v7160
        %v7239 = vadd.f32 %v7047, %v7195
        %v7240 = vadd.f32 %v7048, %v7196
        %v7241 = vadd.f32 %v7049, %v7166
        %v7242 = vadd.f32 %v7050, %v7197
        %v7243 = vadd.f32 %v7051, %v7198
        %v7244 = vadd.f32 %v7052, %v7172
        %v7245 = vadd.f32 %v7053, %v7199
        %v7246 = vadd.f32 %v7054, %v7200
        %v7247 = vadd.f32 %v7055, %v7178
        %v7248 = vadd.f32 %v7056, %v7201
        %v7249 = vadd.f32 %v7057, %v7202
        %v7250 = vadd.f32 %v7058, %v7184
        %v7251 = vadd.f32 %v7059, %v7203
        %v7252 = vadd.f32 %v7060, %v7204
        %7253 = vset.pattern.permute.xlu0 32
        %7254 = vperm.xlu0 %7253, %v1116
        %v7255 = vpop.permute.xlu0 %7254
        %7257 = vset.pattern.permute.xlu0 32
        %7258 = vperm.xlu0 %7257, %v1117
        %v7259 = vpop.permute.xlu0 %7258
        %7261 = vset.pattern.permute.xlu0 32
        %7262 = vperm.xlu0 %7261, %v1118
        %v7263 = vpop.permute.xlu0 %7262
        %7265 = vset.pattern.permute.xlu0 32
        %7266 = vperm.xlu0 %7265, %v1119
        %v7267 = vpop.permute.xlu0 %7266
        %7269 = vset.pattern.permute.xlu0 32
        %7270 = vperm.xlu0 %7269, %v1120
        %v7271 = vpop.permute.xlu0 %7270
        %7273 = vset.pattern.permute.xlu0 32
        %7274 = vperm.xlu0 %7273, %v1121
        %v7275 = vpop.permute.xlu0 %7274
        %7277 = vset.pattern.permute.xlu0 32
        %7278 = vperm.xlu0 %7277, %v1122
        %v7279 = vpop.permute.xlu0 %7278
        %7281 = vset.pattern.permute.xlu0 32
        %7282 = vperm.xlu0 %7281, %v1123
        %v7283 = vpop.permute.xlu0 %7282
        %v7285 = vmul.f32 %v7255, %v1791
        %v7286 = vmul.f32 %v7255, %v1792
        %v7287 = vmul.f32 %v7255, %v1793
        %v7288 = vmul.f32 %v7259, %v1794
        %v7289 = vmul.f32 %v7259, %v1795
        %v7290 = vmul.f32 %v7259, %v1796
        %v7291 = vmul.f32 %v7263, %v1797
        %v7292 = vmul.f32 %v7263, %v1798
        %v7293 = vmul.f32 %v7263, %v1799
        %v7294 = vmul.f32 %v7267, %v1800
        %v7295 = vmul.f32 %v7267, %v1801
        %v7296 = vmul.f32 %v7267, %v1802
        %v7297 = vmul.f32 %v7271, %v1803
        %v7298 = vmul.f32 %v7271, %v1804
        %v7299 = vmul.f32 %v7271, %v1805
        %v7300 = vmul.f32 %v7275, %v1806
        %v7301 = vmul.f32 %v7275, %v1807
        %v7302 = vmul.f32 %v7275, %v1808
        %v7303 = vmul.f32 %v7279, %v1809
        %v7304 = vmul.f32 %v7279, %v1810
        %v7305 = vmul.f32 %v7279, %v1811
        %v7306 = vmul.f32 %v7283, %v1812
        %v7307 = vmul.f32 %v7283, %v1813
        %v7308 = vmul.f32 %v7283, %v1814
        %7333 = vrot.lane.b32.xlu0 %v7285, 64
        %v7334 = vpop.permute.xlu0 %7333
        %7335 = vrot.lane.b32.xlu0 %v7286, 64
        %v7336 = vpop.permute.xlu0 %7335
        %7337 = vrot.lane.b32.xlu0 %v7287, 64
        %v7338 = vpop.permute.xlu0 %7337
        %7339 = vrot.lane.b32.xlu0 %v7288, 64
        %v7340 = vpop.permute.xlu0 %7339
        %7341 = vrot.lane.b32.xlu0 %v7289, 64
        %v7342 = vpop.permute.xlu0 %7341
        %7343 = vrot.lane.b32.xlu0 %v7290, 64
        %v7344 = vpop.permute.xlu0 %7343
        %7345 = vrot.lane.b32.xlu0 %v7291, 64
        %v7346 = vpop.permute.xlu0 %7345
        %7347 = vrot.lane.b32.xlu0 %v7292, 64
        %v7348 = vpop.permute.xlu0 %7347
        %7349 = vrot.lane.b32.xlu0 %v7293, 64
        %v7350 = vpop.permute.xlu0 %7349
        %7351 = vrot.lane.b32.xlu0 %v7294, 64
        %v7352 = vpop.permute.xlu0 %7351
        %7353 = vrot.lane.b32.xlu0 %v7295, 64
        %v7354 = vpop.permute.xlu0 %7353
        %7355 = vrot.lane.b32.xlu0 %v7296, 64
        %v7356 = vpop.permute.xlu0 %7355
        %7357 = vrot.lane.b32.xlu0 %v7297, 64
        %v7358 = vpop.permute.xlu0 %7357
        %7359 = vrot.lane.b32.xlu0 %v7298, 64
        %v7360 = vpop.permute.xlu0 %7359
        %7361 = vrot.lane.b32.xlu0 %v7299, 64
        %v7362 = vpop.permute.xlu0 %7361
        %7363 = vrot.lane.b32.xlu0 %v7300, 64
        %v7364 = vpop.permute.xlu0 %7363
        %7365 = vrot.lane.b32.xlu0 %v7301, 64
        %v7366 = vpop.permute.xlu0 %7365
        %7367 = vrot.lane.b32.xlu0 %v7302, 64
        %v7368 = vpop.permute.xlu0 %7367
        %7369 = vrot.lane.b32.xlu0 %v7303, 64
        %v7370 = vpop.permute.xlu0 %7369
        %7371 = vrot.lane.b32.xlu0 %v7304, 64
        %v7372 = vpop.permute.xlu0 %7371
        %7373 = vrot.lane.b32.xlu0 %v7305, 64
        %v7374 = vpop.permute.xlu0 %7373
        %7375 = vrot.lane.b32.xlu0 %v7306, 64
        %v7376 = vpop.permute.xlu0 %7375
        %7377 = vrot.lane.b32.xlu0 %v7307, 64
        %v7378 = vpop.permute.xlu0 %7377
        %7379 = vrot.lane.b32.xlu0 %v7308, 64
        %v7380 = vpop.permute.xlu0 %7379
        %v7381 = vsel %vm1943, %v7334, %v7336
        %v7382 = vsel %vm1943, %v7336, %v7338
        %v7383 = vsel %vm1943, %v7340, %v7342
        %v7384 = vsel %vm1943, %v7342, %v7344
        %v7385 = vsel %vm1943, %v7346, %v7348
        %v7386 = vsel %vm1943, %v7348, %v7350
        %v7387 = vsel %vm1943, %v7352, %v7354
        %v7388 = vsel %vm1943, %v7354, %v7356
        %v7389 = vsel %vm1943, %v7358, %v7360
        %v7390 = vsel %vm1943, %v7360, %v7362
        %v7391 = vsel %vm1943, %v7364, %v7366
        %v7392 = vsel %vm1943, %v7366, %v7368
        %v7393 = vsel %vm1943, %v7370, %v7372
        %v7394 = vsel %vm1943, %v7372, %v7374
        %v7395 = vsel %vm1943, %v7376, %v7378
        %v7396 = vsel %vm1943, %v7378, %v7380
        %v7421 = vadd.f32 %v7229, %v7334
        %v7422 = vadd.f32 %v7230, %v7381
        %v7423 = vadd.f32 %v7231, %v7382
        %v7424 = vadd.f32 %v7232, %v7340
        %v7425 = vadd.f32 %v7233, %v7383
        %v7426 = vadd.f32 %v7234, %v7384
        %v7427 = vadd.f32 %v7235, %v7346
        %v7428 = vadd.f32 %v7236, %v7385
        %v7429 = vadd.f32 %v7237, %v7386
        %v7430 = vadd.f32 %v7238, %v7352
        %v7431 = vadd.f32 %v7239, %v7387
        %v7432 = vadd.f32 %v7240, %v7388
        %v7433 = vadd.f32 %v7241, %v7358
        %v7434 = vadd.f32 %v7242, %v7389
        %v7435 = vadd.f32 %v7243, %v7390
        %v7436 = vadd.f32 %v7244, %v7364
        %v7437 = vadd.f32 %v7245, %v7391
        %v7438 = vadd.f32 %v7246, %v7392
        %v7439 = vadd.f32 %v7247, %v7370
        %v7440 = vadd.f32 %v7248, %v7393
        %v7441 = vadd.f32 %v7249, %v7394
        %v7442 = vadd.f32 %v7250, %v7376
        %v7443 = vadd.f32 %v7251, %v7395
        %v7444 = vadd.f32 %v7252, %v7396
        %7445 = vset.pattern.permute.xlu0 39
        %7446 = vperm.xlu0 %7445, %v1116
        %v7447 = vpop.permute.xlu0 %7446
        %7449 = vset.pattern.permute.xlu0 39
        %7450 = vperm.xlu0 %7449, %v1117
        %v7451 = vpop.permute.xlu0 %7450
        %7453 = vset.pattern.permute.xlu0 39
        %7454 = vperm.xlu0 %7453, %v1118
        %v7455 = vpop.permute.xlu0 %7454
        %7457 = vset.pattern.permute.xlu0 39
        %7458 = vperm.xlu0 %7457, %v1119
        %v7459 = vpop.permute.xlu0 %7458
        %7461 = vset.pattern.permute.xlu0 39
        %7462 = vperm.xlu0 %7461, %v1120
        %v7463 = vpop.permute.xlu0 %7462
        %7465 = vset.pattern.permute.xlu0 39
        %7466 = vperm.xlu0 %7465, %v1121
        %v7467 = vpop.permute.xlu0 %7466
        %7469 = vset.pattern.permute.xlu0 39
        %7470 = vperm.xlu0 %7469, %v1122
        %v7471 = vpop.permute.xlu0 %7470
        %7473 = vset.pattern.permute.xlu0 39
        %7474 = vperm.xlu0 %7473, %v1123
        %v7475 = vpop.permute.xlu0 %7474
        %v7477 = vmul.f32 %v7447, %v1791
        %v7478 = vmul.f32 %v7447, %v1792
        %v7479 = vmul.f32 %v7447, %v1793
        %v7480 = vmul.f32 %v7451, %v1794
        %v7481 = vmul.f32 %v7451, %v1795
        %v7482 = vmul.f32 %v7451, %v1796
        %v7483 = vmul.f32 %v7455, %v1797
        %v7484 = vmul.f32 %v7455, %v1798
        %v7485 = vmul.f32 %v7455, %v1799
        %v7486 = vmul.f32 %v7459, %v1800
        %v7487 = vmul.f32 %v7459, %v1801
        %v7488 = vmul.f32 %v7459, %v1802
        %v7489 = vmul.f32 %v7463, %v1803
        %v7490 = vmul.f32 %v7463, %v1804
        %v7491 = vmul.f32 %v7463, %v1805
        %v7492 = vmul.f32 %v7467, %v1806
        %v7493 = vmul.f32 %v7467, %v1807
        %v7494 = vmul.f32 %v7467, %v1808
        %v7495 = vmul.f32 %v7471, %v1809
        %v7496 = vmul.f32 %v7471, %v1810
        %v7497 = vmul.f32 %v7471, %v1811
        %v7498 = vmul.f32 %v7475, %v1812
        %v7499 = vmul.f32 %v7475, %v1813
        %v7500 = vmul.f32 %v7475, %v1814
        %7525 = vrot.lane.b32.xlu0 %v7477, 48
        %v7526 = vpop.permute.xlu0 %7525
        %7527 = vrot.lane.b32.xlu0 %v7478, 48
        %v7528 = vpop.permute.xlu0 %7527
        %7529 = vrot.lane.b32.xlu0 %v7479, 48
        %v7530 = vpop.permute.xlu0 %7529
        %7531 = vrot.lane.b32.xlu0 %v7480, 48
        %v7532 = vpop.permute.xlu0 %7531
        %7533 = vrot.lane.b32.xlu0 %v7481, 48
        %v7534 = vpop.permute.xlu0 %7533
        %7535 = vrot.lane.b32.xlu0 %v7482, 48
        %v7536 = vpop.permute.xlu0 %7535
        %7537 = vrot.lane.b32.xlu0 %v7483, 48
        %v7538 = vpop.permute.xlu0 %7537
        %7539 = vrot.lane.b32.xlu0 %v7484, 48
        %v7540 = vpop.permute.xlu0 %7539
        %7541 = vrot.lane.b32.xlu0 %v7485, 48
        %v7542 = vpop.permute.xlu0 %7541
        %7543 = vrot.lane.b32.xlu0 %v7486, 48
        %v7544 = vpop.permute.xlu0 %7543
        %7545 = vrot.lane.b32.xlu0 %v7487, 48
        %v7546 = vpop.permute.xlu0 %7545
        %7547 = vrot.lane.b32.xlu0 %v7488, 48
        %v7548 = vpop.permute.xlu0 %7547
        %7549 = vrot.lane.b32.xlu0 %v7489, 48
        %v7550 = vpop.permute.xlu0 %7549
        %7551 = vrot.lane.b32.xlu0 %v7490, 48
        %v7552 = vpop.permute.xlu0 %7551
        %7553 = vrot.lane.b32.xlu0 %v7491, 48
        %v7554 = vpop.permute.xlu0 %7553
        %7555 = vrot.lane.b32.xlu0 %v7492, 48
        %v7556 = vpop.permute.xlu0 %7555
        %7557 = vrot.lane.b32.xlu0 %v7493, 48
        %v7558 = vpop.permute.xlu0 %7557
        %7559 = vrot.lane.b32.xlu0 %v7494, 48
        %v7560 = vpop.permute.xlu0 %7559
        %7561 = vrot.lane.b32.xlu0 %v7495, 48
        %v7562 = vpop.permute.xlu0 %7561
        %7563 = vrot.lane.b32.xlu0 %v7496, 48
        %v7564 = vpop.permute.xlu0 %7563
        %7565 = vrot.lane.b32.xlu0 %v7497, 48
        %v7566 = vpop.permute.xlu0 %7565
        %7567 = vrot.lane.b32.xlu0 %v7498, 48
        %v7568 = vpop.permute.xlu0 %7567
        %7569 = vrot.lane.b32.xlu0 %v7499, 48
        %v7570 = vpop.permute.xlu0 %7569
        %7571 = vrot.lane.b32.xlu0 %v7500, 48
        %v7572 = vpop.permute.xlu0 %7571
        %v7573 = vsel %vm2136, %v7526, %v7528
        %v7574 = vsel %vm2136, %v7528, %v7530
        %v7575 = vsel %vm2136, %v7532, %v7534
        %v7576 = vsel %vm2136, %v7534, %v7536
        %v7577 = vsel %vm2136, %v7538, %v7540
        %v7578 = vsel %vm2136, %v7540, %v7542
        %v7579 = vsel %vm2136, %v7544, %v7546
        %v7580 = vsel %vm2136, %v7546, %v7548
        %v7581 = vsel %vm2136, %v7550, %v7552
        %v7582 = vsel %vm2136, %v7552, %v7554
        %v7583 = vsel %vm2136, %v7556, %v7558
        %v7584 = vsel %vm2136, %v7558, %v7560
        %v7585 = vsel %vm2136, %v7562, %v7564
        %v7586 = vsel %vm2136, %v7564, %v7566
        %v7587 = vsel %vm2136, %v7568, %v7570
        %v7588 = vsel %vm2136, %v7570, %v7572
        %v7613 = vadd.f32 %v7421, %v7526
        %v7614 = vadd.f32 %v7422, %v7573
        %v7615 = vadd.f32 %v7423, %v7574
        %v7616 = vadd.f32 %v7424, %v7532
        %v7617 = vadd.f32 %v7425, %v7575
        %v7618 = vadd.f32 %v7426, %v7576
        %v7619 = vadd.f32 %v7427, %v7538
        %v7620 = vadd.f32 %v7428, %v7577
        %v7621 = vadd.f32 %v7429, %v7578
        %v7622 = vadd.f32 %v7430, %v7544
        %v7623 = vadd.f32 %v7431, %v7579
        %v7624 = vadd.f32 %v7432, %v7580
        %v7625 = vadd.f32 %v7433, %v7550
        %v7626 = vadd.f32 %v7434, %v7581
        %v7627 = vadd.f32 %v7435, %v7582
        %v7628 = vadd.f32 %v7436, %v7556
        %v7629 = vadd.f32 %v7437, %v7583
        %v7630 = vadd.f32 %v7438, %v7584
        %v7631 = vadd.f32 %v7439, %v7562
        %v7632 = vadd.f32 %v7440, %v7585
        %v7633 = vadd.f32 %v7441, %v7586
        %v7634 = vadd.f32 %v7442, %v7568
        %v7635 = vadd.f32 %v7443, %v7587
        %v7636 = vadd.f32 %v7444, %v7588
        %7637 = vset.pattern.permute.xlu0 46
        %7638 = vperm.xlu0 %7637, %v1116
        %v7639 = vpop.permute.xlu0 %7638
        %7641 = vset.pattern.permute.xlu0 46
        %7642 = vperm.xlu0 %7641, %v1117
        %v7643 = vpop.permute.xlu0 %7642
        %7645 = vset.pattern.permute.xlu0 46
        %7646 = vperm.xlu0 %7645, %v1118
        %v7647 = vpop.permute.xlu0 %7646
        %7649 = vset.pattern.permute.xlu0 46
        %7650 = vperm.xlu0 %7649, %v1119
        %v7651 = vpop.permute.xlu0 %7650
        %7653 = vset.pattern.permute.xlu0 46
        %7654 = vperm.xlu0 %7653, %v1120
        %v7655 = vpop.permute.xlu0 %7654
        %7657 = vset.pattern.permute.xlu0 46
        %7658 = vperm.xlu0 %7657, %v1121
        %v7659 = vpop.permute.xlu0 %7658
        %7661 = vset.pattern.permute.xlu0 46
        %7662 = vperm.xlu0 %7661, %v1122
        %v7663 = vpop.permute.xlu0 %7662
        %7665 = vset.pattern.permute.xlu0 46
        %7666 = vperm.xlu0 %7665, %v1123
        %v7667 = vpop.permute.xlu0 %7666
        %v7669 = vmul.f32 %v7639, %v1791
        %v7670 = vmul.f32 %v7639, %v1792
        %v7671 = vmul.f32 %v7639, %v1793
        %v7672 = vmul.f32 %v7643, %v1794
        %v7673 = vmul.f32 %v7643, %v1795
        %v7674 = vmul.f32 %v7643, %v1796
        %v7675 = vmul.f32 %v7647, %v1797
        %v7676 = vmul.f32 %v7647, %v1798
        %v7677 = vmul.f32 %v7647, %v1799
        %v7678 = vmul.f32 %v7651, %v1800
        %v7679 = vmul.f32 %v7651, %v1801
        %v7680 = vmul.f32 %v7651, %v1802
        %v7681 = vmul.f32 %v7655, %v1803
        %v7682 = vmul.f32 %v7655, %v1804
        %v7683 = vmul.f32 %v7655, %v1805
        %v7684 = vmul.f32 %v7659, %v1806
        %v7685 = vmul.f32 %v7659, %v1807
        %v7686 = vmul.f32 %v7659, %v1808
        %v7687 = vmul.f32 %v7663, %v1809
        %v7688 = vmul.f32 %v7663, %v1810
        %v7689 = vmul.f32 %v7663, %v1811
        %v7690 = vmul.f32 %v7667, %v1812
        %v7691 = vmul.f32 %v7667, %v1813
        %v7692 = vmul.f32 %v7667, %v1814
        %7717 = vrot.lane.b32.xlu0 %v7669, 32
        %v7718 = vpop.permute.xlu0 %7717
        %7719 = vrot.lane.b32.xlu0 %v7670, 32
        %v7720 = vpop.permute.xlu0 %7719
        %7721 = vrot.lane.b32.xlu0 %v7671, 32
        %v7722 = vpop.permute.xlu0 %7721
        %7723 = vrot.lane.b32.xlu0 %v7672, 32
        %v7724 = vpop.permute.xlu0 %7723
        %7725 = vrot.lane.b32.xlu0 %v7673, 32
        %v7726 = vpop.permute.xlu0 %7725
        %7727 = vrot.lane.b32.xlu0 %v7674, 32
        %v7728 = vpop.permute.xlu0 %7727
        %7729 = vrot.lane.b32.xlu0 %v7675, 32
        %v7730 = vpop.permute.xlu0 %7729
        %7731 = vrot.lane.b32.xlu0 %v7676, 32
        %v7732 = vpop.permute.xlu0 %7731
        %7733 = vrot.lane.b32.xlu0 %v7677, 32
        %v7734 = vpop.permute.xlu0 %7733
        %7735 = vrot.lane.b32.xlu0 %v7678, 32
        %v7736 = vpop.permute.xlu0 %7735
        %7737 = vrot.lane.b32.xlu0 %v7679, 32
        %v7738 = vpop.permute.xlu0 %7737
        %7739 = vrot.lane.b32.xlu0 %v7680, 32
        %v7740 = vpop.permute.xlu0 %7739
        %7741 = vrot.lane.b32.xlu0 %v7681, 32
        %v7742 = vpop.permute.xlu0 %7741
        %7743 = vrot.lane.b32.xlu0 %v7682, 32
        %v7744 = vpop.permute.xlu0 %7743
        %7745 = vrot.lane.b32.xlu0 %v7683, 32
        %v7746 = vpop.permute.xlu0 %7745
        %7747 = vrot.lane.b32.xlu0 %v7684, 32
        %v7748 = vpop.permute.xlu0 %7747
        %7749 = vrot.lane.b32.xlu0 %v7685, 32
        %v7750 = vpop.permute.xlu0 %7749
        %7751 = vrot.lane.b32.xlu0 %v7686, 32
        %v7752 = vpop.permute.xlu0 %7751
        %7753 = vrot.lane.b32.xlu0 %v7687, 32
        %v7754 = vpop.permute.xlu0 %7753
        %7755 = vrot.lane.b32.xlu0 %v7688, 32
        %v7756 = vpop.permute.xlu0 %7755
        %7757 = vrot.lane.b32.xlu0 %v7689, 32
        %v7758 = vpop.permute.xlu0 %7757
        %7759 = vrot.lane.b32.xlu0 %v7690, 32
        %v7760 = vpop.permute.xlu0 %7759
        %7761 = vrot.lane.b32.xlu0 %v7691, 32
        %v7762 = vpop.permute.xlu0 %7761
        %7763 = vrot.lane.b32.xlu0 %v7692, 32
        %v7764 = vpop.permute.xlu0 %7763
        %v7765 = vsel %vm626, %v7718, %v7720
        %v7766 = vsel %vm626, %v7720, %v7722
        %v7767 = vsel %vm626, %v7724, %v7726
        %v7768 = vsel %vm626, %v7726, %v7728
        %v7769 = vsel %vm626, %v7730, %v7732
        %v7770 = vsel %vm626, %v7732, %v7734
        %v7771 = vsel %vm626, %v7736, %v7738
        %v7772 = vsel %vm626, %v7738, %v7740
        %v7773 = vsel %vm626, %v7742, %v7744
        %v7774 = vsel %vm626, %v7744, %v7746
        %v7775 = vsel %vm626, %v7748, %v7750
        %v7776 = vsel %vm626, %v7750, %v7752
        %v7777 = vsel %vm626, %v7754, %v7756
        %v7778 = vsel %vm626, %v7756, %v7758
        %v7779 = vsel %vm626, %v7760, %v7762
        %v7780 = vsel %vm626, %v7762, %v7764
        %v7805 = vadd.f32 %v7613, %v7718
        %v7806 = vadd.f32 %v7614, %v7765
        %v7807 = vadd.f32 %v7615, %v7766
        %v7808 = vadd.f32 %v7616, %v7724
        %v7809 = vadd.f32 %v7617, %v7767
        %v7810 = vadd.f32 %v7618, %v7768
        %v7811 = vadd.f32 %v7619, %v7730
        %v7812 = vadd.f32 %v7620, %v7769
        %v7813 = vadd.f32 %v7621, %v7770
        %v7814 = vadd.f32 %v7622, %v7736
        %v7815 = vadd.f32 %v7623, %v7771
        %v7816 = vadd.f32 %v7624, %v7772
        %v7817 = vadd.f32 %v7625, %v7742
        %v7818 = vadd.f32 %v7626, %v7773
        %v7819 = vadd.f32 %v7627, %v7774
        %v7820 = vadd.f32 %v7628, %v7748
        %v7821 = vadd.f32 %v7629, %v7775
        %v7822 = vadd.f32 %v7630, %v7776
        %v7823 = vadd.f32 %v7631, %v7754
        %v7824 = vadd.f32 %v7632, %v7777
        %v7825 = vadd.f32 %v7633, %v7778
        %v7826 = vadd.f32 %v7634, %v7760
        %v7827 = vadd.f32 %v7635, %v7779
        %v7828 = vadd.f32 %v7636, %v7780
        %s7829 = scalar_lea.vmem %s7, 4
        %v7830 = vld [vmem:[%s7829] ss:$8 sm:$0x3]
        %v7832 = vperm.slane %v7830, 0
        %v7833 = vperm.slane %v7830, 1
        %7834 = vrot.lane.b32.xlu0 %v7832, 81
        %v7835 = vpop.permute.xlu0 %7834
        %7836 = vrot.lane.b32.xlu0 %v7833, 81
        %v7837 = vpop.permute.xlu0 %7836
        %vm7838 = vcmask 662528
        %v7839 = vsel %vm7838, %v7835, %v7837
        %v7843 = vmul.f32 %v7805, %v7835
        %v7844 = vmul.f32 %v7806, %v7839
        %v7845 = vmul.f32 %v7807, %v7837
        %v7846 = vmul.f32 %v7808, %v7835
        %v7847 = vmul.f32 %v7809, %v7839
        %v7848 = vmul.f32 %v7810, %v7837
        %v7849 = vmul.f32 %v7811, %v7835
        %v7850 = vmul.f32 %v7812, %v7839
        %v7851 = vmul.f32 %v7813, %v7837
        %v7852 = vmul.f32 %v7814, %v7835
        %v7853 = vmul.f32 %v7815, %v7839
        %v7854 = vmul.f32 %v7816, %v7837
        %v7855 = vmul.f32 %v7817, %v7835
        %v7856 = vmul.f32 %v7818, %v7839
        %v7857 = vmul.f32 %v7819, %v7837
        %v7858 = vmul.f32 %v7820, %v7835
        %v7859 = vmul.f32 %v7821, %v7839
        %v7860 = vmul.f32 %v7822, %v7837
        %v7861 = vmul.f32 %v7823, %v7835
        %v7862 = vmul.f32 %v7824, %v7839
        %v7863 = vmul.f32 %v7825, %v7837
        %v7864 = vmul.f32 %v7826, %v7835
        %v7865 = vmul.f32 %v7827, %v7839
        %v7866 = vmul.f32 %v7828, %v7837
        %7891 = vrot.lane.b32.xlu0 %v7843, 124
        %v7892 = vpop.permute.xlu0 %7891
        %7893 = vrot.lane.b32.xlu0 %v7844, 124
        %v7894 = vpop.permute.xlu0 %7893
        %7895 = vrot.lane.b32.xlu0 %v7845, 124
        %v7896 = vpop.permute.xlu0 %7895
        %7897 = vrot.lane.b32.xlu0 %v7846, 124
        %v7898 = vpop.permute.xlu0 %7897
        %7899 = vrot.lane.b32.xlu0 %v7847, 124
        %v7900 = vpop.permute.xlu0 %7899
        %7901 = vrot.lane.b32.xlu0 %v7848, 124
        %v7902 = vpop.permute.xlu0 %7901
        %7903 = vrot.lane.b32.xlu0 %v7849, 124
        %v7904 = vpop.permute.xlu0 %7903
        %7905 = vrot.lane.b32.xlu0 %v7850, 124
        %v7906 = vpop.permute.xlu0 %7905
        %7907 = vrot.lane.b32.xlu0 %v7851, 124
        %v7908 = vpop.permute.xlu0 %7907
        %7909 = vrot.lane.b32.xlu0 %v7852, 124
        %v7910 = vpop.permute.xlu0 %7909
        %7911 = vrot.lane.b32.xlu0 %v7853, 124
        %v7912 = vpop.permute.xlu0 %7911
        %7913 = vrot.lane.b32.xlu0 %v7854, 124
        %v7914 = vpop.permute.xlu0 %7913
        %7915 = vrot.lane.b32.xlu0 %v7855, 124
        %v7916 = vpop.permute.xlu0 %7915
        %7917 = vrot.lane.b32.xlu0 %v7856, 124
        %v7918 = vpop.permute.xlu0 %7917
        %7919 = vrot.lane.b32.xlu0 %v7857, 124
        %v7920 = vpop.permute.xlu0 %7919
        %7921 = vrot.lane.b32.xlu0 %v7858, 124
        %v7922 = vpop.permute.xlu0 %7921
        %7923 = vrot.lane.b32.xlu0 %v7859, 124
        %v7924 = vpop.permute.xlu0 %7923
        %7925 = vrot.lane.b32.xlu0 %v7860, 124
        %v7926 = vpop.permute.xlu0 %7925
        %7927 = vrot.lane.b32.xlu0 %v7861, 124
        %v7928 = vpop.permute.xlu0 %7927
        %7929 = vrot.lane.b32.xlu0 %v7862, 124
        %v7930 = vpop.permute.xlu0 %7929
        %7931 = vrot.lane.b32.xlu0 %v7863, 124
        %v7932 = vpop.permute.xlu0 %7931
        %7933 = vrot.lane.b32.xlu0 %v7864, 124
        %v7934 = vpop.permute.xlu0 %7933
        %7935 = vrot.lane.b32.xlu0 %v7865, 124
        %v7936 = vpop.permute.xlu0 %7935
        %7937 = vrot.lane.b32.xlu0 %v7866, 124
        %v7938 = vpop.permute.xlu0 %7937
        %vm7939 = vcmask 1014784
        %v7940 = vsel %vm7939, %v7892, %v7894
        %v7941 = vsel %vm7939, %v7894, %v7896
        %v7942 = vsel %vm7939, %v7898, %v7900
        %v7943 = vsel %vm7939, %v7900, %v7902
        %v7944 = vsel %vm7939, %v7904, %v7906
        %v7945 = vsel %vm7939, %v7906, %v7908
        %v7946 = vsel %vm7939, %v7910, %v7912
        %v7947 = vsel %vm7939, %v7912, %v7914
        %v7948 = vsel %vm7939, %v7916, %v7918
        %v7949 = vsel %vm7939, %v7918, %v7920
        %v7950 = vsel %vm7939, %v7922, %v7924
        %v7951 = vsel %vm7939, %v7924, %v7926
        %v7952 = vsel %vm7939, %v7928, %v7930
        %v7953 = vsel %vm7939, %v7930, %v7932
        %v7954 = vsel %vm7939, %v7934, %v7936
        %v7955 = vsel %vm7939, %v7936, %v7938
        %v7980 = vadd.f32 %v6573, %v7940
        %v7981 = vadd.f32 %v6574, %v7941
        %v7982 = vadd.f32 %v6575, %v7896
        %v7983 = vadd.f32 %v6576, %v7942
        %v7984 = vadd.f32 %v6577, %v7943
        %v7985 = vadd.f32 %v6578, %v7902
        %v7986 = vadd.f32 %v6579, %v7944
        %v7987 = vadd.f32 %v6580, %v7945
        %v7988 = vadd.f32 %v6581, %v7908
        %v7989 = vadd.f32 %v6582, %v7946
        %v7990 = vadd.f32 %v6583, %v7947
        %v7991 = vadd.f32 %v6584, %v7914
        %v7992 = vadd.f32 %v6585, %v7948
        %v7993 = vadd.f32 %v6586, %v7949
        %v7994 = vadd.f32 %v6587, %v7920
        %v7995 = vadd.f32 %v6588, %v7950
        %v7996 = vadd.f32 %v6589, %v7951
        %v7997 = vadd.f32 %v6590, %v7926
        %v7998 = vadd.f32 %v6591, %v7952
        %v7999 = vadd.f32 %v6592, %v7953
        %v8000 = vadd.f32 %v6593, %v7932
        %v8001 = vadd.f32 %v6594, %v7954
        %v8002 = vadd.f32 %v6595, %v7955
        %v8003 = vadd.f32 %v6596, %v7938
        %8004 = vset.pattern.permute.xlu0 5
        %8005 = vperm.xlu0 %8004, %v1116
        %v8006 = vpop.permute.xlu0 %8005
        %8008 = vset.pattern.permute.xlu0 5
        %8009 = vperm.xlu0 %8008, %v1117
        %v8010 = vpop.permute.xlu0 %8009
        %8012 = vset.pattern.permute.xlu0 5
        %8013 = vperm.xlu0 %8012, %v1118
        %v8014 = vpop.permute.xlu0 %8013
        %8016 = vset.pattern.permute.xlu0 5
        %8017 = vperm.xlu0 %8016, %v1119
        %v8018 = vpop.permute.xlu0 %8017
        %8020 = vset.pattern.permute.xlu0 5
        %8021 = vperm.xlu0 %8020, %v1120
        %v8022 = vpop.permute.xlu0 %8021
        %8024 = vset.pattern.permute.xlu0 5
        %8025 = vperm.xlu0 %8024, %v1121
        %v8026 = vpop.permute.xlu0 %8025
        %8028 = vset.pattern.permute.xlu0 5
        %8029 = vperm.xlu0 %8028, %v1122
        %v8030 = vpop.permute.xlu0 %8029
        %8032 = vset.pattern.permute.xlu0 5
        %8033 = vperm.xlu0 %8032, %v1123
        %v8034 = vpop.permute.xlu0 %8033
        %v8036 = vmul.f32 %v8006, %v1092
        %v8037 = vmul.f32 %v8006, %v1093
        %v8038 = vmul.f32 %v8006, %v1094
        %v8039 = vmul.f32 %v8010, %v1095
        %v8040 = vmul.f32 %v8010, %v1096
        %v8041 = vmul.f32 %v8010, %v1097
        %v8042 = vmul.f32 %v8014, %v1098
        %v8043 = vmul.f32 %v8014, %v1099
        %v8044 = vmul.f32 %v8014, %v1100
        %v8045 = vmul.f32 %v8018, %v1101
        %v8046 = vmul.f32 %v8018, %v1102
        %v8047 = vmul.f32 %v8018, %v1103
        %v8048 = vmul.f32 %v8022, %v1104
        %v8049 = vmul.f32 %v8022, %v1105
        %v8050 = vmul.f32 %v8022, %v1106
        %v8051 = vmul.f32 %v8026, %v1107
        %v8052 = vmul.f32 %v8026, %v1108
        %v8053 = vmul.f32 %v8026, %v1109
        %v8054 = vmul.f32 %v8030, %v1110
        %v8055 = vmul.f32 %v8030, %v1111
        %v8056 = vmul.f32 %v8030, %v1112
        %v8057 = vmul.f32 %v8034, %v1113
        %v8058 = vmul.f32 %v8034, %v1114
        %v8059 = vmul.f32 %v8034, %v1115
        %v8060 = vadd.f32 %v8036, 0.0
        %v8061 = vadd.f32 %v8037, 0.0
        %v8062 = vadd.f32 %v8038, 0.0
        %v8063 = vadd.f32 %v8039, 0.0
        %v8064 = vadd.f32 %v8040, 0.0
        %v8065 = vadd.f32 %v8041, 0.0
        %v8066 = vadd.f32 %v8042, 0.0
        %v8067 = vadd.f32 %v8043, 0.0
        %v8068 = vadd.f32 %v8044, 0.0
        %v8069 = vadd.f32 %v8045, 0.0
        %v8070 = vadd.f32 %v8046, 0.0
        %v8071 = vadd.f32 %v8047, 0.0
        %v8072 = vadd.f32 %v8048, 0.0
        %v8073 = vadd.f32 %v8049, 0.0
        %v8074 = vadd.f32 %v8050, 0.0
        %v8075 = vadd.f32 %v8051, 0.0
        %v8076 = vadd.f32 %v8052, 0.0
        %v8077 = vadd.f32 %v8053, 0.0
        %v8078 = vadd.f32 %v8054, 0.0
        %v8079 = vadd.f32 %v8055, 0.0
        %v8080 = vadd.f32 %v8056, 0.0
        %v8081 = vadd.f32 %v8057, 0.0
        %v8082 = vadd.f32 %v8058, 0.0
        %v8083 = vadd.f32 %v8059, 0.0
        %8084 = vset.pattern.permute.xlu0 12
        %8085 = vperm.xlu0 %8084, %v1116
        %v8086 = vpop.permute.xlu0 %8085
        %8088 = vset.pattern.permute.xlu0 12
        %8089 = vperm.xlu0 %8088, %v1117
        %v8090 = vpop.permute.xlu0 %8089
        %8092 = vset.pattern.permute.xlu0 12
        %8093 = vperm.xlu0 %8092, %v1118
        %v8094 = vpop.permute.xlu0 %8093
        %8096 = vset.pattern.permute.xlu0 12
        %8097 = vperm.xlu0 %8096, %v1119
        %v8098 = vpop.permute.xlu0 %8097
        %8100 = vset.pattern.permute.xlu0 12
        %8101 = vperm.xlu0 %8100, %v1120
        %v8102 = vpop.permute.xlu0 %8101
        %8104 = vset.pattern.permute.xlu0 12
        %8105 = vperm.xlu0 %8104, %v1121
        %v8106 = vpop.permute.xlu0 %8105
        %8108 = vset.pattern.permute.xlu0 12
        %8109 = vperm.xlu0 %8108, %v1122
        %v8110 = vpop.permute.xlu0 %8109
        %8112 = vset.pattern.permute.xlu0 12
        %8113 = vperm.xlu0 %8112, %v1123
        %v8114 = vpop.permute.xlu0 %8113
        %v8116 = vmul.f32 %v8086, %v1092
        %v8117 = vmul.f32 %v8086, %v1093
        %v8118 = vmul.f32 %v8086, %v1094
        %v8119 = vmul.f32 %v8090, %v1095
        %v8120 = vmul.f32 %v8090, %v1096
        %v8121 = vmul.f32 %v8090, %v1097
        %v8122 = vmul.f32 %v8094, %v1098
        %v8123 = vmul.f32 %v8094, %v1099
        %v8124 = vmul.f32 %v8094, %v1100
        %v8125 = vmul.f32 %v8098, %v1101
        %v8126 = vmul.f32 %v8098, %v1102
        %v8127 = vmul.f32 %v8098, %v1103
        %v8128 = vmul.f32 %v8102, %v1104
        %v8129 = vmul.f32 %v8102, %v1105
        %v8130 = vmul.f32 %v8102, %v1106
        %v8131 = vmul.f32 %v8106, %v1107
        %v8132 = vmul.f32 %v8106, %v1108
        %v8133 = vmul.f32 %v8106, %v1109
        %v8134 = vmul.f32 %v8110, %v1110
        %v8135 = vmul.f32 %v8110, %v1111
        %v8136 = vmul.f32 %v8110, %v1112
        %v8137 = vmul.f32 %v8114, %v1113
        %v8138 = vmul.f32 %v8114, %v1114
        %v8139 = vmul.f32 %v8114, %v1115
        %8164 = vrot.lane.b32.xlu0 %v8116, 112
        %v8165 = vpop.permute.xlu0 %8164
        %8166 = vrot.lane.b32.xlu0 %v8117, 112
        %v8167 = vpop.permute.xlu0 %8166
        %8168 = vrot.lane.b32.xlu0 %v8118, 112
        %v8169 = vpop.permute.xlu0 %8168
        %8170 = vrot.lane.b32.xlu0 %v8119, 112
        %v8171 = vpop.permute.xlu0 %8170
        %8172 = vrot.lane.b32.xlu0 %v8120, 112
        %v8173 = vpop.permute.xlu0 %8172
        %8174 = vrot.lane.b32.xlu0 %v8121, 112
        %v8175 = vpop.permute.xlu0 %8174
        %8176 = vrot.lane.b32.xlu0 %v8122, 112
        %v8177 = vpop.permute.xlu0 %8176
        %8178 = vrot.lane.b32.xlu0 %v8123, 112
        %v8179 = vpop.permute.xlu0 %8178
        %8180 = vrot.lane.b32.xlu0 %v8124, 112
        %v8181 = vpop.permute.xlu0 %8180
        %8182 = vrot.lane.b32.xlu0 %v8125, 112
        %v8183 = vpop.permute.xlu0 %8182
        %8184 = vrot.lane.b32.xlu0 %v8126, 112
        %v8185 = vpop.permute.xlu0 %8184
        %8186 = vrot.lane.b32.xlu0 %v8127, 112
        %v8187 = vpop.permute.xlu0 %8186
        %8188 = vrot.lane.b32.xlu0 %v8128, 112
        %v8189 = vpop.permute.xlu0 %8188
        %8190 = vrot.lane.b32.xlu0 %v8129, 112
        %v8191 = vpop.permute.xlu0 %8190
        %8192 = vrot.lane.b32.xlu0 %v8130, 112
        %v8193 = vpop.permute.xlu0 %8192
        %8194 = vrot.lane.b32.xlu0 %v8131, 112
        %v8195 = vpop.permute.xlu0 %8194
        %8196 = vrot.lane.b32.xlu0 %v8132, 112
        %v8197 = vpop.permute.xlu0 %8196
        %8198 = vrot.lane.b32.xlu0 %v8133, 112
        %v8199 = vpop.permute.xlu0 %8198
        %8200 = vrot.lane.b32.xlu0 %v8134, 112
        %v8201 = vpop.permute.xlu0 %8200
        %8202 = vrot.lane.b32.xlu0 %v8135, 112
        %v8203 = vpop.permute.xlu0 %8202
        %8204 = vrot.lane.b32.xlu0 %v8136, 112
        %v8205 = vpop.permute.xlu0 %8204
        %8206 = vrot.lane.b32.xlu0 %v8137, 112
        %v8207 = vpop.permute.xlu0 %8206
        %8208 = vrot.lane.b32.xlu0 %v8138, 112
        %v8209 = vpop.permute.xlu0 %8208
        %8210 = vrot.lane.b32.xlu0 %v8139, 112
        %v8211 = vpop.permute.xlu0 %8210
        %v8212 = vsel %vm1340, %v8165, %v8167
        %v8213 = vsel %vm1340, %v8167, %v8169
        %v8214 = vsel %vm1340, %v8171, %v8173
        %v8215 = vsel %vm1340, %v8173, %v8175
        %v8216 = vsel %vm1340, %v8177, %v8179
        %v8217 = vsel %vm1340, %v8179, %v8181
        %v8218 = vsel %vm1340, %v8183, %v8185
        %v8219 = vsel %vm1340, %v8185, %v8187
        %v8220 = vsel %vm1340, %v8189, %v8191
        %v8221 = vsel %vm1340, %v8191, %v8193
        %v8222 = vsel %vm1340, %v8195, %v8197
        %v8223 = vsel %vm1340, %v8197, %v8199
        %v8224 = vsel %vm1340, %v8201, %v8203
        %v8225 = vsel %vm1340, %v8203, %v8205
        %v8226 = vsel %vm1340, %v8207, %v8209
        %v8227 = vsel %vm1340, %v8209, %v8211
        %v8252 = vadd.f32 %v8060, %v8212
        %v8253 = vadd.f32 %v8061, %v8213
        %v8254 = vadd.f32 %v8062, %v8169
        %v8255 = vadd.f32 %v8063, %v8214
        %v8256 = vadd.f32 %v8064, %v8215
        %v8257 = vadd.f32 %v8065, %v8175
        %v8258 = vadd.f32 %v8066, %v8216
        %v8259 = vadd.f32 %v8067, %v8217
        %v8260 = vadd.f32 %v8068, %v8181
        %v8261 = vadd.f32 %v8069, %v8218
        %v8262 = vadd.f32 %v8070, %v8219
        %v8263 = vadd.f32 %v8071, %v8187
        %v8264 = vadd.f32 %v8072, %v8220
        %v8265 = vadd.f32 %v8073, %v8221
        %v8266 = vadd.f32 %v8074, %v8193
        %v8267 = vadd.f32 %v8075, %v8222
        %v8268 = vadd.f32 %v8076, %v8223
        %v8269 = vadd.f32 %v8077, %v8199
        %v8270 = vadd.f32 %v8078, %v8224
        %v8271 = vadd.f32 %v8079, %v8225
        %v8272 = vadd.f32 %v8080, %v8205
        %v8273 = vadd.f32 %v8081, %v8226
        %v8274 = vadd.f32 %v8082, %v8227
        %v8275 = vadd.f32 %v8083, %v8211
        %8276 = vset.pattern.permute.xlu0 19
        %8277 = vperm.xlu0 %8276, %v1116
        %v8278 = vpop.permute.xlu0 %8277
        %8280 = vset.pattern.permute.xlu0 19
        %8281 = vperm.xlu0 %8280, %v1117
        %v8282 = vpop.permute.xlu0 %8281
        %8284 = vset.pattern.permute.xlu0 19
        %8285 = vperm.xlu0 %8284, %v1118
        %v8286 = vpop.permute.xlu0 %8285
        %8288 = vset.pattern.permute.xlu0 19
        %8289 = vperm.xlu0 %8288, %v1119
        %v8290 = vpop.permute.xlu0 %8289
        %8292 = vset.pattern.permute.xlu0 19
        %8293 = vperm.xlu0 %8292, %v1120
        %v8294 = vpop.permute.xlu0 %8293
        %8296 = vset.pattern.permute.xlu0 19
        %8297 = vperm.xlu0 %8296, %v1121
        %v8298 = vpop.permute.xlu0 %8297
        %8300 = vset.pattern.permute.xlu0 19
        %8301 = vperm.xlu0 %8300, %v1122
        %v8302 = vpop.permute.xlu0 %8301
        %8304 = vset.pattern.permute.xlu0 19
        %8305 = vperm.xlu0 %8304, %v1123
        %v8306 = vpop.permute.xlu0 %8305
        %v8308 = vmul.f32 %v8278, %v1092
        %v8309 = vmul.f32 %v8278, %v1093
        %v8310 = vmul.f32 %v8278, %v1094
        %v8311 = vmul.f32 %v8282, %v1095
        %v8312 = vmul.f32 %v8282, %v1096
        %v8313 = vmul.f32 %v8282, %v1097
        %v8314 = vmul.f32 %v8286, %v1098
        %v8315 = vmul.f32 %v8286, %v1099
        %v8316 = vmul.f32 %v8286, %v1100
        %v8317 = vmul.f32 %v8290, %v1101
        %v8318 = vmul.f32 %v8290, %v1102
        %v8319 = vmul.f32 %v8290, %v1103
        %v8320 = vmul.f32 %v8294, %v1104
        %v8321 = vmul.f32 %v8294, %v1105
        %v8322 = vmul.f32 %v8294, %v1106
        %v8323 = vmul.f32 %v8298, %v1107
        %v8324 = vmul.f32 %v8298, %v1108
        %v8325 = vmul.f32 %v8298, %v1109
        %v8326 = vmul.f32 %v8302, %v1110
        %v8327 = vmul.f32 %v8302, %v1111
        %v8328 = vmul.f32 %v8302, %v1112
        %v8329 = vmul.f32 %v8306, %v1113
        %v8330 = vmul.f32 %v8306, %v1114
        %v8331 = vmul.f32 %v8306, %v1115
        %8356 = vrot.lane.b32.xlu0 %v8308, 96
        %v8357 = vpop.permute.xlu0 %8356
        %8358 = vrot.lane.b32.xlu0 %v8309, 96
        %v8359 = vpop.permute.xlu0 %8358
        %8360 = vrot.lane.b32.xlu0 %v8310, 96
        %v8361 = vpop.permute.xlu0 %8360
        %8362 = vrot.lane.b32.xlu0 %v8311, 96
        %v8363 = vpop.permute.xlu0 %8362
        %8364 = vrot.lane.b32.xlu0 %v8312, 96
        %v8365 = vpop.permute.xlu0 %8364
        %8366 = vrot.lane.b32.xlu0 %v8313, 96
        %v8367 = vpop.permute.xlu0 %8366
        %8368 = vrot.lane.b32.xlu0 %v8314, 96
        %v8369 = vpop.permute.xlu0 %8368
        %8370 = vrot.lane.b32.xlu0 %v8315, 96
        %v8371 = vpop.permute.xlu0 %8370
        %8372 = vrot.lane.b32.xlu0 %v8316, 96
        %v8373 = vpop.permute.xlu0 %8372
        %8374 = vrot.lane.b32.xlu0 %v8317, 96
        %v8375 = vpop.permute.xlu0 %8374
        %8376 = vrot.lane.b32.xlu0 %v8318, 96
        %v8377 = vpop.permute.xlu0 %8376
        %8378 = vrot.lane.b32.xlu0 %v8319, 96
        %v8379 = vpop.permute.xlu0 %8378
        %8380 = vrot.lane.b32.xlu0 %v8320, 96
        %v8381 = vpop.permute.xlu0 %8380
        %8382 = vrot.lane.b32.xlu0 %v8321, 96
        %v8383 = vpop.permute.xlu0 %8382
        %8384 = vrot.lane.b32.xlu0 %v8322, 96
        %v8385 = vpop.permute.xlu0 %8384
        %8386 = vrot.lane.b32.xlu0 %v8323, 96
        %v8387 = vpop.permute.xlu0 %8386
        %8388 = vrot.lane.b32.xlu0 %v8324, 96
        %v8389 = vpop.permute.xlu0 %8388
        %8390 = vrot.lane.b32.xlu0 %v8325, 96
        %v8391 = vpop.permute.xlu0 %8390
        %8392 = vrot.lane.b32.xlu0 %v8326, 96
        %v8393 = vpop.permute.xlu0 %8392
        %8394 = vrot.lane.b32.xlu0 %v8327, 96
        %v8395 = vpop.permute.xlu0 %8394
        %8396 = vrot.lane.b32.xlu0 %v8328, 96
        %v8397 = vpop.permute.xlu0 %8396
        %8398 = vrot.lane.b32.xlu0 %v8329, 96
        %v8399 = vpop.permute.xlu0 %8398
        %8400 = vrot.lane.b32.xlu0 %v8330, 96
        %v8401 = vpop.permute.xlu0 %8400
        %8402 = vrot.lane.b32.xlu0 %v8331, 96
        %v8403 = vpop.permute.xlu0 %8402
        %v8404 = vsel %vm1533, %v8357, %v8359
        %v8405 = vsel %vm1533, %v8359, %v8361
        %v8406 = vsel %vm1533, %v8363, %v8365
        %v8407 = vsel %vm1533, %v8365, %v8367
        %v8408 = vsel %vm1533, %v8369, %v8371
        %v8409 = vsel %vm1533, %v8371, %v8373
        %v8410 = vsel %vm1533, %v8375, %v8377
        %v8411 = vsel %vm1533, %v8377, %v8379
        %v8412 = vsel %vm1533, %v8381, %v8383
        %v8413 = vsel %vm1533, %v8383, %v8385
        %v8414 = vsel %vm1533, %v8387, %v8389
        %v8415 = vsel %vm1533, %v8389, %v8391
        %v8416 = vsel %vm1533, %v8393, %v8395
        %v8417 = vsel %vm1533, %v8395, %v8397
        %v8418 = vsel %vm1533, %v8399, %v8401
        %v8419 = vsel %vm1533, %v8401, %v8403
        %v8444 = vadd.f32 %v8252, %v8404
        %v8445 = vadd.f32 %v8253, %v8405
        %v8446 = vadd.f32 %v8254, %v8361
        %v8447 = vadd.f32 %v8255, %v8406
        %v8448 = vadd.f32 %v8256, %v8407
        %v8449 = vadd.f32 %v8257, %v8367
        %v8450 = vadd.f32 %v8258, %v8408
        %v8451 = vadd.f32 %v8259, %v8409
        %v8452 = vadd.f32 %v8260, %v8373
        %v8453 = vadd.f32 %v8261, %v8410
        %v8454 = vadd.f32 %v8262, %v8411
        %v8455 = vadd.f32 %v8263, %v8379
        %v8456 = vadd.f32 %v8264, %v8412
        %v8457 = vadd.f32 %v8265, %v8413
        %v8458 = vadd.f32 %v8266, %v8385
        %v8459 = vadd.f32 %v8267, %v8414
        %v8460 = vadd.f32 %v8268, %v8415
        %v8461 = vadd.f32 %v8269, %v8391
        %v8462 = vadd.f32 %v8270, %v8416
        %v8463 = vadd.f32 %v8271, %v8417
        %v8464 = vadd.f32 %v8272, %v8397
        %v8465 = vadd.f32 %v8273, %v8418
        %v8466 = vadd.f32 %v8274, %v8419
        %v8467 = vadd.f32 %v8275, %v8403
        %8468 = vset.pattern.permute.xlu0 26
        %8469 = vperm.xlu0 %8468, %v1116
        %v8470 = vpop.permute.xlu0 %8469
        %8472 = vset.pattern.permute.xlu0 26
        %8473 = vperm.xlu0 %8472, %v1117
        %v8474 = vpop.permute.xlu0 %8473
        %8476 = vset.pattern.permute.xlu0 26
        %8477 = vperm.xlu0 %8476, %v1118
        %v8478 = vpop.permute.xlu0 %8477
        %8480 = vset.pattern.permute.xlu0 26
        %8481 = vperm.xlu0 %8480, %v1119
        %v8482 = vpop.permute.xlu0 %8481
        %8484 = vset.pattern.permute.xlu0 26
        %8485 = vperm.xlu0 %8484, %v1120
        %v8486 = vpop.permute.xlu0 %8485
        %8488 = vset.pattern.permute.xlu0 26
        %8489 = vperm.xlu0 %8488, %v1121
        %v8490 = vpop.permute.xlu0 %8489
        %8492 = vset.pattern.permute.xlu0 26
        %8493 = vperm.xlu0 %8492, %v1122
        %v8494 = vpop.permute.xlu0 %8493
        %8496 = vset.pattern.permute.xlu0 26
        %8497 = vperm.xlu0 %8496, %v1123
        %v8498 = vpop.permute.xlu0 %8497
        %v8500 = vmul.f32 %v8470, %v1791
        %v8501 = vmul.f32 %v8470, %v1792
        %v8502 = vmul.f32 %v8470, %v1793
        %v8503 = vmul.f32 %v8474, %v1794
        %v8504 = vmul.f32 %v8474, %v1795
        %v8505 = vmul.f32 %v8474, %v1796
        %v8506 = vmul.f32 %v8478, %v1797
        %v8507 = vmul.f32 %v8478, %v1798
        %v8508 = vmul.f32 %v8478, %v1799
        %v8509 = vmul.f32 %v8482, %v1800
        %v8510 = vmul.f32 %v8482, %v1801
        %v8511 = vmul.f32 %v8482, %v1802
        %v8512 = vmul.f32 %v8486, %v1803
        %v8513 = vmul.f32 %v8486, %v1804
        %v8514 = vmul.f32 %v8486, %v1805
        %v8515 = vmul.f32 %v8490, %v1806
        %v8516 = vmul.f32 %v8490, %v1807
        %v8517 = vmul.f32 %v8490, %v1808
        %v8518 = vmul.f32 %v8494, %v1809
        %v8519 = vmul.f32 %v8494, %v1810
        %v8520 = vmul.f32 %v8494, %v1811
        %v8521 = vmul.f32 %v8498, %v1812
        %v8522 = vmul.f32 %v8498, %v1813
        %v8523 = vmul.f32 %v8498, %v1814
        %8548 = vrot.lane.b32.xlu0 %v8500, 80
        %v8549 = vpop.permute.xlu0 %8548
        %8550 = vrot.lane.b32.xlu0 %v8501, 80
        %v8551 = vpop.permute.xlu0 %8550
        %8552 = vrot.lane.b32.xlu0 %v8502, 80
        %v8553 = vpop.permute.xlu0 %8552
        %8554 = vrot.lane.b32.xlu0 %v8503, 80
        %v8555 = vpop.permute.xlu0 %8554
        %8556 = vrot.lane.b32.xlu0 %v8504, 80
        %v8557 = vpop.permute.xlu0 %8556
        %8558 = vrot.lane.b32.xlu0 %v8505, 80
        %v8559 = vpop.permute.xlu0 %8558
        %8560 = vrot.lane.b32.xlu0 %v8506, 80
        %v8561 = vpop.permute.xlu0 %8560
        %8562 = vrot.lane.b32.xlu0 %v8507, 80
        %v8563 = vpop.permute.xlu0 %8562
        %8564 = vrot.lane.b32.xlu0 %v8508, 80
        %v8565 = vpop.permute.xlu0 %8564
        %8566 = vrot.lane.b32.xlu0 %v8509, 80
        %v8567 = vpop.permute.xlu0 %8566
        %8568 = vrot.lane.b32.xlu0 %v8510, 80
        %v8569 = vpop.permute.xlu0 %8568
        %8570 = vrot.lane.b32.xlu0 %v8511, 80
        %v8571 = vpop.permute.xlu0 %8570
        %8572 = vrot.lane.b32.xlu0 %v8512, 80
        %v8573 = vpop.permute.xlu0 %8572
        %8574 = vrot.lane.b32.xlu0 %v8513, 80
        %v8575 = vpop.permute.xlu0 %8574
        %8576 = vrot.lane.b32.xlu0 %v8514, 80
        %v8577 = vpop.permute.xlu0 %8576
        %8578 = vrot.lane.b32.xlu0 %v8515, 80
        %v8579 = vpop.permute.xlu0 %8578
        %8580 = vrot.lane.b32.xlu0 %v8516, 80
        %v8581 = vpop.permute.xlu0 %8580
        %8582 = vrot.lane.b32.xlu0 %v8517, 80
        %v8583 = vpop.permute.xlu0 %8582
        %8584 = vrot.lane.b32.xlu0 %v8518, 80
        %v8585 = vpop.permute.xlu0 %8584
        %8586 = vrot.lane.b32.xlu0 %v8519, 80
        %v8587 = vpop.permute.xlu0 %8586
        %8588 = vrot.lane.b32.xlu0 %v8520, 80
        %v8589 = vpop.permute.xlu0 %8588
        %8590 = vrot.lane.b32.xlu0 %v8521, 80
        %v8591 = vpop.permute.xlu0 %8590
        %8592 = vrot.lane.b32.xlu0 %v8522, 80
        %v8593 = vpop.permute.xlu0 %8592
        %8594 = vrot.lane.b32.xlu0 %v8523, 80
        %v8595 = vpop.permute.xlu0 %8594
        %v8596 = vsel %vm1726, %v8549, %v8551
        %v8597 = vsel %vm1726, %v8551, %v8553
        %v8598 = vsel %vm1726, %v8555, %v8557
        %v8599 = vsel %vm1726, %v8557, %v8559
        %v8600 = vsel %vm1726, %v8561, %v8563
        %v8601 = vsel %vm1726, %v8563, %v8565
        %v8602 = vsel %vm1726, %v8567, %v8569
        %v8603 = vsel %vm1726, %v8569, %v8571
        %v8604 = vsel %vm1726, %v8573, %v8575
        %v8605 = vsel %vm1726, %v8575, %v8577
        %v8606 = vsel %vm1726, %v8579, %v8581
        %v8607 = vsel %vm1726, %v8581, %v8583
        %v8608 = vsel %vm1726, %v8585, %v8587
        %v8609 = vsel %vm1726, %v8587, %v8589
        %v8610 = vsel %vm1726, %v8591, %v8593
        %v8611 = vsel %vm1726, %v8593, %v8595
        %v8636 = vadd.f32 %v8444, %v8549
        %v8637 = vadd.f32 %v8445, %v8596
        %v8638 = vadd.f32 %v8446, %v8597
        %v8639 = vadd.f32 %v8447, %v8555
        %v8640 = vadd.f32 %v8448, %v8598
        %v8641 = vadd.f32 %v8449, %v8599
        %v8642 = vadd.f32 %v8450, %v8561
        %v8643 = vadd.f32 %v8451, %v8600
        %v8644 = vadd.f32 %v8452, %v8601
        %v8645 = vadd.f32 %v8453, %v8567
        %v8646 = vadd.f32 %v8454, %v8602
        %v8647 = vadd.f32 %v8455, %v8603
        %v8648 = vadd.f32 %v8456, %v8573
        %v8649 = vadd.f32 %v8457, %v8604
        %v8650 = vadd.f32 %v8458, %v8605
        %v8651 = vadd.f32 %v8459, %v8579
        %v8652 = vadd.f32 %v8460, %v8606
        %v8653 = vadd.f32 %v8461, %v8607
        %v8654 = vadd.f32 %v8462, %v8585
        %v8655 = vadd.f32 %v8463, %v8608
        %v8656 = vadd.f32 %v8464, %v8609
        %v8657 = vadd.f32 %v8465, %v8591
        %v8658 = vadd.f32 %v8466, %v8610
        %v8659 = vadd.f32 %v8467, %v8611
        %8660 = vset.pattern.permute.xlu0 33
        %8661 = vperm.xlu0 %8660, %v1116
        %v8662 = vpop.permute.xlu0 %8661
        %8664 = vset.pattern.permute.xlu0 33
        %8665 = vperm.xlu0 %8664, %v1117
        %v8666 = vpop.permute.xlu0 %8665
        %8668 = vset.pattern.permute.xlu0 33
        %8669 = vperm.xlu0 %8668, %v1118
        %v8670 = vpop.permute.xlu0 %8669
        %8672 = vset.pattern.permute.xlu0 33
        %8673 = vperm.xlu0 %8672, %v1119
        %v8674 = vpop.permute.xlu0 %8673
        %8676 = vset.pattern.permute.xlu0 33
        %8677 = vperm.xlu0 %8676, %v1120
        %v8678 = vpop.permute.xlu0 %8677
        %8680 = vset.pattern.permute.xlu0 33
        %8681 = vperm.xlu0 %8680, %v1121
        %v8682 = vpop.permute.xlu0 %8681
        %8684 = vset.pattern.permute.xlu0 33
        %8685 = vperm.xlu0 %8684, %v1122
        %v8686 = vpop.permute.xlu0 %8685
        %8688 = vset.pattern.permute.xlu0 33
        %8689 = vperm.xlu0 %8688, %v1123
        %v8690 = vpop.permute.xlu0 %8689
        %v8692 = vmul.f32 %v8662, %v1791
        %v8693 = vmul.f32 %v8662, %v1792
        %v8694 = vmul.f32 %v8662, %v1793
        %v8695 = vmul.f32 %v8666, %v1794
        %v8696 = vmul.f32 %v8666, %v1795
        %v8697 = vmul.f32 %v8666, %v1796
        %v8698 = vmul.f32 %v8670, %v1797
        %v8699 = vmul.f32 %v8670, %v1798
        %v8700 = vmul.f32 %v8670, %v1799
        %v8701 = vmul.f32 %v8674, %v1800
        %v8702 = vmul.f32 %v8674, %v1801
        %v8703 = vmul.f32 %v8674, %v1802
        %v8704 = vmul.f32 %v8678, %v1803
        %v8705 = vmul.f32 %v8678, %v1804
        %v8706 = vmul.f32 %v8678, %v1805
        %v8707 = vmul.f32 %v8682, %v1806
        %v8708 = vmul.f32 %v8682, %v1807
        %v8709 = vmul.f32 %v8682, %v1808
        %v8710 = vmul.f32 %v8686, %v1809
        %v8711 = vmul.f32 %v8686, %v1810
        %v8712 = vmul.f32 %v8686, %v1811
        %v8713 = vmul.f32 %v8690, %v1812
        %v8714 = vmul.f32 %v8690, %v1813
        %v8715 = vmul.f32 %v8690, %v1814
        %8740 = vrot.lane.b32.xlu0 %v8692, 64
        %v8741 = vpop.permute.xlu0 %8740
        %8742 = vrot.lane.b32.xlu0 %v8693, 64
        %v8743 = vpop.permute.xlu0 %8742
        %8744 = vrot.lane.b32.xlu0 %v8694, 64
        %v8745 = vpop.permute.xlu0 %8744
        %8746 = vrot.lane.b32.xlu0 %v8695, 64
        %v8747 = vpop.permute.xlu0 %8746
        %8748 = vrot.lane.b32.xlu0 %v8696, 64
        %v8749 = vpop.permute.xlu0 %8748
        %8750 = vrot.lane.b32.xlu0 %v8697, 64
        %v8751 = vpop.permute.xlu0 %8750
        %8752 = vrot.lane.b32.xlu0 %v8698, 64
        %v8753 = vpop.permute.xlu0 %8752
        %8754 = vrot.lane.b32.xlu0 %v8699, 64
        %v8755 = vpop.permute.xlu0 %8754
        %8756 = vrot.lane.b32.xlu0 %v8700, 64
        %v8757 = vpop.permute.xlu0 %8756
        %8758 = vrot.lane.b32.xlu0 %v8701, 64
        %v8759 = vpop.permute.xlu0 %8758
        %8760 = vrot.lane.b32.xlu0 %v8702, 64
        %v8761 = vpop.permute.xlu0 %8760
        %8762 = vrot.lane.b32.xlu0 %v8703, 64
        %v8763 = vpop.permute.xlu0 %8762
        %8764 = vrot.lane.b32.xlu0 %v8704, 64
        %v8765 = vpop.permute.xlu0 %8764
        %8766 = vrot.lane.b32.xlu0 %v8705, 64
        %v8767 = vpop.permute.xlu0 %8766
        %8768 = vrot.lane.b32.xlu0 %v8706, 64
        %v8769 = vpop.permute.xlu0 %8768
        %8770 = vrot.lane.b32.xlu0 %v8707, 64
        %v8771 = vpop.permute.xlu0 %8770
        %8772 = vrot.lane.b32.xlu0 %v8708, 64
        %v8773 = vpop.permute.xlu0 %8772
        %8774 = vrot.lane.b32.xlu0 %v8709, 64
        %v8775 = vpop.permute.xlu0 %8774
        %8776 = vrot.lane.b32.xlu0 %v8710, 64
        %v8777 = vpop.permute.xlu0 %8776
        %8778 = vrot.lane.b32.xlu0 %v8711, 64
        %v8779 = vpop.permute.xlu0 %8778
        %8780 = vrot.lane.b32.xlu0 %v8712, 64
        %v8781 = vpop.permute.xlu0 %8780
        %8782 = vrot.lane.b32.xlu0 %v8713, 64
        %v8783 = vpop.permute.xlu0 %8782
        %8784 = vrot.lane.b32.xlu0 %v8714, 64
        %v8785 = vpop.permute.xlu0 %8784
        %8786 = vrot.lane.b32.xlu0 %v8715, 64
        %v8787 = vpop.permute.xlu0 %8786
        %v8788 = vsel %vm1943, %v8741, %v8743
        %v8789 = vsel %vm1943, %v8743, %v8745
        %v8790 = vsel %vm1943, %v8747, %v8749
        %v8791 = vsel %vm1943, %v8749, %v8751
        %v8792 = vsel %vm1943, %v8753, %v8755
        %v8793 = vsel %vm1943, %v8755, %v8757
        %v8794 = vsel %vm1943, %v8759, %v8761
        %v8795 = vsel %vm1943, %v8761, %v8763
        %v8796 = vsel %vm1943, %v8765, %v8767
        %v8797 = vsel %vm1943, %v8767, %v8769
        %v8798 = vsel %vm1943, %v8771, %v8773
        %v8799 = vsel %vm1943, %v8773, %v8775
        %v8800 = vsel %vm1943, %v8777, %v8779
        %v8801 = vsel %vm1943, %v8779, %v8781
        %v8802 = vsel %vm1943, %v8783, %v8785
        %v8803 = vsel %vm1943, %v8785, %v8787
        %v8828 = vadd.f32 %v8636, %v8741
        %v8829 = vadd.f32 %v8637, %v8788
        %v8830 = vadd.f32 %v8638, %v8789
        %v8831 = vadd.f32 %v8639, %v8747
        %v8832 = vadd.f32 %v8640, %v8790
        %v8833 = vadd.f32 %v8641, %v8791
        %v8834 = vadd.f32 %v8642, %v8753
        %v8835 = vadd.f32 %v8643, %v8792
        %v8836 = vadd.f32 %v8644, %v8793
        %v8837 = vadd.f32 %v8645, %v8759
        %v8838 = vadd.f32 %v8646, %v8794
        %v8839 = vadd.f32 %v8647, %v8795
        %v8840 = vadd.f32 %v8648, %v8765
        %v8841 = vadd.f32 %v8649, %v8796
        %v8842 = vadd.f32 %v8650, %v8797
        %v8843 = vadd.f32 %v8651, %v8771
        %v8844 = vadd.f32 %v8652, %v8798
        %v8845 = vadd.f32 %v8653, %v8799
        %v8846 = vadd.f32 %v8654, %v8777
        %v8847 = vadd.f32 %v8655, %v8800
        %v8848 = vadd.f32 %v8656, %v8801
        %v8849 = vadd.f32 %v8657, %v8783
        %v8850 = vadd.f32 %v8658, %v8802
        %v8851 = vadd.f32 %v8659, %v8803
        %8852 = vset.pattern.permute.xlu0 40
        %8853 = vperm.xlu0 %8852, %v1116
        %v8854 = vpop.permute.xlu0 %8853
        %8856 = vset.pattern.permute.xlu0 40
        %8857 = vperm.xlu0 %8856, %v1117
        %v8858 = vpop.permute.xlu0 %8857
        %8860 = vset.pattern.permute.xlu0 40
        %8861 = vperm.xlu0 %8860, %v1118
        %v8862 = vpop.permute.xlu0 %8861
        %8864 = vset.pattern.permute.xlu0 40
        %8865 = vperm.xlu0 %8864, %v1119
        %v8866 = vpop.permute.xlu0 %8865
        %8868 = vset.pattern.permute.xlu0 40
        %8869 = vperm.xlu0 %8868, %v1120
        %v8870 = vpop.permute.xlu0 %8869
        %8872 = vset.pattern.permute.xlu0 40
        %8873 = vperm.xlu0 %8872, %v1121
        %v8874 = vpop.permute.xlu0 %8873
        %8876 = vset.pattern.permute.xlu0 40
        %8877 = vperm.xlu0 %8876, %v1122
        %v8878 = vpop.permute.xlu0 %8877
        %8880 = vset.pattern.permute.xlu0 40
        %8881 = vperm.xlu0 %8880, %v1123
        %v8882 = vpop.permute.xlu0 %8881
        %v8884 = vmul.f32 %v8854, %v1791
        %v8885 = vmul.f32 %v8854, %v1792
        %v8886 = vmul.f32 %v8854, %v1793
        %v8887 = vmul.f32 %v8858, %v1794
        %v8888 = vmul.f32 %v8858, %v1795
        %v8889 = vmul.f32 %v8858, %v1796
        %v8890 = vmul.f32 %v8862, %v1797
        %v8891 = vmul.f32 %v8862, %v1798
        %v8892 = vmul.f32 %v8862, %v1799
        %v8893 = vmul.f32 %v8866, %v1800
        %v8894 = vmul.f32 %v8866, %v1801
        %v8895 = vmul.f32 %v8866, %v1802
        %v8896 = vmul.f32 %v8870, %v1803
        %v8897 = vmul.f32 %v8870, %v1804
        %v8898 = vmul.f32 %v8870, %v1805
        %v8899 = vmul.f32 %v8874, %v1806
        %v8900 = vmul.f32 %v8874, %v1807
        %v8901 = vmul.f32 %v8874, %v1808
        %v8902 = vmul.f32 %v8878, %v1809
        %v8903 = vmul.f32 %v8878, %v1810
        %v8904 = vmul.f32 %v8878, %v1811
        %v8905 = vmul.f32 %v8882, %v1812
        %v8906 = vmul.f32 %v8882, %v1813
        %v8907 = vmul.f32 %v8882, %v1814
        %8932 = vrot.lane.b32.xlu0 %v8884, 48
        %v8933 = vpop.permute.xlu0 %8932
        %8934 = vrot.lane.b32.xlu0 %v8885, 48
        %v8935 = vpop.permute.xlu0 %8934
        %8936 = vrot.lane.b32.xlu0 %v8886, 48
        %v8937 = vpop.permute.xlu0 %8936
        %8938 = vrot.lane.b32.xlu0 %v8887, 48
        %v8939 = vpop.permute.xlu0 %8938
        %8940 = vrot.lane.b32.xlu0 %v8888, 48
        %v8941 = vpop.permute.xlu0 %8940
        %8942 = vrot.lane.b32.xlu0 %v8889, 48
        %v8943 = vpop.permute.xlu0 %8942
        %8944 = vrot.lane.b32.xlu0 %v8890, 48
        %v8945 = vpop.permute.xlu0 %8944
        %8946 = vrot.lane.b32.xlu0 %v8891, 48
        %v8947 = vpop.permute.xlu0 %8946
        %8948 = vrot.lane.b32.xlu0 %v8892, 48
        %v8949 = vpop.permute.xlu0 %8948
        %8950 = vrot.lane.b32.xlu0 %v8893, 48
        %v8951 = vpop.permute.xlu0 %8950
        %8952 = vrot.lane.b32.xlu0 %v8894, 48
        %v8953 = vpop.permute.xlu0 %8952
        %8954 = vrot.lane.b32.xlu0 %v8895, 48
        %v8955 = vpop.permute.xlu0 %8954
        %8956 = vrot.lane.b32.xlu0 %v8896, 48
        %v8957 = vpop.permute.xlu0 %8956
        %8958 = vrot.lane.b32.xlu0 %v8897, 48
        %v8959 = vpop.permute.xlu0 %8958
        %8960 = vrot.lane.b32.xlu0 %v8898, 48
        %v8961 = vpop.permute.xlu0 %8960
        %8962 = vrot.lane.b32.xlu0 %v8899, 48
        %v8963 = vpop.permute.xlu0 %8962
        %8964 = vrot.lane.b32.xlu0 %v8900, 48
        %v8965 = vpop.permute.xlu0 %8964
        %8966 = vrot.lane.b32.xlu0 %v8901, 48
        %v8967 = vpop.permute.xlu0 %8966
        %8968 = vrot.lane.b32.xlu0 %v8902, 48
        %v8969 = vpop.permute.xlu0 %8968
        %8970 = vrot.lane.b32.xlu0 %v8903, 48
        %v8971 = vpop.permute.xlu0 %8970
        %8972 = vrot.lane.b32.xlu0 %v8904, 48
        %v8973 = vpop.permute.xlu0 %8972
        %8974 = vrot.lane.b32.xlu0 %v8905, 48
        %v8975 = vpop.permute.xlu0 %8974
        %8976 = vrot.lane.b32.xlu0 %v8906, 48
        %v8977 = vpop.permute.xlu0 %8976
        %8978 = vrot.lane.b32.xlu0 %v8907, 48
        %v8979 = vpop.permute.xlu0 %8978
        %v8980 = vsel %vm2136, %v8933, %v8935
        %v8981 = vsel %vm2136, %v8935, %v8937
        %v8982 = vsel %vm2136, %v8939, %v8941
        %v8983 = vsel %vm2136, %v8941, %v8943
        %v8984 = vsel %vm2136, %v8945, %v8947
        %v8985 = vsel %vm2136, %v8947, %v8949
        %v8986 = vsel %vm2136, %v8951, %v8953
        %v8987 = vsel %vm2136, %v8953, %v8955
        %v8988 = vsel %vm2136, %v8957, %v8959
        %v8989 = vsel %vm2136, %v8959, %v8961
        %v8990 = vsel %vm2136, %v8963, %v8965
        %v8991 = vsel %vm2136, %v8965, %v8967
        %v8992 = vsel %vm2136, %v8969, %v8971
        %v8993 = vsel %vm2136, %v8971, %v8973
        %v8994 = vsel %vm2136, %v8975, %v8977
        %v8995 = vsel %vm2136, %v8977, %v8979
        %v9020 = vadd.f32 %v8828, %v8933
        %v9021 = vadd.f32 %v8829, %v8980
        %v9022 = vadd.f32 %v8830, %v8981
        %v9023 = vadd.f32 %v8831, %v8939
        %v9024 = vadd.f32 %v8832, %v8982
        %v9025 = vadd.f32 %v8833, %v8983
        %v9026 = vadd.f32 %v8834, %v8945
        %v9027 = vadd.f32 %v8835, %v8984
        %v9028 = vadd.f32 %v8836, %v8985
        %v9029 = vadd.f32 %v8837, %v8951
        %v9030 = vadd.f32 %v8838, %v8986
        %v9031 = vadd.f32 %v8839, %v8987
        %v9032 = vadd.f32 %v8840, %v8957
        %v9033 = vadd.f32 %v8841, %v8988
        %v9034 = vadd.f32 %v8842, %v8989
        %v9035 = vadd.f32 %v8843, %v8963
        %v9036 = vadd.f32 %v8844, %v8990
        %v9037 = vadd.f32 %v8845, %v8991
        %v9038 = vadd.f32 %v8846, %v8969
        %v9039 = vadd.f32 %v8847, %v8992
        %v9040 = vadd.f32 %v8848, %v8993
        %v9041 = vadd.f32 %v8849, %v8975
        %v9042 = vadd.f32 %v8850, %v8994
        %v9043 = vadd.f32 %v8851, %v8995
        %9044 = vset.pattern.permute.xlu0 47
        %9045 = vperm.xlu0 %9044, %v1116
        %v9046 = vpop.permute.xlu0 %9045
        %9048 = vset.pattern.permute.xlu0 47
        %9049 = vperm.xlu0 %9048, %v1117
        %v9050 = vpop.permute.xlu0 %9049
        %9052 = vset.pattern.permute.xlu0 47
        %9053 = vperm.xlu0 %9052, %v1118
        %v9054 = vpop.permute.xlu0 %9053
        %9056 = vset.pattern.permute.xlu0 47
        %9057 = vperm.xlu0 %9056, %v1119
        %v9058 = vpop.permute.xlu0 %9057
        %9060 = vset.pattern.permute.xlu0 47
        %9061 = vperm.xlu0 %9060, %v1120
        %v9062 = vpop.permute.xlu0 %9061
        %9064 = vset.pattern.permute.xlu0 47
        %9065 = vperm.xlu0 %9064, %v1121
        %v9066 = vpop.permute.xlu0 %9065
        %9068 = vset.pattern.permute.xlu0 47
        %9069 = vperm.xlu0 %9068, %v1122
        %v9070 = vpop.permute.xlu0 %9069
        %9072 = vset.pattern.permute.xlu0 47
        %9073 = vperm.xlu0 %9072, %v1123
        %v9074 = vpop.permute.xlu0 %9073
        %v9076 = vmul.f32 %v9046, %v1791
        %v9077 = vmul.f32 %v9046, %v1792
        %v9078 = vmul.f32 %v9046, %v1793
        %v9079 = vmul.f32 %v9050, %v1794
        %v9080 = vmul.f32 %v9050, %v1795
        %v9081 = vmul.f32 %v9050, %v1796
        %v9082 = vmul.f32 %v9054, %v1797
        %v9083 = vmul.f32 %v9054, %v1798
        %v9084 = vmul.f32 %v9054, %v1799
        %v9085 = vmul.f32 %v9058, %v1800
        %v9086 = vmul.f32 %v9058, %v1801
        %v9087 = vmul.f32 %v9058, %v1802
        %v9088 = vmul.f32 %v9062, %v1803
        %v9089 = vmul.f32 %v9062, %v1804
        %v9090 = vmul.f32 %v9062, %v1805
        %v9091 = vmul.f32 %v9066, %v1806
        %v9092 = vmul.f32 %v9066, %v1807
        %v9093 = vmul.f32 %v9066, %v1808
        %v9094 = vmul.f32 %v9070, %v1809
        %v9095 = vmul.f32 %v9070, %v1810
        %v9096 = vmul.f32 %v9070, %v1811
        %v9097 = vmul.f32 %v9074, %v1812
        %v9098 = vmul.f32 %v9074, %v1813
        %v9099 = vmul.f32 %v9074, %v1814
        %9124 = vrot.lane.b32.xlu0 %v9076, 32
        %v9125 = vpop.permute.xlu0 %9124
        %9126 = vrot.lane.b32.xlu0 %v9077, 32
        %v9127 = vpop.permute.xlu0 %9126
        %9128 = vrot.lane.b32.xlu0 %v9078, 32
        %v9129 = vpop.permute.xlu0 %9128
        %9130 = vrot.lane.b32.xlu0 %v9079, 32
        %v9131 = vpop.permute.xlu0 %9130
        %9132 = vrot.lane.b32.xlu0 %v9080, 32
        %v9133 = vpop.permute.xlu0 %9132
        %9134 = vrot.lane.b32.xlu0 %v9081, 32
        %v9135 = vpop.permute.xlu0 %9134
        %9136 = vrot.lane.b32.xlu0 %v9082, 32
        %v9137 = vpop.permute.xlu0 %9136
        %9138 = vrot.lane.b32.xlu0 %v9083, 32
        %v9139 = vpop.permute.xlu0 %9138
        %9140 = vrot.lane.b32.xlu0 %v9084, 32
        %v9141 = vpop.permute.xlu0 %9140
        %9142 = vrot.lane.b32.xlu0 %v9085, 32
        %v9143 = vpop.permute.xlu0 %9142
        %9144 = vrot.lane.b32.xlu0 %v9086, 32
        %v9145 = vpop.permute.xlu0 %9144
        %9146 = vrot.lane.b32.xlu0 %v9087, 32
        %v9147 = vpop.permute.xlu0 %9146
        %9148 = vrot.lane.b32.xlu0 %v9088, 32
        %v9149 = vpop.permute.xlu0 %9148
        %9150 = vrot.lane.b32.xlu0 %v9089, 32
        %v9151 = vpop.permute.xlu0 %9150
        %9152 = vrot.lane.b32.xlu0 %v9090, 32
        %v9153 = vpop.permute.xlu0 %9152
        %9154 = vrot.lane.b32.xlu0 %v9091, 32
        %v9155 = vpop.permute.xlu0 %9154
        %9156 = vrot.lane.b32.xlu0 %v9092, 32
        %v9157 = vpop.permute.xlu0 %9156
        %9158 = vrot.lane.b32.xlu0 %v9093, 32
        %v9159 = vpop.permute.xlu0 %9158
        %9160 = vrot.lane.b32.xlu0 %v9094, 32
        %v9161 = vpop.permute.xlu0 %9160
        %9162 = vrot.lane.b32.xlu0 %v9095, 32
        %v9163 = vpop.permute.xlu0 %9162
        %9164 = vrot.lane.b32.xlu0 %v9096, 32
        %v9165 = vpop.permute.xlu0 %9164
        %9166 = vrot.lane.b32.xlu0 %v9097, 32
        %v9167 = vpop.permute.xlu0 %9166
        %9168 = vrot.lane.b32.xlu0 %v9098, 32
        %v9169 = vpop.permute.xlu0 %9168
        %9170 = vrot.lane.b32.xlu0 %v9099, 32
        %v9171 = vpop.permute.xlu0 %9170
        %v9172 = vsel %vm626, %v9125, %v9127
        %v9173 = vsel %vm626, %v9127, %v9129
        %v9174 = vsel %vm626, %v9131, %v9133
        %v9175 = vsel %vm626, %v9133, %v9135
        %v9176 = vsel %vm626, %v9137, %v9139
        %v9177 = vsel %vm626, %v9139, %v9141
        %v9178 = vsel %vm626, %v9143, %v9145
        %v9179 = vsel %vm626, %v9145, %v9147
        %v9180 = vsel %vm626, %v9149, %v9151
        %v9181 = vsel %vm626, %v9151, %v9153
        %v9182 = vsel %vm626, %v9155, %v9157
        %v9183 = vsel %vm626, %v9157, %v9159
        %v9184 = vsel %vm626, %v9161, %v9163
        %v9185 = vsel %vm626, %v9163, %v9165
        %v9186 = vsel %vm626, %v9167, %v9169
        %v9187 = vsel %vm626, %v9169, %v9171
        %v9212 = vadd.f32 %v9020, %v9125
        %v9213 = vadd.f32 %v9021, %v9172
        %v9214 = vadd.f32 %v9022, %v9173
        %v9215 = vadd.f32 %v9023, %v9131
        %v9216 = vadd.f32 %v9024, %v9174
        %v9217 = vadd.f32 %v9025, %v9175
        %v9218 = vadd.f32 %v9026, %v9137
        %v9219 = vadd.f32 %v9027, %v9176
        %v9220 = vadd.f32 %v9028, %v9177
        %v9221 = vadd.f32 %v9029, %v9143
        %v9222 = vadd.f32 %v9030, %v9178
        %v9223 = vadd.f32 %v9031, %v9179
        %v9224 = vadd.f32 %v9032, %v9149
        %v9225 = vadd.f32 %v9033, %v9180
        %v9226 = vadd.f32 %v9034, %v9181
        %v9227 = vadd.f32 %v9035, %v9155
        %v9228 = vadd.f32 %v9036, %v9182
        %v9229 = vadd.f32 %v9037, %v9183
        %v9230 = vadd.f32 %v9038, %v9161
        %v9231 = vadd.f32 %v9039, %v9184
        %v9232 = vadd.f32 %v9040, %v9185
        %v9233 = vadd.f32 %v9041, %v9167
        %v9234 = vadd.f32 %v9042, %v9186
        %v9235 = vadd.f32 %v9043, %v9187
        %s9236 = scalar_lea.vmem %s7, 5
        %v9237 = vld [vmem:[%s9236] ss:$8 sm:$0x3]
        %v9239 = vperm.slane %v9237, 0
        %v9240 = vperm.slane %v9237, 1
        %9241 = vrot.lane.b32.xlu0 %v9239, 82
        %v9242 = vpop.permute.xlu0 %9241
        %9243 = vrot.lane.b32.xlu0 %v9240, 82
        %v9244 = vpop.permute.xlu0 %9243
        %vm9245 = vcmask 670720
        %v9246 = vsel %vm9245, %v9242, %v9244
        %v9250 = vmul.f32 %v9212, %v9242
        %v9251 = vmul.f32 %v9213, %v9246
        %v9252 = vmul.f32 %v9214, %v9244
        %v9253 = vmul.f32 %v9215, %v9242
        %v9254 = vmul.f32 %v9216, %v9246
        %v9255 = vmul.f32 %v9217, %v9244
        %v9256 = vmul.f32 %v9218, %v9242
        %v9257 = vmul.f32 %v9219, %v9246
        %v9258 = vmul.f32 %v9220, %v9244
        %v9259 = vmul.f32 %v9221, %v9242
        %v9260 = vmul.f32 %v9222, %v9246
        %v9261 = vmul.f32 %v9223, %v9244
        %v9262 = vmul.f32 %v9224, %v9242
        %v9263 = vmul.f32 %v9225, %v9246
        %v9264 = vmul.f32 %v9226, %v9244
        %v9265 = vmul.f32 %v9227, %v9242
        %v9266 = vmul.f32 %v9228, %v9246
        %v9267 = vmul.f32 %v9229, %v9244
        %v9268 = vmul.f32 %v9230, %v9242
        %v9269 = vmul.f32 %v9231, %v9246
        %v9270 = vmul.f32 %v9232, %v9244
        %v9271 = vmul.f32 %v9233, %v9242
        %v9272 = vmul.f32 %v9234, %v9246
        %v9273 = vmul.f32 %v9235, %v9244
        %9298 = vrot.lane.b32.xlu0 %v9250, 123
        %v9299 = vpop.permute.xlu0 %9298
        %9300 = vrot.lane.b32.xlu0 %v9251, 123
        %v9301 = vpop.permute.xlu0 %9300
        %9302 = vrot.lane.b32.xlu0 %v9252, 123
        %v9303 = vpop.permute.xlu0 %9302
        %9304 = vrot.lane.b32.xlu0 %v9253, 123
        %v9305 = vpop.permute.xlu0 %9304
        %9306 = vrot.lane.b32.xlu0 %v9254, 123
        %v9307 = vpop.permute.xlu0 %9306
        %9308 = vrot.lane.b32.xlu0 %v9255, 123
        %v9309 = vpop.permute.xlu0 %9308
        %9310 = vrot.lane.b32.xlu0 %v9256, 123
        %v9311 = vpop.permute.xlu0 %9310
        %9312 = vrot.lane.b32.xlu0 %v9257, 123
        %v9313 = vpop.permute.xlu0 %9312
        %9314 = vrot.lane.b32.xlu0 %v9258, 123
        %v9315 = vpop.permute.xlu0 %9314
        %9316 = vrot.lane.b32.xlu0 %v9259, 123
        %v9317 = vpop.permute.xlu0 %9316
        %9318 = vrot.lane.b32.xlu0 %v9260, 123
        %v9319 = vpop.permute.xlu0 %9318
        %9320 = vrot.lane.b32.xlu0 %v9261, 123
        %v9321 = vpop.permute.xlu0 %9320
        %9322 = vrot.lane.b32.xlu0 %v9262, 123
        %v9323 = vpop.permute.xlu0 %9322
        %9324 = vrot.lane.b32.xlu0 %v9263, 123
        %v9325 = vpop.permute.xlu0 %9324
        %9326 = vrot.lane.b32.xlu0 %v9264, 123
        %v9327 = vpop.permute.xlu0 %9326
        %9328 = vrot.lane.b32.xlu0 %v9265, 123
        %v9329 = vpop.permute.xlu0 %9328
        %9330 = vrot.lane.b32.xlu0 %v9266, 123
        %v9331 = vpop.permute.xlu0 %9330
        %9332 = vrot.lane.b32.xlu0 %v9267, 123
        %v9333 = vpop.permute.xlu0 %9332
        %9334 = vrot.lane.b32.xlu0 %v9268, 123
        %v9335 = vpop.permute.xlu0 %9334
        %9336 = vrot.lane.b32.xlu0 %v9269, 123
        %v9337 = vpop.permute.xlu0 %9336
        %9338 = vrot.lane.b32.xlu0 %v9270, 123
        %v9339 = vpop.permute.xlu0 %9338
        %9340 = vrot.lane.b32.xlu0 %v9271, 123
        %v9341 = vpop.permute.xlu0 %9340
        %9342 = vrot.lane.b32.xlu0 %v9272, 123
        %v9343 = vpop.permute.xlu0 %9342
        %9344 = vrot.lane.b32.xlu0 %v9273, 123
        %v9345 = vpop.permute.xlu0 %9344
        %vm9346 = vcmask 1006592
        %v9347 = vsel %vm9346, %v9299, %v9301
        %v9348 = vsel %vm9346, %v9301, %v9303
        %v9349 = vsel %vm9346, %v9305, %v9307
        %v9350 = vsel %vm9346, %v9307, %v9309
        %v9351 = vsel %vm9346, %v9311, %v9313
        %v9352 = vsel %vm9346, %v9313, %v9315
        %v9353 = vsel %vm9346, %v9317, %v9319
        %v9354 = vsel %vm9346, %v9319, %v9321
        %v9355 = vsel %vm9346, %v9323, %v9325
        %v9356 = vsel %vm9346, %v9325, %v9327
        %v9357 = vsel %vm9346, %v9329, %v9331
        %v9358 = vsel %vm9346, %v9331, %v9333
        %v9359 = vsel %vm9346, %v9335, %v9337
        %v9360 = vsel %vm9346, %v9337, %v9339
        %v9361 = vsel %vm9346, %v9341, %v9343
        %v9362 = vsel %vm9346, %v9343, %v9345
        %v9387 = vadd.f32 %v7980, %v9347
        %v9388 = vadd.f32 %v7981, %v9348
        %v9389 = vadd.f32 %v7982, %v9303
        %v9390 = vadd.f32 %v7983, %v9349
        %v9391 = vadd.f32 %v7984, %v9350
        %v9392 = vadd.f32 %v7985, %v9309
        %v9393 = vadd.f32 %v7986, %v9351
        %v9394 = vadd.f32 %v7987, %v9352
        %v9395 = vadd.f32 %v7988, %v9315
        %v9396 = vadd.f32 %v7989, %v9353
        %v9397 = vadd.f32 %v7990, %v9354
        %v9398 = vadd.f32 %v7991, %v9321
        %v9399 = vadd.f32 %v7992, %v9355
        %v9400 = vadd.f32 %v7993, %v9356
        %v9401 = vadd.f32 %v7994, %v9327
        %v9402 = vadd.f32 %v7995, %v9357
        %v9403 = vadd.f32 %v7996, %v9358
        %v9404 = vadd.f32 %v7997, %v9333
        %v9405 = vadd.f32 %v7998, %v9359
        %v9406 = vadd.f32 %v7999, %v9360
        %v9407 = vadd.f32 %v8000, %v9339
        %v9408 = vadd.f32 %v8001, %v9361
        %v9409 = vadd.f32 %v8002, %v9362
        %v9410 = vadd.f32 %v8003, %v9345
        %9411 = vset.pattern.permute.xlu0 6
        %9412 = vperm.xlu0 %9411, %v1116
        %v9413 = vpop.permute.xlu0 %9412
        %9415 = vset.pattern.permute.xlu0 6
        %9416 = vperm.xlu0 %9415, %v1117
        %v9417 = vpop.permute.xlu0 %9416
        %9419 = vset.pattern.permute.xlu0 6
        %9420 = vperm.xlu0 %9419, %v1118
        %v9421 = vpop.permute.xlu0 %9420
        %9423 = vset.pattern.permute.xlu0 6
        %9424 = vperm.xlu0 %9423, %v1119
        %v9425 = vpop.permute.xlu0 %9424
        %9427 = vset.pattern.permute.xlu0 6
        %9428 = vperm.xlu0 %9427, %v1120
        %v9429 = vpop.permute.xlu0 %9428
        %9431 = vset.pattern.permute.xlu0 6
        %9432 = vperm.xlu0 %9431, %v1121
        %v9433 = vpop.permute.xlu0 %9432
        %9435 = vset.pattern.permute.xlu0 6
        %9436 = vperm.xlu0 %9435, %v1122
        %v9437 = vpop.permute.xlu0 %9436
        %9439 = vset.pattern.permute.xlu0 6
        %9440 = vperm.xlu0 %9439, %v1123
        %v9441 = vpop.permute.xlu0 %9440
        %v9443 = vmul.f32 %v9413, %v1092
        %v9444 = vmul.f32 %v9413, %v1093
        %v9445 = vmul.f32 %v9413, %v1094
        %v9446 = vmul.f32 %v9417, %v1095
        %v9447 = vmul.f32 %v9417, %v1096
        %v9448 = vmul.f32 %v9417, %v1097
        %v9449 = vmul.f32 %v9421, %v1098
        %v9450 = vmul.f32 %v9421, %v1099
        %v9451 = vmul.f32 %v9421, %v1100
        %v9452 = vmul.f32 %v9425, %v1101
        %v9453 = vmul.f32 %v9425, %v1102
        %v9454 = vmul.f32 %v9425, %v1103
        %v9455 = vmul.f32 %v9429, %v1104
        %v9456 = vmul.f32 %v9429, %v1105
        %v9457 = vmul.f32 %v9429, %v1106
        %v9458 = vmul.f32 %v9433, %v1107
        %v9459 = vmul.f32 %v9433, %v1108
        %v9460 = vmul.f32 %v9433, %v1109
        %v9461 = vmul.f32 %v9437, %v1110
        %v9462 = vmul.f32 %v9437, %v1111
        %v9463 = vmul.f32 %v9437, %v1112
        %v9464 = vmul.f32 %v9441, %v1113
        %v9465 = vmul.f32 %v9441, %v1114
        %v9466 = vmul.f32 %v9441, %v1115
        %v9467 = vadd.f32 %v9443, 0.0
        %v9468 = vadd.f32 %v9444, 0.0
        %v9469 = vadd.f32 %v9445, 0.0
        %v9470 = vadd.f32 %v9446, 0.0
        %v9471 = vadd.f32 %v9447, 0.0
        %v9472 = vadd.f32 %v9448, 0.0
        %v9473 = vadd.f32 %v9449, 0.0
        %v9474 = vadd.f32 %v9450, 0.0
        %v9475 = vadd.f32 %v9451, 0.0
        %v9476 = vadd.f32 %v9452, 0.0
        %v9477 = vadd.f32 %v9453, 0.0
        %v9478 = vadd.f32 %v9454, 0.0
        %v9479 = vadd.f32 %v9455, 0.0
        %v9480 = vadd.f32 %v9456, 0.0
        %v9481 = vadd.f32 %v9457, 0.0
        %v9482 = vadd.f32 %v9458, 0.0
        %v9483 = vadd.f32 %v9459, 0.0
        %v9484 = vadd.f32 %v9460, 0.0
        %v9485 = vadd.f32 %v9461, 0.0
        %v9486 = vadd.f32 %v9462, 0.0
        %v9487 = vadd.f32 %v9463, 0.0
        %v9488 = vadd.f32 %v9464, 0.0
        %v9489 = vadd.f32 %v9465, 0.0
        %v9490 = vadd.f32 %v9466, 0.0
        %9491 = vset.pattern.permute.xlu0 13
        %9492 = vperm.xlu0 %9491, %v1116
        %v9493 = vpop.permute.xlu0 %9492
        %9495 = vset.pattern.permute.xlu0 13
        %9496 = vperm.xlu0 %9495, %v1117
        %v9497 = vpop.permute.xlu0 %9496
        %9499 = vset.pattern.permute.xlu0 13
        %9500 = vperm.xlu0 %9499, %v1118
        %v9501 = vpop.permute.xlu0 %9500
        %9503 = vset.pattern.permute.xlu0 13
        %9504 = vperm.xlu0 %9503, %v1119
        %v9505 = vpop.permute.xlu0 %9504
        %9507 = vset.pattern.permute.xlu0 13
        %9508 = vperm.xlu0 %9507, %v1120
        %v9509 = vpop.permute.xlu0 %9508
        %9511 = vset.pattern.permute.xlu0 13
        %9512 = vperm.xlu0 %9511, %v1121
        %v9513 = vpop.permute.xlu0 %9512
        %9515 = vset.pattern.permute.xlu0 13
        %9516 = vperm.xlu0 %9515, %v1122
        %v9517 = vpop.permute.xlu0 %9516
        %9519 = vset.pattern.permute.xlu0 13
        %9520 = vperm.xlu0 %9519, %v1123
        %v9521 = vpop.permute.xlu0 %9520
        %v9523 = vmul.f32 %v9493, %v1092
        %v9524 = vmul.f32 %v9493, %v1093
        %v9525 = vmul.f32 %v9493, %v1094
        %v9526 = vmul.f32 %v9497, %v1095
        %v9527 = vmul.f32 %v9497, %v1096
        %v9528 = vmul.f32 %v9497, %v1097
        %v9529 = vmul.f32 %v9501, %v1098
        %v9530 = vmul.f32 %v9501, %v1099
        %v9531 = vmul.f32 %v9501, %v1100
        %v9532 = vmul.f32 %v9505, %v1101
        %v9533 = vmul.f32 %v9505, %v1102
        %v9534 = vmul.f32 %v9505, %v1103
        %v9535 = vmul.f32 %v9509, %v1104
        %v9536 = vmul.f32 %v9509, %v1105
        %v9537 = vmul.f32 %v9509, %v1106
        %v9538 = vmul.f32 %v9513, %v1107
        %v9539 = vmul.f32 %v9513, %v1108
        %v9540 = vmul.f32 %v9513, %v1109
        %v9541 = vmul.f32 %v9517, %v1110
        %v9542 = vmul.f32 %v9517, %v1111
        %v9543 = vmul.f32 %v9517, %v1112
        %v9544 = vmul.f32 %v9521, %v1113
        %v9545 = vmul.f32 %v9521, %v1114
        %v9546 = vmul.f32 %v9521, %v1115
        %9571 = vrot.lane.b32.xlu0 %v9523, 112
        %v9572 = vpop.permute.xlu0 %9571
        %9573 = vrot.lane.b32.xlu0 %v9524, 112
        %v9574 = vpop.permute.xlu0 %9573
        %9575 = vrot.lane.b32.xlu0 %v9525, 112
        %v9576 = vpop.permute.xlu0 %9575
        %9577 = vrot.lane.b32.xlu0 %v9526, 112
        %v9578 = vpop.permute.xlu0 %9577
        %9579 = vrot.lane.b32.xlu0 %v9527, 112
        %v9580 = vpop.permute.xlu0 %9579
        %9581 = vrot.lane.b32.xlu0 %v9528, 112
        %v9582 = vpop.permute.xlu0 %9581
        %9583 = vrot.lane.b32.xlu0 %v9529, 112
        %v9584 = vpop.permute.xlu0 %9583
        %9585 = vrot.lane.b32.xlu0 %v9530, 112
        %v9586 = vpop.permute.xlu0 %9585
        %9587 = vrot.lane.b32.xlu0 %v9531, 112
        %v9588 = vpop.permute.xlu0 %9587
        %9589 = vrot.lane.b32.xlu0 %v9532, 112
        %v9590 = vpop.permute.xlu0 %9589
        %9591 = vrot.lane.b32.xlu0 %v9533, 112
        %v9592 = vpop.permute.xlu0 %9591
        %9593 = vrot.lane.b32.xlu0 %v9534, 112
        %v9594 = vpop.permute.xlu0 %9593
        %9595 = vrot.lane.b32.xlu0 %v9535, 112
        %v9596 = vpop.permute.xlu0 %9595
        %9597 = vrot.lane.b32.xlu0 %v9536, 112
        %v9598 = vpop.permute.xlu0 %9597
        %9599 = vrot.lane.b32.xlu0 %v9537, 112
        %v9600 = vpop.permute.xlu0 %9599
        %9601 = vrot.lane.b32.xlu0 %v9538, 112
        %v9602 = vpop.permute.xlu0 %9601
        %9603 = vrot.lane.b32.xlu0 %v9539, 112
        %v9604 = vpop.permute.xlu0 %9603
        %9605 = vrot.lane.b32.xlu0 %v9540, 112
        %v9606 = vpop.permute.xlu0 %9605
        %9607 = vrot.lane.b32.xlu0 %v9541, 112
        %v9608 = vpop.permute.xlu0 %9607
        %9609 = vrot.lane.b32.xlu0 %v9542, 112
        %v9610 = vpop.permute.xlu0 %9609
        %9611 = vrot.lane.b32.xlu0 %v9543, 112
        %v9612 = vpop.permute.xlu0 %9611
        %9613 = vrot.lane.b32.xlu0 %v9544, 112
        %v9614 = vpop.permute.xlu0 %9613
        %9615 = vrot.lane.b32.xlu0 %v9545, 112
        %v9616 = vpop.permute.xlu0 %9615
        %9617 = vrot.lane.b32.xlu0 %v9546, 112
        %v9618 = vpop.permute.xlu0 %9617
        %v9619 = vsel %vm1340, %v9572, %v9574
        %v9620 = vsel %vm1340, %v9574, %v9576
        %v9621 = vsel %vm1340, %v9578, %v9580
        %v9622 = vsel %vm1340, %v9580, %v9582
        %v9623 = vsel %vm1340, %v9584, %v9586
        %v9624 = vsel %vm1340, %v9586, %v9588
        %v9625 = vsel %vm1340, %v9590, %v9592
        %v9626 = vsel %vm1340, %v9592, %v9594
        %v9627 = vsel %vm1340, %v9596, %v9598
        %v9628 = vsel %vm1340, %v9598, %v9600
        %v9629 = vsel %vm1340, %v9602, %v9604
        %v9630 = vsel %vm1340, %v9604, %v9606
        %v9631 = vsel %vm1340, %v9608, %v9610
        %v9632 = vsel %vm1340, %v9610, %v9612
        %v9633 = vsel %vm1340, %v9614, %v9616
        %v9634 = vsel %vm1340, %v9616, %v9618
        %v9659 = vadd.f32 %v9467, %v9619
        %v9660 = vadd.f32 %v9468, %v9620
        %v9661 = vadd.f32 %v9469, %v9576
        %v9662 = vadd.f32 %v9470, %v9621
        %v9663 = vadd.f32 %v9471, %v9622
        %v9664 = vadd.f32 %v9472, %v9582
        %v9665 = vadd.f32 %v9473, %v9623
        %v9666 = vadd.f32 %v9474, %v9624
        %v9667 = vadd.f32 %v9475, %v9588
        %v9668 = vadd.f32 %v9476, %v9625
        %v9669 = vadd.f32 %v9477, %v9626
        %v9670 = vadd.f32 %v9478, %v9594
        %v9671 = vadd.f32 %v9479, %v9627
        %v9672 = vadd.f32 %v9480, %v9628
        %v9673 = vadd.f32 %v9481, %v9600
        %v9674 = vadd.f32 %v9482, %v9629
        %v9675 = vadd.f32 %v9483, %v9630
        %v9676 = vadd.f32 %v9484, %v9606
        %v9677 = vadd.f32 %v9485, %v9631
        %v9678 = vadd.f32 %v9486, %v9632
        %v9679 = vadd.f32 %v9487, %v9612
        %v9680 = vadd.f32 %v9488, %v9633
        %v9681 = vadd.f32 %v9489, %v9634
        %v9682 = vadd.f32 %v9490, %v9618
        %9683 = vset.pattern.permute.xlu0 20
        %9684 = vperm.xlu0 %9683, %v1116
        %v9685 = vpop.permute.xlu0 %9684
        %9687 = vset.pattern.permute.xlu0 20
        %9688 = vperm.xlu0 %9687, %v1117
        %v9689 = vpop.permute.xlu0 %9688
        %9691 = vset.pattern.permute.xlu0 20
        %9692 = vperm.xlu0 %9691, %v1118
        %v9693 = vpop.permute.xlu0 %9692
        %9695 = vset.pattern.permute.xlu0 20
        %9696 = vperm.xlu0 %9695, %v1119
        %v9697 = vpop.permute.xlu0 %9696
        %9699 = vset.pattern.permute.xlu0 20
        %9700 = vperm.xlu0 %9699, %v1120
        %v9701 = vpop.permute.xlu0 %9700
        %9703 = vset.pattern.permute.xlu0 20
        %9704 = vperm.xlu0 %9703, %v1121
        %v9705 = vpop.permute.xlu0 %9704
        %9707 = vset.pattern.permute.xlu0 20
        %9708 = vperm.xlu0 %9707, %v1122
        %v9709 = vpop.permute.xlu0 %9708
        %9711 = vset.pattern.permute.xlu0 20
        %9712 = vperm.xlu0 %9711, %v1123
        %v9713 = vpop.permute.xlu0 %9712
        %v9715 = vmul.f32 %v9685, %v1092
        %v9716 = vmul.f32 %v9685, %v1093
        %v9717 = vmul.f32 %v9685, %v1094
        %v9718 = vmul.f32 %v9689, %v1095
        %v9719 = vmul.f32 %v9689, %v1096
        %v9720 = vmul.f32 %v9689, %v1097
        %v9721 = vmul.f32 %v9693, %v1098
        %v9722 = vmul.f32 %v9693, %v1099
        %v9723 = vmul.f32 %v9693, %v1100
        %v9724 = vmul.f32 %v9697, %v1101
        %v9725 = vmul.f32 %v9697, %v1102
        %v9726 = vmul.f32 %v9697, %v1103
        %v9727 = vmul.f32 %v9701, %v1104
        %v9728 = vmul.f32 %v9701, %v1105
        %v9729 = vmul.f32 %v9701, %v1106
        %v9730 = vmul.f32 %v9705, %v1107
        %v9731 = vmul.f32 %v9705, %v1108
        %v9732 = vmul.f32 %v9705, %v1109
        %v9733 = vmul.f32 %v9709, %v1110
        %v9734 = vmul.f32 %v9709, %v1111
        %v9735 = vmul.f32 %v9709, %v1112
        %v9736 = vmul.f32 %v9713, %v1113
        %v9737 = vmul.f32 %v9713, %v1114
        %v9738 = vmul.f32 %v9713, %v1115
        %9763 = vrot.lane.b32.xlu0 %v9715, 96
        %v9764 = vpop.permute.xlu0 %9763
        %9765 = vrot.lane.b32.xlu0 %v9716, 96
        %v9766 = vpop.permute.xlu0 %9765
        %9767 = vrot.lane.b32.xlu0 %v9717, 96
        %v9768 = vpop.permute.xlu0 %9767
        %9769 = vrot.lane.b32.xlu0 %v9718, 96
        %v9770 = vpop.permute.xlu0 %9769
        %9771 = vrot.lane.b32.xlu0 %v9719, 96
        %v9772 = vpop.permute.xlu0 %9771
        %9773 = vrot.lane.b32.xlu0 %v9720, 96
        %v9774 = vpop.permute.xlu0 %9773
        %9775 = vrot.lane.b32.xlu0 %v9721, 96
        %v9776 = vpop.permute.xlu0 %9775
        %9777 = vrot.lane.b32.xlu0 %v9722, 96
        %v9778 = vpop.permute.xlu0 %9777
        %9779 = vrot.lane.b32.xlu0 %v9723, 96
        %v9780 = vpop.permute.xlu0 %9779
        %9781 = vrot.lane.b32.xlu0 %v9724, 96
        %v9782 = vpop.permute.xlu0 %9781
        %9783 = vrot.lane.b32.xlu0 %v9725, 96
        %v9784 = vpop.permute.xlu0 %9783
        %9785 = vrot.lane.b32.xlu0 %v9726, 96
        %v9786 = vpop.permute.xlu0 %9785
        %9787 = vrot.lane.b32.xlu0 %v9727, 96
        %v9788 = vpop.permute.xlu0 %9787
        %9789 = vrot.lane.b32.xlu0 %v9728, 96
        %v9790 = vpop.permute.xlu0 %9789
        %9791 = vrot.lane.b32.xlu0 %v9729, 96
        %v9792 = vpop.permute.xlu0 %9791
        %9793 = vrot.lane.b32.xlu0 %v9730, 96
        %v9794 = vpop.permute.xlu0 %9793
        %9795 = vrot.lane.b32.xlu0 %v9731, 96
        %v9796 = vpop.permute.xlu0 %9795
        %9797 = vrot.lane.b32.xlu0 %v9732, 96
        %v9798 = vpop.permute.xlu0 %9797
        %9799 = vrot.lane.b32.xlu0 %v9733, 96
        %v9800 = vpop.permute.xlu0 %9799
        %9801 = vrot.lane.b32.xlu0 %v9734, 96
        %v9802 = vpop.permute.xlu0 %9801
        %9803 = vrot.lane.b32.xlu0 %v9735, 96
        %v9804 = vpop.permute.xlu0 %9803
        %9805 = vrot.lane.b32.xlu0 %v9736, 96
        %v9806 = vpop.permute.xlu0 %9805
        %9807 = vrot.lane.b32.xlu0 %v9737, 96
        %v9808 = vpop.permute.xlu0 %9807
        %9809 = vrot.lane.b32.xlu0 %v9738, 96
        %v9810 = vpop.permute.xlu0 %9809
        %v9811 = vsel %vm1533, %v9764, %v9766
        %v9812 = vsel %vm1533, %v9766, %v9768
        %v9813 = vsel %vm1533, %v9770, %v9772
        %v9814 = vsel %vm1533, %v9772, %v9774
        %v9815 = vsel %vm1533, %v9776, %v9778
        %v9816 = vsel %vm1533, %v9778, %v9780
        %v9817 = vsel %vm1533, %v9782, %v9784
        %v9818 = vsel %vm1533, %v9784, %v9786
        %v9819 = vsel %vm1533, %v9788, %v9790
        %v9820 = vsel %vm1533, %v9790, %v9792
        %v9821 = vsel %vm1533, %v9794, %v9796
        %v9822 = vsel %vm1533, %v9796, %v9798
        %v9823 = vsel %vm1533, %v9800, %v9802
        %v9824 = vsel %vm1533, %v9802, %v9804
        %v9825 = vsel %vm1533, %v9806, %v9808
        %v9826 = vsel %vm1533, %v9808, %v9810
        %v9851 = vadd.f32 %v9659, %v9811
        %v9852 = vadd.f32 %v9660, %v9812
        %v9853 = vadd.f32 %v9661, %v9768
        %v9854 = vadd.f32 %v9662, %v9813
        %v9855 = vadd.f32 %v9663, %v9814
        %v9856 = vadd.f32 %v9664, %v9774
        %v9857 = vadd.f32 %v9665, %v9815
        %v9858 = vadd.f32 %v9666, %v9816
        %v9859 = vadd.f32 %v9667, %v9780
        %v9860 = vadd.f32 %v9668, %v9817
        %v9861 = vadd.f32 %v9669, %v9818
        %v9862 = vadd.f32 %v9670, %v9786
        %v9863 = vadd.f32 %v9671, %v9819
        %v9864 = vadd.f32 %v9672, %v9820
        %v9865 = vadd.f32 %v9673, %v9792
        %v9866 = vadd.f32 %v9674, %v9821
        %v9867 = vadd.f32 %v9675, %v9822
        %v9868 = vadd.f32 %v9676, %v9798
        %v9869 = vadd.f32 %v9677, %v9823
        %v9870 = vadd.f32 %v9678, %v9824
        %v9871 = vadd.f32 %v9679, %v9804
        %v9872 = vadd.f32 %v9680, %v9825
        %v9873 = vadd.f32 %v9681, %v9826
        %v9874 = vadd.f32 %v9682, %v9810
        %9875 = vset.pattern.permute.xlu0 27
        %9876 = vperm.xlu0 %9875, %v1116
        %v9877 = vpop.permute.xlu0 %9876
        %9879 = vset.pattern.permute.xlu0 27
        %9880 = vperm.xlu0 %9879, %v1117
        %v9881 = vpop.permute.xlu0 %9880
        %9883 = vset.pattern.permute.xlu0 27
        %9884 = vperm.xlu0 %9883, %v1118
        %v9885 = vpop.permute.xlu0 %9884
        %9887 = vset.pattern.permute.xlu0 27
        %9888 = vperm.xlu0 %9887, %v1119
        %v9889 = vpop.permute.xlu0 %9888
        %9891 = vset.pattern.permute.xlu0 27
        %9892 = vperm.xlu0 %9891, %v1120
        %v9893 = vpop.permute.xlu0 %9892
        %9895 = vset.pattern.permute.xlu0 27
        %9896 = vperm.xlu0 %9895, %v1121
        %v9897 = vpop.permute.xlu0 %9896
        %9899 = vset.pattern.permute.xlu0 27
        %9900 = vperm.xlu0 %9899, %v1122
        %v9901 = vpop.permute.xlu0 %9900
        %9903 = vset.pattern.permute.xlu0 27
        %9904 = vperm.xlu0 %9903, %v1123
        %v9905 = vpop.permute.xlu0 %9904
        %v9907 = vmul.f32 %v9877, %v1791
        %v9908 = vmul.f32 %v9877, %v1792
        %v9909 = vmul.f32 %v9877, %v1793
        %v9910 = vmul.f32 %v9881, %v1794
        %v9911 = vmul.f32 %v9881, %v1795
        %v9912 = vmul.f32 %v9881, %v1796
        %v9913 = vmul.f32 %v9885, %v1797
        %v9914 = vmul.f32 %v9885, %v1798
        %v9915 = vmul.f32 %v9885, %v1799
        %v9916 = vmul.f32 %v9889, %v1800
        %v9917 = vmul.f32 %v9889, %v1801
        %v9918 = vmul.f32 %v9889, %v1802
        %v9919 = vmul.f32 %v9893, %v1803
        %v9920 = vmul.f32 %v9893, %v1804
        %v9921 = vmul.f32 %v9893, %v1805
        %v9922 = vmul.f32 %v9897, %v1806
        %v9923 = vmul.f32 %v9897, %v1807
        %v9924 = vmul.f32 %v9897, %v1808
        %v9925 = vmul.f32 %v9901, %v1809
        %v9926 = vmul.f32 %v9901, %v1810
        %v9927 = vmul.f32 %v9901, %v1811
        %v9928 = vmul.f32 %v9905, %v1812
        %v9929 = vmul.f32 %v9905, %v1813
        %v9930 = vmul.f32 %v9905, %v1814
        %9955 = vrot.lane.b32.xlu0 %v9907, 80
        %v9956 = vpop.permute.xlu0 %9955
        %9957 = vrot.lane.b32.xlu0 %v9908, 80
        %v9958 = vpop.permute.xlu0 %9957
        %9959 = vrot.lane.b32.xlu0 %v9909, 80
        %v9960 = vpop.permute.xlu0 %9959
        %9961 = vrot.lane.b32.xlu0 %v9910, 80
        %v9962 = vpop.permute.xlu0 %9961
        %9963 = vrot.lane.b32.xlu0 %v9911, 80
        %v9964 = vpop.permute.xlu0 %9963
        %9965 = vrot.lane.b32.xlu0 %v9912, 80
        %v9966 = vpop.permute.xlu0 %9965
        %9967 = vrot.lane.b32.xlu0 %v9913, 80
        %v9968 = vpop.permute.xlu0 %9967
        %9969 = vrot.lane.b32.xlu0 %v9914, 80
        %v9970 = vpop.permute.xlu0 %9969
        %9971 = vrot.lane.b32.xlu0 %v9915, 80
        %v9972 = vpop.permute.xlu0 %9971
        %9973 = vrot.lane.b32.xlu0 %v9916, 80
        %v9974 = vpop.permute.xlu0 %9973
        %9975 = vrot.lane.b32.xlu0 %v9917, 80
        %v9976 = vpop.permute.xlu0 %9975
        %9977 = vrot.lane.b32.xlu0 %v9918, 80
        %v9978 = vpop.permute.xlu0 %9977
        %9979 = vrot.lane.b32.xlu0 %v9919, 80
        %v9980 = vpop.permute.xlu0 %9979
        %9981 = vrot.lane.b32.xlu0 %v9920, 80
        %v9982 = vpop.permute.xlu0 %9981
        %9983 = vrot.lane.b32.xlu0 %v9921, 80
        %v9984 = vpop.permute.xlu0 %9983
        %9985 = vrot.lane.b32.xlu0 %v9922, 80
        %v9986 = vpop.permute.xlu0 %9985
        %9987 = vrot.lane.b32.xlu0 %v9923, 80
        %v9988 = vpop.permute.xlu0 %9987
        %9989 = vrot.lane.b32.xlu0 %v9924, 80
        %v9990 = vpop.permute.xlu0 %9989
        %9991 = vrot.lane.b32.xlu0 %v9925, 80
        %v9992 = vpop.permute.xlu0 %9991
        %9993 = vrot.lane.b32.xlu0 %v9926, 80
        %v9994 = vpop.permute.xlu0 %9993
        %9995 = vrot.lane.b32.xlu0 %v9927, 80
        %v9996 = vpop.permute.xlu0 %9995
        %9997 = vrot.lane.b32.xlu0 %v9928, 80
        %v9998 = vpop.permute.xlu0 %9997
        %9999 = vrot.lane.b32.xlu0 %v9929, 80
        %v10000 = vpop.permute.xlu0 %9999
        %10001 = vrot.lane.b32.xlu0 %v9930, 80
        %v10002 = vpop.permute.xlu0 %10001
        %v10003 = vsel %vm1726, %v9956, %v9958
        %v10004 = vsel %vm1726, %v9958, %v9960
        %v10005 = vsel %vm1726, %v9962, %v9964
        %v10006 = vsel %vm1726, %v9964, %v9966
        %v10007 = vsel %vm1726, %v9968, %v9970
        %v10008 = vsel %vm1726, %v9970, %v9972
        %v10009 = vsel %vm1726, %v9974, %v9976
        %v10010 = vsel %vm1726, %v9976, %v9978
        %v10011 = vsel %vm1726, %v9980, %v9982
        %v10012 = vsel %vm1726, %v9982, %v9984
        %v10013 = vsel %vm1726, %v9986, %v9988
        %v10014 = vsel %vm1726, %v9988, %v9990
        %v10015 = vsel %vm1726, %v9992, %v9994
        %v10016 = vsel %vm1726, %v9994, %v9996
        %v10017 = vsel %vm1726, %v9998, %v10000
        %v10018 = vsel %vm1726, %v10000, %v10002
        %v10043 = vadd.f32 %v9851, %v9956
        %v10044 = vadd.f32 %v9852, %v10003
        %v10045 = vadd.f32 %v9853, %v10004
        %v10046 = vadd.f32 %v9854, %v9962
        %v10047 = vadd.f32 %v9855, %v10005
        %v10048 = vadd.f32 %v9856, %v10006
        %v10049 = vadd.f32 %v9857, %v9968
        %v10050 = vadd.f32 %v9858, %v10007
        %v10051 = vadd.f32 %v9859, %v10008
        %v10052 = vadd.f32 %v9860, %v9974
        %v10053 = vadd.f32 %v9861, %v10009
        %v10054 = vadd.f32 %v9862, %v10010
        %v10055 = vadd.f32 %v9863, %v9980
        %v10056 = vadd.f32 %v9864, %v10011
        %v10057 = vadd.f32 %v9865, %v10012
        %v10058 = vadd.f32 %v9866, %v9986
        %v10059 = vadd.f32 %v9867, %v10013
        %v10060 = vadd.f32 %v9868, %v10014
        %v10061 = vadd.f32 %v9869, %v9992
        %v10062 = vadd.f32 %v9870, %v10015
        %v10063 = vadd.f32 %v9871, %v10016
        %v10064 = vadd.f32 %v9872, %v9998
        %v10065 = vadd.f32 %v9873, %v10017
        %v10066 = vadd.f32 %v9874, %v10018
        %10067 = vset.pattern.permute.xlu0 34
        %10068 = vperm.xlu0 %10067, %v1116
        %v10069 = vpop.permute.xlu0 %10068
        %10071 = vset.pattern.permute.xlu0 34
        %10072 = vperm.xlu0 %10071, %v1117
        %v10073 = vpop.permute.xlu0 %10072
        %10075 = vset.pattern.permute.xlu0 34
        %10076 = vperm.xlu0 %10075, %v1118
        %v10077 = vpop.permute.xlu0 %10076
        %10079 = vset.pattern.permute.xlu0 34
        %10080 = vperm.xlu0 %10079, %v1119
        %v10081 = vpop.permute.xlu0 %10080
        %10083 = vset.pattern.permute.xlu0 34
        %10084 = vperm.xlu0 %10083, %v1120
        %v10085 = vpop.permute.xlu0 %10084
        %10087 = vset.pattern.permute.xlu0 34
        %10088 = vperm.xlu0 %10087, %v1121
        %v10089 = vpop.permute.xlu0 %10088
        %10091 = vset.pattern.permute.xlu0 34
        %10092 = vperm.xlu0 %10091, %v1122
        %v10093 = vpop.permute.xlu0 %10092
        %10095 = vset.pattern.permute.xlu0 34
        %10096 = vperm.xlu0 %10095, %v1123
        %v10097 = vpop.permute.xlu0 %10096
        %v10099 = vmul.f32 %v10069, %v1791
        %v10100 = vmul.f32 %v10069, %v1792
        %v10101 = vmul.f32 %v10069, %v1793
        %v10102 = vmul.f32 %v10073, %v1794
        %v10103 = vmul.f32 %v10073, %v1795
        %v10104 = vmul.f32 %v10073, %v1796
        %v10105 = vmul.f32 %v10077, %v1797
        %v10106 = vmul.f32 %v10077, %v1798
        %v10107 = vmul.f32 %v10077, %v1799
        %v10108 = vmul.f32 %v10081, %v1800
        %v10109 = vmul.f32 %v10081, %v1801
        %v10110 = vmul.f32 %v10081, %v1802
        %v10111 = vmul.f32 %v10085, %v1803
        %v10112 = vmul.f32 %v10085, %v1804
        %v10113 = vmul.f32 %v10085, %v1805
        %v10114 = vmul.f32 %v10089, %v1806
        %v10115 = vmul.f32 %v10089, %v1807
        %v10116 = vmul.f32 %v10089, %v1808
        %v10117 = vmul.f32 %v10093, %v1809
        %v10118 = vmul.f32 %v10093, %v1810
        %v10119 = vmul.f32 %v10093, %v1811
        %v10120 = vmul.f32 %v10097, %v1812
        %v10121 = vmul.f32 %v10097, %v1813
        %v10122 = vmul.f32 %v10097, %v1814
        %10147 = vrot.lane.b32.xlu0 %v10099, 64
        %v10148 = vpop.permute.xlu0 %10147
        %10149 = vrot.lane.b32.xlu0 %v10100, 64
        %v10150 = vpop.permute.xlu0 %10149
        %10151 = vrot.lane.b32.xlu0 %v10101, 64
        %v10152 = vpop.permute.xlu0 %10151
        %10153 = vrot.lane.b32.xlu0 %v10102, 64
        %v10154 = vpop.permute.xlu0 %10153
        %10155 = vrot.lane.b32.xlu0 %v10103, 64
        %v10156 = vpop.permute.xlu0 %10155
        %10157 = vrot.lane.b32.xlu0 %v10104, 64
        %v10158 = vpop.permute.xlu0 %10157
        %10159 = vrot.lane.b32.xlu0 %v10105, 64
        %v10160 = vpop.permute.xlu0 %10159
        %10161 = vrot.lane.b32.xlu0 %v10106, 64
        %v10162 = vpop.permute.xlu0 %10161
        %10163 = vrot.lane.b32.xlu0 %v10107, 64
        %v10164 = vpop.permute.xlu0 %10163
        %10165 = vrot.lane.b32.xlu0 %v10108, 64
        %v10166 = vpop.permute.xlu0 %10165
        %10167 = vrot.lane.b32.xlu0 %v10109, 64
        %v10168 = vpop.permute.xlu0 %10167
        %10169 = vrot.lane.b32.xlu0 %v10110, 64
        %v10170 = vpop.permute.xlu0 %10169
        %10171 = vrot.lane.b32.xlu0 %v10111, 64
        %v10172 = vpop.permute.xlu0 %10171
        %10173 = vrot.lane.b32.xlu0 %v10112, 64
        %v10174 = vpop.permute.xlu0 %10173
        %10175 = vrot.lane.b32.xlu0 %v10113, 64
        %v10176 = vpop.permute.xlu0 %10175
        %10177 = vrot.lane.b32.xlu0 %v10114, 64
        %v10178 = vpop.permute.xlu0 %10177
        %10179 = vrot.lane.b32.xlu0 %v10115, 64
        %v10180 = vpop.permute.xlu0 %10179
        %10181 = vrot.lane.b32.xlu0 %v10116, 64
        %v10182 = vpop.permute.xlu0 %10181
        %10183 = vrot.lane.b32.xlu0 %v10117, 64
        %v10184 = vpop.permute.xlu0 %10183
        %10185 = vrot.lane.b32.xlu0 %v10118, 64
        %v10186 = vpop.permute.xlu0 %10185
        %10187 = vrot.lane.b32.xlu0 %v10119, 64
        %v10188 = vpop.permute.xlu0 %10187
        %10189 = vrot.lane.b32.xlu0 %v10120, 64
        %v10190 = vpop.permute.xlu0 %10189
        %10191 = vrot.lane.b32.xlu0 %v10121, 64
        %v10192 = vpop.permute.xlu0 %10191
        %10193 = vrot.lane.b32.xlu0 %v10122, 64
        %v10194 = vpop.permute.xlu0 %10193
        %v10195 = vsel %vm1943, %v10148, %v10150
        %v10196 = vsel %vm1943, %v10150, %v10152
        %v10197 = vsel %vm1943, %v10154, %v10156
        %v10198 = vsel %vm1943, %v10156, %v10158
        %v10199 = vsel %vm1943, %v10160, %v10162
        %v10200 = vsel %vm1943, %v10162, %v10164
        %v10201 = vsel %vm1943, %v10166, %v10168
        %v10202 = vsel %vm1943, %v10168, %v10170
        %v10203 = vsel %vm1943, %v10172, %v10174
        %v10204 = vsel %vm1943, %v10174, %v10176
        %v10205 = vsel %vm1943, %v10178, %v10180
        %v10206 = vsel %vm1943, %v10180, %v10182
        %v10207 = vsel %vm1943, %v10184, %v10186
        %v10208 = vsel %vm1943, %v10186, %v10188
        %v10209 = vsel %vm1943, %v10190, %v10192
        %v10210 = vsel %vm1943, %v10192, %v10194
        %v10235 = vadd.f32 %v10043, %v10148
        %v10236 = vadd.f32 %v10044, %v10195
        %v10237 = vadd.f32 %v10045, %v10196
        %v10238 = vadd.f32 %v10046, %v10154
        %v10239 = vadd.f32 %v10047, %v10197
        %v10240 = vadd.f32 %v10048, %v10198
        %v10241 = vadd.f32 %v10049, %v10160
        %v10242 = vadd.f32 %v10050, %v10199
        %v10243 = vadd.f32 %v10051, %v10200
        %v10244 = vadd.f32 %v10052, %v10166
        %v10245 = vadd.f32 %v10053, %v10201
        %v10246 = vadd.f32 %v10054, %v10202
        %v10247 = vadd.f32 %v10055, %v10172
        %v10248 = vadd.f32 %v10056, %v10203
        %v10249 = vadd.f32 %v10057, %v10204
        %v10250 = vadd.f32 %v10058, %v10178
        %v10251 = vadd.f32 %v10059, %v10205
        %v10252 = vadd.f32 %v10060, %v10206
        %v10253 = vadd.f32 %v10061, %v10184
        %v10254 = vadd.f32 %v10062, %v10207
        %v10255 = vadd.f32 %v10063, %v10208
        %v10256 = vadd.f32 %v10064, %v10190
        %v10257 = vadd.f32 %v10065, %v10209
        %v10258 = vadd.f32 %v10066, %v10210
        %10259 = vset.pattern.permute.xlu0 41
        %10260 = vperm.xlu0 %10259, %v1116
        %v10261 = vpop.permute.xlu0 %10260
        %10263 = vset.pattern.permute.xlu0 41
        %10264 = vperm.xlu0 %10263, %v1117
        %v10265 = vpop.permute.xlu0 %10264
        %10267 = vset.pattern.permute.xlu0 41
        %10268 = vperm.xlu0 %10267, %v1118
        %v10269 = vpop.permute.xlu0 %10268
        %10271 = vset.pattern.permute.xlu0 41
        %10272 = vperm.xlu0 %10271, %v1119
        %v10273 = vpop.permute.xlu0 %10272
        %10275 = vset.pattern.permute.xlu0 41
        %10276 = vperm.xlu0 %10275, %v1120
        %v10277 = vpop.permute.xlu0 %10276
        %10279 = vset.pattern.permute.xlu0 41
        %10280 = vperm.xlu0 %10279, %v1121
        %v10281 = vpop.permute.xlu0 %10280
        %10283 = vset.pattern.permute.xlu0 41
        %10284 = vperm.xlu0 %10283, %v1122
        %v10285 = vpop.permute.xlu0 %10284
        %10287 = vset.pattern.permute.xlu0 41
        %10288 = vperm.xlu0 %10287, %v1123
        %v10289 = vpop.permute.xlu0 %10288
        %v10291 = vmul.f32 %v10261, %v1791
        %v10292 = vmul.f32 %v10261, %v1792
        %v10293 = vmul.f32 %v10261, %v1793
        %v10294 = vmul.f32 %v10265, %v1794
        %v10295 = vmul.f32 %v10265, %v1795
        %v10296 = vmul.f32 %v10265, %v1796
        %v10297 = vmul.f32 %v10269, %v1797
        %v10298 = vmul.f32 %v10269, %v1798
        %v10299 = vmul.f32 %v10269, %v1799
        %v10300 = vmul.f32 %v10273, %v1800
        %v10301 = vmul.f32 %v10273, %v1801
        %v10302 = vmul.f32 %v10273, %v1802
        %v10303 = vmul.f32 %v10277, %v1803
        %v10304 = vmul.f32 %v10277, %v1804
        %v10305 = vmul.f32 %v10277, %v1805
        %v10306 = vmul.f32 %v10281, %v1806
        %v10307 = vmul.f32 %v10281, %v1807
        %v10308 = vmul.f32 %v10281, %v1808
        %v10309 = vmul.f32 %v10285, %v1809
        %v10310 = vmul.f32 %v10285, %v1810
        %v10311 = vmul.f32 %v10285, %v1811
        %v10312 = vmul.f32 %v10289, %v1812
        %v10313 = vmul.f32 %v10289, %v1813
        %v10314 = vmul.f32 %v10289, %v1814
        %10339 = vrot.lane.b32.xlu0 %v10291, 48
        %v10340 = vpop.permute.xlu0 %10339
        %10341 = vrot.lane.b32.xlu0 %v10292, 48
        %v10342 = vpop.permute.xlu0 %10341
        %10343 = vrot.lane.b32.xlu0 %v10293, 48
        %v10344 = vpop.permute.xlu0 %10343
        %10345 = vrot.lane.b32.xlu0 %v10294, 48
        %v10346 = vpop.permute.xlu0 %10345
        %10347 = vrot.lane.b32.xlu0 %v10295, 48
        %v10348 = vpop.permute.xlu0 %10347
        %10349 = vrot.lane.b32.xlu0 %v10296, 48
        %v10350 = vpop.permute.xlu0 %10349
        %10351 = vrot.lane.b32.xlu0 %v10297, 48
        %v10352 = vpop.permute.xlu0 %10351
        %10353 = vrot.lane.b32.xlu0 %v10298, 48
        %v10354 = vpop.permute.xlu0 %10353
        %10355 = vrot.lane.b32.xlu0 %v10299, 48
        %v10356 = vpop.permute.xlu0 %10355
        %10357 = vrot.lane.b32.xlu0 %v10300, 48
        %v10358 = vpop.permute.xlu0 %10357
        %10359 = vrot.lane.b32.xlu0 %v10301, 48
        %v10360 = vpop.permute.xlu0 %10359
        %10361 = vrot.lane.b32.xlu0 %v10302, 48
        %v10362 = vpop.permute.xlu0 %10361
        %10363 = vrot.lane.b32.xlu0 %v10303, 48
        %v10364 = vpop.permute.xlu0 %10363
        %10365 = vrot.lane.b32.xlu0 %v10304, 48
        %v10366 = vpop.permute.xlu0 %10365
        %10367 = vrot.lane.b32.xlu0 %v10305, 48
        %v10368 = vpop.permute.xlu0 %10367
        %10369 = vrot.lane.b32.xlu0 %v10306, 48
        %v10370 = vpop.permute.xlu0 %10369
        %10371 = vrot.lane.b32.xlu0 %v10307, 48
        %v10372 = vpop.permute.xlu0 %10371
        %10373 = vrot.lane.b32.xlu0 %v10308, 48
        %v10374 = vpop.permute.xlu0 %10373
        %10375 = vrot.lane.b32.xlu0 %v10309, 48
        %v10376 = vpop.permute.xlu0 %10375
        %10377 = vrot.lane.b32.xlu0 %v10310, 48
        %v10378 = vpop.permute.xlu0 %10377
        %10379 = vrot.lane.b32.xlu0 %v10311, 48
        %v10380 = vpop.permute.xlu0 %10379
        %10381 = vrot.lane.b32.xlu0 %v10312, 48
        %v10382 = vpop.permute.xlu0 %10381
        %10383 = vrot.lane.b32.xlu0 %v10313, 48
        %v10384 = vpop.permute.xlu0 %10383
        %10385 = vrot.lane.b32.xlu0 %v10314, 48
        %v10386 = vpop.permute.xlu0 %10385
        %v10387 = vsel %vm2136, %v10340, %v10342
        %v10388 = vsel %vm2136, %v10342, %v10344
        %v10389 = vsel %vm2136, %v10346, %v10348
        %v10390 = vsel %vm2136, %v10348, %v10350
        %v10391 = vsel %vm2136, %v10352, %v10354
        %v10392 = vsel %vm2136, %v10354, %v10356
        %v10393 = vsel %vm2136, %v10358, %v10360
        %v10394 = vsel %vm2136, %v10360, %v10362
        %v10395 = vsel %vm2136, %v10364, %v10366
        %v10396 = vsel %vm2136, %v10366, %v10368
        %v10397 = vsel %vm2136, %v10370, %v10372
        %v10398 = vsel %vm2136, %v10372, %v10374
        %v10399 = vsel %vm2136, %v10376, %v10378
        %v10400 = vsel %vm2136, %v10378, %v10380
        %v10401 = vsel %vm2136, %v10382, %v10384
        %v10402 = vsel %vm2136, %v10384, %v10386
        %v10427 = vadd.f32 %v10235, %v10340
        %v10428 = vadd.f32 %v10236, %v10387
        %v10429 = vadd.f32 %v10237, %v10388
        %v10430 = vadd.f32 %v10238, %v10346
        %v10431 = vadd.f32 %v10239, %v10389
        %v10432 = vadd.f32 %v10240, %v10390
        %v10433 = vadd.f32 %v10241, %v10352
        %v10434 = vadd.f32 %v10242, %v10391
        %v10435 = vadd.f32 %v10243, %v10392
        %v10436 = vadd.f32 %v10244, %v10358
        %v10437 = vadd.f32 %v10245, %v10393
        %v10438 = vadd.f32 %v10246, %v10394
        %v10439 = vadd.f32 %v10247, %v10364
        %v10440 = vadd.f32 %v10248, %v10395
        %v10441 = vadd.f32 %v10249, %v10396
        %v10442 = vadd.f32 %v10250, %v10370
        %v10443 = vadd.f32 %v10251, %v10397
        %v10444 = vadd.f32 %v10252, %v10398
        %v10445 = vadd.f32 %v10253, %v10376
        %v10446 = vadd.f32 %v10254, %v10399
        %v10447 = vadd.f32 %v10255, %v10400
        %v10448 = vadd.f32 %v10256, %v10382
        %v10449 = vadd.f32 %v10257, %v10401
        %v10450 = vadd.f32 %v10258, %v10402
        %10451 = vset.pattern.permute.xlu0 48
        %10452 = vperm.xlu0 %10451, %v1116
        %v10453 = vpop.permute.xlu0 %10452
        %10455 = vset.pattern.permute.xlu0 48
        %10456 = vperm.xlu0 %10455, %v1117
        %v10457 = vpop.permute.xlu0 %10456
        %10459 = vset.pattern.permute.xlu0 48
        %10460 = vperm.xlu0 %10459, %v1118
        %v10461 = vpop.permute.xlu0 %10460
        %10463 = vset.pattern.permute.xlu0 48
        %10464 = vperm.xlu0 %10463, %v1119
        %v10465 = vpop.permute.xlu0 %10464
        %10467 = vset.pattern.permute.xlu0 48
        %10468 = vperm.xlu0 %10467, %v1120
        %v10469 = vpop.permute.xlu0 %10468
        %10471 = vset.pattern.permute.xlu0 48
        %10472 = vperm.xlu0 %10471, %v1121
        %v10473 = vpop.permute.xlu0 %10472
        %10475 = vset.pattern.permute.xlu0 48
        %10476 = vperm.xlu0 %10475, %v1122
        %v10477 = vpop.permute.xlu0 %10476
        %10479 = vset.pattern.permute.xlu0 48
        %10480 = vperm.xlu0 %10479, %v1123
        %v10481 = vpop.permute.xlu0 %10480
        %v10483 = vmul.f32 %v10453, %v1791
        %v10484 = vmul.f32 %v10453, %v1792
        %v10485 = vmul.f32 %v10453, %v1793
        %v10486 = vmul.f32 %v10457, %v1794
        %v10487 = vmul.f32 %v10457, %v1795
        %v10488 = vmul.f32 %v10457, %v1796
        %v10489 = vmul.f32 %v10461, %v1797
        %v10490 = vmul.f32 %v10461, %v1798
        %v10491 = vmul.f32 %v10461, %v1799
        %v10492 = vmul.f32 %v10465, %v1800
        %v10493 = vmul.f32 %v10465, %v1801
        %v10494 = vmul.f32 %v10465, %v1802
        %v10495 = vmul.f32 %v10469, %v1803
        %v10496 = vmul.f32 %v10469, %v1804
        %v10497 = vmul.f32 %v10469, %v1805
        %v10498 = vmul.f32 %v10473, %v1806
        %v10499 = vmul.f32 %v10473, %v1807
        %v10500 = vmul.f32 %v10473, %v1808
        %v10501 = vmul.f32 %v10477, %v1809
        %v10502 = vmul.f32 %v10477, %v1810
        %v10503 = vmul.f32 %v10477, %v1811
        %v10504 = vmul.f32 %v10481, %v1812
        %v10505 = vmul.f32 %v10481, %v1813
        %v10506 = vmul.f32 %v10481, %v1814
        %10531 = vrot.lane.b32.xlu0 %v10483, 32
        %v10532 = vpop.permute.xlu0 %10531
        %10533 = vrot.lane.b32.xlu0 %v10484, 32
        %v10534 = vpop.permute.xlu0 %10533
        %10535 = vrot.lane.b32.xlu0 %v10485, 32
        %v10536 = vpop.permute.xlu0 %10535
        %10537 = vrot.lane.b32.xlu0 %v10486, 32
        %v10538 = vpop.permute.xlu0 %10537
        %10539 = vrot.lane.b32.xlu0 %v10487, 32
        %v10540 = vpop.permute.xlu0 %10539
        %10541 = vrot.lane.b32.xlu0 %v10488, 32
        %v10542 = vpop.permute.xlu0 %10541
        %10543 = vrot.lane.b32.xlu0 %v10489, 32
        %v10544 = vpop.permute.xlu0 %10543
        %10545 = vrot.lane.b32.xlu0 %v10490, 32
        %v10546 = vpop.permute.xlu0 %10545
        %10547 = vrot.lane.b32.xlu0 %v10491, 32
        %v10548 = vpop.permute.xlu0 %10547
        %10549 = vrot.lane.b32.xlu0 %v10492, 32
        %v10550 = vpop.permute.xlu0 %10549
        %10551 = vrot.lane.b32.xlu0 %v10493, 32
        %v10552 = vpop.permute.xlu0 %10551
        %10553 = vrot.lane.b32.xlu0 %v10494, 32
        %v10554 = vpop.permute.xlu0 %10553
        %10555 = vrot.lane.b32.xlu0 %v10495, 32
        %v10556 = vpop.permute.xlu0 %10555
        %10557 = vrot.lane.b32.xlu0 %v10496, 32
        %v10558 = vpop.permute.xlu0 %10557
        %10559 = vrot.lane.b32.xlu0 %v10497, 32
        %v10560 = vpop.permute.xlu0 %10559
        %10561 = vrot.lane.b32.xlu0 %v10498, 32
        %v10562 = vpop.permute.xlu0 %10561
        %10563 = vrot.lane.b32.xlu0 %v10499, 32
        %v10564 = vpop.permute.xlu0 %10563
        %10565 = vrot.lane.b32.xlu0 %v10500, 32
        %v10566 = vpop.permute.xlu0 %10565
        %10567 = vrot.lane.b32.xlu0 %v10501, 32
        %v10568 = vpop.permute.xlu0 %10567
        %10569 = vrot.lane.b32.xlu0 %v10502, 32
        %v10570 = vpop.permute.xlu0 %10569
        %10571 = vrot.lane.b32.xlu0 %v10503, 32
        %v10572 = vpop.permute.xlu0 %10571
        %10573 = vrot.lane.b32.xlu0 %v10504, 32
        %v10574 = vpop.permute.xlu0 %10573
        %10575 = vrot.lane.b32.xlu0 %v10505, 32
        %v10576 = vpop.permute.xlu0 %10575
        %10577 = vrot.lane.b32.xlu0 %v10506, 32
        %v10578 = vpop.permute.xlu0 %10577
        %v10579 = vsel %vm626, %v10532, %v10534
        %v10580 = vsel %vm626, %v10534, %v10536
        %v10581 = vsel %vm626, %v10538, %v10540
        %v10582 = vsel %vm626, %v10540, %v10542
        %v10583 = vsel %vm626, %v10544, %v10546
        %v10584 = vsel %vm626, %v10546, %v10548
        %v10585 = vsel %vm626, %v10550, %v10552
        %v10586 = vsel %vm626, %v10552, %v10554
        %v10587 = vsel %vm626, %v10556, %v10558
        %v10588 = vsel %vm626, %v10558, %v10560
        %v10589 = vsel %vm626, %v10562, %v10564
        %v10590 = vsel %vm626, %v10564, %v10566
        %v10591 = vsel %vm626, %v10568, %v10570
        %v10592 = vsel %vm626, %v10570, %v10572
        %v10593 = vsel %vm626, %v10574, %v10576
        %v10594 = vsel %vm626, %v10576, %v10578
        %v10619 = vadd.f32 %v10427, %v10532
        %v10620 = vadd.f32 %v10428, %v10579
        %v10621 = vadd.f32 %v10429, %v10580
        %v10622 = vadd.f32 %v10430, %v10538
        %v10623 = vadd.f32 %v10431, %v10581
        %v10624 = vadd.f32 %v10432, %v10582
        %v10625 = vadd.f32 %v10433, %v10544
        %v10626 = vadd.f32 %v10434, %v10583
        %v10627 = vadd.f32 %v10435, %v10584
        %v10628 = vadd.f32 %v10436, %v10550
        %v10629 = vadd.f32 %v10437, %v10585
        %v10630 = vadd.f32 %v10438, %v10586
        %v10631 = vadd.f32 %v10439, %v10556
        %v10632 = vadd.f32 %v10440, %v10587
        %v10633 = vadd.f32 %v10441, %v10588
        %v10634 = vadd.f32 %v10442, %v10562
        %v10635 = vadd.f32 %v10443, %v10589
        %v10636 = vadd.f32 %v10444, %v10590
        %v10637 = vadd.f32 %v10445, %v10568
        %v10638 = vadd.f32 %v10446, %v10591
        %v10639 = vadd.f32 %v10447, %v10592
        %v10640 = vadd.f32 %v10448, %v10574
        %v10641 = vadd.f32 %v10449, %v10593
        %v10642 = vadd.f32 %v10450, %v10594
        %s10643 = scalar_lea.vmem %s7, 6
        %v10644 = vld [vmem:[%s10643] ss:$8 sm:$0x3]
        %v10646 = vperm.slane %v10644, 0
        %v10647 = vperm.slane %v10644, 1
        %10648 = vrot.lane.b32.xlu0 %v10646, 83
        %v10649 = vpop.permute.xlu0 %10648
        %10650 = vrot.lane.b32.xlu0 %v10647, 83
        %v10651 = vpop.permute.xlu0 %10650
        %vm10652 = vcmask 678912
        %v10653 = vsel %vm10652, %v10649, %v10651
        %v10657 = vmul.f32 %v10619, %v10649
        %v10658 = vmul.f32 %v10620, %v10653
        %v10659 = vmul.f32 %v10621, %v10651
        %v10660 = vmul.f32 %v10622, %v10649
        %v10661 = vmul.f32 %v10623, %v10653
        %v10662 = vmul.f32 %v10624, %v10651
        %v10663 = vmul.f32 %v10625, %v10649
        %v10664 = vmul.f32 %v10626, %v10653
        %v10665 = vmul.f32 %v10627, %v10651
        %v10666 = vmul.f32 %v10628, %v10649
        %v10667 = vmul.f32 %v10629, %v10653
        %v10668 = vmul.f32 %v10630, %v10651
        %v10669 = vmul.f32 %v10631, %v10649
        %v10670 = vmul.f32 %v10632, %v10653
        %v10671 = vmul.f32 %v10633, %v10651
        %v10672 = vmul.f32 %v10634, %v10649
        %v10673 = vmul.f32 %v10635, %v10653
        %v10674 = vmul.f32 %v10636, %v10651
        %v10675 = vmul.f32 %v10637, %v10649
        %v10676 = vmul.f32 %v10638, %v10653
        %v10677 = vmul.f32 %v10639, %v10651
        %v10678 = vmul.f32 %v10640, %v10649
        %v10679 = vmul.f32 %v10641, %v10653
        %v10680 = vmul.f32 %v10642, %v10651
        %10705 = vrot.lane.b32.xlu0 %v10657, 122
        %v10706 = vpop.permute.xlu0 %10705
        %10707 = vrot.lane.b32.xlu0 %v10658, 122
        %v10708 = vpop.permute.xlu0 %10707
        %10709 = vrot.lane.b32.xlu0 %v10659, 122
        %v10710 = vpop.permute.xlu0 %10709
        %10711 = vrot.lane.b32.xlu0 %v10660, 122
        %v10712 = vpop.permute.xlu0 %10711
        %10713 = vrot.lane.b32.xlu0 %v10661, 122
        %v10714 = vpop.permute.xlu0 %10713
        %10715 = vrot.lane.b32.xlu0 %v10662, 122
        %v10716 = vpop.permute.xlu0 %10715
        %10717 = vrot.lane.b32.xlu0 %v10663, 122
        %v10718 = vpop.permute.xlu0 %10717
        %10719 = vrot.lane.b32.xlu0 %v10664, 122
        %v10720 = vpop.permute.xlu0 %10719
        %10721 = vrot.lane.b32.xlu0 %v10665, 122
        %v10722 = vpop.permute.xlu0 %10721
        %10723 = vrot.lane.b32.xlu0 %v10666, 122
        %v10724 = vpop.permute.xlu0 %10723
        %10725 = vrot.lane.b32.xlu0 %v10667, 122
        %v10726 = vpop.permute.xlu0 %10725
        %10727 = vrot.lane.b32.xlu0 %v10668, 122
        %v10728 = vpop.permute.xlu0 %10727
        %10729 = vrot.lane.b32.xlu0 %v10669, 122
        %v10730 = vpop.permute.xlu0 %10729
        %10731 = vrot.lane.b32.xlu0 %v10670, 122
        %v10732 = vpop.permute.xlu0 %10731
        %10733 = vrot.lane.b32.xlu0 %v10671, 122
        %v10734 = vpop.permute.xlu0 %10733
        %10735 = vrot.lane.b32.xlu0 %v10672, 122
        %v10736 = vpop.permute.xlu0 %10735
        %10737 = vrot.lane.b32.xlu0 %v10673, 122
        %v10738 = vpop.permute.xlu0 %10737
        %10739 = vrot.lane.b32.xlu0 %v10674, 122
        %v10740 = vpop.permute.xlu0 %10739
        %10741 = vrot.lane.b32.xlu0 %v10675, 122
        %v10742 = vpop.permute.xlu0 %10741
        %10743 = vrot.lane.b32.xlu0 %v10676, 122
        %v10744 = vpop.permute.xlu0 %10743
        %10745 = vrot.lane.b32.xlu0 %v10677, 122
        %v10746 = vpop.permute.xlu0 %10745
        %10747 = vrot.lane.b32.xlu0 %v10678, 122
        %v10748 = vpop.permute.xlu0 %10747
        %10749 = vrot.lane.b32.xlu0 %v10679, 122
        %v10750 = vpop.permute.xlu0 %10749
        %10751 = vrot.lane.b32.xlu0 %v10680, 122
        %v10752 = vpop.permute.xlu0 %10751
        %vm10753 = vcmask 998400
        %v10754 = vsel %vm10753, %v10706, %v10708
        %v10755 = vsel %vm10753, %v10708, %v10710
        %v10756 = vsel %vm10753, %v10712, %v10714
        %v10757 = vsel %vm10753, %v10714, %v10716
        %v10758 = vsel %vm10753, %v10718, %v10720
        %v10759 = vsel %vm10753, %v10720, %v10722
        %v10760 = vsel %vm10753, %v10724, %v10726
        %v10761 = vsel %vm10753, %v10726, %v10728
        %v10762 = vsel %vm10753, %v10730, %v10732
        %v10763 = vsel %vm10753, %v10732, %v10734
        %v10764 = vsel %vm10753, %v10736, %v10738
        %v10765 = vsel %vm10753, %v10738, %v10740
        %v10766 = vsel %vm10753, %v10742, %v10744
        %v10767 = vsel %vm10753, %v10744, %v10746
        %v10768 = vsel %vm10753, %v10748, %v10750
        %v10769 = vsel %vm10753, %v10750, %v10752
        %v10794 = vadd.f32 %v9387, %v10754
        %v10795 = vadd.f32 %v9388, %v10755
        %v10796 = vadd.f32 %v9389, %v10710
        %v10797 = vadd.f32 %v9390, %v10756
        %v10798 = vadd.f32 %v9391, %v10757
        %v10799 = vadd.f32 %v9392, %v10716
        %v10800 = vadd.f32 %v9393, %v10758
        %v10801 = vadd.f32 %v9394, %v10759
        %v10802 = vadd.f32 %v9395, %v10722
        %v10803 = vadd.f32 %v9396, %v10760
        %v10804 = vadd.f32 %v9397, %v10761
        %v10805 = vadd.f32 %v9398, %v10728
        %v10806 = vadd.f32 %v9399, %v10762
        %v10807 = vadd.f32 %v9400, %v10763
        %v10808 = vadd.f32 %v9401, %v10734
        %v10809 = vadd.f32 %v9402, %v10764
        %v10810 = vadd.f32 %v9403, %v10765
        %v10811 = vadd.f32 %v9404, %v10740
        %v10812 = vadd.f32 %v9405, %v10766
        %v10813 = vadd.f32 %v9406, %v10767
        %v10814 = vadd.f32 %v9407, %v10746
        %v10815 = vadd.f32 %v9408, %v10768
        %v10816 = vadd.f32 %v9409, %v10769
        %v10817 = vadd.f32 %v9410, %v10752
        %v10818 = vld [vmem:[%s6] sm:$0xff]
        %v10819 = vld [vmem:[%s6 + $0x8] sm:$0xff]
        %v10820 = vld [vmem:[%s6 + $0x10] sm:$0xff]
        %v10821 = vld [vmem:[%s6 + $0x18] sm:$0xff]
        %v10822 = vld [vmem:[%s6 + $0x20] sm:$0xff]
        %v10823 = vld [vmem:[%s6 + $0x28] sm:$0xff]
        %v10824 = vld [vmem:[%s6 + $0x30] sm:$0xff]
        %v10825 = vld [vmem:[%s6 + $0x38] sm:$0x3f]
        %10827 = vset.pattern.permute.xlu0 0
        %10828 = vperm.xlu0 %10827, %v10818
        %v10829 = vpop.permute.xlu0 %10828
        %10832 = vset.pattern.permute.xlu0 0
        %10833 = vperm.xlu0 %10832, %v10819
        %v10834 = vpop.permute.xlu0 %10833
        %10837 = vset.pattern.permute.xlu0 0
        %10838 = vperm.xlu0 %10837, %v10820
        %v10839 = vpop.permute.xlu0 %10838
        %10842 = vset.pattern.permute.xlu0 0
        %10843 = vperm.xlu0 %10842, %v10821
        %v10844 = vpop.permute.xlu0 %10843
        %10847 = vset.pattern.permute.xlu0 0
        %10848 = vperm.xlu0 %10847, %v10822
        %v10849 = vpop.permute.xlu0 %10848
        %10852 = vset.pattern.permute.xlu0 0
        %10853 = vperm.xlu0 %10852, %v10823
        %v10854 = vpop.permute.xlu0 %10853
        %10857 = vset.pattern.permute.xlu0 0
        %10858 = vperm.xlu0 %10857, %v10824
        %v10859 = vpop.permute.xlu0 %10858
        %10862 = vset.pattern.permute.xlu0 0
        %10863 = vperm.xlu0 %10862, %v10825
        %v10864 = vpop.permute.xlu0 %10863
        %v10866 = vadd.f32 %v10794, %v10829
        %v10867 = vadd.f32 %v10795, %v10829
        %v10868 = vadd.f32 %v10796, %v10829
        %v10869 = vadd.f32 %v10797, %v10834
        %v10870 = vadd.f32 %v10798, %v10834
        %v10871 = vadd.f32 %v10799, %v10834
        %v10872 = vadd.f32 %v10800, %v10839
        %v10873 = vadd.f32 %v10801, %v10839
        %v10874 = vadd.f32 %v10802, %v10839
        %v10875 = vadd.f32 %v10803, %v10844
        %v10876 = vadd.f32 %v10804, %v10844
        %v10877 = vadd.f32 %v10805, %v10844
        %v10878 = vadd.f32 %v10806, %v10849
        %v10879 = vadd.f32 %v10807, %v10849
        %v10880 = vadd.f32 %v10808, %v10849
        %v10881 = vadd.f32 %v10809, %v10854
        %v10882 = vadd.f32 %v10810, %v10854
        %v10883 = vadd.f32 %v10811, %v10854
        %v10884 = vadd.f32 %v10812, %v10859
        %v10885 = vadd.f32 %v10813, %v10859
        %v10886 = vadd.f32 %v10814, %v10859
        %v10887 = vadd.f32 %v10815, %v10864
        %v10888 = vadd.f32 %v10816, %v10864
        %v10889 = vadd.f32 %v10817, %v10864
        %10914 = vrot.lane.b32.xlu0 %v10866, 51
        %v10915 = vpop.permute.xlu0 %10914
        %10916 = vrot.lane.b32.xlu0 %v10867, 51
        %v10917 = vpop.permute.xlu0 %10916
        %10918 = vrot.lane.b32.xlu0 %v10868, 51
        %v10919 = vpop.permute.xlu0 %10918
        %10920 = vrot.lane.b32.xlu0 %v10869, 51
        %v10921 = vpop.permute.xlu0 %10920
        %10922 = vrot.lane.b32.xlu0 %v10870, 51
        %v10923 = vpop.permute.xlu0 %10922
        %10924 = vrot.lane.b32.xlu0 %v10871, 51
        %v10925 = vpop.permute.xlu0 %10924
        %10926 = vrot.lane.b32.xlu0 %v10872, 51
        %v10927 = vpop.permute.xlu0 %10926
        %10928 = vrot.lane.b32.xlu0 %v10873, 51
        %v10929 = vpop.permute.xlu0 %10928
        %10930 = vrot.lane.b32.xlu0 %v10874, 51
        %v10931 = vpop.permute.xlu0 %10930
        %10932 = vrot.lane.b32.xlu0 %v10875, 51
        %v10933 = vpop.permute.xlu0 %10932
        %10934 = vrot.lane.b32.xlu0 %v10876, 51
        %v10935 = vpop.permute.xlu0 %10934
        %10936 = vrot.lane.b32.xlu0 %v10877, 51
        %v10937 = vpop.permute.xlu0 %10936
        %10938 = vrot.lane.b32.xlu0 %v10878, 51
        %v10939 = vpop.permute.xlu0 %10938
        %10940 = vrot.lane.b32.xlu0 %v10879, 51
        %v10941 = vpop.permute.xlu0 %10940
        %10942 = vrot.lane.b32.xlu0 %v10880, 51
        %v10943 = vpop.permute.xlu0 %10942
        %10944 = vrot.lane.b32.xlu0 %v10881, 51
        %v10945 = vpop.permute.xlu0 %10944
        %10946 = vrot.lane.b32.xlu0 %v10882, 51
        %v10947 = vpop.permute.xlu0 %10946
        %10948 = vrot.lane.b32.xlu0 %v10883, 51
        %v10949 = vpop.permute.xlu0 %10948
        %10950 = vrot.lane.b32.xlu0 %v10884, 51
        %v10951 = vpop.permute.xlu0 %10950
        %10952 = vrot.lane.b32.xlu0 %v10885, 51
        %v10953 = vpop.permute.xlu0 %10952
        %10954 = vrot.lane.b32.xlu0 %v10886, 51
        %v10955 = vpop.permute.xlu0 %10954
        %10956 = vrot.lane.b32.xlu0 %v10887, 51
        %v10957 = vpop.permute.xlu0 %10956
        %10958 = vrot.lane.b32.xlu0 %v10888, 51
        %v10959 = vpop.permute.xlu0 %10958
        %10960 = vrot.lane.b32.xlu0 %v10889, 51
        %v10961 = vpop.permute.xlu0 %10960
        %vm10962 = vcmask 416768
        %v10963 = vsel %vm10962, %v10915, %v10917
        %v10964 = vsel %vm10962, %v10917, %v10919
        %v10965 = vsel %vm10962, %v10921, %v10923
        %v10966 = vsel %vm10962, %v10923, %v10925
        %v10967 = vsel %vm10962, %v10927, %v10929
        %v10968 = vsel %vm10962, %v10929, %v10931
        %v10969 = vsel %vm10962, %v10933, %v10935
        %v10970 = vsel %vm10962, %v10935, %v10937
        %v10971 = vsel %vm10962, %v10939, %v10941
        %v10972 = vsel %vm10962, %v10941, %v10943
        %v10973 = vsel %vm10962, %v10945, %v10947
        %v10974 = vsel %vm10962, %v10947, %v10949
        %v10975 = vsel %vm10962, %v10951, %v10953
        %v10976 = vsel %vm10962, %v10953, %v10955
        %v10977 = vsel %vm10962, %v10957, %v10959
        %v10978 = vsel %vm10962, %v10959, %v10961
        %10995 = vst [vmem:[#allocation3] sm:$0xff] %v10963
        %10996 = vst [vmem:[#allocation3 + $0x8] sm:$0xff] %v10964
        %10997 = vst [vmem:[#allocation3 + $0x10] sm:$0xff] %v10965
        %10998 = vst [vmem:[#allocation3 + $0x18] sm:$0xff] %v10966
        %10999 = vst [vmem:[#allocation3 + $0x20] sm:$0xff] %v10967
        %11000 = vst [vmem:[#allocation3 + $0x28] sm:$0xff] %v10968
        %11001 = vst [vmem:[#allocation3 + $0x30] sm:$0xff] %v10969
        %11002 = vst [vmem:[#allocation3 + $0x38] sm:$0xff] %v10970
        %11003 = vst [vmem:[#allocation3 + $0x40] sm:$0xff] %v10971
        %11004 = vst [vmem:[#allocation3 + $0x48] sm:$0xff] %v10972
        %11005 = vst [vmem:[#allocation3 + $0x50] sm:$0xff] %v10973
        %11006 = vst [vmem:[#allocation3 + $0x58] sm:$0xff] %v10974
        %11007 = vst [vmem:[#allocation3 + $0x60] sm:$0xff] %v10975
        %11008 = vst [vmem:[#allocation3 + $0x68] sm:$0xff] %v10976
        %11009 = vst [vmem:[#allocation3 + $0x70] sm:$0x3f] %v10977
        %11010 = vst [vmem:[#allocation3 + $0x78] sm:$0x3f] %v10978
        %v11011 = vld [vmem:[#allocation3] sm:$0x3]
        %v11012 = vld [vmem:[#allocation3 + $0x8] sm:$0x3]
        %v11013 = vmul.f32 %v739, %v11011
        %v11014 = vmul.f32 %v740, %v11012
        %v11015 = vpack.c.bf16 %v11014, %v11013
        %v11016 = vunpack.c.l.bf16 %v11015
        %v11017 = vunpack.c.h.bf16 %v11015
        %v11018 = vsub.f32 %v11013, %v11016
        %v11019 = vsub.f32 %v11014, %v11017
        %v11020 = vpack.c.bf16 %v11018, %v11018
        %v11021 = vpack.c.bf16 %v11019, %v11019
        %v11022 = vld [vmem:[%s8] sm:$0x3]
        %s11023 = scalar_lea.vmem %s8, 2
        %v11024 = vld [vmem:[%s11023] sm:$0x3]
        %vm11025 = vcmask 15360
        %v11027 = vsel %vm11025, %v11022, 0
        %vm11029 = vcmask 1040384
        %v11031 = vsel %vm11029, %v11020, 0
        %v11034 = vsel %vm11029, %v11021, 0
        %11036 = vmatpush.bf16.msra.mxu0 0
        %11037 = vmatpush.bf16.msra.mxu0 0
        %11038 = vmatpush.bf16.msra.mxu0 0
        %11039 = vmatpush.bf16.msra.mxu0 0
        %11040 = vmatpush.bf16.msra.mxu0 0
        %11041 = vmatpush.bf16.msra.mxu0 0
        %11042 = vmatpush.bf16.msra.mxu0 0
        %11043 = vmatpush.bf16.msra.mxu0 %v11031
        %11044 = vmatmul.bf16.gmra.mxu0 %v11027
        %v11045 = vpop.f32.mrf.mxu0
        %v11046 = vadd.f32 0.0, %v11045
        %v11047 = vpop.f32.mrf.mxu0
        %11048 = vdwg.mxu0
        %11049 = vmatpush.bf16.msra.mxu0 0
        %11050 = vmatpush.bf16.msra.mxu0 0
        %11051 = vmatpush.bf16.msra.mxu0 0
        %11052 = vmatpush.bf16.msra.mxu0 0
        %11053 = vmatpush.bf16.msra.mxu0 0
        %11054 = vmatpush.bf16.msra.mxu0 0
        %11055 = vmatpush.bf16.msra.mxu0 0
        %11056 = vmatpush.bf16.msra.mxu0 %v11034
        %11057 = vmatmul.bf16.gmra.mxu0 %v11027
        %v11058 = vpop.f32.mrf.mxu0
        %v11059 = vadd.f32 0.0, %v11058
        %v11060 = vpop.f32.mrf.mxu0
        %11061 = vdwg.mxu0
        %v11063 = vunpack.c.l.b16 %v11015
        %v11064 = vunpack.c.h.b16 %v11015
        %v11065 = vpack.c.b16 %v11063, %v11063
        %v11066 = vpack.c.b16 %v11064, %v11064
        %v11068 = vsel %vm11029, %v11065, 0
        %v11071 = vsel %vm11029, %v11066, 0
        %11073 = vmatpush.bf16.msra.mxu0 0
        %11074 = vmatpush.bf16.msra.mxu0 0
        %11075 = vmatpush.bf16.msra.mxu0 0
        %11076 = vmatpush.bf16.msra.mxu0 0
        %11077 = vmatpush.bf16.msra.mxu0 0
        %11078 = vmatpush.bf16.msra.mxu0 0
        %11079 = vmatpush.bf16.msra.mxu0 0
        %11080 = vmatpush.bf16.msra.mxu0 %v11068
        %11081 = vmatmul.bf16.gmra.mxu0 %v11027
        %v11082 = vpop.f32.mrf.mxu0
        %v11083 = vadd.f32 %v11046, %v11082
        %v11084 = vpop.f32.mrf.mxu0
        %11085 = vdwg.mxu0
        %11086 = vmatpush.bf16.msra.mxu0 0
        %11087 = vmatpush.bf16.msra.mxu0 0
        %11088 = vmatpush.bf16.msra.mxu0 0
        %11089 = vmatpush.bf16.msra.mxu0 0
        %11090 = vmatpush.bf16.msra.mxu0 0
        %11091 = vmatpush.bf16.msra.mxu0 0
        %11092 = vmatpush.bf16.msra.mxu0 0
        %11093 = vmatpush.bf16.msra.mxu0 %v11071
        %11094 = vmatmul.bf16.gmra.mxu0 %v11027
        %v11095 = vpop.f32.mrf.mxu0
        %v11096 = vadd.f32 %v11059, %v11095
        %v11097 = vpop.f32.mrf.mxu0
        %11098 = vdwg.mxu0
        %v11100 = vsel %vm11025, %v11024, 0
        %11102 = vmatpush.bf16.msra.mxu0 0
        %11103 = vmatpush.bf16.msra.mxu0 0
        %11104 = vmatpush.bf16.msra.mxu0 0
        %11105 = vmatpush.bf16.msra.mxu0 0
        %11106 = vmatpush.bf16.msra.mxu0 0
        %11107 = vmatpush.bf16.msra.mxu0 0
        %11108 = vmatpush.bf16.msra.mxu0 0
        %11109 = vmatpush.bf16.msra.mxu0 %v11068
        %11110 = vmatmul.bf16.gmra.mxu0 %v11100
        %v11111 = vpop.f32.mrf.mxu0
        %v11112 = vadd.f32 0.0, %v11111
        %v11113 = vpop.f32.mrf.mxu0
        %11114 = vdwg.mxu0
        %11115 = vmatpush.bf16.msra.mxu0 0
        %11116 = vmatpush.bf16.msra.mxu0 0
        %11117 = vmatpush.bf16.msra.mxu0 0
        %11118 = vmatpush.bf16.msra.mxu0 0
        %11119 = vmatpush.bf16.msra.mxu0 0
        %11120 = vmatpush.bf16.msra.mxu0 0
        %11121 = vmatpush.bf16.msra.mxu0 0
        %11122 = vmatpush.bf16.msra.mxu0 %v11071
        %11123 = vmatmul.bf16.gmra.mxu0 %v11100
        %v11124 = vpop.f32.mrf.mxu0
        %v11125 = vadd.f32 0.0, %v11124
        %v11126 = vpop.f32.mrf.mxu0
        %11127 = vdwg.mxu0
        %v11128 = vadd.f32 %v11083, %v11112
        %v11129 = vadd.f32 %v11096, %v11125
        %v11130 = vld [vmem:[%s12] sm:$0xf]
        %11132 = vset.pattern.permute.xlu0 0
        %11133 = vperm.xlu0 %11132, %v11130
        %v11134 = vpop.permute.xlu0 %11133
        %v11136 = vadd.f32 %v11128, %v11134
        %v11137 = vadd.f32 %v11129, %v11134
        %v11138 = vld [vmem:[#allocation3] sm:$0x3c]
        %v11139 = vld [vmem:[#allocation3 + $0x8] sm:$0x3c]
        %v11142 = vrot.slane %v11138, 2
        %v11143 = vrot.slane %v11139, 2
        %v11146 = vmul.f32 %v11136, %v11142
        %v11147 = vmul.f32 %v11137, %v11143
        %v11148 = vpack.c.bf16 %v11147, %v11146
        %v11149 = vunpack.c.l.bf16 %v11148
        %v11150 = vunpack.c.h.bf16 %v11148
        %v11151 = vsub.f32 %v11146, %v11149
        %v11152 = vsub.f32 %v11147, %v11150
        %v11153 = vpack.c.bf16 %v11151, %v11151
        %v11154 = vpack.c.bf16 %v11152, %v11152
        %v11155 = vld [vmem:[%s9] sm:$0xf]
        %s11156 = scalar_lea.vmem %s9, 4
        %v11157 = vld [vmem:[%s11156] sm:$0xf]
        %vm11158 = vcmask 31744
        %v11160 = vsel %vm11158, %v11155, 0
        %vm11162 = vcmask 1041408
        %v11164 = vsel %vm11162, %v11153, 0
        %v11167 = vsel %vm11162, %v11154, 0
        %11169 = vmatpush.bf16.msra.mxu0 0
        %11170 = vmatpush.bf16.msra.mxu0 0
        %11171 = vmatpush.bf16.msra.mxu0 0
        %11172 = vmatpush.bf16.msra.mxu0 0
        %11173 = vmatpush.bf16.msra.mxu0 0
        %11174 = vmatpush.bf16.msra.mxu0 0
        %11175 = vmatpush.bf16.msra.mxu0 0
        %11176 = vmatpush.bf16.msra.mxu0 %v11164
        %11177 = vmatmul.bf16.gmra.mxu0 %v11160
        %v11178 = vpop.f32.mrf.mxu0
        %v11179 = vadd.f32 0.0, %v11178
        %v11180 = vpop.f32.mrf.mxu0
        %11181 = vdwg.mxu0
        %11182 = vmatpush.bf16.msra.mxu0 0
        %11183 = vmatpush.bf16.msra.mxu0 0
        %11184 = vmatpush.bf16.msra.mxu0 0
        %11185 = vmatpush.bf16.msra.mxu0 0
        %11186 = vmatpush.bf16.msra.mxu0 0
        %11187 = vmatpush.bf16.msra.mxu0 0
        %11188 = vmatpush.bf16.msra.mxu0 0
        %11189 = vmatpush.bf16.msra.mxu0 %v11167
        %11190 = vmatmul.bf16.gmra.mxu0 %v11160
        %v11191 = vpop.f32.mrf.mxu0
        %v11192 = vadd.f32 0.0, %v11191
        %v11193 = vpop.f32.mrf.mxu0
        %11194 = vdwg.mxu0
        %v11196 = vunpack.c.l.b16 %v11148
        %v11197 = vunpack.c.h.b16 %v11148
        %v11198 = vpack.c.b16 %v11196, %v11196
        %v11199 = vpack.c.b16 %v11197, %v11197
        %v11201 = vsel %vm11162, %v11198, 0
        %v11204 = vsel %vm11162, %v11199, 0
        %11206 = vmatpush.bf16.msra.mxu0 0
        %11207 = vmatpush.bf16.msra.mxu0 0
        %11208 = vmatpush.bf16.msra.mxu0 0
        %11209 = vmatpush.bf16.msra.mxu0 0
        %11210 = vmatpush.bf16.msra.mxu0 0
        %11211 = vmatpush.bf16.msra.mxu0 0
        %11212 = vmatpush.bf16.msra.mxu0 0
        %11213 = vmatpush.bf16.msra.mxu0 %v11201
        %11214 = vmatmul.bf16.gmra.mxu0 %v11160
        %v11215 = vpop.f32.mrf.mxu0
        %v11216 = vadd.f32 %v11179, %v11215
        %v11217 = vpop.f32.mrf.mxu0
        %11218 = vdwg.mxu0
        %11219 = vmatpush.bf16.msra.mxu0 0
        %11220 = vmatpush.bf16.msra.mxu0 0
        %11221 = vmatpush.bf16.msra.mxu0 0
        %11222 = vmatpush.bf16.msra.mxu0 0
        %11223 = vmatpush.bf16.msra.mxu0 0
        %11224 = vmatpush.bf16.msra.mxu0 0
        %11225 = vmatpush.bf16.msra.mxu0 0
        %11226 = vmatpush.bf16.msra.mxu0 %v11204
        %11227 = vmatmul.bf16.gmra.mxu0 %v11160
        %v11228 = vpop.f32.mrf.mxu0
        %v11229 = vadd.f32 %v11192, %v11228
        %v11230 = vpop.f32.mrf.mxu0
        %11231 = vdwg.mxu0
        %v11233 = vsel %vm11158, %v11157, 0
        %11235 = vmatpush.bf16.msra.mxu0 0
        %11236 = vmatpush.bf16.msra.mxu0 0
        %11237 = vmatpush.bf16.msra.mxu0 0
        %11238 = vmatpush.bf16.msra.mxu0 0
        %11239 = vmatpush.bf16.msra.mxu0 0
        %11240 = vmatpush.bf16.msra.mxu0 0
        %11241 = vmatpush.bf16.msra.mxu0 0
        %11242 = vmatpush.bf16.msra.mxu0 %v11201
        %11243 = vmatmul.bf16.gmra.mxu0 %v11233
        %v11244 = vpop.f32.mrf.mxu0
        %v11245 = vadd.f32 0.0, %v11244
        %v11246 = vpop.f32.mrf.mxu0
        %11247 = vdwg.mxu0
        %11248 = vmatpush.bf16.msra.mxu0 0
        %11249 = vmatpush.bf16.msra.mxu0 0
        %11250 = vmatpush.bf16.msra.mxu0 0
        %11251 = vmatpush.bf16.msra.mxu0 0
        %11252 = vmatpush.bf16.msra.mxu0 0
        %11253 = vmatpush.bf16.msra.mxu0 0
        %11254 = vmatpush.bf16.msra.mxu0 0
        %11255 = vmatpush.bf16.msra.mxu0 %v11204
        %11256 = vmatmul.bf16.gmra.mxu0 %v11233
        %v11257 = vpop.f32.mrf.mxu0
        %v11258 = vadd.f32 0.0, %v11257
        %v11259 = vpop.f32.mrf.mxu0
        %11260 = vdwg.mxu0
        %v11261 = vadd.f32 %v11216, %v11245
        %v11262 = vadd.f32 %v11229, %v11258
        %v11263 = vld [vmem:[%s13] sm:$0xff]
        %11265 = vset.pattern.permute.xlu0 0
        %11266 = vperm.xlu0 %11265, %v11263
        %v11267 = vpop.permute.xlu0 %11266
        %v11269 = vadd.f32 %v11261, %v11267
        %v11270 = vadd.f32 %v11262, %v11267
        %v11271 = vld [vmem:[#allocation3] sm:$0xc0]
        %v11272 = vld [vmem:[#allocation3 + $0x8] sm:$0xc0]
        %v11273 = vld [vmem:[#allocation3 + $0x10] sm:$0x3f]
        %v11274 = vld [vmem:[#allocation3 + $0x18] sm:$0x3f]
        %v11279 = vrot.slane %v11271, 6
        %v11280 = vrot.slane %v11273, 6
        %v11281 = vsel %vm11162, %v11279, %v11280
        %v11282 = vrot.slane %v11272, 6
        %v11283 = vrot.slane %v11274, 6
        %v11284 = vsel %vm11162, %v11282, %v11283
        %v11287 = vmul.f32 %v11269, %v11281
        %v11288 = vmul.f32 %v11270, %v11284
        %v11289 = vpack.c.bf16 %v11288, %v11287
        %v11290 = vunpack.c.l.bf16 %v11289
        %v11291 = vunpack.c.h.bf16 %v11289
        %v11292 = vsub.f32 %v11287, %v11290
        %v11293 = vsub.f32 %v11288, %v11291
        %v11294 = vpack.c.bf16 %v11292, %v11292
        %v11295 = vpack.c.bf16 %v11293, %v11293
        %v11296 = vld [vmem:[%s10] sm:$0xf]
        %v11297 = vld [vmem:[%s10 + $0x4] sm:$0xf]
        %s11298 = scalar_lea.vmem %s10, 8
        %v11299 = vld [vmem:[%s11298] sm:$0xf]
        %v11300 = vld [vmem:[%s11298 + $0x4] sm:$0xf]
        %v11303 = vunpack.c.l.b16 %v11296
        %v11304 = vunpack.c.l.b16 %v11297
        %v11305 = vpack.c.b16 %v11304, %v11303
        %vm11306 = vcmask 64512
        %v11308 = vsel %vm11306, %v11305, 0
        %vm11310 = vcmask 1043456
        %v11312 = vsel %vm11310, %v11294, 0
        %v11315 = vsel %vm11310, %v11295, 0
        %11317 = vmatpush.bf16.msra.mxu0 0
        %11318 = vmatpush.bf16.msra.mxu0 0
        %11319 = vmatpush.bf16.msra.mxu0 0
        %11320 = vmatpush.bf16.msra.mxu0 0
        %11321 = vmatpush.bf16.msra.mxu0 0
        %11322 = vmatpush.bf16.msra.mxu0 0
        %11323 = vmatpush.bf16.msra.mxu0 0
        %11324 = vmatpush.bf16.msra.mxu0 %v11312
        %11325 = vmatmul.bf16.gmra.mxu0 %v11308
        %v11326 = vpop.f32.mrf.mxu0
        %v11327 = vadd.f32 0.0, %v11326
        %v11328 = vpop.f32.mrf.mxu0
        %v11329 = vadd.f32 0.0, %v11328
        %11330 = vdwg.mxu0
        %11331 = vmatpush.bf16.msra.mxu0 0
        %11332 = vmatpush.bf16.msra.mxu0 0
        %11333 = vmatpush.bf16.msra.mxu0 0
        %11334 = vmatpush.bf16.msra.mxu0 0
        %11335 = vmatpush.bf16.msra.mxu0 0
        %11336 = vmatpush.bf16.msra.mxu0 0
        %11337 = vmatpush.bf16.msra.mxu0 0
        %11338 = vmatpush.bf16.msra.mxu0 %v11315
        %11339 = vmatmul.bf16.gmra.mxu0 %v11308
        %v11340 = vpop.f32.mrf.mxu0
        %v11341 = vadd.f32 0.0, %v11340
        %v11342 = vpop.f32.mrf.mxu0
        %v11343 = vadd.f32 0.0, %v11342
        %11344 = vdwg.mxu0
        %v11346 = vunpack.c.l.b16 %v11289
        %v11347 = vunpack.c.h.b16 %v11289
        %v11348 = vpack.c.b16 %v11346, %v11346
        %v11349 = vpack.c.b16 %v11347, %v11347
        %v11351 = vsel %vm11310, %v11348, 0
        %v11354 = vsel %vm11310, %v11349, 0
        %11356 = vmatpush.bf16.msra.mxu0 0
        %11357 = vmatpush.bf16.msra.mxu0 0
        %11358 = vmatpush.bf16.msra.mxu0 0
        %11359 = vmatpush.bf16.msra.mxu0 0
        %11360 = vmatpush.bf16.msra.mxu0 0
        %11361 = vmatpush.bf16.msra.mxu0 0
        %11362 = vmatpush.bf16.msra.mxu0 0
        %11363 = vmatpush.bf16.msra.mxu0 %v11351
        %11364 = vmatmul.bf16.gmra.mxu0 %v11308
        %v11365 = vpop.f32.mrf.mxu0
        %v11366 = vadd.f32 %v11327, %v11365
        %v11367 = vpop.f32.mrf.mxu0
        %v11368 = vadd.f32 %v11329, %v11367
        %11369 = vdwg.mxu0
        %11370 = vmatpush.bf16.msra.mxu0 0
        %11371 = vmatpush.bf16.msra.mxu0 0
        %11372 = vmatpush.bf16.msra.mxu0 0
        %11373 = vmatpush.bf16.msra.mxu0 0
        %11374 = vmatpush.bf16.msra.mxu0 0
        %11375 = vmatpush.bf16.msra.mxu0 0
        %11376 = vmatpush.bf16.msra.mxu0 0
        %11377 = vmatpush.bf16.msra.mxu0 %v11354
        %11378 = vmatmul.bf16.gmra.mxu0 %v11308
        %v11379 = vpop.f32.mrf.mxu0
        %v11380 = vadd.f32 %v11341, %v11379
        %v11381 = vpop.f32.mrf.mxu0
        %v11382 = vadd.f32 %v11343, %v11381
        %11383 = vdwg.mxu0
        %v11386 = vunpack.c.l.b16 %v11299
        %v11387 = vunpack.c.l.b16 %v11300
        %v11388 = vpack.c.b16 %v11387, %v11386
        %v11390 = vsel %vm11306, %v11388, 0
        %11392 = vmatpush.bf16.msra.mxu0 0
        %11393 = vmatpush.bf16.msra.mxu0 0
        %11394 = vmatpush.bf16.msra.mxu0 0
        %11395 = vmatpush.bf16.msra.mxu0 0
        %11396 = vmatpush.bf16.msra.mxu0 0
        %11397 = vmatpush.bf16.msra.mxu0 0
        %11398 = vmatpush.bf16.msra.mxu0 0
        %11399 = vmatpush.bf16.msra.mxu0 %v11351
        %11400 = vmatmul.bf16.gmra.mxu0 %v11390
        %v11401 = vpop.f32.mrf.mxu0
        %v11402 = vadd.f32 0.0, %v11401
        %v11403 = vpop.f32.mrf.mxu0
        %v11404 = vadd.f32 0.0, %v11403
        %11405 = vdwg.mxu0
        %11406 = vmatpush.bf16.msra.mxu0 0
        %11407 = vmatpush.bf16.msra.mxu0 0
        %11408 = vmatpush.bf16.msra.mxu0 0
        %11409 = vmatpush.bf16.msra.mxu0 0
        %11410 = vmatpush.bf16.msra.mxu0 0
        %11411 = vmatpush.bf16.msra.mxu0 0
        %11412 = vmatpush.bf16.msra.mxu0 0
        %11413 = vmatpush.bf16.msra.mxu0 %v11354
        %11414 = vmatmul.bf16.gmra.mxu0 %v11390
        %v11415 = vpop.f32.mrf.mxu0
        %v11416 = vadd.f32 0.0, %v11415
        %v11417 = vpop.f32.mrf.mxu0
        %v11418 = vadd.f32 0.0, %v11417
        %11419 = vdwg.mxu0
        %v11420 = vadd.f32 %v11366, %v11402
        %v11421 = vadd.f32 %v11380, %v11416
        %v11422 = vadd.f32 %v11368, %v11404
        %v11423 = vadd.f32 %v11382, %v11418
        %v11424 = vld [vmem:[%s14] sm:$0xff]
        %v11425 = vld [vmem:[%s14 + $0x8] sm:$0xff]
        %11427 = vset.pattern.permute.xlu0 0
        %11428 = vperm.xlu0 %11427, %v11424
        %v11429 = vpop.permute.xlu0 %11428
        %11432 = vset.pattern.permute.xlu0 0
        %11433 = vperm.xlu0 %11432, %v11425
        %v11434 = vpop.permute.xlu0 %11433
        %v11436 = vadd.f32 %v11420, %v11429
        %v11437 = vadd.f32 %v11421, %v11429
        %v11438 = vadd.f32 %v11422, %v11434
        %v11439 = vadd.f32 %v11423, %v11434
        %v11440 = vld [vmem:[#allocation3 + $0x10] sm:$0xc0]
        %v11441 = vld [vmem:[#allocation3 + $0x18] sm:$0xc0]
        %v11442 = vld [vmem:[#allocation3 + $0x20] sm:$0xff]
        %v11443 = vld [vmem:[#allocation3 + $0x28] sm:$0xff]
        %v11444 = vld [vmem:[#allocation3 + $0x30] sm:$0x3f]
        %v11445 = vld [vmem:[#allocation3 + $0x38] sm:$0x3f]
        %v11452 = vrot.slane %v11440, 6
        %v11453 = vrot.slane %v11442, 6
        %v11454 = vsel %vm11162, %v11452, %v11453
        %v11455 = vrot.slane %v11441, 6
        %v11456 = vrot.slane %v11443, 6
        %v11457 = vsel %vm11162, %v11455, %v11456
        %v11458 = vrot.slane %v11444, 6
        %v11459 = vsel %vm11162, %v11453, %v11458
        %v11460 = vrot.slane %v11445, 6
        %v11461 = vsel %vm11162, %v11456, %v11460
        %v11466 = vmul.f32 %v11436, %v11454
        %v11467 = vmul.f32 %v11437, %v11457
        %v11468 = vmul.f32 %v11438, %v11459
        %v11469 = vmul.f32 %v11439, %v11461
        %v11470 = vpack.c.bf16 %v11467, %v11466
        %v11471 = vpack.c.bf16 %v11469, %v11468
        %v11472 = vunpack.c.l.bf16 %v11470
        %v11473 = vunpack.c.h.bf16 %v11470
        %v11474 = vunpack.c.l.bf16 %v11471
        %v11475 = vunpack.c.h.bf16 %v11471
        %v11476 = vsub.f32 %v11466, %v11472
        %v11477 = vsub.f32 %v11467, %v11473
        %v11478 = vsub.f32 %v11468, %v11474
        %v11479 = vsub.f32 %v11469, %v11475
        %v11480 = vpack.c.bf16 %v11478, %v11476
        %v11481 = vpack.c.bf16 %v11479, %v11477
        %v11482 = vld [vmem:[%s11] sm:$0xf]
        %v11483 = vld [vmem:[%s11 + $0x4] sm:$0xf]
        %v11484 = vld [vmem:[%s11 + $0x8] sm:$0xf]
        %v11485 = vld [vmem:[%s11 + $0xc] sm:$0xf]
        %s11486 = scalar_lea.vmem %s11, 16
        %v11487 = vld [vmem:[%s11486] sm:$0xf]
        %v11488 = vld [vmem:[%s11486 + $0x4] sm:$0xf]
        %v11489 = vld [vmem:[%s11486 + $0x8] sm:$0xf]
        %v11490 = vld [vmem:[%s11486 + $0xc] sm:$0xf]
        %v11495 = vunpack.c.l.b16 %v11482
        %v11496 = vunpack.c.l.b16 %v11483
        %v11497 = vunpack.c.l.b16 %v11484
        %v11498 = vunpack.c.l.b16 %v11485
        %v11499 = vpack.c.b16 %v11496, %v11495
        %v11500 = vpack.c.b16 %v11498, %v11497
        %vm11501 = vcmask 130048
        %v11503 = vsel %vm11501, %v11499, 0
        %v11506 = vsel %vm11501, %v11500, 0
        %11508 = vmatpush.bf16.msra.mxu0 0
        %11509 = vmatpush.bf16.msra.mxu0 0
        %11510 = vmatpush.bf16.msra.mxu0 0
        %11511 = vmatpush.bf16.msra.mxu0 0
        %11512 = vmatpush.bf16.msra.mxu0 0
        %11513 = vmatpush.bf16.msra.mxu0 0
        %11514 = vmatpush.bf16.msra.mxu0 0
        %11515 = vmatpush.bf16.msra.mxu0 %v11480
        %11516 = vmatmul.bf16.gmra.mxu0 %v11503
        %v11517 = vpop.f32.mrf.mxu0
        %v11518 = vadd.f32 0.0, %v11517
        %v11519 = vpop.f32.mrf.mxu0
        %v11520 = vadd.f32 0.0, %v11519
        %11521 = vmatmul.bf16.gmra.mxu0 %v11506
        %v11522 = vpop.f32.mrf.mxu0
        %v11523 = vadd.f32 0.0, %v11522
        %v11524 = vpop.f32.mrf.mxu0
        %v11525 = vadd.f32 0.0, %v11524
        %11526 = vdwg.mxu0
        %11527 = vmatpush.bf16.msra.mxu0 0
        %11528 = vmatpush.bf16.msra.mxu0 0
        %11529 = vmatpush.bf16.msra.mxu0 0
        %11530 = vmatpush.bf16.msra.mxu0 0
        %11531 = vmatpush.bf16.msra.mxu0 0
        %11532 = vmatpush.bf16.msra.mxu0 0
        %11533 = vmatpush.bf16.msra.mxu0 0
        %11534 = vmatpush.bf16.msra.mxu0 %v11481
        %11535 = vmatmul.bf16.gmra.mxu0 %v11503
        %v11536 = vpop.f32.mrf.mxu0
        %v11537 = vadd.f32 0.0, %v11536
        %v11538 = vpop.f32.mrf.mxu0
        %v11539 = vadd.f32 0.0, %v11538
        %11540 = vmatmul.bf16.gmra.mxu0 %v11506
        %v11541 = vpop.f32.mrf.mxu0
        %v11542 = vadd.f32 0.0, %v11541
        %v11543 = vpop.f32.mrf.mxu0
        %v11544 = vadd.f32 0.0, %v11543
        %11545 = vdwg.mxu0
        %v11548 = vunpack.c.l.b16 %v11470
        %v11549 = vunpack.c.h.b16 %v11470
        %v11550 = vunpack.c.l.b16 %v11471
        %v11551 = vunpack.c.h.b16 %v11471
        %v11552 = vpack.c.b16 %v11550, %v11548
        %v11553 = vpack.c.b16 %v11551, %v11549
        %11556 = vmatpush.bf16.msra.mxu0 0
        %11557 = vmatpush.bf16.msra.mxu0 0
        %11558 = vmatpush.bf16.msra.mxu0 0
        %11559 = vmatpush.bf16.msra.mxu0 0
        %11560 = vmatpush.bf16.msra.mxu0 0
        %11561 = vmatpush.bf16.msra.mxu0 0
        %11562 = vmatpush.bf16.msra.mxu0 0
        %11563 = vmatpush.bf16.msra.mxu0 %v11552
        %11564 = vmatmul.bf16.gmra.mxu0 %v11503
        %v11565 = vpop.f32.mrf.mxu0
        %v11566 = vadd.f32 %v11518, %v11565
        %v11567 = vpop.f32.mrf.mxu0
        %v11568 = vadd.f32 %v11520, %v11567
        %11569 = vmatmul.bf16.gmra.mxu0 %v11506
        %v11570 = vpop.f32.mrf.mxu0
        %v11571 = vadd.f32 %v11523, %v11570
        %v11572 = vpop.f32.mrf.mxu0
        %v11573 = vadd.f32 %v11525, %v11572
        %11574 = vdwg.mxu0
        %11575 = vmatpush.bf16.msra.mxu0 0
        %11576 = vmatpush.bf16.msra.mxu0 0
        %11577 = vmatpush.bf16.msra.mxu0 0
        %11578 = vmatpush.bf16.msra.mxu0 0
        %11579 = vmatpush.bf16.msra.mxu0 0
        %11580 = vmatpush.bf16.msra.mxu0 0
        %11581 = vmatpush.bf16.msra.mxu0 0
        %11582 = vmatpush.bf16.msra.mxu0 %v11553
        %11583 = vmatmul.bf16.gmra.mxu0 %v11503
        %v11584 = vpop.f32.mrf.mxu0
        %v11585 = vadd.f32 %v11537, %v11584
        %v11586 = vpop.f32.mrf.mxu0
        %v11587 = vadd.f32 %v11539, %v11586
        %11588 = vmatmul.bf16.gmra.mxu0 %v11506
        %v11589 = vpop.f32.mrf.mxu0
        %v11590 = vadd.f32 %v11542, %v11589
        %v11591 = vpop.f32.mrf.mxu0
        %v11592 = vadd.f32 %v11544, %v11591
        %11593 = vdwg.mxu0
        %v11598 = vunpack.c.l.b16 %v11487
        %v11599 = vunpack.c.l.b16 %v11488
        %v11600 = vunpack.c.l.b16 %v11489
        %v11601 = vunpack.c.l.b16 %v11490
        %v11602 = vpack.c.b16 %v11599, %v11598
        %v11603 = vpack.c.b16 %v11601, %v11600
        %v11605 = vsel %vm11501, %v11602, 0
        %v11608 = vsel %vm11501, %v11603, 0
        %11610 = vmatpush.bf16.msra.mxu0 0
        %11611 = vmatpush.bf16.msra.mxu0 0
        %11612 = vmatpush.bf16.msra.mxu0 0
        %11613 = vmatpush.bf16.msra.mxu0 0
        %11614 = vmatpush.bf16.msra.mxu0 0
        %11615 = vmatpush.bf16.msra.mxu0 0
        %11616 = vmatpush.bf16.msra.mxu0 0
        %11617 = vmatpush.bf16.msra.mxu0 %v11552
        %11618 = vmatmul.bf16.gmra.mxu0 %v11605
        %v11619 = vpop.f32.mrf.mxu0
        %v11620 = vadd.f32 0.0, %v11619
        %v11621 = vpop.f32.mrf.mxu0
        %v11622 = vadd.f32 0.0, %v11621
        %11623 = vmatmul.bf16.gmra.mxu0 %v11608
        %v11624 = vpop.f32.mrf.mxu0
        %v11625 = vadd.f32 0.0, %v11624
        %v11626 = vpop.f32.mrf.mxu0
        %v11627 = vadd.f32 0.0, %v11626
        %11628 = vdwg.mxu0
        %11629 = vmatpush.bf16.msra.mxu0 0
        %11630 = vmatpush.bf16.msra.mxu0 0
        %11631 = vmatpush.bf16.msra.mxu0 0
        %11632 = vmatpush.bf16.msra.mxu0 0
        %11633 = vmatpush.bf16.msra.mxu0 0
        %11634 = vmatpush.bf16.msra.mxu0 0
        %11635 = vmatpush.bf16.msra.mxu0 0
        %11636 = vmatpush.bf16.msra.mxu0 %v11553
        %11637 = vmatmul.bf16.gmra.mxu0 %v11605
        %v11638 = vpop.f32.mrf.mxu0
        %v11639 = vadd.f32 0.0, %v11638
        %v11640 = vpop.f32.mrf.mxu0
        %v11641 = vadd.f32 0.0, %v11640
        %11642 = vmatmul.bf16.gmra.mxu0 %v11608
        %v11643 = vpop.f32.mrf.mxu0
        %v11644 = vadd.f32 0.0, %v11643
        %v11645 = vpop.f32.mrf.mxu0
        %v11646 = vadd.f32 0.0, %v11645
        %11647 = vdwg.mxu0
        %v11648 = vadd.f32 %v11566, %v11620
        %v11649 = vadd.f32 %v11585, %v11639
        %v11650 = vadd.f32 %v11568, %v11622
        %v11651 = vadd.f32 %v11587, %v11641
        %v11652 = vadd.f32 %v11571, %v11625
        %v11653 = vadd.f32 %v11590, %v11644
        %v11654 = vadd.f32 %v11573, %v11627
        %v11655 = vadd.f32 %v11592, %v11646
        %v11656 = vld [vmem:[%s15] sm:$0xff]
        %v11657 = vld [vmem:[%s15 + $0x8] sm:$0xff]
        %v11658 = vld [vmem:[%s15 + $0x10] sm:$0xff]
        %v11659 = vld [vmem:[%s15 + $0x18] sm:$0xff]
        %11661 = vset.pattern.permute.xlu0 0
        %11662 = vperm.xlu0 %11661, %v11656
        %v11663 = vpop.permute.xlu0 %11662
        %11666 = vset.pattern.permute.xlu0 0
        %11667 = vperm.xlu0 %11666, %v11657
        %v11668 = vpop.permute.xlu0 %11667
        %11671 = vset.pattern.permute.xlu0 0
        %11672 = vperm.xlu0 %11671, %v11658
        %v11673 = vpop.permute.xlu0 %11672
        %11676 = vset.pattern.permute.xlu0 0
        %11677 = vperm.xlu0 %11676, %v11659
        %v11678 = vpop.permute.xlu0 %11677
        %v11680 = vadd.f32 %v11648, %v11663
        %v11681 = vadd.f32 %v11649, %v11663
        %v11682 = vadd.f32 %v11650, %v11668
        %v11683 = vadd.f32 %v11651, %v11668
        %v11684 = vadd.f32 %v11652, %v11673
        %v11685 = vadd.f32 %v11653, %v11673
        %v11686 = vadd.f32 %v11654, %v11678
        %v11687 = vadd.f32 %v11655, %v11678
        %v11688 = vld [vmem:[#allocation3 + $0x30] sm:$0xc0]
        %v11689 = vld [vmem:[#allocation3 + $0x38] sm:$0xc0]
        %v11690 = vld [vmem:[#allocation3 + $0x40] sm:$0xff]
        %v11691 = vld [vmem:[#allocation3 + $0x48] sm:$0xff]
        %v11692 = vld [vmem:[#allocation3 + $0x50] sm:$0xff]
        %v11693 = vld [vmem:[#allocation3 + $0x58] sm:$0xff]
        %v11694 = vld [vmem:[#allocation3 + $0x60] sm:$0xff]
        %v11695 = vld [vmem:[#allocation3 + $0x68] sm:$0xff]
        %v11696 = vld [vmem:[#allocation3 + $0x70] sm:$0x3f]
        %v11697 = vld [vmem:[#allocation3 + $0x78] sm:$0x3f]
        %v11708 = vrot.slane %v11688, 6
        %v11709 = vrot.slane %v11690, 6
        %v11710 = vsel %vm11162, %v11708, %v11709
        %v11711 = vrot.slane %v11689, 6
        %v11712 = vrot.slane %v11691, 6
        %v11713 = vsel %vm11162, %v11711, %v11712
        %v11714 = vrot.slane %v11692, 6
        %v11715 = vsel %vm11162, %v11709, %v11714
        %v11716 = vrot.slane %v11693, 6
        %v11717 = vsel %vm11162, %v11712, %v11716
        %v11718 = vrot.slane %v11694, 6
        %v11719 = vsel %vm11162, %v11714, %v11718
        %v11720 = vrot.slane %v11695, 6
        %v11721 = vsel %vm11162, %v11716, %v11720
        %v11722 = vrot.slane %v11696, 6
        %v11723 = vsel %vm11162, %v11718, %v11722
        %v11724 = vrot.slane %v11697, 6
        %v11725 = vsel %vm11162, %v11720, %v11724
        %v11734 = vmul.f32 %v11680, %v11710
        %v11735 = vmul.f32 %v11681, %v11713
        %v11736 = vmul.f32 %v11682, %v11715
        %v11737 = vmul.f32 %v11683, %v11717
        %v11738 = vmul.f32 %v11684, %v11719
        %v11739 = vmul.f32 %v11685, %v11721
        %v11740 = vmul.f32 %v11686, %v11723
        %v11741 = vmul.f32 %v11687, %v11725
        %v11742 = vpack.c.bf16 %v11735, %v11734
        %v11743 = vpack.c.bf16 %v11737, %v11736
        %v11744 = vpack.c.bf16 %v11739, %v11738
        %v11745 = vpack.c.bf16 %v11741, %v11740
        %v11746 = vunpack.c.l.bf16 %v11742
        %v11747 = vunpack.c.h.bf16 %v11742
        %v11748 = vunpack.c.l.bf16 %v11743
        %v11749 = vunpack.c.h.bf16 %v11743
        %v11750 = vunpack.c.l.bf16 %v11744
        %v11751 = vunpack.c.h.bf16 %v11744
        %v11752 = vunpack.c.l.bf16 %v11745
        %v11753 = vunpack.c.h.bf16 %v11745
        %v11754 = vsub.f32 %v11734, %v11746
        %v11755 = vsub.f32 %v11735, %v11747
        %v11756 = vsub.f32 %v11736, %v11748
        %v11757 = vsub.f32 %v11737, %v11749
        %v11758 = vsub.f32 %v11738, %v11750
        %v11759 = vsub.f32 %v11739, %v11751
        %v11760 = vsub.f32 %v11740, %v11752
        %v11761 = vsub.f32 %v11741, %v11753
        %v11762 = vpack.c.bf16 %v11756, %v11754
        %v11763 = vpack.c.bf16 %v11757, %v11755
        %v11764 = vpack.c.bf16 %v11760, %v11758
        %v11765 = vpack.c.bf16 %v11761, %v11759
        %v11766 = vld [vmem:[%s16] sm:$0xf]
        %v11767 = vld [vmem:[%s16 + $0x4] sm:$0xf]
        %v11768 = vld [vmem:[%s16 + $0x8] sm:$0xf]
        %v11769 = vld [vmem:[%s16 + $0xc] sm:$0xf]
        %s11770 = scalar_lea.vmem %s16, 16
        %v11771 = vld [vmem:[%s11770] sm:$0xf]
        %v11772 = vld [vmem:[%s11770 + $0x4] sm:$0xf]
        %v11773 = vld [vmem:[%s11770 + $0x8] sm:$0xf]
        %v11774 = vld [vmem:[%s11770 + $0xc] sm:$0xf]
        %v11779 = vunpack.c.l.b16 %v11766
        %v11780 = vunpack.c.l.b16 %v11767
        %v11781 = vunpack.c.l.b16 %v11768
        %v11782 = vunpack.c.l.b16 %v11769
        %v11783 = vpack.c.b16 %v11780, %v11779
        %v11784 = vpack.c.b16 %v11782, %v11781
        %v11786 = vsel %vm626, %v11783, 0
        %v11789 = vsel %vm626, %v11784, 0
        %11791 = vmatpush.bf16.msra.mxu0 0
        %11792 = vmatpush.bf16.msra.mxu0 0
        %11793 = vmatpush.bf16.msra.mxu0 0
        %11794 = vmatpush.bf16.msra.mxu0 0
        %11795 = vmatpush.bf16.msra.mxu0 0
        %11796 = vmatpush.bf16.msra.mxu0 0
        %11797 = vmatpush.bf16.msra.mxu0 %v11764
        %11798 = vmatpush.bf16.msra.mxu0 %v11762
        %11799 = vmatmul.bf16.gmra.mxu0 %v11786
        %v11800 = vpop.f32.mrf.mxu0
        %v11801 = vadd.f32 0.0, %v11800
        %v11802 = vpop.f32.mrf.mxu0
        %v11803 = vadd.f32 0.0, %v11802
        %11804 = vmatmul.bf16.gmra.mxu0 %v11789
        %v11805 = vpop.f32.mrf.mxu0
        %v11806 = vadd.f32 0.0, %v11805
        %v11807 = vpop.f32.mrf.mxu0
        %v11808 = vadd.f32 0.0, %v11807
        %11809 = vdwg.mxu0
        %11810 = vmatpush.bf16.msra.mxu0 0
        %11811 = vmatpush.bf16.msra.mxu0 0
        %11812 = vmatpush.bf16.msra.mxu0 0
        %11813 = vmatpush.bf16.msra.mxu0 0
        %11814 = vmatpush.bf16.msra.mxu0 0
        %11815 = vmatpush.bf16.msra.mxu0 0
        %11816 = vmatpush.bf16.msra.mxu0 %v11765
        %11817 = vmatpush.bf16.msra.mxu0 %v11763
        %11818 = vmatmul.bf16.gmra.mxu0 %v11786
        %v11819 = vpop.f32.mrf.mxu0
        %v11820 = vadd.f32 0.0, %v11819
        %v11821 = vpop.f32.mrf.mxu0
        %v11822 = vadd.f32 0.0, %v11821
        %11823 = vmatmul.bf16.gmra.mxu0 %v11789
        %v11824 = vpop.f32.mrf.mxu0
        %v11825 = vadd.f32 0.0, %v11824
        %v11826 = vpop.f32.mrf.mxu0
        %v11827 = vadd.f32 0.0, %v11826
        %11828 = vdwg.mxu0
        %v11833 = vunpack.c.l.b16 %v11742
        %v11834 = vunpack.c.h.b16 %v11742
        %v11835 = vunpack.c.l.b16 %v11743
        %v11836 = vunpack.c.h.b16 %v11743
        %v11837 = vunpack.c.l.b16 %v11744
        %v11838 = vunpack.c.h.b16 %v11744
        %v11839 = vunpack.c.l.b16 %v11745
        %v11840 = vunpack.c.h.b16 %v11745
        %v11841 = vpack.c.b16 %v11835, %v11833
        %v11842 = vpack.c.b16 %v11836, %v11834
        %v11843 = vpack.c.b16 %v11839, %v11837
        %v11844 = vpack.c.b16 %v11840, %v11838
        %11849 = vmatpush.bf16.msra.mxu0 0
        %11850 = vmatpush.bf16.msra.mxu0 0
        %11851 = vmatpush.bf16.msra.mxu0 0
        %11852 = vmatpush.bf16.msra.mxu0 0
        %11853 = vmatpush.bf16.msra.mxu0 0
        %11854 = vmatpush.bf16.msra.mxu0 0
        %11855 = vmatpush.bf16.msra.mxu0 %v11843
        %11856 = vmatpush.bf16.msra.mxu0 %v11841
        %11857 = vmatmul.bf16.gmra.mxu0 %v11786
        %v11858 = vpop.f32.mrf.mxu0
        %v11859 = vadd.f32 %v11801, %v11858
        %v11860 = vpop.f32.mrf.mxu0
        %v11861 = vadd.f32 %v11803, %v11860
        %11862 = vmatmul.bf16.gmra.mxu0 %v11789
        %v11863 = vpop.f32.mrf.mxu0
        %v11864 = vadd.f32 %v11806, %v11863
        %v11865 = vpop.f32.mrf.mxu0
        %v11866 = vadd.f32 %v11808, %v11865
        %11867 = vdwg.mxu0
        %11868 = vmatpush.bf16.msra.mxu0 0
        %11869 = vmatpush.bf16.msra.mxu0 0
        %11870 = vmatpush.bf16.msra.mxu0 0
        %11871 = vmatpush.bf16.msra.mxu0 0
        %11872 = vmatpush.bf16.msra.mxu0 0
        %11873 = vmatpush.bf16.msra.mxu0 0
        %11874 = vmatpush.bf16.msra.mxu0 %v11844
        %11875 = vmatpush.bf16.msra.mxu0 %v11842
        %11876 = vmatmul.bf16.gmra.mxu0 %v11786
        %v11877 = vpop.f32.mrf.mxu0
        %v11878 = vadd.f32 %v11820, %v11877
        %v11879 = vpop.f32.mrf.mxu0
        %v11880 = vadd.f32 %v11822, %v11879
        %11881 = vmatmul.bf16.gmra.mxu0 %v11789
        %v11882 = vpop.f32.mrf.mxu0
        %v11883 = vadd.f32 %v11825, %v11882
        %v11884 = vpop.f32.mrf.mxu0
        %v11885 = vadd.f32 %v11827, %v11884
        %11886 = vdwg.mxu0
        %v11891 = vunpack.c.l.b16 %v11771
        %v11892 = vunpack.c.l.b16 %v11772
        %v11893 = vunpack.c.l.b16 %v11773
        %v11894 = vunpack.c.l.b16 %v11774
        %v11895 = vpack.c.b16 %v11892, %v11891
        %v11896 = vpack.c.b16 %v11894, %v11893
        %v11898 = vsel %vm626, %v11895, 0
        %v11901 = vsel %vm626, %v11896, 0
        %11903 = vmatpush.bf16.msra.mxu0 0
        %11904 = vmatpush.bf16.msra.mxu0 0
        %11905 = vmatpush.bf16.msra.mxu0 0
        %11906 = vmatpush.bf16.msra.mxu0 0
        %11907 = vmatpush.bf16.msra.mxu0 0
        %11908 = vmatpush.bf16.msra.mxu0 0
        %11909 = vmatpush.bf16.msra.mxu0 %v11843
        %11910 = vmatpush.bf16.msra.mxu0 %v11841
        %11911 = vmatmul.bf16.gmra.mxu0 %v11898
        %v11912 = vpop.f32.mrf.mxu0
        %v11913 = vadd.f32 0.0, %v11912
        %v11914 = vpop.f32.mrf.mxu0
        %v11915 = vadd.f32 0.0, %v11914
        %11916 = vmatmul.bf16.gmra.mxu0 %v11901
        %v11917 = vpop.f32.mrf.mxu0
        %v11918 = vadd.f32 0.0, %v11917
        %v11919 = vpop.f32.mrf.mxu0
        %v11920 = vadd.f32 0.0, %v11919
        %11921 = vdwg.mxu0
        %11922 = vmatpush.bf16.msra.mxu0 0
        %11923 = vmatpush.bf16.msra.mxu0 0
        %11924 = vmatpush.bf16.msra.mxu0 0
        %11925 = vmatpush.bf16.msra.mxu0 0
        %11926 = vmatpush.bf16.msra.mxu0 0
        %11927 = vmatpush.bf16.msra.mxu0 0
        %11928 = vmatpush.bf16.msra.mxu0 %v11844
        %11929 = vmatpush.bf16.msra.mxu0 %v11842
        %11930 = vmatmul.bf16.gmra.mxu0 %v11898
        %v11931 = vpop.f32.mrf.mxu0
        %v11932 = vadd.f32 0.0, %v11931
        %v11933 = vpop.f32.mrf.mxu0
        %v11934 = vadd.f32 0.0, %v11933
        %11935 = vmatmul.bf16.gmra.mxu0 %v11901
        %v11936 = vpop.f32.mrf.mxu0
        %v11937 = vadd.f32 0.0, %v11936
        %v11938 = vpop.f32.mrf.mxu0
        %v11939 = vadd.f32 0.0, %v11938
        %11940 = vdwg.mxu0
        %v11941 = vadd.f32 %v11859, %v11913
        %v11942 = vadd.f32 %v11878, %v11932
        %v11943 = vadd.f32 %v11861, %v11915
        %v11944 = vadd.f32 %v11880, %v11934
        %v11945 = vadd.f32 %v11864, %v11918
        %v11946 = vadd.f32 %v11883, %v11937
        %v11947 = vadd.f32 %v11866, %v11920
        %v11948 = vadd.f32 %v11885, %v11939
        %v11949 = vld [vmem:[%s17] sm:$0xff]
        %v11950 = vld [vmem:[%s17 + $0x8] sm:$0xff]
        %v11951 = vld [vmem:[%s17 + $0x10] sm:$0xff]
        %v11952 = vld [vmem:[%s17 + $0x18] sm:$0xff]
        %11954 = vset.pattern.permute.xlu0 0
        %11955 = vperm.xlu0 %11954, %v11949
        %v11956 = vpop.permute.xlu0 %11955
        %11959 = vset.pattern.permute.xlu0 0
        %11960 = vperm.xlu0 %11959, %v11950
        %v11961 = vpop.permute.xlu0 %11960
        %11964 = vset.pattern.permute.xlu0 0
        %11965 = vperm.xlu0 %11964, %v11951
        %v11966 = vpop.permute.xlu0 %11965
        %11969 = vset.pattern.permute.xlu0 0
        %11970 = vperm.xlu0 %11969, %v11952
        %v11971 = vpop.permute.xlu0 %11970
        %v11973 = vadd.f32 %v11941, %v11956
        %v11974 = vadd.f32 %v11942, %v11956
        %v11975 = vadd.f32 %v11943, %v11961
        %v11976 = vadd.f32 %v11944, %v11961
        %v11977 = vadd.f32 %v11945, %v11966
        %v11978 = vadd.f32 %v11946, %v11966
        %v11979 = vadd.f32 %v11947, %v11971
        %v11980 = vadd.f32 %v11948, %v11971
        %11981 = vst [vmem:[%s568] sm:$0xff] %v11973
        %11982 = vst [vmem:[%s568 + $0x8] sm:$0xff] %v11974
        %11983 = vst [vmem:[%s568 + $0x10] sm:$0xff] %v11975
        %11984 = vst [vmem:[%s568 + $0x18] sm:$0xff] %v11976
        %11985 = vst [vmem:[%s568 + $0x20] sm:$0xff] %v11977
        %11986 = vst [vmem:[%s568 + $0x28] sm:$0xff] %v11978
        %11987 = vst [vmem:[%s568 + $0x30] sm:$0xff] %v11979
        %11988 = vst [vmem:[%s568 + $0x38] sm:$0xff] %v11980
        %s11989 = sand.u32 %s423, 1
        %s11990 = scalar_lea.sflag [#allocation5], %s11989
        %s11991 = sand.u32 %s423, 1
        %s11992 = smul.addr %s11991, 64
        %s11993 = scalar_lea.vmem [#allocation4], %s11992
        // Predicated region
        $region93: #{tpu_custom_call.1} parent=91 // pred_check
          %p11994 = pneg %p433
        $region94: #{tpu_custom_call.1} parent=91 // pred_check_branch
          %11996 = sbr.rel (%p11994) target = $region96
        $region95: #{tpu_custom_call.1} parent=91 // pred_region
          %11998 = vsyncadd %s11990, 0
          %s11999 = smul.addr %s32, 8
          %s12000 = smul.addr %s11999, 8
          %s12001 = scalar_lea.hbm %s18, %s12000
          %s12002 = sshll.u32 %s11993, 4
          %s12003 = int_to_ptr.vmem [resolvable:$true] %s12002
          %s12004 = sshll.u32 %s12001, 4
          %s12005 = int_to_ptr.hbm [resolvable:$true] %s12004
          %12010 = dma.vmem_to_hbm [thread:$0]  %s12003, 1024, %s12005, %s11990, 256, 256, 16
        $region96: #{tpu_custom_call.1} parent=91 // pred_fallthru
          _
      $region92: #{tpu_custom_call.1} parent=5 // pred_fallthru
        _
      %p12011 = scmp.le.s32.totalorder 2, %s27
      // Predicated region
      $region97: #{tpu_custom_call.1} parent=5 // pred_check
        %p12012 = pneg %p12011
      $region98: #{tpu_custom_call.1} parent=5 // pred_check_branch
        %12014 = sbr.rel (%p12012) target = $region100
      $region99: #{tpu_custom_call.1} parent=5 // pred_region
        %s12015 = ssub.s32 %s27, 2
        // Predicated region
        $region101: #{tpu_custom_call.1} parent=99 // pred_check
          %p12016 = pneg %p439
        $region102: #{tpu_custom_call.1} parent=99 // pred_check_branch
          %12018 = sbr.rel (%p12016) target = $region104
        $region103: #{tpu_custom_call.1} parent=99 // pred_region
          %s12019 = sand.u32 %s424, 1
          %s12020 = scalar_lea.sflag [#allocation5], %s12019
          %s12021 = sand.u32 %s424, 1
          %s12022 = smul.addr %s12021, 64
          %s12023 = scalar_lea.vmem [#allocation4], %s12022
          %12025 = dma.done %s12020, 1024
        $region104: #{tpu_custom_call.1} parent=99 // pred_fallthru
          _
      $region100: #{tpu_custom_call.1} parent=5 // pred_fallthru
        _
    $region6: #{tpu_custom_call.1} parent=1 // loop_footer
      %s31 = sadd.s32 1, %s27
    $region7: #{tpu_custom_call.1} parent=1 // loop_footer_branch
      %26 = sbr.rel target = $region3
    $region8: #{tpu_custom_call.1} parent=1 // loop_exit
      _
    %12026 = vsyncpa [#allocation5], 1
    %s12027 = scalar_lea.sflag [#allocation5], 1
    %12028 = vsyncpa %s12027, 1

</llo_original>
